<compile_context>
chip_gen: v6e
topology: v6e:2x2x1
jax: 0.10.0
libtpu: 0.0.40
codegen_flags: <defaults>
</compile_context>

<pallas_src>
import functools

import jax
import jax.numpy as jnp
from jax.experimental import pallas as pl
from jax.experimental.pallas import tpu as pltpu

_LANES = 128
_BN_EPS = 1e-5


# ----------------------------------------------------------------------------- helpers

def _round_up(x, m):
    return (x + m - 1) // m * m


def _fold_bn(w_oihw, conv_b, gamma, beta, mean, var, eps=_BN_EPS):
    """Fold eval-mode BatchNorm (and the conv bias) into conv weight + additive shift."""
    scale = gamma / jnp.sqrt(var + eps)
    w_folded = w_oihw * scale[:, None, None, None]
    shift = (conv_b - mean) * scale + beta
    return w_folded, shift


def _conv_w_to_taps(w_oihw, cin_pad, cout_pad):
    """(Cout, Cin, 3, 3) torch layout -> (9, cin_pad, cout_pad) bf16, zero padded."""
    cout, cin, kh, kw = w_oihw.shape
    w = jnp.transpose(w_oihw, (2, 3, 1, 0)).reshape(kh * kw, cin, cout)
    w = jnp.pad(w, ((0, 0), (0, cin_pad - cin), (0, cout_pad - cout)))
    return w.astype(jnp.bfloat16)


def _pad_row(v, n):
    """(c,) -> (1, n) f32 zero padded."""
    return jnp.pad(v, (0, n - v.shape[0])).reshape(1, n).astype(jnp.float32)


# ----------------------------------------------------------------------------- kernel

def _make_sknet_kernel(H, W):
    """Fused per-image kernel: conv3x3+BN+ReLU -> conv3x3+BN+ReLU -> GAP -> Linear."""
    HW = H * W
    taps = [(dh, dw) for dh in range(3) for dw in range(3)]

    def kernel(x_ref, w1_ref, s1_ref, w2_ref, s2_ref, wh_ref, bh_ref, o_ref, f1_ref):
        def conv3x3_relu(load_tap, w_ref_, s_ref_):
            # 9 shifted MXU matmuls, accumulated in f32; epilogue = relu(acc + shift).
            acc = None
            for t, (dh, dw) in enumerate(taps):
                lhs = load_tap(dh, dw)                             # (HW, Cin_p) bf16
                part = jnp.dot(lhs, w_ref_[t],
                               preferred_element_type=jnp.float32)
                acc = part if acc is None else acc + part
            return jnp.maximum(acc + s_ref_[...], 0.0)             # (HW, Cout_p) f32

        # ---- clf_stem: conv + folded BN + ReLU, straight from the zero-haloed image
        def image_tap(dh, dw):
            blk = x_ref[0, dh:dh + H, dw:dw + W, :]                # (H, W, cin_p) f32
            return blk.reshape(HW, blk.shape[-1]).astype(jnp.bfloat16)

        y1 = conv3x3_relu(image_tap, w1_ref, s1_ref)               # (HW, c1_p) f32

        # ---- stage stem output in a zero-haloed VMEM tile (no HBM round trip)
        f1_ref[...] = jnp.zeros(f1_ref.shape, f1_ref.dtype)
        f1_ref[1:H + 1, 1:W + 1, :] = y1.reshape(H, W, y1.shape[-1])

        def feat_tap(dh, dw):
            blk = f1_ref[dh:dh + H, dw:dw + W, :]                  # (H, W, c1_p) f32
            return blk.reshape(HW, blk.shape[-1]).astype(jnp.bfloat16)

        # ---- backbone body: conv + folded BN + ReLU
        y2 = conv3x3_relu(feat_tap, w2_ref, s2_ref)                # (HW, c2_p) f32

        # ---- clf_head: global average pool (ones-matmul on the MXU) + Linear
        ones_row = jnp.ones((1, HW), dtype=jnp.bfloat16)
        pooled = jnp.dot(ones_row, y2.astype(jnp.bfloat16),
                         preferred_element_type=jnp.float32) * (1.0 / HW)  # (1, c2_p)
        logits = jnp.dot(pooled.astype(jnp.bfloat16), wh_ref[...],
                         preferred_element_type=jnp.float32) + bh_ref[...]
        o_ref[0] = logits

    return kernel


# ----------------------------------------------------------------------------- forward

@jax.jit
def sknet_forward_val_clf(params, images_nchw):
    """Eval-mode forward for task='clf': stem -> backbone body -> classifier head.
    Returns predictions, analogous to dict(outputs=predictions)['outputs']."""
    N, Cin, H, W = images_nchw.shape
    p1, p2, ph = params["clf_stem"], params["backbone"], params["clf_head"]
    C1, C2 = p1["w"].shape[0], p2["w"].shape[0]
    NC = ph["w"].shape[0]

    cin_p = _round_up(Cin, _LANES)
    c1_p = _round_up(C1, _LANES)
    c2_p = _round_up(C2, _LANES)
    nc_p = _round_up(NC, _LANES)

    # NCHW -> NHWC, zero-pad channels to lane width, add 1-pixel spatial halo.
    x = jnp.transpose(images_nchw, (0, 2, 3, 1)).astype(jnp.float32)
    x = jnp.pad(x, ((0, 0), (1, 1), (1, 1), (0, cin_p - Cin)))

    # Host-side folding: BN + conv bias folded into weight / shift; weights in bf16.
    w1f, s1 = _fold_bn(p1["w"], p1["b"], p1["gamma"], p1["beta"], p1["mean"], p1["var"])
    w2f, s2 = _fold_bn(p2["w"], p2["b"], p2["gamma"], p2["beta"], p2["mean"], p2["var"])
    w1 = _conv_w_to_taps(w1f, cin_p, c1_p)
    w2 = _conv_w_to_taps(w2f, c1_p, c2_p)
    s1 = _pad_row(s1, c1_p)
    s2 = _pad_row(s2, c2_p)
    wh = jnp.pad(ph["w"].T, ((0, c2_p - C2), (0, nc_p - NC))).astype(jnp.bfloat16)
    bh = _pad_row(ph["b"], nc_p)

    flops = int(2 * N * H * W * 9 * (cin_p * c1_p + c1_p * c2_p)
                + 2 * N * (H * W * c2_p + c2_p * nc_p))
    bytes_accessed = int(x.size * 4 + (w1.size + w2.size + wh.size) * 2
                         + (s1.size + s2.size + bh.size) * 4 + N * nc_p * 4)

    out = pl.pallas_call(
        _make_sknet_kernel(H, W),
        out_shape=jax.ShapeDtypeStruct((N, 1, nc_p), jnp.float32),
        grid=(N,),
        in_specs=[
            pl.BlockSpec((1, H + 2, W + 2, cin_p), lambda n: (n, 0, 0, 0)),
            pl.BlockSpec((9, cin_p, c1_p), lambda n: (0, 0, 0)),
            pl.BlockSpec((1, c1_p), lambda n: (0, 0)),
            pl.BlockSpec((9, c1_p, c2_p), lambda n: (0, 0, 0)),
            pl.BlockSpec((1, c2_p), lambda n: (0, 0)),
            pl.BlockSpec((c2_p, nc_p), lambda n: (0, 0)),
            pl.BlockSpec((1, nc_p), lambda n: (0, 0)),
        ],
        out_specs=pl.BlockSpec((1, 1, nc_p), lambda n: (n, 0, 0)),
        scratch_shapes=[pltpu.VMEM((H + 2, W + 2, c1_p), jnp.float32)],
        compiler_params=pltpu.CompilerParams(
            dimension_semantics=("parallel",),
            vmem_limit_bytes=64 * 1024 * 1024),
        cost_estimate=pl.CostEstimate(flops=flops, transcendentals=0,
                                      bytes_accessed=bytes_accessed),
    )(x, w1, s1, w2, s2, wh, bh)

    return out[:, 0, :NC]                                          # (N, num_classes)


# ----------------------------------------------------------------------------- params

def init_sknet_params(key, c_in=3, c_stem=16, c_body=32, num_classes=10):
    """Deterministic init mirroring init_weights(): kaiming_normal for convs (bias=0),
    BN weight=1 / bias=0 (eval: running_mean=0, running_var=1), kaiming_uniform Linear."""
    k_stem, k_body, k_lin = jax.random.split(key, 3)

    def conv_block(k, cin, cout):
        fan_in = cin * 9
        std = jnp.sqrt(2.0 / fan_in)                               # kaiming_normal, relu
        w = std * jax.random.normal(k, (cout, cin, 3, 3), dtype=jnp.float32)
        return dict(w=w, b=jnp.zeros((cout,), jnp.float32),
                    gamma=jnp.ones((cout,), jnp.float32),
                    beta=jnp.zeros((cout,), jnp.float32),
                    mean=jnp.zeros((cout,), jnp.float32),
                    var=jnp.ones((cout,), jnp.float32))

    bound = jnp.sqrt(6.0 / c_body)                                 # kaiming_uniform, relu
    lin_w = jax.random.uniform(k_lin, (num_classes, c_body), jnp.float32,
                               minval=-bound, maxval=bound)

    return dict(clf_stem=conv_block(k_stem, c_in, c_stem),
                backbone=conv_block(k_body, c_stem, c_body),
                clf_head=dict(w=lin_w, b=jnp.zeros((num_classes,), jnp.float32)))


# ----------------------------------------------------------------------------- main

if __name__ == "__main__":
    key = jax.random.PRNGKey(0)
    k_params, k_img = jax.random.split(key)

    params = init_sknet_params(k_params, c_in=3, c_stem=16, c_body=32, num_classes=10)
    images = jax.random.normal(k_img, (2, 3, 16, 16), dtype=jnp.float32)  # NCHW

    logits = sknet_forward_val_clf(params, images)
    jax.block_until_ready(logits)

    # Pure-JAX reference with matching bf16 casts (f32 accumulation) for validation.
    def ref_forward(params, images_nchw):
        x = jnp.transpose(images_nchw, (0, 2, 3, 1)).astype(jnp.float32)
        for name in ("clf_stem", "backbone"):
            p = params[name]
            scale = p["gamma"] / jnp.sqrt(p["var"] + _BN_EPS)
            w = (p["w"] * scale[:, None, None, None]).astype(jnp.bfloat16)
            shift = (p["b"] - p["mean"]) * scale + p["beta"]
            y = jax.lax.conv_general_dilated(
                x.astype(jnp.bfloat16), jnp.transpose(w, (2, 3, 1, 0)), (1, 1), "SAME",
                dimension_numbers=("NHWC", "HWIO", "NHWC"),
                preferred_element_type=jnp.float32)
            x = jnp.maximum(y + shift, 0.0)
        pooled = jnp.mean(x.astype(jnp.bfloat16).astype(jnp.float32), axis=(1, 2))
        wh = params["clf_head"]["w"].T.astype(jnp.bfloat16).astype(jnp.float32)
        return pooled.astype(jnp.bfloat16).astype(jnp.float32) @ wh + params["clf_head"]["b"]

    ref = ref_forward(params, images)
    assert logits.shape == (2, 10)
    assert jnp.allclose(logits, ref, atol=1e-2, rtol=1e-2)

    print("KERNEL_OK")
</pallas_src>

<mosaic_0001>
module attributes {stable_mosaic.version = 11 : i64} {
  func.func @kernel(%arg0: i32, %arg1: memref<1x18x18x128xf32, #tpu.memory_space<vmem>>, %arg2: memref<9x128x128xbf16, #tpu.memory_space<vmem>>, %arg3: memref<1x128xf32, #tpu.memory_space<vmem>>, %arg4: memref<9x128x128xbf16, #tpu.memory_space<vmem>>, %arg5: memref<1x128xf32, #tpu.memory_space<vmem>>, %arg6: memref<128x128xbf16, #tpu.memory_space<vmem>>, %arg7: memref<1x128xf32, #tpu.memory_space<vmem>>, %arg8: memref<1x1x128xf32, #tpu.memory_space<vmem>>, %arg9: memref<18x18x128xf32, #tpu.memory_space<vmem>>) attributes {dimension_semantics = [#tpu.dimension_semantics<parallel>], iteration_bounds = array<i64: 2>, scalar_prefetch = 0 : i64, scratch_operands = 1 : i64, tpu.core_type = #tpu.core_type<tc>, window_params = [{transform_indices = @transform_0, window_bounds = array<i64: 1, 18, 18, 128>}, {pipeline_mode = #tpu.pipeline_mode<synchronous>, transform_indices = @transform_1, window_bounds = array<i64: 9, 128, 128>}, {pipeline_mode = #tpu.pipeline_mode<synchronous>, transform_indices = @transform_2, window_bounds = array<i64: 1, 128>}, {pipeline_mode = #tpu.pipeline_mode<synchronous>, transform_indices = @transform_3, window_bounds = array<i64: 9, 128, 128>}, {pipeline_mode = #tpu.pipeline_mode<synchronous>, transform_indices = @transform_4, window_bounds = array<i64: 1, 128>}, {pipeline_mode = #tpu.pipeline_mode<synchronous>, transform_indices = @transform_5, window_bounds = array<i64: 128, 128>}, {pipeline_mode = #tpu.pipeline_mode<synchronous>, transform_indices = @transform_6, window_bounds = array<i64: 1, 128>}, {transform_indices = @transform_7, window_bounds = array<i64: 1, 1, 128>}]} {
    %c0 = arith.constant 0 : index
    %c0_0 = arith.constant 0 : index
    %c0_1 = arith.constant 0 : index
    %c0_2 = arith.constant 0 : index
    %0 = vector.load %arg1[%c0, %c0_0, %c0_1, %c0_2] : memref<1x18x18x128xf32, #tpu.memory_space<vmem>>, vector<1x16x16x128xf32>
    %1 = vector.shape_cast %0 : vector<1x16x16x128xf32> to vector<16x16x128xf32>
    %2 = vector.shape_cast %1 : vector<16x16x128xf32> to vector<256x128xf32>
    %3 = arith.truncf %2 : vector<256x128xf32> to vector<256x128xbf16>
    %c0_3 = arith.constant 0 : index
    %c0_4 = arith.constant 0 : index
    %c0_5 = arith.constant 0 : index
    %4 = vector.load %arg2[%c0_3, %c0_4, %c0_5] : memref<9x128x128xbf16, #tpu.memory_space<vmem>>, vector<1x128x128xbf16>
    %5 = vector.shape_cast %4 : vector<1x128x128xbf16> to vector<128x128xbf16>
    %cst = arith.constant dense<0.000000e+00> : vector<256x128xf32>
    %6 = tpu.matmul %3, %5, %cst {dimension_numbers = #tpu.dot_dimension_numbers<[1], [0], [0], [1], [0, 0, 1, 1], [], []>} : vector<256x128xbf16>, vector<128x128xbf16>, vector<256x128xf32> -> vector<256x128xf32>
    %c0_6 = arith.constant 0 : index
    %c0_7 = arith.constant 0 : index
    %c1 = arith.constant 1 : index
    %c0_8 = arith.constant 0 : index
    %7 = vector.load %arg1[%c0_6, %c0_7, %c1, %c0_8] : memref<1x18x18x128xf32, #tpu.memory_space<vmem>>, vector<1x16x16x128xf32>
    %8 = vector.shape_cast %7 : vector<1x16x16x128xf32> to vector<16x16x128xf32>
    %9 = vector.shape_cast %8 : vector<16x16x128xf32> to vector<256x128xf32>
    %10 = arith.truncf %9 : vector<256x128xf32> to vector<256x128xbf16>
    %c1_9 = arith.constant 1 : index
    %c0_10 = arith.constant 0 : index
    %c0_11 = arith.constant 0 : index
    %11 = vector.load %arg2[%c1_9, %c0_10, %c0_11] : memref<9x128x128xbf16, #tpu.memory_space<vmem>>, vector<1x128x128xbf16>
    %12 = vector.shape_cast %11 : vector<1x128x128xbf16> to vector<128x128xbf16>
    %cst_12 = arith.constant dense<0.000000e+00> : vector<256x128xf32>
    %13 = tpu.matmul %10, %12, %cst_12 {dimension_numbers = #tpu.dot_dimension_numbers<[1], [0], [0], [1], [0, 0, 1, 1], [], []>} : vector<256x128xbf16>, vector<128x128xbf16>, vector<256x128xf32> -> vector<256x128xf32>
    %14 = arith.addf %6, %13 : vector<256x128xf32>
    %c0_13 = arith.constant 0 : index
    %c0_14 = arith.constant 0 : index
    %c2 = arith.constant 2 : index
    %c0_15 = arith.constant 0 : index
    %15 = vector.load %arg1[%c0_13, %c0_14, %c2, %c0_15] : memref<1x18x18x128xf32, #tpu.memory_space<vmem>>, vector<1x16x16x128xf32>
    %16 = vector.shape_cast %15 : vector<1x16x16x128xf32> to vector<16x16x128xf32>
    %17 = vector.shape_cast %16 : vector<16x16x128xf32> to vector<256x128xf32>
    %18 = arith.truncf %17 : vector<256x128xf32> to vector<256x128xbf16>
    %c2_16 = arith.constant 2 : index
    %c0_17 = arith.constant 0 : index
    %c0_18 = arith.constant 0 : index
    %19 = vector.load %arg2[%c2_16, %c0_17, %c0_18] : memref<9x128x128xbf16, #tpu.memory_space<vmem>>, vector<1x128x128xbf16>
    %20 = vector.shape_cast %19 : vector<1x128x128xbf16> to vector<128x128xbf16>
    %cst_19 = arith.constant dense<0.000000e+00> : vector<256x128xf32>
    %21 = tpu.matmul %18, %20, %cst_19 {dimension_numbers = #tpu.dot_dimension_numbers<[1], [0], [0], [1], [0, 0, 1, 1], [], []>} : vector<256x128xbf16>, vector<128x128xbf16>, vector<256x128xf32> -> vector<256x128xf32>
    %22 = arith.addf %14, %21 : vector<256x128xf32>
    %c0_20 = arith.constant 0 : index
    %c1_21 = arith.constant 1 : index
    %c0_22 = arith.constant 0 : index
    %c0_23 = arith.constant 0 : index
    %23 = vector.load %arg1[%c0_20, %c1_21, %c0_22, %c0_23] : memref<1x18x18x128xf32, #tpu.memory_space<vmem>>, vector<1x16x16x128xf32>
    %24 = vector.shape_cast %23 : vector<1x16x16x128xf32> to vector<16x16x128xf32>
    %25 = vector.shape_cast %24 : vector<16x16x128xf32> to vector<256x128xf32>
    %26 = arith.truncf %25 : vector<256x128xf32> to vector<256x128xbf16>
    %c3 = arith.constant 3 : index
    %c0_24 = arith.constant 0 : index
    %c0_25 = arith.constant 0 : index
    %27 = vector.load %arg2[%c3, %c0_24, %c0_25] : memref<9x128x128xbf16, #tpu.memory_space<vmem>>, vector<1x128x128xbf16>
    %28 = vector.shape_cast %27 : vector<1x128x128xbf16> to vector<128x128xbf16>
    %cst_26 = arith.constant dense<0.000000e+00> : vector<256x128xf32>
    %29 = tpu.matmul %26, %28, %cst_26 {dimension_numbers = #tpu.dot_dimension_numbers<[1], [0], [0], [1], [0, 0, 1, 1], [], []>} : vector<256x128xbf16>, vector<128x128xbf16>, vector<256x128xf32> -> vector<256x128xf32>
    %30 = arith.addf %22, %29 : vector<256x128xf32>
    %c0_27 = arith.constant 0 : index
    %c1_28 = arith.constant 1 : index
    %c1_29 = arith.constant 1 : index
    %c0_30 = arith.constant 0 : index
    %31 = vector.load %arg1[%c0_27, %c1_28, %c1_29, %c0_30] : memref<1x18x18x128xf32, #tpu.memory_space<vmem>>, vector<1x16x16x128xf32>
    %32 = vector.shape_cast %31 : vector<1x16x16x128xf32> to vector<16x16x128xf32>
    %33 = vector.shape_cast %32 : vector<16x16x128xf32> to vector<256x128xf32>
    %34 = arith.truncf %33 : vector<256x128xf32> to vector<256x128xbf16>
    %c4 = arith.constant 4 : index
    %c0_31 = arith.constant 0 : index
    %c0_32 = arith.constant 0 : index
    %35 = vector.load %arg2[%c4, %c0_31, %c0_32] : memref<9x128x128xbf16, #tpu.memory_space<vmem>>, vector<1x128x128xbf16>
    %36 = vector.shape_cast %35 : vector<1x128x128xbf16> to vector<128x128xbf16>
    %cst_33 = arith.constant dense<0.000000e+00> : vector<256x128xf32>
    %37 = tpu.matmul %34, %36, %cst_33 {dimension_numbers = #tpu.dot_dimension_numbers<[1], [0], [0], [1], [0, 0, 1, 1], [], []>} : vector<256x128xbf16>, vector<128x128xbf16>, vector<256x128xf32> -> vector<256x128xf32>
    %38 = arith.addf %30, %37 : vector<256x128xf32>
    %c0_34 = arith.constant 0 : index
    %c1_35 = arith.constant 1 : index
    %c2_36 = arith.constant 2 : index
    %c0_37 = arith.constant 0 : index
    %39 = vector.load %arg1[%c0_34, %c1_35, %c2_36, %c0_37] : memref<1x18x18x128xf32, #tpu.memory_space<vmem>>, vector<1x16x16x128xf32>
    %40 = vector.shape_cast %39 : vector<1x16x16x128xf32> to vector<16x16x128xf32>
    %41 = vector.shape_cast %40 : vector<16x16x128xf32> to vector<256x128xf32>
    %42 = arith.truncf %41 : vector<256x128xf32> to vector<256x128xbf16>
    %c5 = arith.constant 5 : index
    %c0_38 = arith.constant 0 : index
    %c0_39 = arith.constant 0 : index
    %43 = vector.load %arg2[%c5, %c0_38, %c0_39] : memref<9x128x128xbf16, #tpu.memory_space<vmem>>, vector<1x128x128xbf16>
    %44 = vector.shape_cast %43 : vector<1x128x128xbf16> to vector<128x128xbf16>
    %cst_40 = arith.constant dense<0.000000e+00> : vector<256x128xf32>
    %45 = tpu.matmul %42, %44, %cst_40 {dimension_numbers = #tpu.dot_dimension_numbers<[1], [0], [0], [1], [0, 0, 1, 1], [], []>} : vector<256x128xbf16>, vector<128x128xbf16>, vector<256x128xf32> -> vector<256x128xf32>
    %46 = arith.addf %38, %45 : vector<256x128xf32>
    %c0_41 = arith.constant 0 : index
    %c2_42 = arith.constant 2 : index
    %c0_43 = arith.constant 0 : index
    %c0_44 = arith.constant 0 : index
    %47 = vector.load %arg1[%c0_41, %c2_42, %c0_43, %c0_44] : memref<1x18x18x128xf32, #tpu.memory_space<vmem>>, vector<1x16x16x128xf32>
    %48 = vector.shape_cast %47 : vector<1x16x16x128xf32> to vector<16x16x128xf32>
    %49 = vector.shape_cast %48 : vector<16x16x128xf32> to vector<256x128xf32>
    %50 = arith.truncf %49 : vector<256x128xf32> to vector<256x128xbf16>
    %c6 = arith.constant 6 : index
    %c0_45 = arith.constant 0 : index
    %c0_46 = arith.constant 0 : index
    %51 = vector.load %arg2[%c6, %c0_45, %c0_46] : memref<9x128x128xbf16, #tpu.memory_space<vmem>>, vector<1x128x128xbf16>
    %52 = vector.shape_cast %51 : vector<1x128x128xbf16> to vector<128x128xbf16>
    %cst_47 = arith.constant dense<0.000000e+00> : vector<256x128xf32>
    %53 = tpu.matmul %50, %52, %cst_47 {dimension_numbers = #tpu.dot_dimension_numbers<[1], [0], [0], [1], [0, 0, 1, 1], [], []>} : vector<256x128xbf16>, vector<128x128xbf16>, vector<256x128xf32> -> vector<256x128xf32>
    %54 = arith.addf %46, %53 : vector<256x128xf32>
    %c0_48 = arith.constant 0 : index
    %c2_49 = arith.constant 2 : index
    %c1_50 = arith.constant 1 : index
    %c0_51 = arith.constant 0 : index
    %55 = vector.load %arg1[%c0_48, %c2_49, %c1_50, %c0_51] : memref<1x18x18x128xf32, #tpu.memory_space<vmem>>, vector<1x16x16x128xf32>
    %56 = vector.shape_cast %55 : vector<1x16x16x128xf32> to vector<16x16x128xf32>
    %57 = vector.shape_cast %56 : vector<16x16x128xf32> to vector<256x128xf32>
    %58 = arith.truncf %57 : vector<256x128xf32> to vector<256x128xbf16>
    %c7 = arith.constant 7 : index
    %c0_52 = arith.constant 0 : index
    %c0_53 = arith.constant 0 : index
    %59 = vector.load %arg2[%c7, %c0_52, %c0_53] : memref<9x128x128xbf16, #tpu.memory_space<vmem>>, vector<1x128x128xbf16>
    %60 = vector.shape_cast %59 : vector<1x128x128xbf16> to vector<128x128xbf16>
    %cst_54 = arith.constant dense<0.000000e+00> : vector<256x128xf32>
    %61 = tpu.matmul %58, %60, %cst_54 {dimension_numbers = #tpu.dot_dimension_numbers<[1], [0], [0], [1], [0, 0, 1, 1], [], []>} : vector<256x128xbf16>, vector<128x128xbf16>, vector<256x128xf32> -> vector<256x128xf32>
    %62 = arith.addf %54, %61 : vector<256x128xf32>
    %c0_55 = arith.constant 0 : index
    %c2_56 = arith.constant 2 : index
    %c2_57 = arith.constant 2 : index
    %c0_58 = arith.constant 0 : index
    %63 = vector.load %arg1[%c0_55, %c2_56, %c2_57, %c0_58] : memref<1x18x18x128xf32, #tpu.memory_space<vmem>>, vector<1x16x16x128xf32>
    %64 = vector.shape_cast %63 : vector<1x16x16x128xf32> to vector<16x16x128xf32>
    %65 = vector.shape_cast %64 : vector<16x16x128xf32> to vector<256x128xf32>
    %66 = arith.truncf %65 : vector<256x128xf32> to vector<256x128xbf16>
    %c8 = arith.constant 8 : index
    %c0_59 = arith.constant 0 : index
    %c0_60 = arith.constant 0 : index
    %67 = vector.load %arg2[%c8, %c0_59, %c0_60] : memref<9x128x128xbf16, #tpu.memory_space<vmem>>, vector<1x128x128xbf16>
    %68 = vector.shape_cast %67 : vector<1x128x128xbf16> to vector<128x128xbf16>
    %cst_61 = arith.constant dense<0.000000e+00> : vector<256x128xf32>
    %69 = tpu.matmul %66, %68, %cst_61 {dimension_numbers = #tpu.dot_dimension_numbers<[1], [0], [0], [1], [0, 0, 1, 1], [], []>} : vector<256x128xbf16>, vector<128x128xbf16>, vector<256x128xf32> -> vector<256x128xf32>
    %70 = arith.addf %62, %69 : vector<256x128xf32>
    %c0_62 = arith.constant 0 : index
    %c0_63 = arith.constant 0 : index
    %71 = vector.load %arg3[%c0_62, %c0_63] : memref<1x128xf32, #tpu.memory_space<vmem>>, vector<1x128xf32>
    %72 = vector.broadcast %71 : vector<1x128xf32> to vector<256x128xf32>
    %73 = arith.addf %70, %72 : vector<256x128xf32>
    %cst_64 = arith.constant 0.000000e+00 : f32
    %74 = vector.broadcast %cst_64 : f32 to vector<256x128xf32>
    %75 = arith.maximumf %73, %74 : vector<256x128xf32>
    %cst_65 = arith.constant 0.000000e+00 : f32
    %76 = vector.broadcast %cst_65 : f32 to vector<18x18x128xf32>
    %c0_66 = arith.constant 0 : index
    %c0_67 = arith.constant 0 : index
    %c0_68 = arith.constant 0 : index
    %77 = vector.load %arg9[%c0_66, %c0_67, %c0_68] : memref<18x18x128xf32, #tpu.memory_space<vmem>>, vector<18x18x128xf32>
    tpu.vector_store %arg9[%c0_66, %c0_67, %c0_68], %76 {strides = array<i32>} : memref<18x18x128xf32, #tpu.memory_space<vmem>>, vector<18x18x128xf32>,
    %78 = vector.shape_cast %75 : vector<256x128xf32> to vector<16x16x128xf32>
    %c1_69 = arith.constant 1 : index
    %c1_70 = arith.constant 1 : index
    %c0_71 = arith.constant 0 : index
    %79 = vector.load %arg9[%c1_69, %c1_70, %c0_71] : memref<18x18x128xf32, #tpu.memory_space<vmem>>, vector<16x16x128xf32>
    tpu.vector_store %arg9[%c1_69, %c1_70, %c0_71], %78 {strides = array<i32>} : memref<18x18x128xf32, #tpu.memory_space<vmem>>, vector<16x16x128xf32>,
    %c0_72 = arith.constant 0 : index
    %c0_73 = arith.constant 0 : index
    %c0_74 = arith.constant 0 : index
    %80 = vector.load %arg9[%c0_72, %c0_73, %c0_74] : memref<18x18x128xf32, #tpu.memory_space<vmem>>, vector<16x16x128xf32>
    %81 = vector.shape_cast %80 : vector<16x16x128xf32> to vector<256x128xf32>
    %82 = arith.truncf %81 : vector<256x128xf32> to vector<256x128xbf16>
    %c0_75 = arith.constant 0 : index
    %c0_76 = arith.constant 0 : index
    %c0_77 = arith.constant 0 : index
    %83 = vector.load %arg4[%c0_75, %c0_76, %c0_77] : memref<9x128x128xbf16, #tpu.memory_space<vmem>>, vector<1x128x128xbf16>
    %84 = vector.shape_cast %83 : vector<1x128x128xbf16> to vector<128x128xbf16>
    %cst_78 = arith.constant dense<0.000000e+00> : vector<256x128xf32>
    %85 = tpu.matmul %82, %84, %cst_78 {dimension_numbers = #tpu.dot_dimension_numbers<[1], [0], [0], [1], [0, 0, 1, 1], [], []>} : vector<256x128xbf16>, vector<128x128xbf16>, vector<256x128xf32> -> vector<256x128xf32>
    %c0_79 = arith.constant 0 : index
    %c1_80 = arith.constant 1 : index
    %c0_81 = arith.constant 0 : index
    %86 = vector.load %arg9[%c0_79, %c1_80, %c0_81] : memref<18x18x128xf32, #tpu.memory_space<vmem>>, vector<16x16x128xf32>
    %87 = vector.shape_cast %86 : vector<16x16x128xf32> to vector<256x128xf32>
    %88 = arith.truncf %87 : vector<256x128xf32> to vector<256x128xbf16>
    %c1_82 = arith.constant 1 : index
    %c0_83 = arith.constant 0 : index
    %c0_84 = arith.constant 0 : index
    %89 = vector.load %arg4[%c1_82, %c0_83, %c0_84] : memref<9x128x128xbf16, #tpu.memory_space<vmem>>, vector<1x128x128xbf16>
    %90 = vector.shape_cast %89 : vector<1x128x128xbf16> to vector<128x128xbf16>
    %cst_85 = arith.constant dense<0.000000e+00> : vector<256x128xf32>
    %91 = tpu.matmul %88, %90, %cst_85 {dimension_numbers = #tpu.dot_dimension_numbers<[1], [0], [0], [1], [0, 0, 1, 1], [], []>} : vector<256x128xbf16>, vector<128x128xbf16>, vector<256x128xf32> -> vector<256x128xf32>
    %92 = arith.addf %85, %91 : vector<256x128xf32>
    %c0_86 = arith.constant 0 : index
    %c2_87 = arith.constant 2 : index
    %c0_88 = arith.constant 0 : index
    %93 = vector.load %arg9[%c0_86, %c2_87, %c0_88] : memref<18x18x128xf32, #tpu.memory_space<vmem>>, vector<16x16x128xf32>
    %94 = vector.shape_cast %93 : vector<16x16x128xf32> to vector<256x128xf32>
    %95 = arith.truncf %94 : vector<256x128xf32> to vector<256x128xbf16>
    %c2_89 = arith.constant 2 : index
    %c0_90 = arith.constant 0 : index
    %c0_91 = arith.constant 0 : index
    %96 = vector.load %arg4[%c2_89, %c0_90, %c0_91] : memref<9x128x128xbf16, #tpu.memory_space<vmem>>, vector<1x128x128xbf16>
    %97 = vector.shape_cast %96 : vector<1x128x128xbf16> to vector<128x128xbf16>
    %cst_92 = arith.constant dense<0.000000e+00> : vector<256x128xf32>
    %98 = tpu.matmul %95, %97, %cst_92 {dimension_numbers = #tpu.dot_dimension_numbers<[1], [0], [0], [1], [0, 0, 1, 1], [], []>} : vector<256x128xbf16>, vector<128x128xbf16>, vector<256x128xf32> -> vector<256x128xf32>
    %99 = arith.addf %92, %98 : vector<256x128xf32>
    %c1_93 = arith.constant 1 : index
    %c0_94 = arith.constant 0 : index
    %c0_95 = arith.constant 0 : index
    %100 = vector.load %arg9[%c1_93, %c0_94, %c0_95] : memref<18x18x128xf32, #tpu.memory_space<vmem>>, vector<16x16x128xf32>
    %101 = vector.shape_cast %100 : vector<16x16x128xf32> to vector<256x128xf32>
    %102 = arith.truncf %101 : vector<256x128xf32> to vector<256x128xbf16>
    %c3_96 = arith.constant 3 : index
    %c0_97 = arith.constant 0 : index
    %c0_98 = arith.constant 0 : index
    %103 = vector.load %arg4[%c3_96, %c0_97, %c0_98] : memref<9x128x128xbf16, #tpu.memory_space<vmem>>, vector<1x128x128xbf16>
    %104 = vector.shape_cast %103 : vector<1x128x128xbf16> to vector<128x128xbf16>
    %cst_99 = arith.constant dense<0.000000e+00> : vector<256x128xf32>
    %105 = tpu.matmul %102, %104, %cst_99 {dimension_numbers = #tpu.dot_dimension_numbers<[1], [0], [0], [1], [0, 0, 1, 1], [], []>} : vector<256x128xbf16>, vector<128x128xbf16>, vector<256x128xf32> -> vector<256x128xf32>
    %106 = arith.addf %99, %105 : vector<256x128xf32>
    %c1_100 = arith.constant 1 : index
    %c1_101 = arith.constant 1 : index
    %c0_102 = arith.constant 0 : index
    %107 = vector.load %arg9[%c1_100, %c1_101, %c0_102] : memref<18x18x128xf32, #tpu.memory_space<vmem>>, vector<16x16x128xf32>
    %108 = vector.shape_cast %107 : vector<16x16x128xf32> to vector<256x128xf32>
    %109 = arith.truncf %108 : vector<256x128xf32> to vector<256x128xbf16>
    %c4_103 = arith.constant 4 : index
    %c0_104 = arith.constant 0 : index
    %c0_105 = arith.constant 0 : index
    %110 = vector.load %arg4[%c4_103, %c0_104, %c0_105] : memref<9x128x128xbf16, #tpu.memory_space<vmem>>, vector<1x128x128xbf16>
    %111 = vector.shape_cast %110 : vector<1x128x128xbf16> to vector<128x128xbf16>
    %cst_106 = arith.constant dense<0.000000e+00> : vector<256x128xf32>
    %112 = tpu.matmul %109, %111, %cst_106 {dimension_numbers = #tpu.dot_dimension_numbers<[1], [0], [0], [1], [0, 0, 1, 1], [], []>} : vector<256x128xbf16>, vector<128x128xbf16>, vector<256x128xf32> -> vector<256x128xf32>
    %113 = arith.addf %106, %112 : vector<256x128xf32>
    %c1_107 = arith.constant 1 : index
    %c2_108 = arith.constant 2 : index
    %c0_109 = arith.constant 0 : index
    %114 = vector.load %arg9[%c1_107, %c2_108, %c0_109] : memref<18x18x128xf32, #tpu.memory_space<vmem>>, vector<16x16x128xf32>
    %115 = vector.shape_cast %114 : vector<16x16x128xf32> to vector<256x128xf32>
    %116 = arith.truncf %115 : vector<256x128xf32> to vector<256x128xbf16>
    %c5_110 = arith.constant 5 : index
    %c0_111 = arith.constant 0 : index
    %c0_112 = arith.constant 0 : index
    %117 = vector.load %arg4[%c5_110, %c0_111, %c0_112] : memref<9x128x128xbf16, #tpu.memory_space<vmem>>, vector<1x128x128xbf16>
    %118 = vector.shape_cast %117 : vector<1x128x128xbf16> to vector<128x128xbf16>
    %cst_113 = arith.constant dense<0.000000e+00> : vector<256x128xf32>
    %119 = tpu.matmul %116, %118, %cst_113 {dimension_numbers = #tpu.dot_dimension_numbers<[1], [0], [0], [1], [0, 0, 1, 1], [], []>} : vector<256x128xbf16>, vector<128x128xbf16>, vector<256x128xf32> -> vector<256x128xf32>
    %120 = arith.addf %113, %119 : vector<256x128xf32>
    %c2_114 = arith.constant 2 : index
    %c0_115 = arith.constant 0 : index
    %c0_116 = arith.constant 0 : index
    %121 = vector.load %arg9[%c2_114, %c0_115, %c0_116] : memref<18x18x128xf32, #tpu.memory_space<vmem>>, vector<16x16x128xf32>
    %122 = vector.shape_cast %121 : vector<16x16x128xf32> to vector<256x128xf32>
    %123 = arith.truncf %122 : vector<256x128xf32> to vector<256x128xbf16>
    %c6_117 = arith.constant 6 : index
    %c0_118 = arith.constant 0 : index
    %c0_119 = arith.constant 0 : index
    %124 = vector.load %arg4[%c6_117, %c0_118, %c0_119] : memref<9x128x128xbf16, #tpu.memory_space<vmem>>, vector<1x128x128xbf16>
    %125 = vector.shape_cast %124 : vector<1x128x128xbf16> to vector<128x128xbf16>
    %cst_120 = arith.constant dense<0.000000e+00> : vector<256x128xf32>
    %126 = tpu.matmul %123, %125, %cst_120 {dimension_numbers = #tpu.dot_dimension_numbers<[1], [0], [0], [1], [0, 0, 1, 1], [], []>} : vector<256x128xbf16>, vector<128x128xbf16>, vector<256x128xf32> -> vector<256x128xf32>
    %127 = arith.addf %120, %126 : vector<256x128xf32>
    %c2_121 = arith.constant 2 : index
    %c1_122 = arith.constant 1 : index
    %c0_123 = arith.constant 0 : index
    %128 = vector.load %arg9[%c2_121, %c1_122, %c0_123] : memref<18x18x128xf32, #tpu.memory_space<vmem>>, vector<16x16x128xf32>
    %129 = vector.shape_cast %128 : vector<16x16x128xf32> to vector<256x128xf32>
    %130 = arith.truncf %129 : vector<256x128xf32> to vector<256x128xbf16>
    %c7_124 = arith.constant 7 : index
    %c0_125 = arith.constant 0 : index
    %c0_126 = arith.constant 0 : index
    %131 = vector.load %arg4[%c7_124, %c0_125, %c0_126] : memref<9x128x128xbf16, #tpu.memory_space<vmem>>, vector<1x128x128xbf16>
    %132 = vector.shape_cast %131 : vector<1x128x128xbf16> to vector<128x128xbf16>
    %cst_127 = arith.constant dense<0.000000e+00> : vector<256x128xf32>
    %133 = tpu.matmul %130, %132, %cst_127 {dimension_numbers = #tpu.dot_dimension_numbers<[1], [0], [0], [1], [0, 0, 1, 1], [], []>} : vector<256x128xbf16>, vector<128x128xbf16>, vector<256x128xf32> -> vector<256x128xf32>
    %134 = arith.addf %127, %133 : vector<256x128xf32>
    %c2_128 = arith.constant 2 : index
    %c2_129 = arith.constant 2 : index
    %c0_130 = arith.constant 0 : index
    %135 = vector.load %arg9[%c2_128, %c2_129, %c0_130] : memref<18x18x128xf32, #tpu.memory_space<vmem>>, vector<16x16x128xf32>
    %136 = vector.shape_cast %135 : vector<16x16x128xf32> to vector<256x128xf32>
    %137 = arith.truncf %136 : vector<256x128xf32> to vector<256x128xbf16>
    %c8_131 = arith.constant 8 : index
    %c0_132 = arith.constant 0 : index
    %c0_133 = arith.constant 0 : index
    %138 = vector.load %arg4[%c8_131, %c0_132, %c0_133] : memref<9x128x128xbf16, #tpu.memory_space<vmem>>, vector<1x128x128xbf16>
    %139 = vector.shape_cast %138 : vector<1x128x128xbf16> to vector<128x128xbf16>
    %cst_134 = arith.constant dense<0.000000e+00> : vector<256x128xf32>
    %140 = tpu.matmul %137, %139, %cst_134 {dimension_numbers = #tpu.dot_dimension_numbers<[1], [0], [0], [1], [0, 0, 1, 1], [], []>} : vector<256x128xbf16>, vector<128x128xbf16>, vector<256x128xf32> -> vector<256x128xf32>
    %141 = arith.addf %134, %140 : vector<256x128xf32>
    %c0_135 = arith.constant 0 : index
    %c0_136 = arith.constant 0 : index
    %142 = vector.load %arg5[%c0_135, %c0_136] : memref<1x128xf32, #tpu.memory_space<vmem>>, vector<1x128xf32>
    %143 = vector.broadcast %142 : vector<1x128xf32> to vector<256x128xf32>
    %144 = arith.addf %141, %143 : vector<256x128xf32>
    %cst_137 = arith.constant 0.000000e+00 : f32
    %145 = vector.broadcast %cst_137 : f32 to vector<256x128xf32>
    %146 = arith.maximumf %144, %145 : vector<256x128xf32>
    %cst_138 = arith.constant 1.000000e+00 : bf16
    %147 = vector.broadcast %cst_138 : bf16 to vector<1x256xbf16>
    %148 = arith.truncf %146 : vector<256x128xf32> to vector<256x128xbf16>
    %cst_139 = arith.constant dense<0.000000e+00> : vector<1x128xf32>
    %149 = tpu.matmul %147, %148, %cst_139 {dimension_numbers = #tpu.dot_dimension_numbers<[1], [0], [0], [1], [0, 0, 1, 1], [], []>} : vector<1x256xbf16>, vector<256x128xbf16>, vector<1x128xf32> -> vector<1x128xf32>
    %cst_140 = arith.constant 3.906250e-03 : f32
    %150 = vector.broadcast %cst_140 : f32 to vector<1x128xf32>
    %151 = arith.mulf %149, %150 : vector<1x128xf32>
    %152 = arith.truncf %151 : vector<1x128xf32> to vector<1x128xbf16>
    %c0_141 = arith.constant 0 : index
    %c0_142 = arith.constant 0 : index
    %153 = vector.load %arg6[%c0_141, %c0_142] : memref<128x128xbf16, #tpu.memory_space<vmem>>, vector<128x128xbf16>
    %cst_143 = arith.constant dense<0.000000e+00> : vector<1x128xf32>
    %154 = tpu.matmul %152, %153, %cst_143 {dimension_numbers = #tpu.dot_dimension_numbers<[1], [0], [0], [1], [0, 0, 1, 1], [], []>} : vector<1x128xbf16>, vector<128x128xbf16>, vector<1x128xf32> -> vector<1x128xf32>
    %c0_144 = arith.constant 0 : index
    %c0_145 = arith.constant 0 : index
    %155 = vector.load %arg7[%c0_144, %c0_145] : memref<1x128xf32, #tpu.memory_space<vmem>>, vector<1x128xf32>
    %156 = arith.addf %154, %155 : vector<1x128xf32>
    %c0_146 = arith.constant 0 : index
    %c0_147 = arith.constant 0 : index
    %c0_148 = arith.constant 0 : index
    %157 = vector.load %arg8[%c0_146, %c0_147, %c0_148] : memref<1x1x128xf32, #tpu.memory_space<vmem>>, vector<1x1x128xf32>
    %158 = vector.shape_cast %157 : vector<1x1x128xf32> to vector<1x128xf32>
    %159 = vector.shape_cast %156 : vector<1x128xf32> to vector<1x1x128xf32>
    tpu.vector_store %arg8[%c0_146, %c0_147, %c0_148], %159 {strides = array<i32>} : memref<1x1x128xf32, #tpu.memory_space<vmem>>, vector<1x1x128xf32>,
    return
  }
  func.func @transform_0(%arg0: i32) -> (i32, i32, i32, i32) {
    %c0_i32 = arith.constant 0 : i32
    %c0_i32_0 = arith.constant 0 : i32
    %c0_i32_1 = arith.constant 0 : i32
    %c0_i32_2 = arith.constant 0 : i32
    return %arg0, %c0_i32, %c0_i32_0, %c0_i32_1 : i32, i32, i32, i32
  }
  func.func @transform_1(%arg0: i32) -> (i32, i32, i32) {
    %c0_i32 = arith.constant 0 : i32
    %c0_i32_0 = arith.constant 0 : i32
    %c0_i32_1 = arith.constant 0 : i32
    %c0_i32_2 = arith.constant 0 : i32
    return %c0_i32, %c0_i32_0, %c0_i32_1 : i32, i32, i32
  }
  func.func @transform_2(%arg0: i32) -> (i32, i32) {
    %c0_i32 = arith.constant 0 : i32
    %c0_i32_0 = arith.constant 0 : i32
    %c0_i32_1 = arith.constant 0 : i32
    return %c0_i32, %c0_i32_0 : i32, i32
  }
  func.func @transform_3(%arg0: i32) -> (i32, i32, i32) {
    %c0_i32 = arith.constant 0 : i32
    %c0_i32_0 = arith.constant 0 : i32
    %c0_i32_1 = arith.constant 0 : i32
    %c0_i32_2 = arith.constant 0 : i32
    return %c0_i32, %c0_i32_0, %c0_i32_1 : i32, i32, i32
  }
  func.func @transform_4(%arg0: i32) -> (i32, i32) {
    %c0_i32 = arith.constant 0 : i32
    %c0_i32_0 = arith.constant 0 : i32
    %c0_i32_1 = arith.constant 0 : i32
    return %c0_i32, %c0_i32_0 : i32, i32
  }
  func.func @transform_5(%arg0: i32) -> (i32, i32) {
    %c0_i32 = arith.constant 0 : i32
    %c0_i32_0 = arith.constant 0 : i32
    %c0_i32_1 = arith.constant 0 : i32
    return %c0_i32, %c0_i32_0 : i32, i32
  }
  func.func @transform_6(%arg0: i32) -> (i32, i32) {
    %c0_i32 = arith.constant 0 : i32
    %c0_i32_0 = arith.constant 0 : i32
    %c0_i32_1 = arith.constant 0 : i32
    return %c0_i32, %c0_i32_0 : i32, i32
  }
  func.func @transform_7(%arg0: i32) -> (i32, i32, i32) {
    %c0_i32 = arith.constant 0 : i32
    %c0_i32_0 = arith.constant 0 : i32
    %c0_i32_1 = arith.constant 0 : i32
    return %arg0, %c0_i32, %c0_i32_0 : i32, i32, i32
  }
}

</mosaic_0001>

<llo_original>
// kernel: sknet_forward_val_clf.1
$region0: #{sknet_forward_val_clf.1}
  #allocation0 [shape = 'u32[]', space=smem, size = 0x4, offset = 0x4, fixed_abs, tag = 'smem constant byte address 0x4 - core index']
  #allocation1 [shape = 'u32[144,128]{1,0:T(1,128)}', space=vmem, size = 0x12000, scoped, tag = 'internal scratch']
  #allocation2 [shape = 'f32[18,18,128]{2,1,0:T(8,128)}', space=vmem, size = 0x36000, scoped, tag = 'scratch operand']
  %s0 = inlined_call_operand.vmem [shape: f32[2,18,18,128], index: 0, kind: input, shape index: {}]
  %s1 = inlined_call_operand.vmem [shape: bf16[9,128,128], index: 1, kind: input, shape index: {}]
  %s2 = inlined_call_operand.vmem [shape: f32[1,128], index: 2, kind: input, shape index: {}]
  %s3 = inlined_call_operand.vmem [shape: bf16[9,128,128], index: 3, kind: input, shape index: {}]
  %s4 = inlined_call_operand.vmem [shape: f32[1,128], index: 4, kind: input, shape index: {}]
  %s5 = inlined_call_operand.vmem [shape: bf16[128,128], index: 5, kind: input, shape index: {}]
  %s6 = inlined_call_operand.vmem [shape: f32[1,128], index: 6, kind: input, shape index: {}]
  %s7 = inlined_call_operand.hbm [shape: f32[2,1,128], index: 7, kind: output, shape index: {}]
  %s8 = sld [smem:[#allocation0]]
  $region61: #{sknet_forward_val_clf.1} parent=0
    _
  %s10 = ssub.s32 1, %s8
  %s11 = scalar_select 0, %s10, %s8
  $region1: #{sknet_forward_val_clf.1} parent=0
    #allocation3 [shape = 'u8[1024]{0}', space=vmem, size = 0x400, scoped, tag = 'output window, operand 0']
    #allocation4 [shape = 's32[2]{0}', space=sflag, size = 0x8, scoped, tag = 'scoped memory for sknet_forward_val_clf.1']
    %12 = vsyncpa [#allocation4], 0
    %s13 = scalar_lea.sflag [#allocation4], 1
    %14 = vsyncpa %s13, 0
    loop: start=0, step=1, limit=4
    $region2: #{sknet_forward_val_clf.1} parent=1 // loop_pre_header
      _
    $region3: #{sknet_forward_val_clf.1} parent=1 // loop_header
      %s16 = sphi 0, %s20
      %p17 = scmp.ge.s32.totalorder %s16, 4
      %s26 = sphi 0, %s28
      %s29 = sphi 0, %s26
      %s30 = sphi 0, %s29
      %s46 = sphi 0, %s30
      %s50 = sphi 0, %s50
      %s52 = sphi 0, %s50
      %s53 = sphi 0, %s52
      %s67 = sphi 0, %s53
      %s71 = sphi 0, %s71
      %s73 = sphi 0, %s71
      %s74 = sphi 0, %s73
      %s88 = sphi 0, %s74
      %s92 = sphi 0, %s92
      %s94 = sphi 0, %s92
      %s95 = sphi 0, %s94
      %s109 = sphi 0, %s95
      %s113 = sphi 0, %s113
      %s115 = sphi 0, %s113
      %s116 = sphi 0, %s115
      %s130 = sphi 0, %s116
      %s134 = sphi 0, %s134
      %s136 = sphi 0, %s134
      %s137 = sphi 0, %s136
      %s151 = sphi 0, %s137
      %s155 = sphi 0, %s155
      %s157 = sphi 0, %s155
      %s158 = sphi 0, %s157
      %s172 = sphi 0, %s158
      %s178 = sphi 0, %s180
      %s181 = sphi 0, %s178
      %s182 = sphi 0, %s181
      %s198 = sphi 0, %s182
    $region4: #{sknet_forward_val_clf.1} parent=1 // loop_header_branch
      %19 = sbr.rel (%p17) target = $region8
    $region5: #{sknet_forward_val_clf.1} parent=1 // loop_body
      %s21 = ssub.s32 %s16, 1
      %s22 = ssub.s32 %s16, 2
      %s23 = sadd.s32 %s16, 1
      %s24 = ssub.s32 %s16, %s23
      %p25 = scmp.eq.s32.totalorder %s24, 0
      %s27 = sadd.s32 %s26, 1
      %s28 = scalar_select %p25, %s26, %s27
      %p31 = pneg %p25
      %p32 = scmp.eq.s32.totalorder %s16, 1
      %p33 = por %p31, %p32
      %p34 = scmp.ne.s32.totalorder %s26, %s29
      %p35 = scmp.eq.s32.totalorder %s16, 0
      %p36 = por %p34, %p35
      %p37 = scmp.ne.s32.totalorder %s26, %s29
      %p38 = scmp.eq.s32.totalorder %s21, 1
      %p39 = por %p37, %p38
      %p40 = scmp.ne.s32.totalorder %s29, %s30
      %p41 = scmp.eq.s32.totalorder %s21, 0
      %p42 = por %p40, %p41
      %p43 = scmp.ne.s32.totalorder %s29, %s30
      %p44 = scmp.eq.s32.totalorder %s22, 1
      %p45 = por %p43, %p44
      %p47 = scmp.ne.s32.totalorder %s30, %s46
      %p48 = scmp.eq.s32.totalorder %s22, 0
      %p49 = por %p47, %p48
      %s51 = sadd.s32 %s50, 1
      %p54 = scmp.eq.s32.totalorder %s16, 1
      %p55 = scmp.ne.s32.totalorder %s50, %s52
      %p56 = scmp.eq.s32.totalorder %s16, 0
      %p57 = por %p55, %p56
      %p58 = scmp.ne.s32.totalorder %s50, %s52
      %p59 = scmp.eq.s32.totalorder %s21, 1
      %p60 = por %p58, %p59
      %p61 = scmp.ne.s32.totalorder %s52, %s53
      %p62 = scmp.eq.s32.totalorder %s21, 0
      %p63 = por %p61, %p62
      %p64 = scmp.ne.s32.totalorder %s52, %s53
      %p65 = scmp.eq.s32.totalorder %s22, 1
      %p66 = por %p64, %p65
      %p68 = scmp.ne.s32.totalorder %s53, %s67
      %p69 = scmp.eq.s32.totalorder %s22, 0
      %p70 = por %p68, %p69
      %s72 = sadd.s32 %s71, 1
      %p75 = scmp.eq.s32.totalorder %s16, 1
      %p76 = scmp.ne.s32.totalorder %s71, %s73
      %p77 = scmp.eq.s32.totalorder %s16, 0
      %p78 = por %p76, %p77
      %p79 = scmp.ne.s32.totalorder %s71, %s73
      %p80 = scmp.eq.s32.totalorder %s21, 1
      %p81 = por %p79, %p80
      %p82 = scmp.ne.s32.totalorder %s73, %s74
      %p83 = scmp.eq.s32.totalorder %s21, 0
      %p84 = por %p82, %p83
      %p85 = scmp.ne.s32.totalorder %s73, %s74
      %p86 = scmp.eq.s32.totalorder %s22, 1
      %p87 = por %p85, %p86
      %p89 = scmp.ne.s32.totalorder %s74, %s88
      %p90 = scmp.eq.s32.totalorder %s22, 0
      %p91 = por %p89, %p90
      %s93 = sadd.s32 %s92, 1
      %p96 = scmp.eq.s32.totalorder %s16, 1
      %p97 = scmp.ne.s32.totalorder %s92, %s94
      %p98 = scmp.eq.s32.totalorder %s16, 0
      %p99 = por %p97, %p98
      %p100 = scmp.ne.s32.totalorder %s92, %s94
      %p101 = scmp.eq.s32.totalorder %s21, 1
      %p102 = por %p100, %p101
      %p103 = scmp.ne.s32.totalorder %s94, %s95
      %p104 = scmp.eq.s32.totalorder %s21, 0
      %p105 = por %p103, %p104
      %p106 = scmp.ne.s32.totalorder %s94, %s95
      %p107 = scmp.eq.s32.totalorder %s22, 1
      %p108 = por %p106, %p107
      %p110 = scmp.ne.s32.totalorder %s95, %s109
      %p111 = scmp.eq.s32.totalorder %s22, 0
      %p112 = por %p110, %p111
      %s114 = sadd.s32 %s113, 1
      %p117 = scmp.eq.s32.totalorder %s16, 1
      %p118 = scmp.ne.s32.totalorder %s113, %s115
      %p119 = scmp.eq.s32.totalorder %s16, 0
      %p120 = por %p118, %p119
      %p121 = scmp.ne.s32.totalorder %s113, %s115
      %p122 = scmp.eq.s32.totalorder %s21, 1
      %p123 = por %p121, %p122
      %p124 = scmp.ne.s32.totalorder %s115, %s116
      %p125 = scmp.eq.s32.totalorder %s21, 0
      %p126 = por %p124, %p125
      %p127 = scmp.ne.s32.totalorder %s115, %s116
      %p128 = scmp.eq.s32.totalorder %s22, 1
      %p129 = por %p127, %p128
      %p131 = scmp.ne.s32.totalorder %s116, %s130
      %p132 = scmp.eq.s32.totalorder %s22, 0
      %p133 = por %p131, %p132
      %s135 = sadd.s32 %s134, 1
      %p138 = scmp.eq.s32.totalorder %s16, 1
      %p139 = scmp.ne.s32.totalorder %s134, %s136
      %p140 = scmp.eq.s32.totalorder %s16, 0
      %p141 = por %p139, %p140
      %p142 = scmp.ne.s32.totalorder %s134, %s136
      %p143 = scmp.eq.s32.totalorder %s21, 1
      %p144 = por %p142, %p143
      %p145 = scmp.ne.s32.totalorder %s136, %s137
      %p146 = scmp.eq.s32.totalorder %s21, 0
      %p147 = por %p145, %p146
      %p148 = scmp.ne.s32.totalorder %s136, %s137
      %p149 = scmp.eq.s32.totalorder %s22, 1
      %p150 = por %p148, %p149
      %p152 = scmp.ne.s32.totalorder %s137, %s151
      %p153 = scmp.eq.s32.totalorder %s22, 0
      %p154 = por %p152, %p153
      %s156 = sadd.s32 %s155, 1
      %p159 = scmp.eq.s32.totalorder %s16, 1
      %p160 = scmp.ne.s32.totalorder %s155, %s157
      %p161 = scmp.eq.s32.totalorder %s16, 0
      %p162 = por %p160, %p161
      %p163 = scmp.ne.s32.totalorder %s155, %s157
      %p164 = scmp.eq.s32.totalorder %s21, 1
      %p165 = por %p163, %p164
      %p166 = scmp.ne.s32.totalorder %s157, %s158
      %p167 = scmp.eq.s32.totalorder %s21, 0
      %p168 = por %p166, %p167
      %p169 = scmp.ne.s32.totalorder %s157, %s158
      %p170 = scmp.eq.s32.totalorder %s22, 1
      %p171 = por %p169, %p170
      %p173 = scmp.ne.s32.totalorder %s158, %s172
      %p174 = scmp.eq.s32.totalorder %s22, 0
      %p175 = por %p173, %p174
      %s176 = ssub.s32 %s16, %s23
      %p177 = scmp.eq.s32.totalorder %s176, 0
      %s179 = sadd.s32 %s178, 1
      %s180 = scalar_select %p177, %s178, %s179
      %p183 = pneg %p177
      %p184 = scmp.eq.s32.totalorder %s16, 1
      %p185 = por %p183, %p184
      %p186 = scmp.ne.s32.totalorder %s178, %s181
      %p187 = scmp.eq.s32.totalorder %s16, 0
      %p188 = por %p186, %p187
      %p189 = scmp.ne.s32.totalorder %s178, %s181
      %p190 = scmp.eq.s32.totalorder %s21, 1
      %p191 = por %p189, %p190
      %p192 = scmp.ne.s32.totalorder %s181, %s182
      %p193 = scmp.eq.s32.totalorder %s21, 0
      %p194 = por %p192, %p193
      %p195 = scmp.ne.s32.totalorder %s181, %s182
      %p196 = scmp.eq.s32.totalorder %s22, 1
      %p197 = por %p195, %p196
      %p199 = scmp.ne.s32.totalorder %s182, %s198
      %p200 = scmp.eq.s32.totalorder %s22, 0
      %p201 = por %p199, %p200
      %p202 = scmp.le.s32.totalorder 1, %s16
      %p203 = scmp.lt.s32.totalorder %s16, 3
      %p204 = pnand %p202, %p203
      %p205 = pneg %p204
      // Predicated region
      $region9: #{sknet_forward_val_clf.1} parent=5 // pred_check
        _
      $region10: #{sknet_forward_val_clf.1} parent=5 // pred_check_branch
        %207 = sbr.rel (%p204) target = $region12
      $region11: #{sknet_forward_val_clf.1} parent=5 // pred_region
        %s208 = ssub.s32 %s16, 1
        // Predicated region
        $region13: #{sknet_forward_val_clf.1} parent=11 // pred_check
          %p209 = pneg %p63
        $region14: #{sknet_forward_val_clf.1} parent=11 // pred_check_branch
          %211 = sbr.rel (%p209) target = $region16
        $region15: #{sknet_forward_val_clf.1} parent=11 // pred_region
          _
        $region16: #{sknet_forward_val_clf.1} parent=11 // pred_fallthru
          _
        // Predicated region
        $region17: #{sknet_forward_val_clf.1} parent=11 // pred_check
          %p212 = pneg %p84
        $region18: #{sknet_forward_val_clf.1} parent=11 // pred_check_branch
          %214 = sbr.rel (%p212) target = $region20
        $region19: #{sknet_forward_val_clf.1} parent=11 // pred_region
          _
        $region20: #{sknet_forward_val_clf.1} parent=11 // pred_fallthru
          _
        // Predicated region
        $region21: #{sknet_forward_val_clf.1} parent=11 // pred_check
          %p215 = pneg %p105
        $region22: #{sknet_forward_val_clf.1} parent=11 // pred_check_branch
          %217 = sbr.rel (%p215) target = $region24
        $region23: #{sknet_forward_val_clf.1} parent=11 // pred_region
          _
        $region24: #{sknet_forward_val_clf.1} parent=11 // pred_fallthru
          _
        // Predicated region
        $region25: #{sknet_forward_val_clf.1} parent=11 // pred_check
          %p218 = pneg %p126
        $region26: #{sknet_forward_val_clf.1} parent=11 // pred_check_branch
          %220 = sbr.rel (%p218) target = $region28
        $region27: #{sknet_forward_val_clf.1} parent=11 // pred_region
          _
        $region28: #{sknet_forward_val_clf.1} parent=11 // pred_fallthru
          _
        // Predicated region
        $region29: #{sknet_forward_val_clf.1} parent=11 // pred_check
          %p221 = pneg %p147
        $region30: #{sknet_forward_val_clf.1} parent=11 // pred_check_branch
          %223 = sbr.rel (%p221) target = $region32
        $region31: #{sknet_forward_val_clf.1} parent=11 // pred_region
          _
        $region32: #{sknet_forward_val_clf.1} parent=11 // pred_fallthru
          _
        // Predicated region
        $region33: #{sknet_forward_val_clf.1} parent=11 // pred_check
          %p224 = pneg %p168
        $region34: #{sknet_forward_val_clf.1} parent=11 // pred_check_branch
          %226 = sbr.rel (%p224) target = $region36
        $region35: #{sknet_forward_val_clf.1} parent=11 // pred_region
          _
        $region36: #{sknet_forward_val_clf.1} parent=11 // pred_fallthru
          _
      $region12: #{sknet_forward_val_clf.1} parent=5 // pred_fallthru
        _
      %p227 = scmp.lt.s32.totalorder %s16, 2
      // Predicated region
      $region37: #{sknet_forward_val_clf.1} parent=5 // pred_check
        %p228 = pneg %p227
      $region38: #{sknet_forward_val_clf.1} parent=5 // pred_check_branch
        %230 = sbr.rel (%p228) target = $region40
      $region39: #{sknet_forward_val_clf.1} parent=5 // pred_region
        // Predicated region
        $region41: #{sknet_forward_val_clf.1} parent=39 // pred_check
          %p231 = pneg %p36
        $region42: #{sknet_forward_val_clf.1} parent=39 // pred_check_branch
          %233 = sbr.rel (%p231) target = $region44
        $region43: #{sknet_forward_val_clf.1} parent=39 // pred_region
          %p234 = scmp.lt.s32.totalorder %s16, 1
          %s235 = scalar_select %p234, %s16, 1
          %s236 = smul.addr %s235, 54
          %s237 = smul.addr %s236, 8
          %s238 = scalar_lea.vmem %s0, %s237
        $region44: #{sknet_forward_val_clf.1} parent=39 // pred_fallthru
          _
      $region40: #{sknet_forward_val_clf.1} parent=5 // pred_fallthru
        _
      %p239 = scmp.le.s32.totalorder 1, %s16
      %p240 = scmp.lt.s32.totalorder %s16, 3
      %p241 = pnand %p239, %p240
      %p242 = pneg %p241
      // Predicated region
      $region45: #{sknet_forward_val_clf.1} parent=5 // pred_check
        _
      $region46: #{sknet_forward_val_clf.1} parent=5 // pred_check_branch
        %244 = sbr.rel (%p241) target = $region48
      $region47: #{sknet_forward_val_clf.1} parent=5 // pred_region
        %s245 = ssub.s32 %s16, 1
        %p246 = scmp.lt.s32.totalorder %s21, 1
        %s247 = scalar_select %p246, %s21, 1
        %s248 = smul.addr %s247, 54
        %s249 = smul.addr %s248, 8
        %s250 = scalar_lea.vmem %s0, %s249
        %p251 = pneg %p42
        %p252 = pneg %p39
        %p253 = pneg %p63
        %p254 = pneg %p60
        %p255 = pneg %p84
        %p256 = pneg %p81
        %p257 = pneg %p105
        %p258 = pneg %p102
        %p259 = pneg %p126
        %p260 = pneg %p123
        %p261 = pneg %p147
        %p262 = pneg %p144
        %p263 = pneg %p168
        %p264 = pneg %p165
        %p265 = pneg %p194
        %p266 = pneg %p191
        %s267 = sand.u32 %s181, 1
        %s268 = scalar_lea.sflag [#allocation4], %s267
        %s269 = sand.u32 %s181, 1
        %s270 = scalar_lea.vmem [#allocation3], %s269
        %p271 = scmp.lt.s32.totalorder %s21, 1
        %s272 = scalar_select %p271, %s21, 1
        %s273 = smul.addr %s272, 54
        %s274 = smul.addr %s273, 8
        %s275 = scalar_lea.vmem %s0, %s274
        %v278 = vld [vmem:[%s275] sm:$0xff]
        %v279 = vld [vmem:[%s275 + $0x8] sm:$0xff]
        %v280 = vld [vmem:[%s275 + $0x18] sm:$0xff]
        %v281 = vld [vmem:[%s275 + $0x20] sm:$0xff]
        %v282 = vld [vmem:[%s275 + $0x30] sm:$0xff]
        %v283 = vld [vmem:[%s275 + $0x38] sm:$0xff]
        %v284 = vld [vmem:[%s275 + $0x48] sm:$0xff]
        %v285 = vld [vmem:[%s275 + $0x50] sm:$0xff]
        %v286 = vld [vmem:[%s275 + $0x60] sm:$0xff]
        %v287 = vld [vmem:[%s275 + $0x68] sm:$0xff]
        %v288 = vld [vmem:[%s275 + $0x78] sm:$0xff]
        %v289 = vld [vmem:[%s275 + $0x80] sm:$0xff]
        %v290 = vld [vmem:[%s275 + $0x90] sm:$0xff]
        %v291 = vld [vmem:[%s275 + $0x98] sm:$0xff]
        %v292 = vld [vmem:[%s275 + $0xa8] sm:$0xff]
        %v293 = vld [vmem:[%s275 + $0xb0] sm:$0xff]
        %v294 = vld [vmem:[%s275 + $0xc0] sm:$0xff]
        %v295 = vld [vmem:[%s275 + $0xc8] sm:$0xff]
        %v296 = vld [vmem:[%s275 + $0xd8] sm:$0xff]
        %v297 = vld [vmem:[%s275 + $0xe0] sm:$0xff]
        %v298 = vld [vmem:[%s275 + $0xf0] sm:$0xff]
        %v299 = vld [vmem:[%s275 + $0xf8] sm:$0xff]
        %v300 = vld [vmem:[%s275 + $0x108] sm:$0xff]
        %v301 = vld [vmem:[%s275 + $0x110] sm:$0xff]
        %v302 = vld [vmem:[%s275 + $0x120] sm:$0xff]
        %v303 = vld [vmem:[%s275 + $0x128] sm:$0xff]
        %v304 = vld [vmem:[%s275 + $0x138] sm:$0xff]
        %v305 = vld [vmem:[%s275 + $0x140] sm:$0xff]
        %v306 = vld [vmem:[%s275 + $0x150] sm:$0xff]
        %v307 = vld [vmem:[%s275 + $0x158] sm:$0xff]
        %v308 = vld [vmem:[%s275 + $0x168] sm:$0xff]
        %v309 = vld [vmem:[%s275 + $0x170] sm:$0xff]
        %v310 = vpack.c.bf16 %v279, %v278
        %v311 = vpack.c.bf16 %v281, %v280
        %v312 = vpack.c.bf16 %v283, %v282
        %v313 = vpack.c.bf16 %v285, %v284
        %v314 = vpack.c.bf16 %v287, %v286
        %v315 = vpack.c.bf16 %v289, %v288
        %v316 = vpack.c.bf16 %v291, %v290
        %v317 = vpack.c.bf16 %v293, %v292
        %v318 = vpack.c.bf16 %v295, %v294
        %v319 = vpack.c.bf16 %v297, %v296
        %v320 = vpack.c.bf16 %v299, %v298
        %v321 = vpack.c.bf16 %v301, %v300
        %v322 = vpack.c.bf16 %v303, %v302
        %v323 = vpack.c.bf16 %v305, %v304
        %v324 = vpack.c.bf16 %v307, %v306
        %v325 = vpack.c.bf16 %v309, %v308
        %v326 = vld [vmem:[%s1] sm:$0xf]
        %v327 = vld [vmem:[%s1 + $0x4] sm:$0xf]
        %v328 = vld [vmem:[%s1 + $0x8] sm:$0xf]
        %v329 = vld [vmem:[%s1 + $0xc] sm:$0xf]
        %v330 = vld [vmem:[%s1 + $0x10] sm:$0xf]
        %v331 = vld [vmem:[%s1 + $0x14] sm:$0xf]
        %v332 = vld [vmem:[%s1 + $0x18] sm:$0xf]
        %v333 = vld [vmem:[%s1 + $0x1c] sm:$0xf]
        %v334 = vld [vmem:[%s1 + $0x20] sm:$0xf]
        %v335 = vld [vmem:[%s1 + $0x24] sm:$0xf]
        %v336 = vld [vmem:[%s1 + $0x28] sm:$0xf]
        %v337 = vld [vmem:[%s1 + $0x2c] sm:$0xf]
        %v338 = vld [vmem:[%s1 + $0x30] sm:$0xf]
        %v339 = vld [vmem:[%s1 + $0x34] sm:$0xf]
        %v340 = vld [vmem:[%s1 + $0x38] sm:$0xf]
        %v341 = vld [vmem:[%s1 + $0x3c] sm:$0xf]
        %v342 = vld [vmem:[%s275 + $0x1] sm:$0xff]
        %v343 = vld [vmem:[%s275 + $0x9] sm:$0xff]
        %v344 = vld [vmem:[%s275 + $0x19] sm:$0xff]
        %v345 = vld [vmem:[%s275 + $0x21] sm:$0xff]
        %v346 = vld [vmem:[%s275 + $0x31] sm:$0xff]
        %v347 = vld [vmem:[%s275 + $0x39] sm:$0xff]
        %v348 = vld [vmem:[%s275 + $0x49] sm:$0xff]
        %v349 = vld [vmem:[%s275 + $0x51] sm:$0xff]
        %v350 = vld [vmem:[%s275 + $0x61] sm:$0xff]
        %v351 = vld [vmem:[%s275 + $0x69] sm:$0xff]
        %v352 = vld [vmem:[%s275 + $0x79] sm:$0xff]
        %v353 = vld [vmem:[%s275 + $0x81] sm:$0xff]
        %v354 = vld [vmem:[%s275 + $0x91] sm:$0xff]
        %v355 = vld [vmem:[%s275 + $0x99] sm:$0xff]
        %v356 = vld [vmem:[%s275 + $0xa9] sm:$0xff]
        %v357 = vld [vmem:[%s275 + $0xb1] sm:$0xff]
        %v358 = vld [vmem:[%s275 + $0xc1] sm:$0xff]
        %v359 = vld [vmem:[%s275 + $0xc9] sm:$0xff]
        %v360 = vld [vmem:[%s275 + $0xd9] sm:$0xff]
        %v361 = vld [vmem:[%s275 + $0xe1] sm:$0xff]
        %v362 = vld [vmem:[%s275 + $0xf1] sm:$0xff]
        %v363 = vld [vmem:[%s275 + $0xf9] sm:$0xff]
        %v364 = vld [vmem:[%s275 + $0x109] sm:$0xff]
        %v365 = vld [vmem:[%s275 + $0x111] sm:$0xff]
        %v366 = vld [vmem:[%s275 + $0x121] sm:$0xff]
        %v367 = vld [vmem:[%s275 + $0x129] sm:$0xff]
        %v368 = vld [vmem:[%s275 + $0x139] sm:$0xff]
        %v369 = vld [vmem:[%s275 + $0x141] sm:$0xff]
        %v370 = vld [vmem:[%s275 + $0x151] sm:$0xff]
        %v371 = vld [vmem:[%s275 + $0x159] sm:$0xff]
        %v372 = vld [vmem:[%s275 + $0x169] sm:$0xff]
        %v373 = vld [vmem:[%s275 + $0x171] sm:$0xff]
        %v374 = vpack.c.bf16 %v343, %v342
        %v375 = vpack.c.bf16 %v345, %v344
        %v376 = vpack.c.bf16 %v347, %v346
        %v377 = vpack.c.bf16 %v349, %v348
        %v378 = vpack.c.bf16 %v351, %v350
        %v379 = vpack.c.bf16 %v353, %v352
        %v380 = vpack.c.bf16 %v355, %v354
        %v381 = vpack.c.bf16 %v357, %v356
        %v382 = vpack.c.bf16 %v359, %v358
        %v383 = vpack.c.bf16 %v361, %v360
        %v384 = vpack.c.bf16 %v363, %v362
        %v385 = vpack.c.bf16 %v365, %v364
        %v386 = vpack.c.bf16 %v367, %v366
        %v387 = vpack.c.bf16 %v369, %v368
        %v388 = vpack.c.bf16 %v371, %v370
        %v389 = vpack.c.bf16 %v373, %v372
        %s390 = scalar_lea.vmem %s1, 64
        %v391 = vld [vmem:[%s390] sm:$0xf]
        %v392 = vld [vmem:[%s390 + $0x4] sm:$0xf]
        %v393 = vld [vmem:[%s390 + $0x8] sm:$0xf]
        %v394 = vld [vmem:[%s390 + $0xc] sm:$0xf]
        %v395 = vld [vmem:[%s390 + $0x10] sm:$0xf]
        %v396 = vld [vmem:[%s390 + $0x14] sm:$0xf]
        %v397 = vld [vmem:[%s390 + $0x18] sm:$0xf]
        %v398 = vld [vmem:[%s390 + $0x1c] sm:$0xf]
        %v399 = vld [vmem:[%s390 + $0x20] sm:$0xf]
        %v400 = vld [vmem:[%s390 + $0x24] sm:$0xf]
        %v401 = vld [vmem:[%s390 + $0x28] sm:$0xf]
        %v402 = vld [vmem:[%s390 + $0x2c] sm:$0xf]
        %v403 = vld [vmem:[%s390 + $0x30] sm:$0xf]
        %v404 = vld [vmem:[%s390 + $0x34] sm:$0xf]
        %v405 = vld [vmem:[%s390 + $0x38] sm:$0xf]
        %v406 = vld [vmem:[%s390 + $0x3c] sm:$0xf]
        %v423 = vunpack.c.l.b16 %v391
        %v424 = vunpack.c.l.b16 %v392
        %v425 = vunpack.c.l.b16 %v393
        %v426 = vunpack.c.l.b16 %v394
        %v427 = vunpack.c.l.b16 %v395
        %v428 = vunpack.c.l.b16 %v396
        %v429 = vunpack.c.l.b16 %v397
        %v430 = vunpack.c.l.b16 %v398
        %v431 = vunpack.c.l.b16 %v399
        %v432 = vunpack.c.l.b16 %v400
        %v433 = vunpack.c.l.b16 %v401
        %v434 = vunpack.c.l.b16 %v402
        %v435 = vunpack.c.l.b16 %v403
        %v436 = vunpack.c.l.b16 %v404
        %v437 = vunpack.c.l.b16 %v405
        %v438 = vunpack.c.l.b16 %v406
        %v439 = vpack.c.b16 %v424, %v423
        %v440 = vpack.c.b16 %v426, %v425
        %v441 = vpack.c.b16 %v428, %v427
        %v442 = vpack.c.b16 %v430, %v429
        %v443 = vpack.c.b16 %v432, %v431
        %v444 = vpack.c.b16 %v434, %v433
        %v445 = vpack.c.b16 %v436, %v435
        %v446 = vpack.c.b16 %v438, %v437
        %455 = vmatprep.subr.bf16.mxu0 0
        %456 = vmatpush1.bf16.msra.mxu0 %v446
        %457 = vmatprep.subr.bf16.mxu0 0
        %458 = vmatpush1.bf16.msra.mxu0 %v445
        %459 = vmatprep.subr.bf16.mxu0 0
        %460 = vmatpush1.bf16.msra.mxu0 %v444
        %461 = vmatprep.subr.bf16.mxu0 0
        %462 = vmatpush1.bf16.msra.mxu0 %v443
        %463 = vmatprep.subr.bf16.mxu0 0
        %464 = vmatpush1.bf16.msra.mxu0 %v442
        %465 = vmatprep.subr.bf16.mxu0 0
        %466 = vmatpush1.bf16.msra.mxu0 %v441
        %467 = vmatprep.subr.bf16.mxu0 0
        %468 = vmatpush1.bf16.msra.mxu0 %v440
        %469 = vmatprep.subr.bf16.mxu0 0
        %470 = vmatpush1.bf16.msra.mxu0 %v439
        %471 = vmatprep.subr.bf16.mxu0 0
        %472 = vmatpush2.bf16.msra.mxu0 0
        %473 = vmatprep.subr.bf16.mxu0 0
        %474 = vmatpush2.bf16.msra.mxu0 0
        %475 = vmatprep.subr.bf16.mxu0 0
        %476 = vmatpush2.bf16.msra.mxu0 0
        %477 = vmatprep.subr.bf16.mxu0 0
        %478 = vmatpush2.bf16.msra.mxu0 0
        %479 = vmatprep.subr.bf16.mxu0 0
        %480 = vmatpush2.bf16.msra.mxu0 0
        %481 = vmatprep.subr.bf16.mxu0 0
        %482 = vmatpush2.bf16.msra.mxu0 0
        %483 = vmatprep.subr.bf16.mxu0 0
        %484 = vmatpush2.bf16.msra.mxu0 0
        %485 = vmatprep.subr.bf16.mxu0 0
        %486 = vmatpush2.bf16.msra.mxu0 0
        %487 = vmatprep.mubr.bf16.mxu0 0
        %488 = vmatmul.mubr.bf16.gmra.mxu0 %v374
        %v489 = vpop.f32.mrf.mxu0
        %v490 = vadd.f32 0.0, %v489
        %v491 = vpop.f32.mrf.mxu0
        %v492 = vpop.f32.mrf.mxu0
        %v493 = vadd.f32 0.0, %v492
        %v494 = vpop.f32.mrf.mxu0
        %495 = vmatprep.mubr.bf16.mxu0 0
        %496 = vmatmul.mubr.bf16.gmra.mxu0 %v375
        %v497 = vpop.f32.mrf.mxu0
        %v498 = vadd.f32 0.0, %v497
        %v499 = vpop.f32.mrf.mxu0
        %v500 = vpop.f32.mrf.mxu0
        %v501 = vadd.f32 0.0, %v500
        %v502 = vpop.f32.mrf.mxu0
        %503 = vmatprep.mubr.bf16.mxu0 0
        %504 = vmatmul.mubr.bf16.gmra.mxu0 %v376
        %v505 = vpop.f32.mrf.mxu0
        %v506 = vadd.f32 0.0, %v505
        %v507 = vpop.f32.mrf.mxu0
        %v508 = vpop.f32.mrf.mxu0
        %v509 = vadd.f32 0.0, %v508
        %v510 = vpop.f32.mrf.mxu0
        %511 = vmatprep.mubr.bf16.mxu0 0
        %512 = vmatmul.mubr.bf16.gmra.mxu0 %v377
        %v513 = vpop.f32.mrf.mxu0
        %v514 = vadd.f32 0.0, %v513
        %v515 = vpop.f32.mrf.mxu0
        %v516 = vpop.f32.mrf.mxu0
        %v517 = vadd.f32 0.0, %v516
        %v518 = vpop.f32.mrf.mxu0
        %519 = vmatprep.mubr.bf16.mxu0 0
        %520 = vmatmul.mubr.bf16.gmra.mxu0 %v378
        %v521 = vpop.f32.mrf.mxu0
        %v522 = vadd.f32 0.0, %v521
        %v523 = vpop.f32.mrf.mxu0
        %v524 = vpop.f32.mrf.mxu0
        %v525 = vadd.f32 0.0, %v524
        %v526 = vpop.f32.mrf.mxu0
        %527 = vmatprep.mubr.bf16.mxu0 0
        %528 = vmatmul.mubr.bf16.gmra.mxu0 %v379
        %v529 = vpop.f32.mrf.mxu0
        %v530 = vadd.f32 0.0, %v529
        %v531 = vpop.f32.mrf.mxu0
        %v532 = vpop.f32.mrf.mxu0
        %v533 = vadd.f32 0.0, %v532
        %v534 = vpop.f32.mrf.mxu0
        %535 = vmatprep.mubr.bf16.mxu0 0
        %536 = vmatmul.mubr.bf16.gmra.mxu0 %v380
        %v537 = vpop.f32.mrf.mxu0
        %v538 = vadd.f32 0.0, %v537
        %v539 = vpop.f32.mrf.mxu0
        %v540 = vpop.f32.mrf.mxu0
        %v541 = vadd.f32 0.0, %v540
        %v542 = vpop.f32.mrf.mxu0
        %543 = vmatprep.mubr.bf16.mxu0 0
        %544 = vmatmul.mubr.bf16.gmra.mxu0 %v381
        %v545 = vpop.f32.mrf.mxu0
        %v546 = vadd.f32 0.0, %v545
        %v547 = vpop.f32.mrf.mxu0
        %v548 = vpop.f32.mrf.mxu0
        %v549 = vadd.f32 0.0, %v548
        %v550 = vpop.f32.mrf.mxu0
        %551 = vmatprep.mubr.bf16.mxu0 0
        %552 = vmatmul.mubr.bf16.gmra.mxu0 %v382
        %v553 = vpop.f32.mrf.mxu0
        %v554 = vadd.f32 0.0, %v553
        %v555 = vpop.f32.mrf.mxu0
        %v556 = vpop.f32.mrf.mxu0
        %v557 = vadd.f32 0.0, %v556
        %v558 = vpop.f32.mrf.mxu0
        %559 = vmatprep.mubr.bf16.mxu0 0
        %560 = vmatmul.mubr.bf16.gmra.mxu0 %v383
        %v561 = vpop.f32.mrf.mxu0
        %v562 = vadd.f32 0.0, %v561
        %v563 = vpop.f32.mrf.mxu0
        %v564 = vpop.f32.mrf.mxu0
        %v565 = vadd.f32 0.0, %v564
        %v566 = vpop.f32.mrf.mxu0
        %567 = vmatprep.mubr.bf16.mxu0 0
        %568 = vmatmul.mubr.bf16.gmra.mxu0 %v384
        %v569 = vpop.f32.mrf.mxu0
        %v570 = vadd.f32 0.0, %v569
        %v571 = vpop.f32.mrf.mxu0
        %v572 = vpop.f32.mrf.mxu0
        %v573 = vadd.f32 0.0, %v572
        %v574 = vpop.f32.mrf.mxu0
        %575 = vmatprep.mubr.bf16.mxu0 0
        %576 = vmatmul.mubr.bf16.gmra.mxu0 %v385
        %v577 = vpop.f32.mrf.mxu0
        %v578 = vadd.f32 0.0, %v577
        %v579 = vpop.f32.mrf.mxu0
        %v580 = vpop.f32.mrf.mxu0
        %v581 = vadd.f32 0.0, %v580
        %v582 = vpop.f32.mrf.mxu0
        %583 = vmatprep.mubr.bf16.mxu0 0
        %584 = vmatmul.mubr.bf16.gmra.mxu0 %v386
        %v585 = vpop.f32.mrf.mxu0
        %v586 = vadd.f32 0.0, %v585
        %v587 = vpop.f32.mrf.mxu0
        %v588 = vpop.f32.mrf.mxu0
        %v589 = vadd.f32 0.0, %v588
        %v590 = vpop.f32.mrf.mxu0
        %591 = vmatprep.mubr.bf16.mxu0 0
        %592 = vmatmul.mubr.bf16.gmra.mxu0 %v387
        %v593 = vpop.f32.mrf.mxu0
        %v594 = vadd.f32 0.0, %v593
        %v595 = vpop.f32.mrf.mxu0
        %v596 = vpop.f32.mrf.mxu0
        %v597 = vadd.f32 0.0, %v596
        %v598 = vpop.f32.mrf.mxu0
        %599 = vmatprep.mubr.bf16.mxu0 0
        %600 = vmatmul.mubr.bf16.gmra.mxu0 %v388
        %v601 = vpop.f32.mrf.mxu0
        %v602 = vadd.f32 0.0, %v601
        %v603 = vpop.f32.mrf.mxu0
        %v604 = vpop.f32.mrf.mxu0
        %v605 = vadd.f32 0.0, %v604
        %v606 = vpop.f32.mrf.mxu0
        %607 = vmatprep.mubr.bf16.mxu0 0
        %608 = vmatmul.mubr.bf16.gmra.mxu0 %v389
        %v609 = vpop.f32.mrf.mxu0
        %v610 = vadd.f32 0.0, %v609
        %v611 = vpop.f32.mrf.mxu0
        %v612 = vpop.f32.mrf.mxu0
        %v613 = vadd.f32 0.0, %v612
        %v614 = vpop.f32.mrf.mxu0
        %615 = vdwg.mxu0
        %v632 = vunpack.c.l.b16 %v326
        %v633 = vunpack.c.l.b16 %v327
        %v634 = vunpack.c.l.b16 %v328
        %v635 = vunpack.c.l.b16 %v329
        %v636 = vunpack.c.l.b16 %v330
        %v637 = vunpack.c.l.b16 %v331
        %v638 = vunpack.c.l.b16 %v332
        %v639 = vunpack.c.l.b16 %v333
        %v640 = vunpack.c.l.b16 %v334
        %v641 = vunpack.c.l.b16 %v335
        %v642 = vunpack.c.l.b16 %v336
        %v643 = vunpack.c.l.b16 %v337
        %v644 = vunpack.c.l.b16 %v338
        %v645 = vunpack.c.l.b16 %v339
        %v646 = vunpack.c.l.b16 %v340
        %v647 = vunpack.c.l.b16 %v341
        %v648 = vpack.c.b16 %v633, %v632
        %v649 = vpack.c.b16 %v635, %v634
        %v650 = vpack.c.b16 %v637, %v636
        %v651 = vpack.c.b16 %v639, %v638
        %v652 = vpack.c.b16 %v641, %v640
        %v653 = vpack.c.b16 %v643, %v642
        %v654 = vpack.c.b16 %v645, %v644
        %v655 = vpack.c.b16 %v647, %v646
        %664 = vmatprep.subr.bf16.mxu0 0
        %665 = vmatpush1.bf16.msra.mxu0 %v655
        %666 = vmatprep.subr.bf16.mxu0 0
        %667 = vmatpush1.bf16.msra.mxu0 %v654
        %668 = vmatprep.subr.bf16.mxu0 0
        %669 = vmatpush1.bf16.msra.mxu0 %v653
        %670 = vmatprep.subr.bf16.mxu0 0
        %671 = vmatpush1.bf16.msra.mxu0 %v652
        %672 = vmatprep.subr.bf16.mxu0 0
        %673 = vmatpush1.bf16.msra.mxu0 %v651
        %674 = vmatprep.subr.bf16.mxu0 0
        %675 = vmatpush1.bf16.msra.mxu0 %v650
        %676 = vmatprep.subr.bf16.mxu0 0
        %677 = vmatpush1.bf16.msra.mxu0 %v649
        %678 = vmatprep.subr.bf16.mxu0 0
        %679 = vmatpush1.bf16.msra.mxu0 %v648
        %680 = vmatprep.subr.bf16.mxu0 0
        %681 = vmatpush2.bf16.msra.mxu0 0
        %682 = vmatprep.subr.bf16.mxu0 0
        %683 = vmatpush2.bf16.msra.mxu0 0
        %684 = vmatprep.subr.bf16.mxu0 0
        %685 = vmatpush2.bf16.msra.mxu0 0
        %686 = vmatprep.subr.bf16.mxu0 0
        %687 = vmatpush2.bf16.msra.mxu0 0
        %688 = vmatprep.subr.bf16.mxu0 0
        %689 = vmatpush2.bf16.msra.mxu0 0
        %690 = vmatprep.subr.bf16.mxu0 0
        %691 = vmatpush2.bf16.msra.mxu0 0
        %692 = vmatprep.subr.bf16.mxu0 0
        %693 = vmatpush2.bf16.msra.mxu0 0
        %694 = vmatprep.subr.bf16.mxu0 0
        %695 = vmatpush2.bf16.msra.mxu0 0
        %696 = vmatprep.mubr.bf16.mxu0 0
        %697 = vmatmul.mubr.bf16.gmra.mxu0 %v310
        %v698 = vpop.f32.mrf.mxu0
        %v699 = vadd.f32 %v490, %v698
        %v700 = vpop.f32.mrf.mxu0
        %v701 = vpop.f32.mrf.mxu0
        %v702 = vadd.f32 %v493, %v701
        %v703 = vpop.f32.mrf.mxu0
        %704 = vmatprep.mubr.bf16.mxu0 0
        %705 = vmatmul.mubr.bf16.gmra.mxu0 %v311
        %v706 = vpop.f32.mrf.mxu0
        %v707 = vadd.f32 %v498, %v706
        %v708 = vpop.f32.mrf.mxu0
        %v709 = vpop.f32.mrf.mxu0
        %v710 = vadd.f32 %v501, %v709
        %v711 = vpop.f32.mrf.mxu0
        %712 = vmatprep.mubr.bf16.mxu0 0
        %713 = vmatmul.mubr.bf16.gmra.mxu0 %v312
        %v714 = vpop.f32.mrf.mxu0
        %v715 = vadd.f32 %v506, %v714
        %v716 = vpop.f32.mrf.mxu0
        %v717 = vpop.f32.mrf.mxu0
        %v718 = vadd.f32 %v509, %v717
        %v719 = vpop.f32.mrf.mxu0
        %720 = vmatprep.mubr.bf16.mxu0 0
        %721 = vmatmul.mubr.bf16.gmra.mxu0 %v313
        %v722 = vpop.f32.mrf.mxu0
        %v723 = vadd.f32 %v514, %v722
        %v724 = vpop.f32.mrf.mxu0
        %v725 = vpop.f32.mrf.mxu0
        %v726 = vadd.f32 %v517, %v725
        %v727 = vpop.f32.mrf.mxu0
        %728 = vmatprep.mubr.bf16.mxu0 0
        %729 = vmatmul.mubr.bf16.gmra.mxu0 %v314
        %v730 = vpop.f32.mrf.mxu0
        %v731 = vadd.f32 %v522, %v730
        %v732 = vpop.f32.mrf.mxu0
        %v733 = vpop.f32.mrf.mxu0
        %v734 = vadd.f32 %v525, %v733
        %v735 = vpop.f32.mrf.mxu0
        %736 = vmatprep.mubr.bf16.mxu0 0
        %737 = vmatmul.mubr.bf16.gmra.mxu0 %v315
        %v738 = vpop.f32.mrf.mxu0
        %v739 = vadd.f32 %v530, %v738
        %v740 = vpop.f32.mrf.mxu0
        %v741 = vpop.f32.mrf.mxu0
        %v742 = vadd.f32 %v533, %v741
        %v743 = vpop.f32.mrf.mxu0
        %744 = vmatprep.mubr.bf16.mxu0 0
        %745 = vmatmul.mubr.bf16.gmra.mxu0 %v316
        %v746 = vpop.f32.mrf.mxu0
        %v747 = vadd.f32 %v538, %v746
        %v748 = vpop.f32.mrf.mxu0
        %v749 = vpop.f32.mrf.mxu0
        %v750 = vadd.f32 %v541, %v749
        %v751 = vpop.f32.mrf.mxu0
        %752 = vmatprep.mubr.bf16.mxu0 0
        %753 = vmatmul.mubr.bf16.gmra.mxu0 %v317
        %v754 = vpop.f32.mrf.mxu0
        %v755 = vadd.f32 %v546, %v754
        %v756 = vpop.f32.mrf.mxu0
        %v757 = vpop.f32.mrf.mxu0
        %v758 = vadd.f32 %v549, %v757
        %v759 = vpop.f32.mrf.mxu0
        %760 = vmatprep.mubr.bf16.mxu0 0
        %761 = vmatmul.mubr.bf16.gmra.mxu0 %v318
        %v762 = vpop.f32.mrf.mxu0
        %v763 = vadd.f32 %v554, %v762
        %v764 = vpop.f32.mrf.mxu0
        %v765 = vpop.f32.mrf.mxu0
        %v766 = vadd.f32 %v557, %v765
        %v767 = vpop.f32.mrf.mxu0
        %768 = vmatprep.mubr.bf16.mxu0 0
        %769 = vmatmul.mubr.bf16.gmra.mxu0 %v319
        %v770 = vpop.f32.mrf.mxu0
        %v771 = vadd.f32 %v562, %v770
        %v772 = vpop.f32.mrf.mxu0
        %v773 = vpop.f32.mrf.mxu0
        %v774 = vadd.f32 %v565, %v773
        %v775 = vpop.f32.mrf.mxu0
        %776 = vmatprep.mubr.bf16.mxu0 0
        %777 = vmatmul.mubr.bf16.gmra.mxu0 %v320
        %v778 = vpop.f32.mrf.mxu0
        %v779 = vadd.f32 %v570, %v778
        %v780 = vpop.f32.mrf.mxu0
        %v781 = vpop.f32.mrf.mxu0
        %v782 = vadd.f32 %v573, %v781
        %v783 = vpop.f32.mrf.mxu0
        %784 = vmatprep.mubr.bf16.mxu0 0
        %785 = vmatmul.mubr.bf16.gmra.mxu0 %v321
        %v786 = vpop.f32.mrf.mxu0
        %v787 = vadd.f32 %v578, %v786
        %v788 = vpop.f32.mrf.mxu0
        %v789 = vpop.f32.mrf.mxu0
        %v790 = vadd.f32 %v581, %v789
        %v791 = vpop.f32.mrf.mxu0
        %792 = vmatprep.mubr.bf16.mxu0 0
        %793 = vmatmul.mubr.bf16.gmra.mxu0 %v322
        %v794 = vpop.f32.mrf.mxu0
        %v795 = vadd.f32 %v586, %v794
        %v796 = vpop.f32.mrf.mxu0
        %v797 = vpop.f32.mrf.mxu0
        %v798 = vadd.f32 %v589, %v797
        %v799 = vpop.f32.mrf.mxu0
        %800 = vmatprep.mubr.bf16.mxu0 0
        %801 = vmatmul.mubr.bf16.gmra.mxu0 %v323
        %v802 = vpop.f32.mrf.mxu0
        %v803 = vadd.f32 %v594, %v802
        %v804 = vpop.f32.mrf.mxu0
        %v805 = vpop.f32.mrf.mxu0
        %v806 = vadd.f32 %v597, %v805
        %v807 = vpop.f32.mrf.mxu0
        %808 = vmatprep.mubr.bf16.mxu0 0
        %809 = vmatmul.mubr.bf16.gmra.mxu0 %v324
        %v810 = vpop.f32.mrf.mxu0
        %v811 = vadd.f32 %v602, %v810
        %v812 = vpop.f32.mrf.mxu0
        %v813 = vpop.f32.mrf.mxu0
        %v814 = vadd.f32 %v605, %v813
        %v815 = vpop.f32.mrf.mxu0
        %816 = vmatprep.mubr.bf16.mxu0 0
        %817 = vmatmul.mubr.bf16.gmra.mxu0 %v325
        %v818 = vpop.f32.mrf.mxu0
        %v819 = vadd.f32 %v610, %v818
        %v820 = vpop.f32.mrf.mxu0
        %v821 = vpop.f32.mrf.mxu0
        %v822 = vadd.f32 %v613, %v821
        %v823 = vpop.f32.mrf.mxu0
        %824 = vdwg.mxu0
        %v825 = vld [vmem:[%s275 + $0x2] sm:$0xff]
        %v826 = vld [vmem:[%s275 + $0xa] sm:$0xff]
        %v827 = vld [vmem:[%s275 + $0x1a] sm:$0xff]
        %v828 = vld [vmem:[%s275 + $0x22] sm:$0xff]
        %v829 = vld [vmem:[%s275 + $0x32] sm:$0xff]
        %v830 = vld [vmem:[%s275 + $0x3a] sm:$0xff]
        %v831 = vld [vmem:[%s275 + $0x4a] sm:$0xff]
        %v832 = vld [vmem:[%s275 + $0x52] sm:$0xff]
        %v833 = vld [vmem:[%s275 + $0x62] sm:$0xff]
        %v834 = vld [vmem:[%s275 + $0x6a] sm:$0xff]
        %v835 = vld [vmem:[%s275 + $0x7a] sm:$0xff]
        %v836 = vld [vmem:[%s275 + $0x82] sm:$0xff]
        %v837 = vld [vmem:[%s275 + $0x92] sm:$0xff]
        %v838 = vld [vmem:[%s275 + $0x9a] sm:$0xff]
        %v839 = vld [vmem:[%s275 + $0xaa] sm:$0xff]
        %v840 = vld [vmem:[%s275 + $0xb2] sm:$0xff]
        %v841 = vld [vmem:[%s275 + $0xc2] sm:$0xff]
        %v842 = vld [vmem:[%s275 + $0xca] sm:$0xff]
        %v843 = vld [vmem:[%s275 + $0xda] sm:$0xff]
        %v844 = vld [vmem:[%s275 + $0xe2] sm:$0xff]
        %v845 = vld [vmem:[%s275 + $0xf2] sm:$0xff]
        %v846 = vld [vmem:[%s275 + $0xfa] sm:$0xff]
        %v847 = vld [vmem:[%s275 + $0x10a] sm:$0xff]
        %v848 = vld [vmem:[%s275 + $0x112] sm:$0xff]
        %v849 = vld [vmem:[%s275 + $0x122] sm:$0xff]
        %v850 = vld [vmem:[%s275 + $0x12a] sm:$0xff]
        %v851 = vld [vmem:[%s275 + $0x13a] sm:$0xff]
        %v852 = vld [vmem:[%s275 + $0x142] sm:$0xff]
        %v853 = vld [vmem:[%s275 + $0x152] sm:$0xff]
        %v854 = vld [vmem:[%s275 + $0x15a] sm:$0xff]
        %v855 = vld [vmem:[%s275 + $0x16a] sm:$0xff]
        %v856 = vld [vmem:[%s275 + $0x172] sm:$0xff]
        %v857 = vpack.c.bf16 %v826, %v825
        %v858 = vpack.c.bf16 %v828, %v827
        %v859 = vpack.c.bf16 %v830, %v829
        %v860 = vpack.c.bf16 %v832, %v831
        %v861 = vpack.c.bf16 %v834, %v833
        %v862 = vpack.c.bf16 %v836, %v835
        %v863 = vpack.c.bf16 %v838, %v837
        %v864 = vpack.c.bf16 %v840, %v839
        %v865 = vpack.c.bf16 %v842, %v841
        %v866 = vpack.c.bf16 %v844, %v843
        %v867 = vpack.c.bf16 %v846, %v845
        %v868 = vpack.c.bf16 %v848, %v847
        %v869 = vpack.c.bf16 %v850, %v849
        %v870 = vpack.c.bf16 %v852, %v851
        %v871 = vpack.c.bf16 %v854, %v853
        %v872 = vpack.c.bf16 %v856, %v855
        %s873 = scalar_lea.vmem %s1, 128
        %v874 = vld [vmem:[%s873] sm:$0xf]
        %v875 = vld [vmem:[%s873 + $0x4] sm:$0xf]
        %v876 = vld [vmem:[%s873 + $0x8] sm:$0xf]
        %v877 = vld [vmem:[%s873 + $0xc] sm:$0xf]
        %v878 = vld [vmem:[%s873 + $0x10] sm:$0xf]
        %v879 = vld [vmem:[%s873 + $0x14] sm:$0xf]
        %v880 = vld [vmem:[%s873 + $0x18] sm:$0xf]
        %v881 = vld [vmem:[%s873 + $0x1c] sm:$0xf]
        %v882 = vld [vmem:[%s873 + $0x20] sm:$0xf]
        %v883 = vld [vmem:[%s873 + $0x24] sm:$0xf]
        %v884 = vld [vmem:[%s873 + $0x28] sm:$0xf]
        %v885 = vld [vmem:[%s873 + $0x2c] sm:$0xf]
        %v886 = vld [vmem:[%s873 + $0x30] sm:$0xf]
        %v887 = vld [vmem:[%s873 + $0x34] sm:$0xf]
        %v888 = vld [vmem:[%s873 + $0x38] sm:$0xf]
        %v889 = vld [vmem:[%s873 + $0x3c] sm:$0xf]
        %v906 = vunpack.c.l.b16 %v874
        %v907 = vunpack.c.l.b16 %v875
        %v908 = vunpack.c.l.b16 %v876
        %v909 = vunpack.c.l.b16 %v877
        %v910 = vunpack.c.l.b16 %v878
        %v911 = vunpack.c.l.b16 %v879
        %v912 = vunpack.c.l.b16 %v880
        %v913 = vunpack.c.l.b16 %v881
        %v914 = vunpack.c.l.b16 %v882
        %v915 = vunpack.c.l.b16 %v883
        %v916 = vunpack.c.l.b16 %v884
        %v917 = vunpack.c.l.b16 %v885
        %v918 = vunpack.c.l.b16 %v886
        %v919 = vunpack.c.l.b16 %v887
        %v920 = vunpack.c.l.b16 %v888
        %v921 = vunpack.c.l.b16 %v889
        %v922 = vpack.c.b16 %v907, %v906
        %v923 = vpack.c.b16 %v909, %v908
        %v924 = vpack.c.b16 %v911, %v910
        %v925 = vpack.c.b16 %v913, %v912
        %v926 = vpack.c.b16 %v915, %v914
        %v927 = vpack.c.b16 %v917, %v916
        %v928 = vpack.c.b16 %v919, %v918
        %v929 = vpack.c.b16 %v921, %v920
        %938 = vmatprep.subr.bf16.mxu0 0
        %939 = vmatpush1.bf16.msra.mxu0 %v929
        %940 = vmatprep.subr.bf16.mxu0 0
        %941 = vmatpush1.bf16.msra.mxu0 %v928
        %942 = vmatprep.subr.bf16.mxu0 0
        %943 = vmatpush1.bf16.msra.mxu0 %v927
        %944 = vmatprep.subr.bf16.mxu0 0
        %945 = vmatpush1.bf16.msra.mxu0 %v926
        %946 = vmatprep.subr.bf16.mxu0 0
        %947 = vmatpush1.bf16.msra.mxu0 %v925
        %948 = vmatprep.subr.bf16.mxu0 0
        %949 = vmatpush1.bf16.msra.mxu0 %v924
        %950 = vmatprep.subr.bf16.mxu0 0
        %951 = vmatpush1.bf16.msra.mxu0 %v923
        %952 = vmatprep.subr.bf16.mxu0 0
        %953 = vmatpush1.bf16.msra.mxu0 %v922
        %954 = vmatprep.subr.bf16.mxu0 0
        %955 = vmatpush2.bf16.msra.mxu0 0
        %956 = vmatprep.subr.bf16.mxu0 0
        %957 = vmatpush2.bf16.msra.mxu0 0
        %958 = vmatprep.subr.bf16.mxu0 0
        %959 = vmatpush2.bf16.msra.mxu0 0
        %960 = vmatprep.subr.bf16.mxu0 0
        %961 = vmatpush2.bf16.msra.mxu0 0
        %962 = vmatprep.subr.bf16.mxu0 0
        %963 = vmatpush2.bf16.msra.mxu0 0
        %964 = vmatprep.subr.bf16.mxu0 0
        %965 = vmatpush2.bf16.msra.mxu0 0
        %966 = vmatprep.subr.bf16.mxu0 0
        %967 = vmatpush2.bf16.msra.mxu0 0
        %968 = vmatprep.subr.bf16.mxu0 0
        %969 = vmatpush2.bf16.msra.mxu0 0
        %970 = vmatprep.mubr.bf16.mxu0 0
        %971 = vmatmul.mubr.bf16.gmra.mxu0 %v857
        %v972 = vpop.f32.mrf.mxu0
        %v973 = vadd.f32 0.0, %v972
        %v974 = vpop.f32.mrf.mxu0
        %v975 = vpop.f32.mrf.mxu0
        %v976 = vadd.f32 0.0, %v975
        %v977 = vpop.f32.mrf.mxu0
        %978 = vmatprep.mubr.bf16.mxu0 0
        %979 = vmatmul.mubr.bf16.gmra.mxu0 %v858
        %v980 = vpop.f32.mrf.mxu0
        %v981 = vadd.f32 0.0, %v980
        %v982 = vpop.f32.mrf.mxu0
        %v983 = vpop.f32.mrf.mxu0
        %v984 = vadd.f32 0.0, %v983
        %v985 = vpop.f32.mrf.mxu0
        %986 = vmatprep.mubr.bf16.mxu0 0
        %987 = vmatmul.mubr.bf16.gmra.mxu0 %v859
        %v988 = vpop.f32.mrf.mxu0
        %v989 = vadd.f32 0.0, %v988
        %v990 = vpop.f32.mrf.mxu0
        %v991 = vpop.f32.mrf.mxu0
        %v992 = vadd.f32 0.0, %v991
        %v993 = vpop.f32.mrf.mxu0
        %994 = vmatprep.mubr.bf16.mxu0 0
        %995 = vmatmul.mubr.bf16.gmra.mxu0 %v860
        %v996 = vpop.f32.mrf.mxu0
        %v997 = vadd.f32 0.0, %v996
        %v998 = vpop.f32.mrf.mxu0
        %v999 = vpop.f32.mrf.mxu0
        %v1000 = vadd.f32 0.0, %v999
        %v1001 = vpop.f32.mrf.mxu0
        %1002 = vmatprep.mubr.bf16.mxu0 0
        %1003 = vmatmul.mubr.bf16.gmra.mxu0 %v861
        %v1004 = vpop.f32.mrf.mxu0
        %v1005 = vadd.f32 0.0, %v1004
        %v1006 = vpop.f32.mrf.mxu0
        %v1007 = vpop.f32.mrf.mxu0
        %v1008 = vadd.f32 0.0, %v1007
        %v1009 = vpop.f32.mrf.mxu0
        %1010 = vmatprep.mubr.bf16.mxu0 0
        %1011 = vmatmul.mubr.bf16.gmra.mxu0 %v862
        %v1012 = vpop.f32.mrf.mxu0
        %v1013 = vadd.f32 0.0, %v1012
        %v1014 = vpop.f32.mrf.mxu0
        %v1015 = vpop.f32.mrf.mxu0
        %v1016 = vadd.f32 0.0, %v1015
        %v1017 = vpop.f32.mrf.mxu0
        %1018 = vmatprep.mubr.bf16.mxu0 0
        %1019 = vmatmul.mubr.bf16.gmra.mxu0 %v863
        %v1020 = vpop.f32.mrf.mxu0
        %v1021 = vadd.f32 0.0, %v1020
        %v1022 = vpop.f32.mrf.mxu0
        %v1023 = vpop.f32.mrf.mxu0
        %v1024 = vadd.f32 0.0, %v1023
        %v1025 = vpop.f32.mrf.mxu0
        %1026 = vmatprep.mubr.bf16.mxu0 0
        %1027 = vmatmul.mubr.bf16.gmra.mxu0 %v864
        %v1028 = vpop.f32.mrf.mxu0
        %v1029 = vadd.f32 0.0, %v1028
        %v1030 = vpop.f32.mrf.mxu0
        %v1031 = vpop.f32.mrf.mxu0
        %v1032 = vadd.f32 0.0, %v1031
        %v1033 = vpop.f32.mrf.mxu0
        %1034 = vmatprep.mubr.bf16.mxu0 0
        %1035 = vmatmul.mubr.bf16.gmra.mxu0 %v865
        %v1036 = vpop.f32.mrf.mxu0
        %v1037 = vadd.f32 0.0, %v1036
        %v1038 = vpop.f32.mrf.mxu0
        %v1039 = vpop.f32.mrf.mxu0
        %v1040 = vadd.f32 0.0, %v1039
        %v1041 = vpop.f32.mrf.mxu0
        %1042 = vmatprep.mubr.bf16.mxu0 0
        %1043 = vmatmul.mubr.bf16.gmra.mxu0 %v866
        %v1044 = vpop.f32.mrf.mxu0
        %v1045 = vadd.f32 0.0, %v1044
        %v1046 = vpop.f32.mrf.mxu0
        %v1047 = vpop.f32.mrf.mxu0
        %v1048 = vadd.f32 0.0, %v1047
        %v1049 = vpop.f32.mrf.mxu0
        %1050 = vmatprep.mubr.bf16.mxu0 0
        %1051 = vmatmul.mubr.bf16.gmra.mxu0 %v867
        %v1052 = vpop.f32.mrf.mxu0
        %v1053 = vadd.f32 0.0, %v1052
        %v1054 = vpop.f32.mrf.mxu0
        %v1055 = vpop.f32.mrf.mxu0
        %v1056 = vadd.f32 0.0, %v1055
        %v1057 = vpop.f32.mrf.mxu0
        %1058 = vmatprep.mubr.bf16.mxu0 0
        %1059 = vmatmul.mubr.bf16.gmra.mxu0 %v868
        %v1060 = vpop.f32.mrf.mxu0
        %v1061 = vadd.f32 0.0, %v1060
        %v1062 = vpop.f32.mrf.mxu0
        %v1063 = vpop.f32.mrf.mxu0
        %v1064 = vadd.f32 0.0, %v1063
        %v1065 = vpop.f32.mrf.mxu0
        %1066 = vmatprep.mubr.bf16.mxu0 0
        %1067 = vmatmul.mubr.bf16.gmra.mxu0 %v869
        %v1068 = vpop.f32.mrf.mxu0
        %v1069 = vadd.f32 0.0, %v1068
        %v1070 = vpop.f32.mrf.mxu0
        %v1071 = vpop.f32.mrf.mxu0
        %v1072 = vadd.f32 0.0, %v1071
        %v1073 = vpop.f32.mrf.mxu0
        %1074 = vmatprep.mubr.bf16.mxu0 0
        %1075 = vmatmul.mubr.bf16.gmra.mxu0 %v870
        %v1076 = vpop.f32.mrf.mxu0
        %v1077 = vadd.f32 0.0, %v1076
        %v1078 = vpop.f32.mrf.mxu0
        %v1079 = vpop.f32.mrf.mxu0
        %v1080 = vadd.f32 0.0, %v1079
        %v1081 = vpop.f32.mrf.mxu0
        %1082 = vmatprep.mubr.bf16.mxu0 0
        %1083 = vmatmul.mubr.bf16.gmra.mxu0 %v871
        %v1084 = vpop.f32.mrf.mxu0
        %v1085 = vadd.f32 0.0, %v1084
        %v1086 = vpop.f32.mrf.mxu0
        %v1087 = vpop.f32.mrf.mxu0
        %v1088 = vadd.f32 0.0, %v1087
        %v1089 = vpop.f32.mrf.mxu0
        %1090 = vmatprep.mubr.bf16.mxu0 0
        %1091 = vmatmul.mubr.bf16.gmra.mxu0 %v872
        %v1092 = vpop.f32.mrf.mxu0
        %v1093 = vadd.f32 0.0, %v1092
        %v1094 = vpop.f32.mrf.mxu0
        %v1095 = vpop.f32.mrf.mxu0
        %v1096 = vadd.f32 0.0, %v1095
        %v1097 = vpop.f32.mrf.mxu0
        %1098 = vdwg.mxu0
        %v1099 = vadd.f32 %v699, %v973
        %v1100 = vadd.f32 %v702, %v976
        %v1101 = vadd.f32 %v707, %v981
        %v1102 = vadd.f32 %v710, %v984
        %v1103 = vadd.f32 %v715, %v989
        %v1104 = vadd.f32 %v718, %v992
        %v1105 = vadd.f32 %v723, %v997
        %v1106 = vadd.f32 %v726, %v1000
        %v1107 = vadd.f32 %v731, %v1005
        %v1108 = vadd.f32 %v734, %v1008
        %v1109 = vadd.f32 %v739, %v1013
        %v1110 = vadd.f32 %v742, %v1016
        %v1111 = vadd.f32 %v747, %v1021
        %v1112 = vadd.f32 %v750, %v1024
        %v1113 = vadd.f32 %v755, %v1029
        %v1114 = vadd.f32 %v758, %v1032
        %v1115 = vadd.f32 %v763, %v1037
        %v1116 = vadd.f32 %v766, %v1040
        %v1117 = vadd.f32 %v771, %v1045
        %v1118 = vadd.f32 %v774, %v1048
        %v1119 = vadd.f32 %v779, %v1053
        %v1120 = vadd.f32 %v782, %v1056
        %v1121 = vadd.f32 %v787, %v1061
        %v1122 = vadd.f32 %v790, %v1064
        %v1123 = vadd.f32 %v795, %v1069
        %v1124 = vadd.f32 %v798, %v1072
        %v1125 = vadd.f32 %v803, %v1077
        %v1126 = vadd.f32 %v806, %v1080
        %v1127 = vadd.f32 %v811, %v1085
        %v1128 = vadd.f32 %v814, %v1088
        %v1129 = vadd.f32 %v819, %v1093
        %v1130 = vadd.f32 %v822, %v1096
        %s1131 = scalar_lea.vmem %s275, 24
        %v1132 = vld [vmem:[%s1131] sm:$0xff]
        %v1133 = vld [vmem:[%s1131 + $0x8] sm:$0xff]
        %v1134 = vld [vmem:[%s1131 + $0x18] sm:$0xff]
        %v1135 = vld [vmem:[%s1131 + $0x20] sm:$0xff]
        %v1136 = vld [vmem:[%s1131 + $0x30] sm:$0xff]
        %v1137 = vld [vmem:[%s1131 + $0x38] sm:$0xff]
        %v1138 = vld [vmem:[%s1131 + $0x48] sm:$0xff]
        %v1139 = vld [vmem:[%s1131 + $0x50] sm:$0xff]
        %v1140 = vld [vmem:[%s1131 + $0x60] sm:$0xff]
        %v1141 = vld [vmem:[%s1131 + $0x68] sm:$0xff]
        %v1142 = vld [vmem:[%s1131 + $0x78] sm:$0xff]
        %v1143 = vld [vmem:[%s1131 + $0x80] sm:$0xff]
        %v1144 = vld [vmem:[%s1131 + $0x90] sm:$0xff]
        %v1145 = vld [vmem:[%s1131 + $0x98] sm:$0xff]
        %v1146 = vld [vmem:[%s1131 + $0xa8] sm:$0xff]
        %v1147 = vld [vmem:[%s1131 + $0xb0] sm:$0xff]
        %v1148 = vld [vmem:[%s1131 + $0xc0] sm:$0xff]
        %v1149 = vld [vmem:[%s1131 + $0xc8] sm:$0xff]
        %v1150 = vld [vmem:[%s1131 + $0xd8] sm:$0xff]
        %v1151 = vld [vmem:[%s1131 + $0xe0] sm:$0xff]
        %v1152 = vld [vmem:[%s1131 + $0xf0] sm:$0xff]
        %v1153 = vld [vmem:[%s1131 + $0xf8] sm:$0xff]
        %v1154 = vld [vmem:[%s1131 + $0x108] sm:$0xff]
        %v1155 = vld [vmem:[%s1131 + $0x110] sm:$0xff]
        %v1156 = vld [vmem:[%s1131 + $0x120] sm:$0xff]
        %v1157 = vld [vmem:[%s1131 + $0x128] sm:$0xff]
        %v1158 = vld [vmem:[%s1131 + $0x138] sm:$0xff]
        %v1159 = vld [vmem:[%s1131 + $0x140] sm:$0xff]
        %v1160 = vld [vmem:[%s1131 + $0x150] sm:$0xff]
        %v1161 = vld [vmem:[%s1131 + $0x158] sm:$0xff]
        %v1162 = vld [vmem:[%s1131 + $0x168] sm:$0xff]
        %v1163 = vld [vmem:[%s1131 + $0x170] sm:$0xff]
        %v1164 = vpack.c.bf16 %v1133, %v1132
        %v1165 = vpack.c.bf16 %v1135, %v1134
        %v1166 = vpack.c.bf16 %v1137, %v1136
        %v1167 = vpack.c.bf16 %v1139, %v1138
        %v1168 = vpack.c.bf16 %v1141, %v1140
        %v1169 = vpack.c.bf16 %v1143, %v1142
        %v1170 = vpack.c.bf16 %v1145, %v1144
        %v1171 = vpack.c.bf16 %v1147, %v1146
        %v1172 = vpack.c.bf16 %v1149, %v1148
        %v1173 = vpack.c.bf16 %v1151, %v1150
        %v1174 = vpack.c.bf16 %v1153, %v1152
        %v1175 = vpack.c.bf16 %v1155, %v1154
        %v1176 = vpack.c.bf16 %v1157, %v1156
        %v1177 = vpack.c.bf16 %v1159, %v1158
        %v1178 = vpack.c.bf16 %v1161, %v1160
        %v1179 = vpack.c.bf16 %v1163, %v1162
        %s1180 = scalar_lea.vmem %s1, 192
        %v1181 = vld [vmem:[%s1180] sm:$0xf]
        %v1182 = vld [vmem:[%s1180 + $0x4] sm:$0xf]
        %v1183 = vld [vmem:[%s1180 + $0x8] sm:$0xf]
        %v1184 = vld [vmem:[%s1180 + $0xc] sm:$0xf]
        %v1185 = vld [vmem:[%s1180 + $0x10] sm:$0xf]
        %v1186 = vld [vmem:[%s1180 + $0x14] sm:$0xf]
        %v1187 = vld [vmem:[%s1180 + $0x18] sm:$0xf]
        %v1188 = vld [vmem:[%s1180 + $0x1c] sm:$0xf]
        %v1189 = vld [vmem:[%s1180 + $0x20] sm:$0xf]
        %v1190 = vld [vmem:[%s1180 + $0x24] sm:$0xf]
        %v1191 = vld [vmem:[%s1180 + $0x28] sm:$0xf]
        %v1192 = vld [vmem:[%s1180 + $0x2c] sm:$0xf]
        %v1193 = vld [vmem:[%s1180 + $0x30] sm:$0xf]
        %v1194 = vld [vmem:[%s1180 + $0x34] sm:$0xf]
        %v1195 = vld [vmem:[%s1180 + $0x38] sm:$0xf]
        %v1196 = vld [vmem:[%s1180 + $0x3c] sm:$0xf]
        %v1213 = vunpack.c.l.b16 %v1181
        %v1214 = vunpack.c.l.b16 %v1182
        %v1215 = vunpack.c.l.b16 %v1183
        %v1216 = vunpack.c.l.b16 %v1184
        %v1217 = vunpack.c.l.b16 %v1185
        %v1218 = vunpack.c.l.b16 %v1186
        %v1219 = vunpack.c.l.b16 %v1187
        %v1220 = vunpack.c.l.b16 %v1188
        %v1221 = vunpack.c.l.b16 %v1189
        %v1222 = vunpack.c.l.b16 %v1190
        %v1223 = vunpack.c.l.b16 %v1191
        %v1224 = vunpack.c.l.b16 %v1192
        %v1225 = vunpack.c.l.b16 %v1193
        %v1226 = vunpack.c.l.b16 %v1194
        %v1227 = vunpack.c.l.b16 %v1195
        %v1228 = vunpack.c.l.b16 %v1196
        %v1229 = vpack.c.b16 %v1214, %v1213
        %v1230 = vpack.c.b16 %v1216, %v1215
        %v1231 = vpack.c.b16 %v1218, %v1217
        %v1232 = vpack.c.b16 %v1220, %v1219
        %v1233 = vpack.c.b16 %v1222, %v1221
        %v1234 = vpack.c.b16 %v1224, %v1223
        %v1235 = vpack.c.b16 %v1226, %v1225
        %v1236 = vpack.c.b16 %v1228, %v1227
        %1245 = vmatprep.subr.bf16.mxu0 0
        %1246 = vmatpush1.bf16.msra.mxu0 %v1236
        %1247 = vmatprep.subr.bf16.mxu0 0
        %1248 = vmatpush1.bf16.msra.mxu0 %v1235
        %1249 = vmatprep.subr.bf16.mxu0 0
        %1250 = vmatpush1.bf16.msra.mxu0 %v1234
        %1251 = vmatprep.subr.bf16.mxu0 0
        %1252 = vmatpush1.bf16.msra.mxu0 %v1233
        %1253 = vmatprep.subr.bf16.mxu0 0
        %1254 = vmatpush1.bf16.msra.mxu0 %v1232
        %1255 = vmatprep.subr.bf16.mxu0 0
        %1256 = vmatpush1.bf16.msra.mxu0 %v1231
        %1257 = vmatprep.subr.bf16.mxu0 0
        %1258 = vmatpush1.bf16.msra.mxu0 %v1230
        %1259 = vmatprep.subr.bf16.mxu0 0
        %1260 = vmatpush1.bf16.msra.mxu0 %v1229
        %1261 = vmatprep.subr.bf16.mxu0 0
        %1262 = vmatpush2.bf16.msra.mxu0 0
        %1263 = vmatprep.subr.bf16.mxu0 0
        %1264 = vmatpush2.bf16.msra.mxu0 0
        %1265 = vmatprep.subr.bf16.mxu0 0
        %1266 = vmatpush2.bf16.msra.mxu0 0
        %1267 = vmatprep.subr.bf16.mxu0 0
        %1268 = vmatpush2.bf16.msra.mxu0 0
        %1269 = vmatprep.subr.bf16.mxu0 0
        %1270 = vmatpush2.bf16.msra.mxu0 0
        %1271 = vmatprep.subr.bf16.mxu0 0
        %1272 = vmatpush2.bf16.msra.mxu0 0
        %1273 = vmatprep.subr.bf16.mxu0 0
        %1274 = vmatpush2.bf16.msra.mxu0 0
        %1275 = vmatprep.subr.bf16.mxu0 0
        %1276 = vmatpush2.bf16.msra.mxu0 0
        %1277 = vmatprep.mubr.bf16.mxu0 0
        %1278 = vmatmul.mubr.bf16.gmra.mxu0 %v1164
        %v1279 = vpop.f32.mrf.mxu0
        %v1280 = vadd.f32 0.0, %v1279
        %v1281 = vpop.f32.mrf.mxu0
        %v1282 = vpop.f32.mrf.mxu0
        %v1283 = vadd.f32 0.0, %v1282
        %v1284 = vpop.f32.mrf.mxu0
        %1285 = vmatprep.mubr.bf16.mxu0 0
        %1286 = vmatmul.mubr.bf16.gmra.mxu0 %v1165
        %v1287 = vpop.f32.mrf.mxu0
        %v1288 = vadd.f32 0.0, %v1287
        %v1289 = vpop.f32.mrf.mxu0
        %v1290 = vpop.f32.mrf.mxu0
        %v1291 = vadd.f32 0.0, %v1290
        %v1292 = vpop.f32.mrf.mxu0
        %1293 = vmatprep.mubr.bf16.mxu0 0
        %1294 = vmatmul.mubr.bf16.gmra.mxu0 %v1166
        %v1295 = vpop.f32.mrf.mxu0
        %v1296 = vadd.f32 0.0, %v1295
        %v1297 = vpop.f32.mrf.mxu0
        %v1298 = vpop.f32.mrf.mxu0
        %v1299 = vadd.f32 0.0, %v1298
        %v1300 = vpop.f32.mrf.mxu0
        %1301 = vmatprep.mubr.bf16.mxu0 0
        %1302 = vmatmul.mubr.bf16.gmra.mxu0 %v1167
        %v1303 = vpop.f32.mrf.mxu0
        %v1304 = vadd.f32 0.0, %v1303
        %v1305 = vpop.f32.mrf.mxu0
        %v1306 = vpop.f32.mrf.mxu0
        %v1307 = vadd.f32 0.0, %v1306
        %v1308 = vpop.f32.mrf.mxu0
        %1309 = vmatprep.mubr.bf16.mxu0 0
        %1310 = vmatmul.mubr.bf16.gmra.mxu0 %v1168
        %v1311 = vpop.f32.mrf.mxu0
        %v1312 = vadd.f32 0.0, %v1311
        %v1313 = vpop.f32.mrf.mxu0
        %v1314 = vpop.f32.mrf.mxu0
        %v1315 = vadd.f32 0.0, %v1314
        %v1316 = vpop.f32.mrf.mxu0
        %1317 = vmatprep.mubr.bf16.mxu0 0
        %1318 = vmatmul.mubr.bf16.gmra.mxu0 %v1169
        %v1319 = vpop.f32.mrf.mxu0
        %v1320 = vadd.f32 0.0, %v1319
        %v1321 = vpop.f32.mrf.mxu0
        %v1322 = vpop.f32.mrf.mxu0
        %v1323 = vadd.f32 0.0, %v1322
        %v1324 = vpop.f32.mrf.mxu0
        %1325 = vmatprep.mubr.bf16.mxu0 0
        %1326 = vmatmul.mubr.bf16.gmra.mxu0 %v1170
        %v1327 = vpop.f32.mrf.mxu0
        %v1328 = vadd.f32 0.0, %v1327
        %v1329 = vpop.f32.mrf.mxu0
        %v1330 = vpop.f32.mrf.mxu0
        %v1331 = vadd.f32 0.0, %v1330
        %v1332 = vpop.f32.mrf.mxu0
        %1333 = vmatprep.mubr.bf16.mxu0 0
        %1334 = vmatmul.mubr.bf16.gmra.mxu0 %v1171
        %v1335 = vpop.f32.mrf.mxu0
        %v1336 = vadd.f32 0.0, %v1335
        %v1337 = vpop.f32.mrf.mxu0
        %v1338 = vpop.f32.mrf.mxu0
        %v1339 = vadd.f32 0.0, %v1338
        %v1340 = vpop.f32.mrf.mxu0
        %1341 = vmatprep.mubr.bf16.mxu0 0
        %1342 = vmatmul.mubr.bf16.gmra.mxu0 %v1172
        %v1343 = vpop.f32.mrf.mxu0
        %v1344 = vadd.f32 0.0, %v1343
        %v1345 = vpop.f32.mrf.mxu0
        %v1346 = vpop.f32.mrf.mxu0
        %v1347 = vadd.f32 0.0, %v1346
        %v1348 = vpop.f32.mrf.mxu0
        %1349 = vmatprep.mubr.bf16.mxu0 0
        %1350 = vmatmul.mubr.bf16.gmra.mxu0 %v1173
        %v1351 = vpop.f32.mrf.mxu0
        %v1352 = vadd.f32 0.0, %v1351
        %v1353 = vpop.f32.mrf.mxu0
        %v1354 = vpop.f32.mrf.mxu0
        %v1355 = vadd.f32 0.0, %v1354
        %v1356 = vpop.f32.mrf.mxu0
        %1357 = vmatprep.mubr.bf16.mxu0 0
        %1358 = vmatmul.mubr.bf16.gmra.mxu0 %v1174
        %v1359 = vpop.f32.mrf.mxu0
        %v1360 = vadd.f32 0.0, %v1359
        %v1361 = vpop.f32.mrf.mxu0
        %v1362 = vpop.f32.mrf.mxu0
        %v1363 = vadd.f32 0.0, %v1362
        %v1364 = vpop.f32.mrf.mxu0
        %1365 = vmatprep.mubr.bf16.mxu0 0
        %1366 = vmatmul.mubr.bf16.gmra.mxu0 %v1175
        %v1367 = vpop.f32.mrf.mxu0
        %v1368 = vadd.f32 0.0, %v1367
        %v1369 = vpop.f32.mrf.mxu0
        %v1370 = vpop.f32.mrf.mxu0
        %v1371 = vadd.f32 0.0, %v1370
        %v1372 = vpop.f32.mrf.mxu0
        %1373 = vmatprep.mubr.bf16.mxu0 0
        %1374 = vmatmul.mubr.bf16.gmra.mxu0 %v1176
        %v1375 = vpop.f32.mrf.mxu0
        %v1376 = vadd.f32 0.0, %v1375
        %v1377 = vpop.f32.mrf.mxu0
        %v1378 = vpop.f32.mrf.mxu0
        %v1379 = vadd.f32 0.0, %v1378
        %v1380 = vpop.f32.mrf.mxu0
        %1381 = vmatprep.mubr.bf16.mxu0 0
        %1382 = vmatmul.mubr.bf16.gmra.mxu0 %v1177
        %v1383 = vpop.f32.mrf.mxu0
        %v1384 = vadd.f32 0.0, %v1383
        %v1385 = vpop.f32.mrf.mxu0
        %v1386 = vpop.f32.mrf.mxu0
        %v1387 = vadd.f32 0.0, %v1386
        %v1388 = vpop.f32.mrf.mxu0
        %1389 = vmatprep.mubr.bf16.mxu0 0
        %1390 = vmatmul.mubr.bf16.gmra.mxu0 %v1178
        %v1391 = vpop.f32.mrf.mxu0
        %v1392 = vadd.f32 0.0, %v1391
        %v1393 = vpop.f32.mrf.mxu0
        %v1394 = vpop.f32.mrf.mxu0
        %v1395 = vadd.f32 0.0, %v1394
        %v1396 = vpop.f32.mrf.mxu0
        %1397 = vmatprep.mubr.bf16.mxu0 0
        %1398 = vmatmul.mubr.bf16.gmra.mxu0 %v1179
        %v1399 = vpop.f32.mrf.mxu0
        %v1400 = vadd.f32 0.0, %v1399
        %v1401 = vpop.f32.mrf.mxu0
        %v1402 = vpop.f32.mrf.mxu0
        %v1403 = vadd.f32 0.0, %v1402
        %v1404 = vpop.f32.mrf.mxu0
        %1405 = vdwg.mxu0
        %v1406 = vadd.f32 %v1099, %v1280
        %v1407 = vadd.f32 %v1100, %v1283
        %v1408 = vadd.f32 %v1101, %v1288
        %v1409 = vadd.f32 %v1102, %v1291
        %v1410 = vadd.f32 %v1103, %v1296
        %v1411 = vadd.f32 %v1104, %v1299
        %v1412 = vadd.f32 %v1105, %v1304
        %v1413 = vadd.f32 %v1106, %v1307
        %v1414 = vadd.f32 %v1107, %v1312
        %v1415 = vadd.f32 %v1108, %v1315
        %v1416 = vadd.f32 %v1109, %v1320
        %v1417 = vadd.f32 %v1110, %v1323
        %v1418 = vadd.f32 %v1111, %v1328
        %v1419 = vadd.f32 %v1112, %v1331
        %v1420 = vadd.f32 %v1113, %v1336
        %v1421 = vadd.f32 %v1114, %v1339
        %v1422 = vadd.f32 %v1115, %v1344
        %v1423 = vadd.f32 %v1116, %v1347
        %v1424 = vadd.f32 %v1117, %v1352
        %v1425 = vadd.f32 %v1118, %v1355
        %v1426 = vadd.f32 %v1119, %v1360
        %v1427 = vadd.f32 %v1120, %v1363
        %v1428 = vadd.f32 %v1121, %v1368
        %v1429 = vadd.f32 %v1122, %v1371
        %v1430 = vadd.f32 %v1123, %v1376
        %v1431 = vadd.f32 %v1124, %v1379
        %v1432 = vadd.f32 %v1125, %v1384
        %v1433 = vadd.f32 %v1126, %v1387
        %v1434 = vadd.f32 %v1127, %v1392
        %v1435 = vadd.f32 %v1128, %v1395
        %v1436 = vadd.f32 %v1129, %v1400
        %v1437 = vadd.f32 %v1130, %v1403
        %v1438 = vld [vmem:[%s1131 + $0x1] sm:$0xff]
        %v1439 = vld [vmem:[%s1131 + $0x9] sm:$0xff]
        %v1440 = vld [vmem:[%s1131 + $0x19] sm:$0xff]
        %v1441 = vld [vmem:[%s1131 + $0x21] sm:$0xff]
        %v1442 = vld [vmem:[%s1131 + $0x31] sm:$0xff]
        %v1443 = vld [vmem:[%s1131 + $0x39] sm:$0xff]
        %v1444 = vld [vmem:[%s1131 + $0x49] sm:$0xff]
        %v1445 = vld [vmem:[%s1131 + $0x51] sm:$0xff]
        %v1446 = vld [vmem:[%s1131 + $0x61] sm:$0xff]
        %v1447 = vld [vmem:[%s1131 + $0x69] sm:$0xff]
        %v1448 = vld [vmem:[%s1131 + $0x79] sm:$0xff]
        %v1449 = vld [vmem:[%s1131 + $0x81] sm:$0xff]
        %v1450 = vld [vmem:[%s1131 + $0x91] sm:$0xff]
        %v1451 = vld [vmem:[%s1131 + $0x99] sm:$0xff]
        %v1452 = vld [vmem:[%s1131 + $0xa9] sm:$0xff]
        %v1453 = vld [vmem:[%s1131 + $0xb1] sm:$0xff]
        %v1454 = vld [vmem:[%s1131 + $0xc1] sm:$0xff]
        %v1455 = vld [vmem:[%s1131 + $0xc9] sm:$0xff]
        %v1456 = vld [vmem:[%s1131 + $0xd9] sm:$0xff]
        %v1457 = vld [vmem:[%s1131 + $0xe1] sm:$0xff]
        %v1458 = vld [vmem:[%s1131 + $0xf1] sm:$0xff]
        %v1459 = vld [vmem:[%s1131 + $0xf9] sm:$0xff]
        %v1460 = vld [vmem:[%s1131 + $0x109] sm:$0xff]
        %v1461 = vld [vmem:[%s1131 + $0x111] sm:$0xff]
        %v1462 = vld [vmem:[%s1131 + $0x121] sm:$0xff]
        %v1463 = vld [vmem:[%s1131 + $0x129] sm:$0xff]
        %v1464 = vld [vmem:[%s1131 + $0x139] sm:$0xff]
        %v1465 = vld [vmem:[%s1131 + $0x141] sm:$0xff]
        %v1466 = vld [vmem:[%s1131 + $0x151] sm:$0xff]
        %v1467 = vld [vmem:[%s1131 + $0x159] sm:$0xff]
        %v1468 = vld [vmem:[%s1131 + $0x169] sm:$0xff]
        %v1469 = vld [vmem:[%s1131 + $0x171] sm:$0xff]
        %v1470 = vpack.c.bf16 %v1439, %v1438
        %v1471 = vpack.c.bf16 %v1441, %v1440
        %v1472 = vpack.c.bf16 %v1443, %v1442
        %v1473 = vpack.c.bf16 %v1445, %v1444
        %v1474 = vpack.c.bf16 %v1447, %v1446
        %v1475 = vpack.c.bf16 %v1449, %v1448
        %v1476 = vpack.c.bf16 %v1451, %v1450
        %v1477 = vpack.c.bf16 %v1453, %v1452
        %v1478 = vpack.c.bf16 %v1455, %v1454
        %v1479 = vpack.c.bf16 %v1457, %v1456
        %v1480 = vpack.c.bf16 %v1459, %v1458
        %v1481 = vpack.c.bf16 %v1461, %v1460
        %v1482 = vpack.c.bf16 %v1463, %v1462
        %v1483 = vpack.c.bf16 %v1465, %v1464
        %v1484 = vpack.c.bf16 %v1467, %v1466
        %v1485 = vpack.c.bf16 %v1469, %v1468
        %s1486 = scalar_lea.vmem %s1, 256
        %v1487 = vld [vmem:[%s1486] sm:$0xf]
        %v1488 = vld [vmem:[%s1486 + $0x4] sm:$0xf]
        %v1489 = vld [vmem:[%s1486 + $0x8] sm:$0xf]
        %v1490 = vld [vmem:[%s1486 + $0xc] sm:$0xf]
        %v1491 = vld [vmem:[%s1486 + $0x10] sm:$0xf]
        %v1492 = vld [vmem:[%s1486 + $0x14] sm:$0xf]
        %v1493 = vld [vmem:[%s1486 + $0x18] sm:$0xf]
        %v1494 = vld [vmem:[%s1486 + $0x1c] sm:$0xf]
        %v1495 = vld [vmem:[%s1486 + $0x20] sm:$0xf]
        %v1496 = vld [vmem:[%s1486 + $0x24] sm:$0xf]
        %v1497 = vld [vmem:[%s1486 + $0x28] sm:$0xf]
        %v1498 = vld [vmem:[%s1486 + $0x2c] sm:$0xf]
        %v1499 = vld [vmem:[%s1486 + $0x30] sm:$0xf]
        %v1500 = vld [vmem:[%s1486 + $0x34] sm:$0xf]
        %v1501 = vld [vmem:[%s1486 + $0x38] sm:$0xf]
        %v1502 = vld [vmem:[%s1486 + $0x3c] sm:$0xf]
        %v1519 = vunpack.c.l.b16 %v1487
        %v1520 = vunpack.c.l.b16 %v1488
        %v1521 = vunpack.c.l.b16 %v1489
        %v1522 = vunpack.c.l.b16 %v1490
        %v1523 = vunpack.c.l.b16 %v1491
        %v1524 = vunpack.c.l.b16 %v1492
        %v1525 = vunpack.c.l.b16 %v1493
        %v1526 = vunpack.c.l.b16 %v1494
        %v1527 = vunpack.c.l.b16 %v1495
        %v1528 = vunpack.c.l.b16 %v1496
        %v1529 = vunpack.c.l.b16 %v1497
        %v1530 = vunpack.c.l.b16 %v1498
        %v1531 = vunpack.c.l.b16 %v1499
        %v1532 = vunpack.c.l.b16 %v1500
        %v1533 = vunpack.c.l.b16 %v1501
        %v1534 = vunpack.c.l.b16 %v1502
        %v1535 = vpack.c.b16 %v1520, %v1519
        %v1536 = vpack.c.b16 %v1522, %v1521
        %v1537 = vpack.c.b16 %v1524, %v1523
        %v1538 = vpack.c.b16 %v1526, %v1525
        %v1539 = vpack.c.b16 %v1528, %v1527
        %v1540 = vpack.c.b16 %v1530, %v1529
        %v1541 = vpack.c.b16 %v1532, %v1531
        %v1542 = vpack.c.b16 %v1534, %v1533
        %1551 = vmatprep.subr.bf16.mxu0 0
        %1552 = vmatpush1.bf16.msra.mxu0 %v1542
        %1553 = vmatprep.subr.bf16.mxu0 0
        %1554 = vmatpush1.bf16.msra.mxu0 %v1541
        %1555 = vmatprep.subr.bf16.mxu0 0
        %1556 = vmatpush1.bf16.msra.mxu0 %v1540
        %1557 = vmatprep.subr.bf16.mxu0 0
        %1558 = vmatpush1.bf16.msra.mxu0 %v1539
        %1559 = vmatprep.subr.bf16.mxu0 0
        %1560 = vmatpush1.bf16.msra.mxu0 %v1538
        %1561 = vmatprep.subr.bf16.mxu0 0
        %1562 = vmatpush1.bf16.msra.mxu0 %v1537
        %1563 = vmatprep.subr.bf16.mxu0 0
        %1564 = vmatpush1.bf16.msra.mxu0 %v1536
        %1565 = vmatprep.subr.bf16.mxu0 0
        %1566 = vmatpush1.bf16.msra.mxu0 %v1535
        %1567 = vmatprep.subr.bf16.mxu0 0
        %1568 = vmatpush2.bf16.msra.mxu0 0
        %1569 = vmatprep.subr.bf16.mxu0 0
        %1570 = vmatpush2.bf16.msra.mxu0 0
        %1571 = vmatprep.subr.bf16.mxu0 0
        %1572 = vmatpush2.bf16.msra.mxu0 0
        %1573 = vmatprep.subr.bf16.mxu0 0
        %1574 = vmatpush2.bf16.msra.mxu0 0
        %1575 = vmatprep.subr.bf16.mxu0 0
        %1576 = vmatpush2.bf16.msra.mxu0 0
        %1577 = vmatprep.subr.bf16.mxu0 0
        %1578 = vmatpush2.bf16.msra.mxu0 0
        %1579 = vmatprep.subr.bf16.mxu0 0
        %1580 = vmatpush2.bf16.msra.mxu0 0
        %1581 = vmatprep.subr.bf16.mxu0 0
        %1582 = vmatpush2.bf16.msra.mxu0 0
        %1583 = vmatprep.mubr.bf16.mxu0 0
        %1584 = vmatmul.mubr.bf16.gmra.mxu0 %v1470
        %v1585 = vpop.f32.mrf.mxu0
        %v1586 = vadd.f32 0.0, %v1585
        %v1587 = vpop.f32.mrf.mxu0
        %v1588 = vpop.f32.mrf.mxu0
        %v1589 = vadd.f32 0.0, %v1588
        %v1590 = vpop.f32.mrf.mxu0
        %1591 = vmatprep.mubr.bf16.mxu0 0
        %1592 = vmatmul.mubr.bf16.gmra.mxu0 %v1471
        %v1593 = vpop.f32.mrf.mxu0
        %v1594 = vadd.f32 0.0, %v1593
        %v1595 = vpop.f32.mrf.mxu0
        %v1596 = vpop.f32.mrf.mxu0
        %v1597 = vadd.f32 0.0, %v1596
        %v1598 = vpop.f32.mrf.mxu0
        %1599 = vmatprep.mubr.bf16.mxu0 0
        %1600 = vmatmul.mubr.bf16.gmra.mxu0 %v1472
        %v1601 = vpop.f32.mrf.mxu0
        %v1602 = vadd.f32 0.0, %v1601
        %v1603 = vpop.f32.mrf.mxu0
        %v1604 = vpop.f32.mrf.mxu0
        %v1605 = vadd.f32 0.0, %v1604
        %v1606 = vpop.f32.mrf.mxu0
        %1607 = vmatprep.mubr.bf16.mxu0 0
        %1608 = vmatmul.mubr.bf16.gmra.mxu0 %v1473
        %v1609 = vpop.f32.mrf.mxu0
        %v1610 = vadd.f32 0.0, %v1609
        %v1611 = vpop.f32.mrf.mxu0
        %v1612 = vpop.f32.mrf.mxu0
        %v1613 = vadd.f32 0.0, %v1612
        %v1614 = vpop.f32.mrf.mxu0
        %1615 = vmatprep.mubr.bf16.mxu0 0
        %1616 = vmatmul.mubr.bf16.gmra.mxu0 %v1474
        %v1617 = vpop.f32.mrf.mxu0
        %v1618 = vadd.f32 0.0, %v1617
        %v1619 = vpop.f32.mrf.mxu0
        %v1620 = vpop.f32.mrf.mxu0
        %v1621 = vadd.f32 0.0, %v1620
        %v1622 = vpop.f32.mrf.mxu0
        %1623 = vmatprep.mubr.bf16.mxu0 0
        %1624 = vmatmul.mubr.bf16.gmra.mxu0 %v1475
        %v1625 = vpop.f32.mrf.mxu0
        %v1626 = vadd.f32 0.0, %v1625
        %v1627 = vpop.f32.mrf.mxu0
        %v1628 = vpop.f32.mrf.mxu0
        %v1629 = vadd.f32 0.0, %v1628
        %v1630 = vpop.f32.mrf.mxu0
        %1631 = vmatprep.mubr.bf16.mxu0 0
        %1632 = vmatmul.mubr.bf16.gmra.mxu0 %v1476
        %v1633 = vpop.f32.mrf.mxu0
        %v1634 = vadd.f32 0.0, %v1633
        %v1635 = vpop.f32.mrf.mxu0
        %v1636 = vpop.f32.mrf.mxu0
        %v1637 = vadd.f32 0.0, %v1636
        %v1638 = vpop.f32.mrf.mxu0
        %1639 = vmatprep.mubr.bf16.mxu0 0
        %1640 = vmatmul.mubr.bf16.gmra.mxu0 %v1477
        %v1641 = vpop.f32.mrf.mxu0
        %v1642 = vadd.f32 0.0, %v1641
        %v1643 = vpop.f32.mrf.mxu0
        %v1644 = vpop.f32.mrf.mxu0
        %v1645 = vadd.f32 0.0, %v1644
        %v1646 = vpop.f32.mrf.mxu0
        %1647 = vmatprep.mubr.bf16.mxu0 0
        %1648 = vmatmul.mubr.bf16.gmra.mxu0 %v1478
        %v1649 = vpop.f32.mrf.mxu0
        %v1650 = vadd.f32 0.0, %v1649
        %v1651 = vpop.f32.mrf.mxu0
        %v1652 = vpop.f32.mrf.mxu0
        %v1653 = vadd.f32 0.0, %v1652
        %v1654 = vpop.f32.mrf.mxu0
        %1655 = vmatprep.mubr.bf16.mxu0 0
        %1656 = vmatmul.mubr.bf16.gmra.mxu0 %v1479
        %v1657 = vpop.f32.mrf.mxu0
        %v1658 = vadd.f32 0.0, %v1657
        %v1659 = vpop.f32.mrf.mxu0
        %v1660 = vpop.f32.mrf.mxu0
        %v1661 = vadd.f32 0.0, %v1660
        %v1662 = vpop.f32.mrf.mxu0
        %1663 = vmatprep.mubr.bf16.mxu0 0
        %1664 = vmatmul.mubr.bf16.gmra.mxu0 %v1480
        %v1665 = vpop.f32.mrf.mxu0
        %v1666 = vadd.f32 0.0, %v1665
        %v1667 = vpop.f32.mrf.mxu0
        %v1668 = vpop.f32.mrf.mxu0
        %v1669 = vadd.f32 0.0, %v1668
        %v1670 = vpop.f32.mrf.mxu0
        %1671 = vmatprep.mubr.bf16.mxu0 0
        %1672 = vmatmul.mubr.bf16.gmra.mxu0 %v1481
        %v1673 = vpop.f32.mrf.mxu0
        %v1674 = vadd.f32 0.0, %v1673
        %v1675 = vpop.f32.mrf.mxu0
        %v1676 = vpop.f32.mrf.mxu0
        %v1677 = vadd.f32 0.0, %v1676
        %v1678 = vpop.f32.mrf.mxu0
        %1679 = vmatprep.mubr.bf16.mxu0 0
        %1680 = vmatmul.mubr.bf16.gmra.mxu0 %v1482
        %v1681 = vpop.f32.mrf.mxu0
        %v1682 = vadd.f32 0.0, %v1681
        %v1683 = vpop.f32.mrf.mxu0
        %v1684 = vpop.f32.mrf.mxu0
        %v1685 = vadd.f32 0.0, %v1684
        %v1686 = vpop.f32.mrf.mxu0
        %1687 = vmatprep.mubr.bf16.mxu0 0
        %1688 = vmatmul.mubr.bf16.gmra.mxu0 %v1483
        %v1689 = vpop.f32.mrf.mxu0
        %v1690 = vadd.f32 0.0, %v1689
        %v1691 = vpop.f32.mrf.mxu0
        %v1692 = vpop.f32.mrf.mxu0
        %v1693 = vadd.f32 0.0, %v1692
        %v1694 = vpop.f32.mrf.mxu0
        %1695 = vmatprep.mubr.bf16.mxu0 0
        %1696 = vmatmul.mubr.bf16.gmra.mxu0 %v1484
        %v1697 = vpop.f32.mrf.mxu0
        %v1698 = vadd.f32 0.0, %v1697
        %v1699 = vpop.f32.mrf.mxu0
        %v1700 = vpop.f32.mrf.mxu0
        %v1701 = vadd.f32 0.0, %v1700
        %v1702 = vpop.f32.mrf.mxu0
        %1703 = vmatprep.mubr.bf16.mxu0 0
        %1704 = vmatmul.mubr.bf16.gmra.mxu0 %v1485
        %v1705 = vpop.f32.mrf.mxu0
        %v1706 = vadd.f32 0.0, %v1705
        %v1707 = vpop.f32.mrf.mxu0
        %v1708 = vpop.f32.mrf.mxu0
        %v1709 = vadd.f32 0.0, %v1708
        %v1710 = vpop.f32.mrf.mxu0
        %1711 = vdwg.mxu0
        %v1712 = vadd.f32 %v1406, %v1586
        %v1713 = vadd.f32 %v1407, %v1589
        %v1714 = vadd.f32 %v1408, %v1594
        %v1715 = vadd.f32 %v1409, %v1597
        %v1716 = vadd.f32 %v1410, %v1602
        %v1717 = vadd.f32 %v1411, %v1605
        %v1718 = vadd.f32 %v1412, %v1610
        %v1719 = vadd.f32 %v1413, %v1613
        %v1720 = vadd.f32 %v1414, %v1618
        %v1721 = vadd.f32 %v1415, %v1621
        %v1722 = vadd.f32 %v1416, %v1626
        %v1723 = vadd.f32 %v1417, %v1629
        %v1724 = vadd.f32 %v1418, %v1634
        %v1725 = vadd.f32 %v1419, %v1637
        %v1726 = vadd.f32 %v1420, %v1642
        %v1727 = vadd.f32 %v1421, %v1645
        %v1728 = vadd.f32 %v1422, %v1650
        %v1729 = vadd.f32 %v1423, %v1653
        %v1730 = vadd.f32 %v1424, %v1658
        %v1731 = vadd.f32 %v1425, %v1661
        %v1732 = vadd.f32 %v1426, %v1666
        %v1733 = vadd.f32 %v1427, %v1669
        %v1734 = vadd.f32 %v1428, %v1674
        %v1735 = vadd.f32 %v1429, %v1677
        %v1736 = vadd.f32 %v1430, %v1682
        %v1737 = vadd.f32 %v1431, %v1685
        %v1738 = vadd.f32 %v1432, %v1690
        %v1739 = vadd.f32 %v1433, %v1693
        %v1740 = vadd.f32 %v1434, %v1698
        %v1741 = vadd.f32 %v1435, %v1701
        %v1742 = vadd.f32 %v1436, %v1706
        %v1743 = vadd.f32 %v1437, %v1709
        %v1744 = vld [vmem:[%s1131 + $0x2] sm:$0xff]
        %v1745 = vld [vmem:[%s1131 + $0xa] sm:$0xff]
        %v1746 = vld [vmem:[%s1131 + $0x1a] sm:$0xff]
        %v1747 = vld [vmem:[%s1131 + $0x22] sm:$0xff]
        %v1748 = vld [vmem:[%s1131 + $0x32] sm:$0xff]
        %v1749 = vld [vmem:[%s1131 + $0x3a] sm:$0xff]
        %v1750 = vld [vmem:[%s1131 + $0x4a] sm:$0xff]
        %v1751 = vld [vmem:[%s1131 + $0x52] sm:$0xff]
        %v1752 = vld [vmem:[%s1131 + $0x62] sm:$0xff]
        %v1753 = vld [vmem:[%s1131 + $0x6a] sm:$0xff]
        %v1754 = vld [vmem:[%s1131 + $0x7a] sm:$0xff]
        %v1755 = vld [vmem:[%s1131 + $0x82] sm:$0xff]
        %v1756 = vld [vmem:[%s1131 + $0x92] sm:$0xff]
        %v1757 = vld [vmem:[%s1131 + $0x9a] sm:$0xff]
        %v1758 = vld [vmem:[%s1131 + $0xaa] sm:$0xff]
        %v1759 = vld [vmem:[%s1131 + $0xb2] sm:$0xff]
        %v1760 = vld [vmem:[%s1131 + $0xc2] sm:$0xff]
        %v1761 = vld [vmem:[%s1131 + $0xca] sm:$0xff]
        %v1762 = vld [vmem:[%s1131 + $0xda] sm:$0xff]
        %v1763 = vld [vmem:[%s1131 + $0xe2] sm:$0xff]
        %v1764 = vld [vmem:[%s1131 + $0xf2] sm:$0xff]
        %v1765 = vld [vmem:[%s1131 + $0xfa] sm:$0xff]
        %v1766 = vld [vmem:[%s1131 + $0x10a] sm:$0xff]
        %v1767 = vld [vmem:[%s1131 + $0x112] sm:$0xff]
        %v1768 = vld [vmem:[%s1131 + $0x122] sm:$0xff]
        %v1769 = vld [vmem:[%s1131 + $0x12a] sm:$0xff]
        %v1770 = vld [vmem:[%s1131 + $0x13a] sm:$0xff]
        %v1771 = vld [vmem:[%s1131 + $0x142] sm:$0xff]
        %v1772 = vld [vmem:[%s1131 + $0x152] sm:$0xff]
        %v1773 = vld [vmem:[%s1131 + $0x15a] sm:$0xff]
        %v1774 = vld [vmem:[%s1131 + $0x16a] sm:$0xff]
        %v1775 = vld [vmem:[%s1131 + $0x172] sm:$0xff]
        %v1776 = vpack.c.bf16 %v1745, %v1744
        %v1777 = vpack.c.bf16 %v1747, %v1746
        %v1778 = vpack.c.bf16 %v1749, %v1748
        %v1779 = vpack.c.bf16 %v1751, %v1750
        %v1780 = vpack.c.bf16 %v1753, %v1752
        %v1781 = vpack.c.bf16 %v1755, %v1754
        %v1782 = vpack.c.bf16 %v1757, %v1756
        %v1783 = vpack.c.bf16 %v1759, %v1758
        %v1784 = vpack.c.bf16 %v1761, %v1760
        %v1785 = vpack.c.bf16 %v1763, %v1762
        %v1786 = vpack.c.bf16 %v1765, %v1764
        %v1787 = vpack.c.bf16 %v1767, %v1766
        %v1788 = vpack.c.bf16 %v1769, %v1768
        %v1789 = vpack.c.bf16 %v1771, %v1770
        %v1790 = vpack.c.bf16 %v1773, %v1772
        %v1791 = vpack.c.bf16 %v1775, %v1774
        %s1792 = scalar_lea.vmem %s1, 320
        %v1793 = vld [vmem:[%s1792] sm:$0xf]
        %v1794 = vld [vmem:[%s1792 + $0x4] sm:$0xf]
        %v1795 = vld [vmem:[%s1792 + $0x8] sm:$0xf]
        %v1796 = vld [vmem:[%s1792 + $0xc] sm:$0xf]
        %v1797 = vld [vmem:[%s1792 + $0x10] sm:$0xf]
        %v1798 = vld [vmem:[%s1792 + $0x14] sm:$0xf]
        %v1799 = vld [vmem:[%s1792 + $0x18] sm:$0xf]
        %v1800 = vld [vmem:[%s1792 + $0x1c] sm:$0xf]
        %v1801 = vld [vmem:[%s1792 + $0x20] sm:$0xf]
        %v1802 = vld [vmem:[%s1792 + $0x24] sm:$0xf]
        %v1803 = vld [vmem:[%s1792 + $0x28] sm:$0xf]
        %v1804 = vld [vmem:[%s1792 + $0x2c] sm:$0xf]
        %v1805 = vld [vmem:[%s1792 + $0x30] sm:$0xf]
        %v1806 = vld [vmem:[%s1792 + $0x34] sm:$0xf]
        %v1807 = vld [vmem:[%s1792 + $0x38] sm:$0xf]
        %v1808 = vld [vmem:[%s1792 + $0x3c] sm:$0xf]
        %v1825 = vunpack.c.l.b16 %v1793
        %v1826 = vunpack.c.l.b16 %v1794
        %v1827 = vunpack.c.l.b16 %v1795
        %v1828 = vunpack.c.l.b16 %v1796
        %v1829 = vunpack.c.l.b16 %v1797
        %v1830 = vunpack.c.l.b16 %v1798
        %v1831 = vunpack.c.l.b16 %v1799
        %v1832 = vunpack.c.l.b16 %v1800
        %v1833 = vunpack.c.l.b16 %v1801
        %v1834 = vunpack.c.l.b16 %v1802
        %v1835 = vunpack.c.l.b16 %v1803
        %v1836 = vunpack.c.l.b16 %v1804
        %v1837 = vunpack.c.l.b16 %v1805
        %v1838 = vunpack.c.l.b16 %v1806
        %v1839 = vunpack.c.l.b16 %v1807
        %v1840 = vunpack.c.l.b16 %v1808
        %v1841 = vpack.c.b16 %v1826, %v1825
        %v1842 = vpack.c.b16 %v1828, %v1827
        %v1843 = vpack.c.b16 %v1830, %v1829
        %v1844 = vpack.c.b16 %v1832, %v1831
        %v1845 = vpack.c.b16 %v1834, %v1833
        %v1846 = vpack.c.b16 %v1836, %v1835
        %v1847 = vpack.c.b16 %v1838, %v1837
        %v1848 = vpack.c.b16 %v1840, %v1839
        %1857 = vmatprep.subr.bf16.mxu0 0
        %1858 = vmatpush1.bf16.msra.mxu0 %v1848
        %1859 = vmatprep.subr.bf16.mxu0 0
        %1860 = vmatpush1.bf16.msra.mxu0 %v1847
        %1861 = vmatprep.subr.bf16.mxu0 0
        %1862 = vmatpush1.bf16.msra.mxu0 %v1846
        %1863 = vmatprep.subr.bf16.mxu0 0
        %1864 = vmatpush1.bf16.msra.mxu0 %v1845
        %1865 = vmatprep.subr.bf16.mxu0 0
        %1866 = vmatpush1.bf16.msra.mxu0 %v1844
        %1867 = vmatprep.subr.bf16.mxu0 0
        %1868 = vmatpush1.bf16.msra.mxu0 %v1843
        %1869 = vmatprep.subr.bf16.mxu0 0
        %1870 = vmatpush1.bf16.msra.mxu0 %v1842
        %1871 = vmatprep.subr.bf16.mxu0 0
        %1872 = vmatpush1.bf16.msra.mxu0 %v1841
        %1873 = vmatprep.subr.bf16.mxu0 0
        %1874 = vmatpush2.bf16.msra.mxu0 0
        %1875 = vmatprep.subr.bf16.mxu0 0
        %1876 = vmatpush2.bf16.msra.mxu0 0
        %1877 = vmatprep.subr.bf16.mxu0 0
        %1878 = vmatpush2.bf16.msra.mxu0 0
        %1879 = vmatprep.subr.bf16.mxu0 0
        %1880 = vmatpush2.bf16.msra.mxu0 0
        %1881 = vmatprep.subr.bf16.mxu0 0
        %1882 = vmatpush2.bf16.msra.mxu0 0
        %1883 = vmatprep.subr.bf16.mxu0 0
        %1884 = vmatpush2.bf16.msra.mxu0 0
        %1885 = vmatprep.subr.bf16.mxu0 0
        %1886 = vmatpush2.bf16.msra.mxu0 0
        %1887 = vmatprep.subr.bf16.mxu0 0
        %1888 = vmatpush2.bf16.msra.mxu0 0
        %1889 = vmatprep.mubr.bf16.mxu0 0
        %1890 = vmatmul.mubr.bf16.gmra.mxu0 %v1776
        %v1891 = vpop.f32.mrf.mxu0
        %v1892 = vadd.f32 0.0, %v1891
        %v1893 = vpop.f32.mrf.mxu0
        %v1894 = vpop.f32.mrf.mxu0
        %v1895 = vadd.f32 0.0, %v1894
        %v1896 = vpop.f32.mrf.mxu0
        %1897 = vmatprep.mubr.bf16.mxu0 0
        %1898 = vmatmul.mubr.bf16.gmra.mxu0 %v1777
        %v1899 = vpop.f32.mrf.mxu0
        %v1900 = vadd.f32 0.0, %v1899
        %v1901 = vpop.f32.mrf.mxu0
        %v1902 = vpop.f32.mrf.mxu0
        %v1903 = vadd.f32 0.0, %v1902
        %v1904 = vpop.f32.mrf.mxu0
        %1905 = vmatprep.mubr.bf16.mxu0 0
        %1906 = vmatmul.mubr.bf16.gmra.mxu0 %v1778
        %v1907 = vpop.f32.mrf.mxu0
        %v1908 = vadd.f32 0.0, %v1907
        %v1909 = vpop.f32.mrf.mxu0
        %v1910 = vpop.f32.mrf.mxu0
        %v1911 = vadd.f32 0.0, %v1910
        %v1912 = vpop.f32.mrf.mxu0
        %1913 = vmatprep.mubr.bf16.mxu0 0
        %1914 = vmatmul.mubr.bf16.gmra.mxu0 %v1779
        %v1915 = vpop.f32.mrf.mxu0
        %v1916 = vadd.f32 0.0, %v1915
        %v1917 = vpop.f32.mrf.mxu0
        %v1918 = vpop.f32.mrf.mxu0
        %v1919 = vadd.f32 0.0, %v1918
        %v1920 = vpop.f32.mrf.mxu0
        %1921 = vmatprep.mubr.bf16.mxu0 0
        %1922 = vmatmul.mubr.bf16.gmra.mxu0 %v1780
        %v1923 = vpop.f32.mrf.mxu0
        %v1924 = vadd.f32 0.0, %v1923
        %v1925 = vpop.f32.mrf.mxu0
        %v1926 = vpop.f32.mrf.mxu0
        %v1927 = vadd.f32 0.0, %v1926
        %v1928 = vpop.f32.mrf.mxu0
        %1929 = vmatprep.mubr.bf16.mxu0 0
        %1930 = vmatmul.mubr.bf16.gmra.mxu0 %v1781
        %v1931 = vpop.f32.mrf.mxu0
        %v1932 = vadd.f32 0.0, %v1931
        %v1933 = vpop.f32.mrf.mxu0
        %v1934 = vpop.f32.mrf.mxu0
        %v1935 = vadd.f32 0.0, %v1934
        %v1936 = vpop.f32.mrf.mxu0
        %1937 = vmatprep.mubr.bf16.mxu0 0
        %1938 = vmatmul.mubr.bf16.gmra.mxu0 %v1782
        %v1939 = vpop.f32.mrf.mxu0
        %v1940 = vadd.f32 0.0, %v1939
        %v1941 = vpop.f32.mrf.mxu0
        %v1942 = vpop.f32.mrf.mxu0
        %v1943 = vadd.f32 0.0, %v1942
        %v1944 = vpop.f32.mrf.mxu0
        %1945 = vmatprep.mubr.bf16.mxu0 0
        %1946 = vmatmul.mubr.bf16.gmra.mxu0 %v1783
        %v1947 = vpop.f32.mrf.mxu0
        %v1948 = vadd.f32 0.0, %v1947
        %v1949 = vpop.f32.mrf.mxu0
        %v1950 = vpop.f32.mrf.mxu0
        %v1951 = vadd.f32 0.0, %v1950
        %v1952 = vpop.f32.mrf.mxu0
        %1953 = vmatprep.mubr.bf16.mxu0 0
        %1954 = vmatmul.mubr.bf16.gmra.mxu0 %v1784
        %v1955 = vpop.f32.mrf.mxu0
        %v1956 = vadd.f32 0.0, %v1955
        %v1957 = vpop.f32.mrf.mxu0
        %v1958 = vpop.f32.mrf.mxu0
        %v1959 = vadd.f32 0.0, %v1958
        %v1960 = vpop.f32.mrf.mxu0
        %1961 = vmatprep.mubr.bf16.mxu0 0
        %1962 = vmatmul.mubr.bf16.gmra.mxu0 %v1785
        %v1963 = vpop.f32.mrf.mxu0
        %v1964 = vadd.f32 0.0, %v1963
        %v1965 = vpop.f32.mrf.mxu0
        %v1966 = vpop.f32.mrf.mxu0
        %v1967 = vadd.f32 0.0, %v1966
        %v1968 = vpop.f32.mrf.mxu0
        %1969 = vmatprep.mubr.bf16.mxu0 0
        %1970 = vmatmul.mubr.bf16.gmra.mxu0 %v1786
        %v1971 = vpop.f32.mrf.mxu0
        %v1972 = vadd.f32 0.0, %v1971
        %v1973 = vpop.f32.mrf.mxu0
        %v1974 = vpop.f32.mrf.mxu0
        %v1975 = vadd.f32 0.0, %v1974
        %v1976 = vpop.f32.mrf.mxu0
        %1977 = vmatprep.mubr.bf16.mxu0 0
        %1978 = vmatmul.mubr.bf16.gmra.mxu0 %v1787
        %v1979 = vpop.f32.mrf.mxu0
        %v1980 = vadd.f32 0.0, %v1979
        %v1981 = vpop.f32.mrf.mxu0
        %v1982 = vpop.f32.mrf.mxu0
        %v1983 = vadd.f32 0.0, %v1982
        %v1984 = vpop.f32.mrf.mxu0
        %1985 = vmatprep.mubr.bf16.mxu0 0
        %1986 = vmatmul.mubr.bf16.gmra.mxu0 %v1788
        %v1987 = vpop.f32.mrf.mxu0
        %v1988 = vadd.f32 0.0, %v1987
        %v1989 = vpop.f32.mrf.mxu0
        %v1990 = vpop.f32.mrf.mxu0
        %v1991 = vadd.f32 0.0, %v1990
        %v1992 = vpop.f32.mrf.mxu0
        %1993 = vmatprep.mubr.bf16.mxu0 0
        %1994 = vmatmul.mubr.bf16.gmra.mxu0 %v1789
        %v1995 = vpop.f32.mrf.mxu0
        %v1996 = vadd.f32 0.0, %v1995
        %v1997 = vpop.f32.mrf.mxu0
        %v1998 = vpop.f32.mrf.mxu0
        %v1999 = vadd.f32 0.0, %v1998
        %v2000 = vpop.f32.mrf.mxu0
        %2001 = vmatprep.mubr.bf16.mxu0 0
        %2002 = vmatmul.mubr.bf16.gmra.mxu0 %v1790
        %v2003 = vpop.f32.mrf.mxu0
        %v2004 = vadd.f32 0.0, %v2003
        %v2005 = vpop.f32.mrf.mxu0
        %v2006 = vpop.f32.mrf.mxu0
        %v2007 = vadd.f32 0.0, %v2006
        %v2008 = vpop.f32.mrf.mxu0
        %2009 = vmatprep.mubr.bf16.mxu0 0
        %2010 = vmatmul.mubr.bf16.gmra.mxu0 %v1791
        %v2011 = vpop.f32.mrf.mxu0
        %v2012 = vadd.f32 0.0, %v2011
        %v2013 = vpop.f32.mrf.mxu0
        %v2014 = vpop.f32.mrf.mxu0
        %v2015 = vadd.f32 0.0, %v2014
        %v2016 = vpop.f32.mrf.mxu0
        %2017 = vdwg.mxu0
        %v2018 = vadd.f32 %v1712, %v1892
        %v2019 = vadd.f32 %v1713, %v1895
        %v2020 = vadd.f32 %v1714, %v1900
        %v2021 = vadd.f32 %v1715, %v1903
        %v2022 = vadd.f32 %v1716, %v1908
        %v2023 = vadd.f32 %v1717, %v1911
        %v2024 = vadd.f32 %v1718, %v1916
        %v2025 = vadd.f32 %v1719, %v1919
        %v2026 = vadd.f32 %v1720, %v1924
        %v2027 = vadd.f32 %v1721, %v1927
        %v2028 = vadd.f32 %v1722, %v1932
        %v2029 = vadd.f32 %v1723, %v1935
        %v2030 = vadd.f32 %v1724, %v1940
        %v2031 = vadd.f32 %v1725, %v1943
        %v2032 = vadd.f32 %v1726, %v1948
        %v2033 = vadd.f32 %v1727, %v1951
        %v2034 = vadd.f32 %v1728, %v1956
        %v2035 = vadd.f32 %v1729, %v1959
        %v2036 = vadd.f32 %v1730, %v1964
        %v2037 = vadd.f32 %v1731, %v1967
        %v2038 = vadd.f32 %v1732, %v1972
        %v2039 = vadd.f32 %v1733, %v1975
        %v2040 = vadd.f32 %v1734, %v1980
        %v2041 = vadd.f32 %v1735, %v1983
        %v2042 = vadd.f32 %v1736, %v1988
        %v2043 = vadd.f32 %v1737, %v1991
        %v2044 = vadd.f32 %v1738, %v1996
        %v2045 = vadd.f32 %v1739, %v1999
        %v2046 = vadd.f32 %v1740, %v2004
        %v2047 = vadd.f32 %v1741, %v2007
        %v2048 = vadd.f32 %v1742, %v2012
        %v2049 = vadd.f32 %v1743, %v2015
        %s2050 = scalar_lea.vmem %s275, 48
        %v2051 = vld [vmem:[%s2050] sm:$0xff]
        %v2052 = vld [vmem:[%s2050 + $0x8] sm:$0xff]
        %v2053 = vld [vmem:[%s2050 + $0x18] sm:$0xff]
        %v2054 = vld [vmem:[%s2050 + $0x20] sm:$0xff]
        %v2055 = vld [vmem:[%s2050 + $0x30] sm:$0xff]
        %v2056 = vld [vmem:[%s2050 + $0x38] sm:$0xff]
        %v2057 = vld [vmem:[%s2050 + $0x48] sm:$0xff]
        %v2058 = vld [vmem:[%s2050 + $0x50] sm:$0xff]
        %v2059 = vld [vmem:[%s2050 + $0x60] sm:$0xff]
        %v2060 = vld [vmem:[%s2050 + $0x68] sm:$0xff]
        %v2061 = vld [vmem:[%s2050 + $0x78] sm:$0xff]
        %v2062 = vld [vmem:[%s2050 + $0x80] sm:$0xff]
        %v2063 = vld [vmem:[%s2050 + $0x90] sm:$0xff]
        %v2064 = vld [vmem:[%s2050 + $0x98] sm:$0xff]
        %v2065 = vld [vmem:[%s2050 + $0xa8] sm:$0xff]
        %v2066 = vld [vmem:[%s2050 + $0xb0] sm:$0xff]
        %v2067 = vld [vmem:[%s2050 + $0xc0] sm:$0xff]
        %v2068 = vld [vmem:[%s2050 + $0xc8] sm:$0xff]
        %v2069 = vld [vmem:[%s2050 + $0xd8] sm:$0xff]
        %v2070 = vld [vmem:[%s2050 + $0xe0] sm:$0xff]
        %v2071 = vld [vmem:[%s2050 + $0xf0] sm:$0xff]
        %v2072 = vld [vmem:[%s2050 + $0xf8] sm:$0xff]
        %v2073 = vld [vmem:[%s2050 + $0x108] sm:$0xff]
        %v2074 = vld [vmem:[%s2050 + $0x110] sm:$0xff]
        %v2075 = vld [vmem:[%s2050 + $0x120] sm:$0xff]
        %v2076 = vld [vmem:[%s2050 + $0x128] sm:$0xff]
        %v2077 = vld [vmem:[%s2050 + $0x138] sm:$0xff]
        %v2078 = vld [vmem:[%s2050 + $0x140] sm:$0xff]
        %v2079 = vld [vmem:[%s2050 + $0x150] sm:$0xff]
        %v2080 = vld [vmem:[%s2050 + $0x158] sm:$0xff]
        %v2081 = vld [vmem:[%s2050 + $0x168] sm:$0xff]
        %v2082 = vld [vmem:[%s2050 + $0x170] sm:$0xff]
        %v2083 = vpack.c.bf16 %v2052, %v2051
        %v2084 = vpack.c.bf16 %v2054, %v2053
        %v2085 = vpack.c.bf16 %v2056, %v2055
        %v2086 = vpack.c.bf16 %v2058, %v2057
        %v2087 = vpack.c.bf16 %v2060, %v2059
        %v2088 = vpack.c.bf16 %v2062, %v2061
        %v2089 = vpack.c.bf16 %v2064, %v2063
        %v2090 = vpack.c.bf16 %v2066, %v2065
        %v2091 = vpack.c.bf16 %v2068, %v2067
        %v2092 = vpack.c.bf16 %v2070, %v2069
        %v2093 = vpack.c.bf16 %v2072, %v2071
        %v2094 = vpack.c.bf16 %v2074, %v2073
        %v2095 = vpack.c.bf16 %v2076, %v2075
        %v2096 = vpack.c.bf16 %v2078, %v2077
        %v2097 = vpack.c.bf16 %v2080, %v2079
        %v2098 = vpack.c.bf16 %v2082, %v2081
        %s2099 = scalar_lea.vmem %s1, 384
        %v2100 = vld [vmem:[%s2099] sm:$0xf]
        %v2101 = vld [vmem:[%s2099 + $0x4] sm:$0xf]
        %v2102 = vld [vmem:[%s2099 + $0x8] sm:$0xf]
        %v2103 = vld [vmem:[%s2099 + $0xc] sm:$0xf]
        %v2104 = vld [vmem:[%s2099 + $0x10] sm:$0xf]
        %v2105 = vld [vmem:[%s2099 + $0x14] sm:$0xf]
        %v2106 = vld [vmem:[%s2099 + $0x18] sm:$0xf]
        %v2107 = vld [vmem:[%s2099 + $0x1c] sm:$0xf]
        %v2108 = vld [vmem:[%s2099 + $0x20] sm:$0xf]
        %v2109 = vld [vmem:[%s2099 + $0x24] sm:$0xf]
        %v2110 = vld [vmem:[%s2099 + $0x28] sm:$0xf]
        %v2111 = vld [vmem:[%s2099 + $0x2c] sm:$0xf]
        %v2112 = vld [vmem:[%s2099 + $0x30] sm:$0xf]
        %v2113 = vld [vmem:[%s2099 + $0x34] sm:$0xf]
        %v2114 = vld [vmem:[%s2099 + $0x38] sm:$0xf]
        %v2115 = vld [vmem:[%s2099 + $0x3c] sm:$0xf]
        %v2132 = vunpack.c.l.b16 %v2100
        %v2133 = vunpack.c.l.b16 %v2101
        %v2134 = vunpack.c.l.b16 %v2102
        %v2135 = vunpack.c.l.b16 %v2103
        %v2136 = vunpack.c.l.b16 %v2104
        %v2137 = vunpack.c.l.b16 %v2105
        %v2138 = vunpack.c.l.b16 %v2106
        %v2139 = vunpack.c.l.b16 %v2107
        %v2140 = vunpack.c.l.b16 %v2108
        %v2141 = vunpack.c.l.b16 %v2109
        %v2142 = vunpack.c.l.b16 %v2110
        %v2143 = vunpack.c.l.b16 %v2111
        %v2144 = vunpack.c.l.b16 %v2112
        %v2145 = vunpack.c.l.b16 %v2113
        %v2146 = vunpack.c.l.b16 %v2114
        %v2147 = vunpack.c.l.b16 %v2115
        %v2148 = vpack.c.b16 %v2133, %v2132
        %v2149 = vpack.c.b16 %v2135, %v2134
        %v2150 = vpack.c.b16 %v2137, %v2136
        %v2151 = vpack.c.b16 %v2139, %v2138
        %v2152 = vpack.c.b16 %v2141, %v2140
        %v2153 = vpack.c.b16 %v2143, %v2142
        %v2154 = vpack.c.b16 %v2145, %v2144
        %v2155 = vpack.c.b16 %v2147, %v2146
        %2164 = vmatprep.subr.bf16.mxu0 0
        %2165 = vmatpush1.bf16.msra.mxu0 %v2155
        %2166 = vmatprep.subr.bf16.mxu0 0
        %2167 = vmatpush1.bf16.msra.mxu0 %v2154
        %2168 = vmatprep.subr.bf16.mxu0 0
        %2169 = vmatpush1.bf16.msra.mxu0 %v2153
        %2170 = vmatprep.subr.bf16.mxu0 0
        %2171 = vmatpush1.bf16.msra.mxu0 %v2152
        %2172 = vmatprep.subr.bf16.mxu0 0
        %2173 = vmatpush1.bf16.msra.mxu0 %v2151
        %2174 = vmatprep.subr.bf16.mxu0 0
        %2175 = vmatpush1.bf16.msra.mxu0 %v2150
        %2176 = vmatprep.subr.bf16.mxu0 0
        %2177 = vmatpush1.bf16.msra.mxu0 %v2149
        %2178 = vmatprep.subr.bf16.mxu0 0
        %2179 = vmatpush1.bf16.msra.mxu0 %v2148
        %2180 = vmatprep.subr.bf16.mxu0 0
        %2181 = vmatpush2.bf16.msra.mxu0 0
        %2182 = vmatprep.subr.bf16.mxu0 0
        %2183 = vmatpush2.bf16.msra.mxu0 0
        %2184 = vmatprep.subr.bf16.mxu0 0
        %2185 = vmatpush2.bf16.msra.mxu0 0
        %2186 = vmatprep.subr.bf16.mxu0 0
        %2187 = vmatpush2.bf16.msra.mxu0 0
        %2188 = vmatprep.subr.bf16.mxu0 0
        %2189 = vmatpush2.bf16.msra.mxu0 0
        %2190 = vmatprep.subr.bf16.mxu0 0
        %2191 = vmatpush2.bf16.msra.mxu0 0
        %2192 = vmatprep.subr.bf16.mxu0 0
        %2193 = vmatpush2.bf16.msra.mxu0 0
        %2194 = vmatprep.subr.bf16.mxu0 0
        %2195 = vmatpush2.bf16.msra.mxu0 0
        %2196 = vmatprep.mubr.bf16.mxu0 0
        %2197 = vmatmul.mubr.bf16.gmra.mxu0 %v2083
        %v2198 = vpop.f32.mrf.mxu0
        %v2199 = vadd.f32 0.0, %v2198
        %v2200 = vpop.f32.mrf.mxu0
        %v2201 = vpop.f32.mrf.mxu0
        %v2202 = vadd.f32 0.0, %v2201
        %v2203 = vpop.f32.mrf.mxu0
        %2204 = vmatprep.mubr.bf16.mxu0 0
        %2205 = vmatmul.mubr.bf16.gmra.mxu0 %v2084
        %v2206 = vpop.f32.mrf.mxu0
        %v2207 = vadd.f32 0.0, %v2206
        %v2208 = vpop.f32.mrf.mxu0
        %v2209 = vpop.f32.mrf.mxu0
        %v2210 = vadd.f32 0.0, %v2209
        %v2211 = vpop.f32.mrf.mxu0
        %2212 = vmatprep.mubr.bf16.mxu0 0
        %2213 = vmatmul.mubr.bf16.gmra.mxu0 %v2085
        %v2214 = vpop.f32.mrf.mxu0
        %v2215 = vadd.f32 0.0, %v2214
        %v2216 = vpop.f32.mrf.mxu0
        %v2217 = vpop.f32.mrf.mxu0
        %v2218 = vadd.f32 0.0, %v2217
        %v2219 = vpop.f32.mrf.mxu0
        %2220 = vmatprep.mubr.bf16.mxu0 0
        %2221 = vmatmul.mubr.bf16.gmra.mxu0 %v2086
        %v2222 = vpop.f32.mrf.mxu0
        %v2223 = vadd.f32 0.0, %v2222
        %v2224 = vpop.f32.mrf.mxu0
        %v2225 = vpop.f32.mrf.mxu0
        %v2226 = vadd.f32 0.0, %v2225
        %v2227 = vpop.f32.mrf.mxu0
        %2228 = vmatprep.mubr.bf16.mxu0 0
        %2229 = vmatmul.mubr.bf16.gmra.mxu0 %v2087
        %v2230 = vpop.f32.mrf.mxu0
        %v2231 = vadd.f32 0.0, %v2230
        %v2232 = vpop.f32.mrf.mxu0
        %v2233 = vpop.f32.mrf.mxu0
        %v2234 = vadd.f32 0.0, %v2233
        %v2235 = vpop.f32.mrf.mxu0
        %2236 = vmatprep.mubr.bf16.mxu0 0
        %2237 = vmatmul.mubr.bf16.gmra.mxu0 %v2088
        %v2238 = vpop.f32.mrf.mxu0
        %v2239 = vadd.f32 0.0, %v2238
        %v2240 = vpop.f32.mrf.mxu0
        %v2241 = vpop.f32.mrf.mxu0
        %v2242 = vadd.f32 0.0, %v2241
        %v2243 = vpop.f32.mrf.mxu0
        %2244 = vmatprep.mubr.bf16.mxu0 0
        %2245 = vmatmul.mubr.bf16.gmra.mxu0 %v2089
        %v2246 = vpop.f32.mrf.mxu0
        %v2247 = vadd.f32 0.0, %v2246
        %v2248 = vpop.f32.mrf.mxu0
        %v2249 = vpop.f32.mrf.mxu0
        %v2250 = vadd.f32 0.0, %v2249
        %v2251 = vpop.f32.mrf.mxu0
        %2252 = vmatprep.mubr.bf16.mxu0 0
        %2253 = vmatmul.mubr.bf16.gmra.mxu0 %v2090
        %v2254 = vpop.f32.mrf.mxu0
        %v2255 = vadd.f32 0.0, %v2254
        %v2256 = vpop.f32.mrf.mxu0
        %v2257 = vpop.f32.mrf.mxu0
        %v2258 = vadd.f32 0.0, %v2257
        %v2259 = vpop.f32.mrf.mxu0
        %2260 = vmatprep.mubr.bf16.mxu0 0
        %2261 = vmatmul.mubr.bf16.gmra.mxu0 %v2091
        %v2262 = vpop.f32.mrf.mxu0
        %v2263 = vadd.f32 0.0, %v2262
        %v2264 = vpop.f32.mrf.mxu0
        %v2265 = vpop.f32.mrf.mxu0
        %v2266 = vadd.f32 0.0, %v2265
        %v2267 = vpop.f32.mrf.mxu0
        %2268 = vmatprep.mubr.bf16.mxu0 0
        %2269 = vmatmul.mubr.bf16.gmra.mxu0 %v2092
        %v2270 = vpop.f32.mrf.mxu0
        %v2271 = vadd.f32 0.0, %v2270
        %v2272 = vpop.f32.mrf.mxu0
        %v2273 = vpop.f32.mrf.mxu0
        %v2274 = vadd.f32 0.0, %v2273
        %v2275 = vpop.f32.mrf.mxu0
        %2276 = vmatprep.mubr.bf16.mxu0 0
        %2277 = vmatmul.mubr.bf16.gmra.mxu0 %v2093
        %v2278 = vpop.f32.mrf.mxu0
        %v2279 = vadd.f32 0.0, %v2278
        %v2280 = vpop.f32.mrf.mxu0
        %v2281 = vpop.f32.mrf.mxu0
        %v2282 = vadd.f32 0.0, %v2281
        %v2283 = vpop.f32.mrf.mxu0
        %2284 = vmatprep.mubr.bf16.mxu0 0
        %2285 = vmatmul.mubr.bf16.gmra.mxu0 %v2094
        %v2286 = vpop.f32.mrf.mxu0
        %v2287 = vadd.f32 0.0, %v2286
        %v2288 = vpop.f32.mrf.mxu0
        %v2289 = vpop.f32.mrf.mxu0
        %v2290 = vadd.f32 0.0, %v2289
        %v2291 = vpop.f32.mrf.mxu0
        %2292 = vmatprep.mubr.bf16.mxu0 0
        %2293 = vmatmul.mubr.bf16.gmra.mxu0 %v2095
        %v2294 = vpop.f32.mrf.mxu0
        %v2295 = vadd.f32 0.0, %v2294
        %v2296 = vpop.f32.mrf.mxu0
        %v2297 = vpop.f32.mrf.mxu0
        %v2298 = vadd.f32 0.0, %v2297
        %v2299 = vpop.f32.mrf.mxu0
        %2300 = vmatprep.mubr.bf16.mxu0 0
        %2301 = vmatmul.mubr.bf16.gmra.mxu0 %v2096
        %v2302 = vpop.f32.mrf.mxu0
        %v2303 = vadd.f32 0.0, %v2302
        %v2304 = vpop.f32.mrf.mxu0
        %v2305 = vpop.f32.mrf.mxu0
        %v2306 = vadd.f32 0.0, %v2305
        %v2307 = vpop.f32.mrf.mxu0
        %2308 = vmatprep.mubr.bf16.mxu0 0
        %2309 = vmatmul.mubr.bf16.gmra.mxu0 %v2097
        %v2310 = vpop.f32.mrf.mxu0
        %v2311 = vadd.f32 0.0, %v2310
        %v2312 = vpop.f32.mrf.mxu0
        %v2313 = vpop.f32.mrf.mxu0
        %v2314 = vadd.f32 0.0, %v2313
        %v2315 = vpop.f32.mrf.mxu0
        %2316 = vmatprep.mubr.bf16.mxu0 0
        %2317 = vmatmul.mubr.bf16.gmra.mxu0 %v2098
        %v2318 = vpop.f32.mrf.mxu0
        %v2319 = vadd.f32 0.0, %v2318
        %v2320 = vpop.f32.mrf.mxu0
        %v2321 = vpop.f32.mrf.mxu0
        %v2322 = vadd.f32 0.0, %v2321
        %v2323 = vpop.f32.mrf.mxu0
        %2324 = vdwg.mxu0
        %v2325 = vadd.f32 %v2018, %v2199
        %v2326 = vadd.f32 %v2019, %v2202
        %v2327 = vadd.f32 %v2020, %v2207
        %v2328 = vadd.f32 %v2021, %v2210
        %v2329 = vadd.f32 %v2022, %v2215
        %v2330 = vadd.f32 %v2023, %v2218
        %v2331 = vadd.f32 %v2024, %v2223
        %v2332 = vadd.f32 %v2025, %v2226
        %v2333 = vadd.f32 %v2026, %v2231
        %v2334 = vadd.f32 %v2027, %v2234
        %v2335 = vadd.f32 %v2028, %v2239
        %v2336 = vadd.f32 %v2029, %v2242
        %v2337 = vadd.f32 %v2030, %v2247
        %v2338 = vadd.f32 %v2031, %v2250
        %v2339 = vadd.f32 %v2032, %v2255
        %v2340 = vadd.f32 %v2033, %v2258
        %v2341 = vadd.f32 %v2034, %v2263
        %v2342 = vadd.f32 %v2035, %v2266
        %v2343 = vadd.f32 %v2036, %v2271
        %v2344 = vadd.f32 %v2037, %v2274
        %v2345 = vadd.f32 %v2038, %v2279
        %v2346 = vadd.f32 %v2039, %v2282
        %v2347 = vadd.f32 %v2040, %v2287
        %v2348 = vadd.f32 %v2041, %v2290
        %v2349 = vadd.f32 %v2042, %v2295
        %v2350 = vadd.f32 %v2043, %v2298
        %v2351 = vadd.f32 %v2044, %v2303
        %v2352 = vadd.f32 %v2045, %v2306
        %v2353 = vadd.f32 %v2046, %v2311
        %v2354 = vadd.f32 %v2047, %v2314
        %v2355 = vadd.f32 %v2048, %v2319
        %v2356 = vadd.f32 %v2049, %v2322
        %v2357 = vld [vmem:[%s2050 + $0x1] sm:$0xff]
        %v2358 = vld [vmem:[%s2050 + $0x9] sm:$0xff]
        %v2359 = vld [vmem:[%s2050 + $0x19] sm:$0xff]
        %v2360 = vld [vmem:[%s2050 + $0x21] sm:$0xff]
        %v2361 = vld [vmem:[%s2050 + $0x31] sm:$0xff]
        %v2362 = vld [vmem:[%s2050 + $0x39] sm:$0xff]
        %v2363 = vld [vmem:[%s2050 + $0x49] sm:$0xff]
        %v2364 = vld [vmem:[%s2050 + $0x51] sm:$0xff]
        %v2365 = vld [vmem:[%s2050 + $0x61] sm:$0xff]
        %v2366 = vld [vmem:[%s2050 + $0x69] sm:$0xff]
        %v2367 = vld [vmem:[%s2050 + $0x79] sm:$0xff]
        %v2368 = vld [vmem:[%s2050 + $0x81] sm:$0xff]
        %v2369 = vld [vmem:[%s2050 + $0x91] sm:$0xff]
        %v2370 = vld [vmem:[%s2050 + $0x99] sm:$0xff]
        %v2371 = vld [vmem:[%s2050 + $0xa9] sm:$0xff]
        %v2372 = vld [vmem:[%s2050 + $0xb1] sm:$0xff]
        %v2373 = vld [vmem:[%s2050 + $0xc1] sm:$0xff]
        %v2374 = vld [vmem:[%s2050 + $0xc9] sm:$0xff]
        %v2375 = vld [vmem:[%s2050 + $0xd9] sm:$0xff]
        %v2376 = vld [vmem:[%s2050 + $0xe1] sm:$0xff]
        %v2377 = vld [vmem:[%s2050 + $0xf1] sm:$0xff]
        %v2378 = vld [vmem:[%s2050 + $0xf9] sm:$0xff]
        %v2379 = vld [vmem:[%s2050 + $0x109] sm:$0xff]
        %v2380 = vld [vmem:[%s2050 + $0x111] sm:$0xff]
        %v2381 = vld [vmem:[%s2050 + $0x121] sm:$0xff]
        %v2382 = vld [vmem:[%s2050 + $0x129] sm:$0xff]
        %v2383 = vld [vmem:[%s2050 + $0x139] sm:$0xff]
        %v2384 = vld [vmem:[%s2050 + $0x141] sm:$0xff]
        %v2385 = vld [vmem:[%s2050 + $0x151] sm:$0xff]
        %v2386 = vld [vmem:[%s2050 + $0x159] sm:$0xff]
        %v2387 = vld [vmem:[%s2050 + $0x169] sm:$0xff]
        %v2388 = vld [vmem:[%s2050 + $0x171] sm:$0xff]
        %v2389 = vpack.c.bf16 %v2358, %v2357
        %v2390 = vpack.c.bf16 %v2360, %v2359
        %v2391 = vpack.c.bf16 %v2362, %v2361
        %v2392 = vpack.c.bf16 %v2364, %v2363
        %v2393 = vpack.c.bf16 %v2366, %v2365
        %v2394 = vpack.c.bf16 %v2368, %v2367
        %v2395 = vpack.c.bf16 %v2370, %v2369
        %v2396 = vpack.c.bf16 %v2372, %v2371
        %v2397 = vpack.c.bf16 %v2374, %v2373
        %v2398 = vpack.c.bf16 %v2376, %v2375
        %v2399 = vpack.c.bf16 %v2378, %v2377
        %v2400 = vpack.c.bf16 %v2380, %v2379
        %v2401 = vpack.c.bf16 %v2382, %v2381
        %v2402 = vpack.c.bf16 %v2384, %v2383
        %v2403 = vpack.c.bf16 %v2386, %v2385
        %v2404 = vpack.c.bf16 %v2388, %v2387
        %s2405 = scalar_lea.vmem %s1, 448
        %v2406 = vld [vmem:[%s2405] sm:$0xf]
        %v2407 = vld [vmem:[%s2405 + $0x4] sm:$0xf]
        %v2408 = vld [vmem:[%s2405 + $0x8] sm:$0xf]
        %v2409 = vld [vmem:[%s2405 + $0xc] sm:$0xf]
        %v2410 = vld [vmem:[%s2405 + $0x10] sm:$0xf]
        %v2411 = vld [vmem:[%s2405 + $0x14] sm:$0xf]
        %v2412 = vld [vmem:[%s2405 + $0x18] sm:$0xf]
        %v2413 = vld [vmem:[%s2405 + $0x1c] sm:$0xf]
        %v2414 = vld [vmem:[%s2405 + $0x20] sm:$0xf]
        %v2415 = vld [vmem:[%s2405 + $0x24] sm:$0xf]
        %v2416 = vld [vmem:[%s2405 + $0x28] sm:$0xf]
        %v2417 = vld [vmem:[%s2405 + $0x2c] sm:$0xf]
        %v2418 = vld [vmem:[%s2405 + $0x30] sm:$0xf]
        %v2419 = vld [vmem:[%s2405 + $0x34] sm:$0xf]
        %v2420 = vld [vmem:[%s2405 + $0x38] sm:$0xf]
        %v2421 = vld [vmem:[%s2405 + $0x3c] sm:$0xf]
        %v2438 = vunpack.c.l.b16 %v2406
        %v2439 = vunpack.c.l.b16 %v2407
        %v2440 = vunpack.c.l.b16 %v2408
        %v2441 = vunpack.c.l.b16 %v2409
        %v2442 = vunpack.c.l.b16 %v2410
        %v2443 = vunpack.c.l.b16 %v2411
        %v2444 = vunpack.c.l.b16 %v2412
        %v2445 = vunpack.c.l.b16 %v2413
        %v2446 = vunpack.c.l.b16 %v2414
        %v2447 = vunpack.c.l.b16 %v2415
        %v2448 = vunpack.c.l.b16 %v2416
        %v2449 = vunpack.c.l.b16 %v2417
        %v2450 = vunpack.c.l.b16 %v2418
        %v2451 = vunpack.c.l.b16 %v2419
        %v2452 = vunpack.c.l.b16 %v2420
        %v2453 = vunpack.c.l.b16 %v2421
        %v2454 = vpack.c.b16 %v2439, %v2438
        %v2455 = vpack.c.b16 %v2441, %v2440
        %v2456 = vpack.c.b16 %v2443, %v2442
        %v2457 = vpack.c.b16 %v2445, %v2444
        %v2458 = vpack.c.b16 %v2447, %v2446
        %v2459 = vpack.c.b16 %v2449, %v2448
        %v2460 = vpack.c.b16 %v2451, %v2450
        %v2461 = vpack.c.b16 %v2453, %v2452
        %2470 = vmatprep.subr.bf16.mxu0 0
        %2471 = vmatpush1.bf16.msra.mxu0 %v2461
        %2472 = vmatprep.subr.bf16.mxu0 0
        %2473 = vmatpush1.bf16.msra.mxu0 %v2460
        %2474 = vmatprep.subr.bf16.mxu0 0
        %2475 = vmatpush1.bf16.msra.mxu0 %v2459
        %2476 = vmatprep.subr.bf16.mxu0 0
        %2477 = vmatpush1.bf16.msra.mxu0 %v2458
        %2478 = vmatprep.subr.bf16.mxu0 0
        %2479 = vmatpush1.bf16.msra.mxu0 %v2457
        %2480 = vmatprep.subr.bf16.mxu0 0
        %2481 = vmatpush1.bf16.msra.mxu0 %v2456
        %2482 = vmatprep.subr.bf16.mxu0 0
        %2483 = vmatpush1.bf16.msra.mxu0 %v2455
        %2484 = vmatprep.subr.bf16.mxu0 0
        %2485 = vmatpush1.bf16.msra.mxu0 %v2454
        %2486 = vmatprep.subr.bf16.mxu0 0
        %2487 = vmatpush2.bf16.msra.mxu0 0
        %2488 = vmatprep.subr.bf16.mxu0 0
        %2489 = vmatpush2.bf16.msra.mxu0 0
        %2490 = vmatprep.subr.bf16.mxu0 0
        %2491 = vmatpush2.bf16.msra.mxu0 0
        %2492 = vmatprep.subr.bf16.mxu0 0
        %2493 = vmatpush2.bf16.msra.mxu0 0
        %2494 = vmatprep.subr.bf16.mxu0 0
        %2495 = vmatpush2.bf16.msra.mxu0 0
        %2496 = vmatprep.subr.bf16.mxu0 0
        %2497 = vmatpush2.bf16.msra.mxu0 0
        %2498 = vmatprep.subr.bf16.mxu0 0
        %2499 = vmatpush2.bf16.msra.mxu0 0
        %2500 = vmatprep.subr.bf16.mxu0 0
        %2501 = vmatpush2.bf16.msra.mxu0 0
        %2502 = vmatprep.mubr.bf16.mxu0 0
        %2503 = vmatmul.mubr.bf16.gmra.mxu0 %v2389
        %v2504 = vpop.f32.mrf.mxu0
        %v2505 = vadd.f32 0.0, %v2504
        %v2506 = vpop.f32.mrf.mxu0
        %v2507 = vpop.f32.mrf.mxu0
        %v2508 = vadd.f32 0.0, %v2507
        %v2509 = vpop.f32.mrf.mxu0
        %2510 = vmatprep.mubr.bf16.mxu0 0
        %2511 = vmatmul.mubr.bf16.gmra.mxu0 %v2390
        %v2512 = vpop.f32.mrf.mxu0
        %v2513 = vadd.f32 0.0, %v2512
        %v2514 = vpop.f32.mrf.mxu0
        %v2515 = vpop.f32.mrf.mxu0
        %v2516 = vadd.f32 0.0, %v2515
        %v2517 = vpop.f32.mrf.mxu0
        %2518 = vmatprep.mubr.bf16.mxu0 0
        %2519 = vmatmul.mubr.bf16.gmra.mxu0 %v2391
        %v2520 = vpop.f32.mrf.mxu0
        %v2521 = vadd.f32 0.0, %v2520
        %v2522 = vpop.f32.mrf.mxu0
        %v2523 = vpop.f32.mrf.mxu0
        %v2524 = vadd.f32 0.0, %v2523
        %v2525 = vpop.f32.mrf.mxu0
        %2526 = vmatprep.mubr.bf16.mxu0 0
        %2527 = vmatmul.mubr.bf16.gmra.mxu0 %v2392
        %v2528 = vpop.f32.mrf.mxu0
        %v2529 = vadd.f32 0.0, %v2528
        %v2530 = vpop.f32.mrf.mxu0
        %v2531 = vpop.f32.mrf.mxu0
        %v2532 = vadd.f32 0.0, %v2531
        %v2533 = vpop.f32.mrf.mxu0
        %2534 = vmatprep.mubr.bf16.mxu0 0
        %2535 = vmatmul.mubr.bf16.gmra.mxu0 %v2393
        %v2536 = vpop.f32.mrf.mxu0
        %v2537 = vadd.f32 0.0, %v2536
        %v2538 = vpop.f32.mrf.mxu0
        %v2539 = vpop.f32.mrf.mxu0
        %v2540 = vadd.f32 0.0, %v2539
        %v2541 = vpop.f32.mrf.mxu0
        %2542 = vmatprep.mubr.bf16.mxu0 0
        %2543 = vmatmul.mubr.bf16.gmra.mxu0 %v2394
        %v2544 = vpop.f32.mrf.mxu0
        %v2545 = vadd.f32 0.0, %v2544
        %v2546 = vpop.f32.mrf.mxu0
        %v2547 = vpop.f32.mrf.mxu0
        %v2548 = vadd.f32 0.0, %v2547
        %v2549 = vpop.f32.mrf.mxu0
        %2550 = vmatprep.mubr.bf16.mxu0 0
        %2551 = vmatmul.mubr.bf16.gmra.mxu0 %v2395
        %v2552 = vpop.f32.mrf.mxu0
        %v2553 = vadd.f32 0.0, %v2552
        %v2554 = vpop.f32.mrf.mxu0
        %v2555 = vpop.f32.mrf.mxu0
        %v2556 = vadd.f32 0.0, %v2555
        %v2557 = vpop.f32.mrf.mxu0
        %2558 = vmatprep.mubr.bf16.mxu0 0
        %2559 = vmatmul.mubr.bf16.gmra.mxu0 %v2396
        %v2560 = vpop.f32.mrf.mxu0
        %v2561 = vadd.f32 0.0, %v2560
        %v2562 = vpop.f32.mrf.mxu0
        %v2563 = vpop.f32.mrf.mxu0
        %v2564 = vadd.f32 0.0, %v2563
        %v2565 = vpop.f32.mrf.mxu0
        %2566 = vmatprep.mubr.bf16.mxu0 0
        %2567 = vmatmul.mubr.bf16.gmra.mxu0 %v2397
        %v2568 = vpop.f32.mrf.mxu0
        %v2569 = vadd.f32 0.0, %v2568
        %v2570 = vpop.f32.mrf.mxu0
        %v2571 = vpop.f32.mrf.mxu0
        %v2572 = vadd.f32 0.0, %v2571
        %v2573 = vpop.f32.mrf.mxu0
        %2574 = vmatprep.mubr.bf16.mxu0 0
        %2575 = vmatmul.mubr.bf16.gmra.mxu0 %v2398
        %v2576 = vpop.f32.mrf.mxu0
        %v2577 = vadd.f32 0.0, %v2576
        %v2578 = vpop.f32.mrf.mxu0
        %v2579 = vpop.f32.mrf.mxu0
        %v2580 = vadd.f32 0.0, %v2579
        %v2581 = vpop.f32.mrf.mxu0
        %2582 = vmatprep.mubr.bf16.mxu0 0
        %2583 = vmatmul.mubr.bf16.gmra.mxu0 %v2399
        %v2584 = vpop.f32.mrf.mxu0
        %v2585 = vadd.f32 0.0, %v2584
        %v2586 = vpop.f32.mrf.mxu0
        %v2587 = vpop.f32.mrf.mxu0
        %v2588 = vadd.f32 0.0, %v2587
        %v2589 = vpop.f32.mrf.mxu0
        %2590 = vmatprep.mubr.bf16.mxu0 0
        %2591 = vmatmul.mubr.bf16.gmra.mxu0 %v2400
        %v2592 = vpop.f32.mrf.mxu0
        %v2593 = vadd.f32 0.0, %v2592
        %v2594 = vpop.f32.mrf.mxu0
        %v2595 = vpop.f32.mrf.mxu0
        %v2596 = vadd.f32 0.0, %v2595
        %v2597 = vpop.f32.mrf.mxu0
        %2598 = vmatprep.mubr.bf16.mxu0 0
        %2599 = vmatmul.mubr.bf16.gmra.mxu0 %v2401
        %v2600 = vpop.f32.mrf.mxu0
        %v2601 = vadd.f32 0.0, %v2600
        %v2602 = vpop.f32.mrf.mxu0
        %v2603 = vpop.f32.mrf.mxu0
        %v2604 = vadd.f32 0.0, %v2603
        %v2605 = vpop.f32.mrf.mxu0
        %2606 = vmatprep.mubr.bf16.mxu0 0
        %2607 = vmatmul.mubr.bf16.gmra.mxu0 %v2402
        %v2608 = vpop.f32.mrf.mxu0
        %v2609 = vadd.f32 0.0, %v2608
        %v2610 = vpop.f32.mrf.mxu0
        %v2611 = vpop.f32.mrf.mxu0
        %v2612 = vadd.f32 0.0, %v2611
        %v2613 = vpop.f32.mrf.mxu0
        %2614 = vmatprep.mubr.bf16.mxu0 0
        %2615 = vmatmul.mubr.bf16.gmra.mxu0 %v2403
        %v2616 = vpop.f32.mrf.mxu0
        %v2617 = vadd.f32 0.0, %v2616
        %v2618 = vpop.f32.mrf.mxu0
        %v2619 = vpop.f32.mrf.mxu0
        %v2620 = vadd.f32 0.0, %v2619
        %v2621 = vpop.f32.mrf.mxu0
        %2622 = vmatprep.mubr.bf16.mxu0 0
        %2623 = vmatmul.mubr.bf16.gmra.mxu0 %v2404
        %v2624 = vpop.f32.mrf.mxu0
        %v2625 = vadd.f32 0.0, %v2624
        %v2626 = vpop.f32.mrf.mxu0
        %v2627 = vpop.f32.mrf.mxu0
        %v2628 = vadd.f32 0.0, %v2627
        %v2629 = vpop.f32.mrf.mxu0
        %2630 = vdwg.mxu0
        %v2631 = vadd.f32 %v2325, %v2505
        %v2632 = vadd.f32 %v2326, %v2508
        %v2633 = vadd.f32 %v2327, %v2513
        %v2634 = vadd.f32 %v2328, %v2516
        %v2635 = vadd.f32 %v2329, %v2521
        %v2636 = vadd.f32 %v2330, %v2524
        %v2637 = vadd.f32 %v2331, %v2529
        %v2638 = vadd.f32 %v2332, %v2532
        %v2639 = vadd.f32 %v2333, %v2537
        %v2640 = vadd.f32 %v2334, %v2540
        %v2641 = vadd.f32 %v2335, %v2545
        %v2642 = vadd.f32 %v2336, %v2548
        %v2643 = vadd.f32 %v2337, %v2553
        %v2644 = vadd.f32 %v2338, %v2556
        %v2645 = vadd.f32 %v2339, %v2561
        %v2646 = vadd.f32 %v2340, %v2564
        %v2647 = vadd.f32 %v2341, %v2569
        %v2648 = vadd.f32 %v2342, %v2572
        %v2649 = vadd.f32 %v2343, %v2577
        %v2650 = vadd.f32 %v2344, %v2580
        %v2651 = vadd.f32 %v2345, %v2585
        %v2652 = vadd.f32 %v2346, %v2588
        %v2653 = vadd.f32 %v2347, %v2593
        %v2654 = vadd.f32 %v2348, %v2596
        %v2655 = vadd.f32 %v2349, %v2601
        %v2656 = vadd.f32 %v2350, %v2604
        %v2657 = vadd.f32 %v2351, %v2609
        %v2658 = vadd.f32 %v2352, %v2612
        %v2659 = vadd.f32 %v2353, %v2617
        %v2660 = vadd.f32 %v2354, %v2620
        %v2661 = vadd.f32 %v2355, %v2625
        %v2662 = vadd.f32 %v2356, %v2628
        %v2663 = vld [vmem:[%s2050 + $0x2] sm:$0xff]
        %v2664 = vld [vmem:[%s2050 + $0xa] sm:$0xff]
        %v2665 = vld [vmem:[%s2050 + $0x1a] sm:$0xff]
        %v2666 = vld [vmem:[%s2050 + $0x22] sm:$0xff]
        %v2667 = vld [vmem:[%s2050 + $0x32] sm:$0xff]
        %v2668 = vld [vmem:[%s2050 + $0x3a] sm:$0xff]
        %v2669 = vld [vmem:[%s2050 + $0x4a] sm:$0xff]
        %v2670 = vld [vmem:[%s2050 + $0x52] sm:$0xff]
        %v2671 = vld [vmem:[%s2050 + $0x62] sm:$0xff]
        %v2672 = vld [vmem:[%s2050 + $0x6a] sm:$0xff]
        %v2673 = vld [vmem:[%s2050 + $0x7a] sm:$0xff]
        %v2674 = vld [vmem:[%s2050 + $0x82] sm:$0xff]
        %v2675 = vld [vmem:[%s2050 + $0x92] sm:$0xff]
        %v2676 = vld [vmem:[%s2050 + $0x9a] sm:$0xff]
        %v2677 = vld [vmem:[%s2050 + $0xaa] sm:$0xff]
        %v2678 = vld [vmem:[%s2050 + $0xb2] sm:$0xff]
        %v2679 = vld [vmem:[%s2050 + $0xc2] sm:$0xff]
        %v2680 = vld [vmem:[%s2050 + $0xca] sm:$0xff]
        %v2681 = vld [vmem:[%s2050 + $0xda] sm:$0xff]
        %v2682 = vld [vmem:[%s2050 + $0xe2] sm:$0xff]
        %v2683 = vld [vmem:[%s2050 + $0xf2] sm:$0xff]
        %v2684 = vld [vmem:[%s2050 + $0xfa] sm:$0xff]
        %v2685 = vld [vmem:[%s2050 + $0x10a] sm:$0xff]
        %v2686 = vld [vmem:[%s2050 + $0x112] sm:$0xff]
        %v2687 = vld [vmem:[%s2050 + $0x122] sm:$0xff]
        %v2688 = vld [vmem:[%s2050 + $0x12a] sm:$0xff]
        %v2689 = vld [vmem:[%s2050 + $0x13a] sm:$0xff]
        %v2690 = vld [vmem:[%s2050 + $0x142] sm:$0xff]
        %v2691 = vld [vmem:[%s2050 + $0x152] sm:$0xff]
        %v2692 = vld [vmem:[%s2050 + $0x15a] sm:$0xff]
        %v2693 = vld [vmem:[%s2050 + $0x16a] sm:$0xff]
        %v2694 = vld [vmem:[%s2050 + $0x172] sm:$0xff]
        %v2695 = vpack.c.bf16 %v2664, %v2663
        %v2696 = vpack.c.bf16 %v2666, %v2665
        %v2697 = vpack.c.bf16 %v2668, %v2667
        %v2698 = vpack.c.bf16 %v2670, %v2669
        %v2699 = vpack.c.bf16 %v2672, %v2671
        %v2700 = vpack.c.bf16 %v2674, %v2673
        %v2701 = vpack.c.bf16 %v2676, %v2675
        %v2702 = vpack.c.bf16 %v2678, %v2677
        %v2703 = vpack.c.bf16 %v2680, %v2679
        %v2704 = vpack.c.bf16 %v2682, %v2681
        %v2705 = vpack.c.bf16 %v2684, %v2683
        %v2706 = vpack.c.bf16 %v2686, %v2685
        %v2707 = vpack.c.bf16 %v2688, %v2687
        %v2708 = vpack.c.bf16 %v2690, %v2689
        %v2709 = vpack.c.bf16 %v2692, %v2691
        %v2710 = vpack.c.bf16 %v2694, %v2693
        %s2711 = scalar_lea.vmem %s1, 512
        %v2712 = vld [vmem:[%s2711] sm:$0xf]
        %v2713 = vld [vmem:[%s2711 + $0x4] sm:$0xf]
        %v2714 = vld [vmem:[%s2711 + $0x8] sm:$0xf]
        %v2715 = vld [vmem:[%s2711 + $0xc] sm:$0xf]
        %v2716 = vld [vmem:[%s2711 + $0x10] sm:$0xf]
        %v2717 = vld [vmem:[%s2711 + $0x14] sm:$0xf]
        %v2718 = vld [vmem:[%s2711 + $0x18] sm:$0xf]
        %v2719 = vld [vmem:[%s2711 + $0x1c] sm:$0xf]
        %v2720 = vld [vmem:[%s2711 + $0x20] sm:$0xf]
        %v2721 = vld [vmem:[%s2711 + $0x24] sm:$0xf]
        %v2722 = vld [vmem:[%s2711 + $0x28] sm:$0xf]
        %v2723 = vld [vmem:[%s2711 + $0x2c] sm:$0xf]
        %v2724 = vld [vmem:[%s2711 + $0x30] sm:$0xf]
        %v2725 = vld [vmem:[%s2711 + $0x34] sm:$0xf]
        %v2726 = vld [vmem:[%s2711 + $0x38] sm:$0xf]
        %v2727 = vld [vmem:[%s2711 + $0x3c] sm:$0xf]
        %v2744 = vunpack.c.l.b16 %v2712
        %v2745 = vunpack.c.l.b16 %v2713
        %v2746 = vunpack.c.l.b16 %v2714
        %v2747 = vunpack.c.l.b16 %v2715
        %v2748 = vunpack.c.l.b16 %v2716
        %v2749 = vunpack.c.l.b16 %v2717
        %v2750 = vunpack.c.l.b16 %v2718
        %v2751 = vunpack.c.l.b16 %v2719
        %v2752 = vunpack.c.l.b16 %v2720
        %v2753 = vunpack.c.l.b16 %v2721
        %v2754 = vunpack.c.l.b16 %v2722
        %v2755 = vunpack.c.l.b16 %v2723
        %v2756 = vunpack.c.l.b16 %v2724
        %v2757 = vunpack.c.l.b16 %v2725
        %v2758 = vunpack.c.l.b16 %v2726
        %v2759 = vunpack.c.l.b16 %v2727
        %v2760 = vpack.c.b16 %v2745, %v2744
        %v2761 = vpack.c.b16 %v2747, %v2746
        %v2762 = vpack.c.b16 %v2749, %v2748
        %v2763 = vpack.c.b16 %v2751, %v2750
        %v2764 = vpack.c.b16 %v2753, %v2752
        %v2765 = vpack.c.b16 %v2755, %v2754
        %v2766 = vpack.c.b16 %v2757, %v2756
        %v2767 = vpack.c.b16 %v2759, %v2758
        %2776 = vmatprep.subr.bf16.mxu0 0
        %2777 = vmatpush1.bf16.msra.mxu0 %v2767
        %2778 = vmatprep.subr.bf16.mxu0 0
        %2779 = vmatpush1.bf16.msra.mxu0 %v2766
        %2780 = vmatprep.subr.bf16.mxu0 0
        %2781 = vmatpush1.bf16.msra.mxu0 %v2765
        %2782 = vmatprep.subr.bf16.mxu0 0
        %2783 = vmatpush1.bf16.msra.mxu0 %v2764
        %2784 = vmatprep.subr.bf16.mxu0 0
        %2785 = vmatpush1.bf16.msra.mxu0 %v2763
        %2786 = vmatprep.subr.bf16.mxu0 0
        %2787 = vmatpush1.bf16.msra.mxu0 %v2762
        %2788 = vmatprep.subr.bf16.mxu0 0
        %2789 = vmatpush1.bf16.msra.mxu0 %v2761
        %2790 = vmatprep.subr.bf16.mxu0 0
        %2791 = vmatpush1.bf16.msra.mxu0 %v2760
        %2792 = vmatprep.subr.bf16.mxu0 0
        %2793 = vmatpush2.bf16.msra.mxu0 0
        %2794 = vmatprep.subr.bf16.mxu0 0
        %2795 = vmatpush2.bf16.msra.mxu0 0
        %2796 = vmatprep.subr.bf16.mxu0 0
        %2797 = vmatpush2.bf16.msra.mxu0 0
        %2798 = vmatprep.subr.bf16.mxu0 0
        %2799 = vmatpush2.bf16.msra.mxu0 0
        %2800 = vmatprep.subr.bf16.mxu0 0
        %2801 = vmatpush2.bf16.msra.mxu0 0
        %2802 = vmatprep.subr.bf16.mxu0 0
        %2803 = vmatpush2.bf16.msra.mxu0 0
        %2804 = vmatprep.subr.bf16.mxu0 0
        %2805 = vmatpush2.bf16.msra.mxu0 0
        %2806 = vmatprep.subr.bf16.mxu0 0
        %2807 = vmatpush2.bf16.msra.mxu0 0
        %2808 = vmatprep.mubr.bf16.mxu0 0
        %2809 = vmatmul.mubr.bf16.gmra.mxu0 %v2695
        %v2810 = vpop.f32.mrf.mxu0
        %v2811 = vadd.f32 0.0, %v2810
        %v2812 = vpop.f32.mrf.mxu0
        %v2813 = vpop.f32.mrf.mxu0
        %v2814 = vadd.f32 0.0, %v2813
        %v2815 = vpop.f32.mrf.mxu0
        %2816 = vmatprep.mubr.bf16.mxu0 0
        %2817 = vmatmul.mubr.bf16.gmra.mxu0 %v2696
        %v2818 = vpop.f32.mrf.mxu0
        %v2819 = vadd.f32 0.0, %v2818
        %v2820 = vpop.f32.mrf.mxu0
        %v2821 = vpop.f32.mrf.mxu0
        %v2822 = vadd.f32 0.0, %v2821
        %v2823 = vpop.f32.mrf.mxu0
        %2824 = vmatprep.mubr.bf16.mxu0 0
        %2825 = vmatmul.mubr.bf16.gmra.mxu0 %v2697
        %v2826 = vpop.f32.mrf.mxu0
        %v2827 = vadd.f32 0.0, %v2826
        %v2828 = vpop.f32.mrf.mxu0
        %v2829 = vpop.f32.mrf.mxu0
        %v2830 = vadd.f32 0.0, %v2829
        %v2831 = vpop.f32.mrf.mxu0
        %2832 = vmatprep.mubr.bf16.mxu0 0
        %2833 = vmatmul.mubr.bf16.gmra.mxu0 %v2698
        %v2834 = vpop.f32.mrf.mxu0
        %v2835 = vadd.f32 0.0, %v2834
        %v2836 = vpop.f32.mrf.mxu0
        %v2837 = vpop.f32.mrf.mxu0
        %v2838 = vadd.f32 0.0, %v2837
        %v2839 = vpop.f32.mrf.mxu0
        %2840 = vmatprep.mubr.bf16.mxu0 0
        %2841 = vmatmul.mubr.bf16.gmra.mxu0 %v2699
        %v2842 = vpop.f32.mrf.mxu0
        %v2843 = vadd.f32 0.0, %v2842
        %v2844 = vpop.f32.mrf.mxu0
        %v2845 = vpop.f32.mrf.mxu0
        %v2846 = vadd.f32 0.0, %v2845
        %v2847 = vpop.f32.mrf.mxu0
        %2848 = vmatprep.mubr.bf16.mxu0 0
        %2849 = vmatmul.mubr.bf16.gmra.mxu0 %v2700
        %v2850 = vpop.f32.mrf.mxu0
        %v2851 = vadd.f32 0.0, %v2850
        %v2852 = vpop.f32.mrf.mxu0
        %v2853 = vpop.f32.mrf.mxu0
        %v2854 = vadd.f32 0.0, %v2853
        %v2855 = vpop.f32.mrf.mxu0
        %2856 = vmatprep.mubr.bf16.mxu0 0
        %2857 = vmatmul.mubr.bf16.gmra.mxu0 %v2701
        %v2858 = vpop.f32.mrf.mxu0
        %v2859 = vadd.f32 0.0, %v2858
        %v2860 = vpop.f32.mrf.mxu0
        %v2861 = vpop.f32.mrf.mxu0
        %v2862 = vadd.f32 0.0, %v2861
        %v2863 = vpop.f32.mrf.mxu0
        %2864 = vmatprep.mubr.bf16.mxu0 0
        %2865 = vmatmul.mubr.bf16.gmra.mxu0 %v2702
        %v2866 = vpop.f32.mrf.mxu0
        %v2867 = vadd.f32 0.0, %v2866
        %v2868 = vpop.f32.mrf.mxu0
        %v2869 = vpop.f32.mrf.mxu0
        %v2870 = vadd.f32 0.0, %v2869
        %v2871 = vpop.f32.mrf.mxu0
        %2872 = vmatprep.mubr.bf16.mxu0 0
        %2873 = vmatmul.mubr.bf16.gmra.mxu0 %v2703
        %v2874 = vpop.f32.mrf.mxu0
        %v2875 = vadd.f32 0.0, %v2874
        %v2876 = vpop.f32.mrf.mxu0
        %v2877 = vpop.f32.mrf.mxu0
        %v2878 = vadd.f32 0.0, %v2877
        %v2879 = vpop.f32.mrf.mxu0
        %2880 = vmatprep.mubr.bf16.mxu0 0
        %2881 = vmatmul.mubr.bf16.gmra.mxu0 %v2704
        %v2882 = vpop.f32.mrf.mxu0
        %v2883 = vadd.f32 0.0, %v2882
        %v2884 = vpop.f32.mrf.mxu0
        %v2885 = vpop.f32.mrf.mxu0
        %v2886 = vadd.f32 0.0, %v2885
        %v2887 = vpop.f32.mrf.mxu0
        %2888 = vmatprep.mubr.bf16.mxu0 0
        %2889 = vmatmul.mubr.bf16.gmra.mxu0 %v2705
        %v2890 = vpop.f32.mrf.mxu0
        %v2891 = vadd.f32 0.0, %v2890
        %v2892 = vpop.f32.mrf.mxu0
        %v2893 = vpop.f32.mrf.mxu0
        %v2894 = vadd.f32 0.0, %v2893
        %v2895 = vpop.f32.mrf.mxu0
        %2896 = vmatprep.mubr.bf16.mxu0 0
        %2897 = vmatmul.mubr.bf16.gmra.mxu0 %v2706
        %v2898 = vpop.f32.mrf.mxu0
        %v2899 = vadd.f32 0.0, %v2898
        %v2900 = vpop.f32.mrf.mxu0
        %v2901 = vpop.f32.mrf.mxu0
        %v2902 = vadd.f32 0.0, %v2901
        %v2903 = vpop.f32.mrf.mxu0
        %2904 = vmatprep.mubr.bf16.mxu0 0
        %2905 = vmatmul.mubr.bf16.gmra.mxu0 %v2707
        %v2906 = vpop.f32.mrf.mxu0
        %v2907 = vadd.f32 0.0, %v2906
        %v2908 = vpop.f32.mrf.mxu0
        %v2909 = vpop.f32.mrf.mxu0
        %v2910 = vadd.f32 0.0, %v2909
        %v2911 = vpop.f32.mrf.mxu0
        %2912 = vmatprep.mubr.bf16.mxu0 0
        %2913 = vmatmul.mubr.bf16.gmra.mxu0 %v2708
        %v2914 = vpop.f32.mrf.mxu0
        %v2915 = vadd.f32 0.0, %v2914
        %v2916 = vpop.f32.mrf.mxu0
        %v2917 = vpop.f32.mrf.mxu0
        %v2918 = vadd.f32 0.0, %v2917
        %v2919 = vpop.f32.mrf.mxu0
        %2920 = vmatprep.mubr.bf16.mxu0 0
        %2921 = vmatmul.mubr.bf16.gmra.mxu0 %v2709
        %v2922 = vpop.f32.mrf.mxu0
        %v2923 = vadd.f32 0.0, %v2922
        %v2924 = vpop.f32.mrf.mxu0
        %v2925 = vpop.f32.mrf.mxu0
        %v2926 = vadd.f32 0.0, %v2925
        %v2927 = vpop.f32.mrf.mxu0
        %2928 = vmatprep.mubr.bf16.mxu0 0
        %2929 = vmatmul.mubr.bf16.gmra.mxu0 %v2710
        %v2930 = vpop.f32.mrf.mxu0
        %v2931 = vadd.f32 0.0, %v2930
        %v2932 = vpop.f32.mrf.mxu0
        %v2933 = vpop.f32.mrf.mxu0
        %v2934 = vadd.f32 0.0, %v2933
        %v2935 = vpop.f32.mrf.mxu0
        %2936 = vdwg.mxu0
        %v2937 = vadd.f32 %v2631, %v2811
        %v2938 = vadd.f32 %v2632, %v2814
        %v2939 = vadd.f32 %v2633, %v2819
        %v2940 = vadd.f32 %v2634, %v2822
        %v2941 = vadd.f32 %v2635, %v2827
        %v2942 = vadd.f32 %v2636, %v2830
        %v2943 = vadd.f32 %v2637, %v2835
        %v2944 = vadd.f32 %v2638, %v2838
        %v2945 = vadd.f32 %v2639, %v2843
        %v2946 = vadd.f32 %v2640, %v2846
        %v2947 = vadd.f32 %v2641, %v2851
        %v2948 = vadd.f32 %v2642, %v2854
        %v2949 = vadd.f32 %v2643, %v2859
        %v2950 = vadd.f32 %v2644, %v2862
        %v2951 = vadd.f32 %v2645, %v2867
        %v2952 = vadd.f32 %v2646, %v2870
        %v2953 = vadd.f32 %v2647, %v2875
        %v2954 = vadd.f32 %v2648, %v2878
        %v2955 = vadd.f32 %v2649, %v2883
        %v2956 = vadd.f32 %v2650, %v2886
        %v2957 = vadd.f32 %v2651, %v2891
        %v2958 = vadd.f32 %v2652, %v2894
        %v2959 = vadd.f32 %v2653, %v2899
        %v2960 = vadd.f32 %v2654, %v2902
        %v2961 = vadd.f32 %v2655, %v2907
        %v2962 = vadd.f32 %v2656, %v2910
        %v2963 = vadd.f32 %v2657, %v2915
        %v2964 = vadd.f32 %v2658, %v2918
        %v2965 = vadd.f32 %v2659, %v2923
        %v2966 = vadd.f32 %v2660, %v2926
        %v2967 = vadd.f32 %v2661, %v2931
        %v2968 = vadd.f32 %v2662, %v2934
        %v2969 = vld [vmem:[%s2] sm:$0x1]
        %v2971 = vlaneseq
        %v2972 = vshrl.u32 %v2971, 7
        %v2973 = vsub.s32 0, %v2972
        %v2974 = vrot.slane %v2969, %v2973
        %v2976 = vadd.f32 %v2937, %v2974
        %v2977 = vadd.f32 %v2938, %v2974
        %v2978 = vadd.f32 %v2939, %v2974
        %v2979 = vadd.f32 %v2940, %v2974
        %v2980 = vadd.f32 %v2941, %v2974
        %v2981 = vadd.f32 %v2942, %v2974
        %v2982 = vadd.f32 %v2943, %v2974
        %v2983 = vadd.f32 %v2944, %v2974
        %v2984 = vadd.f32 %v2945, %v2974
        %v2985 = vadd.f32 %v2946, %v2974
        %v2986 = vadd.f32 %v2947, %v2974
        %v2987 = vadd.f32 %v2948, %v2974
        %v2988 = vadd.f32 %v2949, %v2974
        %v2989 = vadd.f32 %v2950, %v2974
        %v2990 = vadd.f32 %v2951, %v2974
        %v2991 = vadd.f32 %v2952, %v2974
        %v2992 = vadd.f32 %v2953, %v2974
        %v2993 = vadd.f32 %v2954, %v2974
        %v2994 = vadd.f32 %v2955, %v2974
        %v2995 = vadd.f32 %v2956, %v2974
        %v2996 = vadd.f32 %v2957, %v2974
        %v2997 = vadd.f32 %v2958, %v2974
        %v2998 = vadd.f32 %v2959, %v2974
        %v2999 = vadd.f32 %v2960, %v2974
        %v3000 = vadd.f32 %v2961, %v2974
        %v3001 = vadd.f32 %v2962, %v2974
        %v3002 = vadd.f32 %v2963, %v2974
        %v3003 = vadd.f32 %v2964, %v2974
        %v3004 = vadd.f32 %v2965, %v2974
        %v3005 = vadd.f32 %v2966, %v2974
        %v3006 = vadd.f32 %v2967, %v2974
        %v3007 = vadd.f32 %v2968, %v2974
        %v3008 = vmax.f32 %v2976, 0.0
        %v3009 = vmax.f32 %v2977, 0.0
        %v3010 = vmax.f32 %v2978, 0.0
        %v3011 = vmax.f32 %v2979, 0.0
        %v3012 = vmax.f32 %v2980, 0.0
        %v3013 = vmax.f32 %v2981, 0.0
        %v3014 = vmax.f32 %v2982, 0.0
        %v3015 = vmax.f32 %v2983, 0.0
        %v3016 = vmax.f32 %v2984, 0.0
        %v3017 = vmax.f32 %v2985, 0.0
        %v3018 = vmax.f32 %v2986, 0.0
        %v3019 = vmax.f32 %v2987, 0.0
        %v3020 = vmax.f32 %v2988, 0.0
        %v3021 = vmax.f32 %v2989, 0.0
        %v3022 = vmax.f32 %v2990, 0.0
        %v3023 = vmax.f32 %v2991, 0.0
        %v3024 = vmax.f32 %v2992, 0.0
        %v3025 = vmax.f32 %v2993, 0.0
        %v3026 = vmax.f32 %v2994, 0.0
        %v3027 = vmax.f32 %v2995, 0.0
        %v3028 = vmax.f32 %v2996, 0.0
        %v3029 = vmax.f32 %v2997, 0.0
        %v3030 = vmax.f32 %v2998, 0.0
        %v3031 = vmax.f32 %v2999, 0.0
        %v3032 = vmax.f32 %v3000, 0.0
        %v3033 = vmax.f32 %v3001, 0.0
        %v3034 = vmax.f32 %v3002, 0.0
        %v3035 = vmax.f32 %v3003, 0.0
        %v3036 = vmax.f32 %v3004, 0.0
        %v3037 = vmax.f32 %v3005, 0.0
        %v3038 = vmax.f32 %v3006, 0.0
        %v3039 = vmax.f32 %v3007, 0.0
        %3040 = vst [vmem:[#allocation2] sm:$0xff] 0.0
        %3041 = vst [vmem:[#allocation2 + $0x8] sm:$0xff] 0.0
        %3042 = vst [vmem:[#allocation2 + $0x10] sm:$0x3] 0.0
        %3043 = vst [vmem:[#allocation2 + $0x18] sm:$0xff] 0.0
        %3044 = vst [vmem:[#allocation2 + $0x20] sm:$0xff] 0.0
        %3045 = vst [vmem:[#allocation2 + $0x28] sm:$0x3] 0.0
        %3046 = vst [vmem:[#allocation2 + $0x30] sm:$0xff] 0.0
        %3047 = vst [vmem:[#allocation2 + $0x38] sm:$0xff] 0.0
        %3048 = vst [vmem:[#allocation2 + $0x40] sm:$0x3] 0.0
        %3049 = vst [vmem:[#allocation2 + $0x48] sm:$0xff] 0.0
        %3050 = vst [vmem:[#allocation2 + $0x50] sm:$0xff] 0.0
        %3051 = vst [vmem:[#allocation2 + $0x58] sm:$0x3] 0.0
        %3052 = vst [vmem:[#allocation2 + $0x60] sm:$0xff] 0.0
        %3053 = vst [vmem:[#allocation2 + $0x68] sm:$0xff] 0.0
        %3054 = vst [vmem:[#allocation2 + $0x70] sm:$0x3] 0.0
        %3055 = vst [vmem:[#allocation2 + $0x78] sm:$0xff] 0.0
        %3056 = vst [vmem:[#allocation2 + $0x80] sm:$0xff] 0.0
        %3057 = vst [vmem:[#allocation2 + $0x88] sm:$0x3] 0.0
        %3058 = vst [vmem:[#allocation2 + $0x90] sm:$0xff] 0.0
        %3059 = vst [vmem:[#allocation2 + $0x98] sm:$0xff] 0.0
        %3060 = vst [vmem:[#allocation2 + $0xa0] sm:$0x3] 0.0
        %3061 = vst [vmem:[#allocation2 + $0xa8] sm:$0xff] 0.0
        %3062 = vst [vmem:[#allocation2 + $0xb0] sm:$0xff] 0.0
        %3063 = vst [vmem:[#allocation2 + $0xb8] sm:$0x3] 0.0
        %3064 = vst [vmem:[#allocation2 + $0xc0] sm:$0xff] 0.0
        %3065 = vst [vmem:[#allocation2 + $0xc8] sm:$0xff] 0.0
        %3066 = vst [vmem:[#allocation2 + $0xd0] sm:$0x3] 0.0
        %3067 = vst [vmem:[#allocation2 + $0xd8] sm:$0xff] 0.0
        %3068 = vst [vmem:[#allocation2 + $0xe0] sm:$0xff] 0.0
        %3069 = vst [vmem:[#allocation2 + $0xe8] sm:$0x3] 0.0
        %3070 = vst [vmem:[#allocation2 + $0xf0] sm:$0xff] 0.0
        %3071 = vst [vmem:[#allocation2 + $0xf8] sm:$0xff] 0.0
        %3072 = vst [vmem:[#allocation2 + $0x100] sm:$0x3] 0.0
        %3073 = vst [vmem:[#allocation2 + $0x108] sm:$0xff] 0.0
        %3074 = vst [vmem:[#allocation2 + $0x110] sm:$0xff] 0.0
        %3075 = vst [vmem:[#allocation2 + $0x118] sm:$0x3] 0.0
        %3076 = vst [vmem:[#allocation2 + $0x120] sm:$0xff] 0.0
        %3077 = vst [vmem:[#allocation2 + $0x128] sm:$0xff] 0.0
        %3078 = vst [vmem:[#allocation2 + $0x130] sm:$0x3] 0.0
        %3079 = vst [vmem:[#allocation2 + $0x138] sm:$0xff] 0.0
        %3080 = vst [vmem:[#allocation2 + $0x140] sm:$0xff] 0.0
        %3081 = vst [vmem:[#allocation2 + $0x148] sm:$0x3] 0.0
        %3082 = vst [vmem:[#allocation2 + $0x150] sm:$0xff] 0.0
        %3083 = vst [vmem:[#allocation2 + $0x158] sm:$0xff] 0.0
        %3084 = vst [vmem:[#allocation2 + $0x160] sm:$0x3] 0.0
        %3085 = vst [vmem:[#allocation2 + $0x168] sm:$0xff] 0.0
        %3086 = vst [vmem:[#allocation2 + $0x170] sm:$0xff] 0.0
        %3087 = vst [vmem:[#allocation2 + $0x178] sm:$0x3] 0.0
        %3088 = vst [vmem:[#allocation2 + $0x180] sm:$0xff] 0.0
        %3089 = vst [vmem:[#allocation2 + $0x188] sm:$0xff] 0.0
        %3090 = vst [vmem:[#allocation2 + $0x190] sm:$0x3] 0.0
        %3091 = vst [vmem:[#allocation2 + $0x198] sm:$0xff] 0.0
        %3092 = vst [vmem:[#allocation2 + $0x1a0] sm:$0xff] 0.0
        %3093 = vst [vmem:[#allocation2 + $0x1a8] sm:$0x3] 0.0
        %s3094 = scalar_lea.vmem [#allocation2], 24
        %3095 = vst [vmem:[%s3094 + $0x1] sm:$0xff] %v3008
        %3096 = vst [vmem:[%s3094 + $0x9] sm:$0xff] %v3009
        %3097 = vst [vmem:[%s3094 + $0x19] sm:$0xff] %v3010
        %3098 = vst [vmem:[%s3094 + $0x21] sm:$0xff] %v3011
        %3099 = vst [vmem:[%s3094 + $0x31] sm:$0xff] %v3012
        %3100 = vst [vmem:[%s3094 + $0x39] sm:$0xff] %v3013
        %3101 = vst [vmem:[%s3094 + $0x49] sm:$0xff] %v3014
        %3102 = vst [vmem:[%s3094 + $0x51] sm:$0xff] %v3015
        %3103 = vst [vmem:[%s3094 + $0x61] sm:$0xff] %v3016
        %3104 = vst [vmem:[%s3094 + $0x69] sm:$0xff] %v3017
        %3105 = vst [vmem:[%s3094 + $0x79] sm:$0xff] %v3018
        %3106 = vst [vmem:[%s3094 + $0x81] sm:$0xff] %v3019
        %3107 = vst [vmem:[%s3094 + $0x91] sm:$0xff] %v3020
        %3108 = vst [vmem:[%s3094 + $0x99] sm:$0xff] %v3021
        %3109 = vst [vmem:[%s3094 + $0xa9] sm:$0xff] %v3022
        %3110 = vst [vmem:[%s3094 + $0xb1] sm:$0xff] %v3023
        %3111 = vst [vmem:[%s3094 + $0xc1] sm:$0xff] %v3024
        %3112 = vst [vmem:[%s3094 + $0xc9] sm:$0xff] %v3025
        %3113 = vst [vmem:[%s3094 + $0xd9] sm:$0xff] %v3026
        %3114 = vst [vmem:[%s3094 + $0xe1] sm:$0xff] %v3027
        %3115 = vst [vmem:[%s3094 + $0xf1] sm:$0xff] %v3028
        %3116 = vst [vmem:[%s3094 + $0xf9] sm:$0xff] %v3029
        %3117 = vst [vmem:[%s3094 + $0x109] sm:$0xff] %v3030
        %3118 = vst [vmem:[%s3094 + $0x111] sm:$0xff] %v3031
        %3119 = vst [vmem:[%s3094 + $0x121] sm:$0xff] %v3032
        %3120 = vst [vmem:[%s3094 + $0x129] sm:$0xff] %v3033
        %3121 = vst [vmem:[%s3094 + $0x139] sm:$0xff] %v3034
        %3122 = vst [vmem:[%s3094 + $0x141] sm:$0xff] %v3035
        %3123 = vst [vmem:[%s3094 + $0x151] sm:$0xff] %v3036
        %3124 = vst [vmem:[%s3094 + $0x159] sm:$0xff] %v3037
        %3125 = vst [vmem:[%s3094 + $0x169] sm:$0xff] %v3038
        %3126 = vst [vmem:[%s3094 + $0x171] sm:$0xff] %v3039
        %v3127 = vld [vmem:[#allocation2] sm:$0xff]
        %v3128 = vld [vmem:[#allocation2 + $0x8] sm:$0xff]
        %v3129 = vld [vmem:[#allocation2 + $0x18] sm:$0xff]
        %v3130 = vld [vmem:[#allocation2 + $0x20] sm:$0xff]
        %v3131 = vld [vmem:[#allocation2 + $0x30] sm:$0xff]
        %v3132 = vld [vmem:[#allocation2 + $0x38] sm:$0xff]
        %v3133 = vld [vmem:[#allocation2 + $0x48] sm:$0xff]
        %v3134 = vld [vmem:[#allocation2 + $0x50] sm:$0xff]
        %v3135 = vld [vmem:[#allocation2 + $0x60] sm:$0xff]
        %v3136 = vld [vmem:[#allocation2 + $0x68] sm:$0xff]
        %v3137 = vld [vmem:[#allocation2 + $0x78] sm:$0xff]
        %v3138 = vld [vmem:[#allocation2 + $0x80] sm:$0xff]
        %v3139 = vld [vmem:[#allocation2 + $0x90] sm:$0xff]
        %v3140 = vld [vmem:[#allocation2 + $0x98] sm:$0xff]
        %v3141 = vld [vmem:[#allocation2 + $0xa8] sm:$0xff]
        %v3142 = vld [vmem:[#allocation2 + $0xb0] sm:$0xff]
        %v3143 = vld [vmem:[#allocation2 + $0xc0] sm:$0xff]
        %v3144 = vld [vmem:[#allocation2 + $0xc8] sm:$0xff]
        %v3145 = vld [vmem:[#allocation2 + $0xd8] sm:$0xff]
        %v3146 = vld [vmem:[#allocation2 + $0xe0] sm:$0xff]
        %v3147 = vld [vmem:[#allocation2 + $0xf0] sm:$0xff]
        %v3148 = vld [vmem:[#allocation2 + $0xf8] sm:$0xff]
        %v3149 = vld [vmem:[#allocation2 + $0x108] sm:$0xff]
        %v3150 = vld [vmem:[#allocation2 + $0x110] sm:$0xff]
        %v3151 = vld [vmem:[#allocation2 + $0x120] sm:$0xff]
        %v3152 = vld [vmem:[#allocation2 + $0x128] sm:$0xff]
        %v3153 = vld [vmem:[#allocation2 + $0x138] sm:$0xff]
        %v3154 = vld [vmem:[#allocation2 + $0x140] sm:$0xff]
        %v3155 = vld [vmem:[#allocation2 + $0x150] sm:$0xff]
        %v3156 = vld [vmem:[#allocation2 + $0x158] sm:$0xff]
        %v3157 = vld [vmem:[#allocation2 + $0x168] sm:$0xff]
        %v3158 = vld [vmem:[#allocation2 + $0x170] sm:$0xff]
        %v3159 = vpack.c.bf16 %v3128, %v3127
        %v3160 = vpack.c.bf16 %v3130, %v3129
        %v3161 = vpack.c.bf16 %v3132, %v3131
        %v3162 = vpack.c.bf16 %v3134, %v3133
        %v3163 = vpack.c.bf16 %v3136, %v3135
        %v3164 = vpack.c.bf16 %v3138, %v3137
        %v3165 = vpack.c.bf16 %v3140, %v3139
        %v3166 = vpack.c.bf16 %v3142, %v3141
        %v3167 = vpack.c.bf16 %v3144, %v3143
        %v3168 = vpack.c.bf16 %v3146, %v3145
        %v3169 = vpack.c.bf16 %v3148, %v3147
        %v3170 = vpack.c.bf16 %v3150, %v3149
        %v3171 = vpack.c.bf16 %v3152, %v3151
        %v3172 = vpack.c.bf16 %v3154, %v3153
        %v3173 = vpack.c.bf16 %v3156, %v3155
        %v3174 = vpack.c.bf16 %v3158, %v3157
        %v3175 = vld [vmem:[%s3] sm:$0xf]
        %v3176 = vld [vmem:[%s3 + $0x4] sm:$0xf]
        %v3177 = vld [vmem:[%s3 + $0x8] sm:$0xf]
        %v3178 = vld [vmem:[%s3 + $0xc] sm:$0xf]
        %v3179 = vld [vmem:[%s3 + $0x10] sm:$0xf]
        %v3180 = vld [vmem:[%s3 + $0x14] sm:$0xf]
        %v3181 = vld [vmem:[%s3 + $0x18] sm:$0xf]
        %v3182 = vld [vmem:[%s3 + $0x1c] sm:$0xf]
        %v3183 = vld [vmem:[%s3 + $0x20] sm:$0xf]
        %v3184 = vld [vmem:[%s3 + $0x24] sm:$0xf]
        %v3185 = vld [vmem:[%s3 + $0x28] sm:$0xf]
        %v3186 = vld [vmem:[%s3 + $0x2c] sm:$0xf]
        %v3187 = vld [vmem:[%s3 + $0x30] sm:$0xf]
        %v3188 = vld [vmem:[%s3 + $0x34] sm:$0xf]
        %v3189 = vld [vmem:[%s3 + $0x38] sm:$0xf]
        %v3190 = vld [vmem:[%s3 + $0x3c] sm:$0xf]
        %v3191 = vld [vmem:[#allocation2 + $0x1] sm:$0xff]
        %v3192 = vld [vmem:[#allocation2 + $0x9] sm:$0xff]
        %v3193 = vld [vmem:[#allocation2 + $0x19] sm:$0xff]
        %v3194 = vld [vmem:[#allocation2 + $0x21] sm:$0xff]
        %v3195 = vld [vmem:[#allocation2 + $0x31] sm:$0xff]
        %v3196 = vld [vmem:[#allocation2 + $0x39] sm:$0xff]
        %v3197 = vld [vmem:[#allocation2 + $0x49] sm:$0xff]
        %v3198 = vld [vmem:[#allocation2 + $0x51] sm:$0xff]
        %v3199 = vld [vmem:[#allocation2 + $0x61] sm:$0xff]
        %v3200 = vld [vmem:[#allocation2 + $0x69] sm:$0xff]
        %v3201 = vld [vmem:[#allocation2 + $0x79] sm:$0xff]
        %v3202 = vld [vmem:[#allocation2 + $0x81] sm:$0xff]
        %v3203 = vld [vmem:[#allocation2 + $0x91] sm:$0xff]
        %v3204 = vld [vmem:[#allocation2 + $0x99] sm:$0xff]
        %v3205 = vld [vmem:[#allocation2 + $0xa9] sm:$0xff]
        %v3206 = vld [vmem:[#allocation2 + $0xb1] sm:$0xff]
        %v3207 = vld [vmem:[#allocation2 + $0xc1] sm:$0xff]
        %v3208 = vld [vmem:[#allocation2 + $0xc9] sm:$0xff]
        %v3209 = vld [vmem:[#allocation2 + $0xd9] sm:$0xff]
        %v3210 = vld [vmem:[#allocation2 + $0xe1] sm:$0xff]
        %v3211 = vld [vmem:[#allocation2 + $0xf1] sm:$0xff]
        %v3212 = vld [vmem:[#allocation2 + $0xf9] sm:$0xff]
        %v3213 = vld [vmem:[#allocation2 + $0x109] sm:$0xff]
        %v3214 = vld [vmem:[#allocation2 + $0x111] sm:$0xff]
        %v3215 = vld [vmem:[#allocation2 + $0x121] sm:$0xff]
        %v3216 = vld [vmem:[#allocation2 + $0x129] sm:$0xff]
        %v3217 = vld [vmem:[#allocation2 + $0x139] sm:$0xff]
        %v3218 = vld [vmem:[#allocation2 + $0x141] sm:$0xff]
        %v3219 = vld [vmem:[#allocation2 + $0x151] sm:$0xff]
        %v3220 = vld [vmem:[#allocation2 + $0x159] sm:$0xff]
        %v3221 = vld [vmem:[#allocation2 + $0x169] sm:$0xff]
        %v3222 = vld [vmem:[#allocation2 + $0x171] sm:$0xff]
        %v3223 = vpack.c.bf16 %v3192, %v3191
        %v3224 = vpack.c.bf16 %v3194, %v3193
        %v3225 = vpack.c.bf16 %v3196, %v3195
        %v3226 = vpack.c.bf16 %v3198, %v3197
        %v3227 = vpack.c.bf16 %v3200, %v3199
        %v3228 = vpack.c.bf16 %v3202, %v3201
        %v3229 = vpack.c.bf16 %v3204, %v3203
        %v3230 = vpack.c.bf16 %v3206, %v3205
        %v3231 = vpack.c.bf16 %v3208, %v3207
        %v3232 = vpack.c.bf16 %v3210, %v3209
        %v3233 = vpack.c.bf16 %v3212, %v3211
        %v3234 = vpack.c.bf16 %v3214, %v3213
        %v3235 = vpack.c.bf16 %v3216, %v3215
        %v3236 = vpack.c.bf16 %v3218, %v3217
        %v3237 = vpack.c.bf16 %v3220, %v3219
        %v3238 = vpack.c.bf16 %v3222, %v3221
        %s3239 = scalar_lea.vmem %s3, 64
        %v3240 = vld [vmem:[%s3239] sm:$0xf]
        %v3241 = vld [vmem:[%s3239 + $0x4] sm:$0xf]
        %v3242 = vld [vmem:[%s3239 + $0x8] sm:$0xf]
        %v3243 = vld [vmem:[%s3239 + $0xc] sm:$0xf]
        %v3244 = vld [vmem:[%s3239 + $0x10] sm:$0xf]
        %v3245 = vld [vmem:[%s3239 + $0x14] sm:$0xf]
        %v3246 = vld [vmem:[%s3239 + $0x18] sm:$0xf]
        %v3247 = vld [vmem:[%s3239 + $0x1c] sm:$0xf]
        %v3248 = vld [vmem:[%s3239 + $0x20] sm:$0xf]
        %v3249 = vld [vmem:[%s3239 + $0x24] sm:$0xf]
        %v3250 = vld [vmem:[%s3239 + $0x28] sm:$0xf]
        %v3251 = vld [vmem:[%s3239 + $0x2c] sm:$0xf]
        %v3252 = vld [vmem:[%s3239 + $0x30] sm:$0xf]
        %v3253 = vld [vmem:[%s3239 + $0x34] sm:$0xf]
        %v3254 = vld [vmem:[%s3239 + $0x38] sm:$0xf]
        %v3255 = vld [vmem:[%s3239 + $0x3c] sm:$0xf]
        %v3272 = vunpack.c.l.b16 %v3240
        %v3273 = vunpack.c.l.b16 %v3241
        %v3274 = vunpack.c.l.b16 %v3242
        %v3275 = vunpack.c.l.b16 %v3243
        %v3276 = vunpack.c.l.b16 %v3244
        %v3277 = vunpack.c.l.b16 %v3245
        %v3278 = vunpack.c.l.b16 %v3246
        %v3279 = vunpack.c.l.b16 %v3247
        %v3280 = vunpack.c.l.b16 %v3248
        %v3281 = vunpack.c.l.b16 %v3249
        %v3282 = vunpack.c.l.b16 %v3250
        %v3283 = vunpack.c.l.b16 %v3251
        %v3284 = vunpack.c.l.b16 %v3252
        %v3285 = vunpack.c.l.b16 %v3253
        %v3286 = vunpack.c.l.b16 %v3254
        %v3287 = vunpack.c.l.b16 %v3255
        %v3288 = vpack.c.b16 %v3273, %v3272
        %v3289 = vpack.c.b16 %v3275, %v3274
        %v3290 = vpack.c.b16 %v3277, %v3276
        %v3291 = vpack.c.b16 %v3279, %v3278
        %v3292 = vpack.c.b16 %v3281, %v3280
        %v3293 = vpack.c.b16 %v3283, %v3282
        %v3294 = vpack.c.b16 %v3285, %v3284
        %v3295 = vpack.c.b16 %v3287, %v3286
        %3304 = vmatprep.subr.bf16.mxu0 0
        %3305 = vmatpush1.bf16.msra.mxu0 %v3295
        %3306 = vmatprep.subr.bf16.mxu0 0
        %3307 = vmatpush1.bf16.msra.mxu0 %v3294
        %3308 = vmatprep.subr.bf16.mxu0 0
        %3309 = vmatpush1.bf16.msra.mxu0 %v3293
        %3310 = vmatprep.subr.bf16.mxu0 0
        %3311 = vmatpush1.bf16.msra.mxu0 %v3292
        %3312 = vmatprep.subr.bf16.mxu0 0
        %3313 = vmatpush1.bf16.msra.mxu0 %v3291
        %3314 = vmatprep.subr.bf16.mxu0 0
        %3315 = vmatpush1.bf16.msra.mxu0 %v3290
        %3316 = vmatprep.subr.bf16.mxu0 0
        %3317 = vmatpush1.bf16.msra.mxu0 %v3289
        %3318 = vmatprep.subr.bf16.mxu0 0
        %3319 = vmatpush1.bf16.msra.mxu0 %v3288
        %3320 = vmatprep.subr.bf16.mxu0 0
        %3321 = vmatpush2.bf16.msra.mxu0 0
        %3322 = vmatprep.subr.bf16.mxu0 0
        %3323 = vmatpush2.bf16.msra.mxu0 0
        %3324 = vmatprep.subr.bf16.mxu0 0
        %3325 = vmatpush2.bf16.msra.mxu0 0
        %3326 = vmatprep.subr.bf16.mxu0 0
        %3327 = vmatpush2.bf16.msra.mxu0 0
        %3328 = vmatprep.subr.bf16.mxu0 0
        %3329 = vmatpush2.bf16.msra.mxu0 0
        %3330 = vmatprep.subr.bf16.mxu0 0
        %3331 = vmatpush2.bf16.msra.mxu0 0
        %3332 = vmatprep.subr.bf16.mxu0 0
        %3333 = vmatpush2.bf16.msra.mxu0 0
        %3334 = vmatprep.subr.bf16.mxu0 0
        %3335 = vmatpush2.bf16.msra.mxu0 0
        %3336 = vmatprep.mubr.bf16.mxu0 0
        %3337 = vmatmul.mubr.bf16.gmra.mxu0 %v3223
        %v3338 = vpop.f32.mrf.mxu0
        %v3339 = vadd.f32 0.0, %v3338
        %v3340 = vpop.f32.mrf.mxu0
        %v3341 = vpop.f32.mrf.mxu0
        %v3342 = vadd.f32 0.0, %v3341
        %v3343 = vpop.f32.mrf.mxu0
        %3344 = vmatprep.mubr.bf16.mxu0 0
        %3345 = vmatmul.mubr.bf16.gmra.mxu0 %v3224
        %v3346 = vpop.f32.mrf.mxu0
        %v3347 = vadd.f32 0.0, %v3346
        %v3348 = vpop.f32.mrf.mxu0
        %v3349 = vpop.f32.mrf.mxu0
        %v3350 = vadd.f32 0.0, %v3349
        %v3351 = vpop.f32.mrf.mxu0
        %3352 = vmatprep.mubr.bf16.mxu0 0
        %3353 = vmatmul.mubr.bf16.gmra.mxu0 %v3225
        %v3354 = vpop.f32.mrf.mxu0
        %v3355 = vadd.f32 0.0, %v3354
        %v3356 = vpop.f32.mrf.mxu0
        %v3357 = vpop.f32.mrf.mxu0
        %v3358 = vadd.f32 0.0, %v3357
        %v3359 = vpop.f32.mrf.mxu0
        %3360 = vmatprep.mubr.bf16.mxu0 0
        %3361 = vmatmul.mubr.bf16.gmra.mxu0 %v3226
        %v3362 = vpop.f32.mrf.mxu0
        %v3363 = vadd.f32 0.0, %v3362
        %v3364 = vpop.f32.mrf.mxu0
        %v3365 = vpop.f32.mrf.mxu0
        %v3366 = vadd.f32 0.0, %v3365
        %v3367 = vpop.f32.mrf.mxu0
        %3368 = vmatprep.mubr.bf16.mxu0 0
        %3369 = vmatmul.mubr.bf16.gmra.mxu0 %v3227
        %v3370 = vpop.f32.mrf.mxu0
        %v3371 = vadd.f32 0.0, %v3370
        %v3372 = vpop.f32.mrf.mxu0
        %v3373 = vpop.f32.mrf.mxu0
        %v3374 = vadd.f32 0.0, %v3373
        %v3375 = vpop.f32.mrf.mxu0
        %3376 = vmatprep.mubr.bf16.mxu0 0
        %3377 = vmatmul.mubr.bf16.gmra.mxu0 %v3228
        %v3378 = vpop.f32.mrf.mxu0
        %v3379 = vadd.f32 0.0, %v3378
        %v3380 = vpop.f32.mrf.mxu0
        %v3381 = vpop.f32.mrf.mxu0
        %v3382 = vadd.f32 0.0, %v3381
        %v3383 = vpop.f32.mrf.mxu0
        %3384 = vmatprep.mubr.bf16.mxu0 0
        %3385 = vmatmul.mubr.bf16.gmra.mxu0 %v3229
        %v3386 = vpop.f32.mrf.mxu0
        %v3387 = vadd.f32 0.0, %v3386
        %v3388 = vpop.f32.mrf.mxu0
        %v3389 = vpop.f32.mrf.mxu0
        %v3390 = vadd.f32 0.0, %v3389
        %v3391 = vpop.f32.mrf.mxu0
        %3392 = vmatprep.mubr.bf16.mxu0 0
        %3393 = vmatmul.mubr.bf16.gmra.mxu0 %v3230
        %v3394 = vpop.f32.mrf.mxu0
        %v3395 = vadd.f32 0.0, %v3394
        %v3396 = vpop.f32.mrf.mxu0
        %v3397 = vpop.f32.mrf.mxu0
        %v3398 = vadd.f32 0.0, %v3397
        %v3399 = vpop.f32.mrf.mxu0
        %3400 = vmatprep.mubr.bf16.mxu0 0
        %3401 = vmatmul.mubr.bf16.gmra.mxu0 %v3231
        %v3402 = vpop.f32.mrf.mxu0
        %v3403 = vadd.f32 0.0, %v3402
        %v3404 = vpop.f32.mrf.mxu0
        %v3405 = vpop.f32.mrf.mxu0
        %v3406 = vadd.f32 0.0, %v3405
        %v3407 = vpop.f32.mrf.mxu0
        %3408 = vmatprep.mubr.bf16.mxu0 0
        %3409 = vmatmul.mubr.bf16.gmra.mxu0 %v3232
        %v3410 = vpop.f32.mrf.mxu0
        %v3411 = vadd.f32 0.0, %v3410
        %v3412 = vpop.f32.mrf.mxu0
        %v3413 = vpop.f32.mrf.mxu0
        %v3414 = vadd.f32 0.0, %v3413
        %v3415 = vpop.f32.mrf.mxu0
        %3416 = vmatprep.mubr.bf16.mxu0 0
        %3417 = vmatmul.mubr.bf16.gmra.mxu0 %v3233
        %v3418 = vpop.f32.mrf.mxu0
        %v3419 = vadd.f32 0.0, %v3418
        %v3420 = vpop.f32.mrf.mxu0
        %v3421 = vpop.f32.mrf.mxu0
        %v3422 = vadd.f32 0.0, %v3421
        %v3423 = vpop.f32.mrf.mxu0
        %3424 = vmatprep.mubr.bf16.mxu0 0
        %3425 = vmatmul.mubr.bf16.gmra.mxu0 %v3234
        %v3426 = vpop.f32.mrf.mxu0
        %v3427 = vadd.f32 0.0, %v3426
        %v3428 = vpop.f32.mrf.mxu0
        %v3429 = vpop.f32.mrf.mxu0
        %v3430 = vadd.f32 0.0, %v3429
        %v3431 = vpop.f32.mrf.mxu0
        %3432 = vmatprep.mubr.bf16.mxu0 0
        %3433 = vmatmul.mubr.bf16.gmra.mxu0 %v3235
        %v3434 = vpop.f32.mrf.mxu0
        %v3435 = vadd.f32 0.0, %v3434
        %v3436 = vpop.f32.mrf.mxu0
        %v3437 = vpop.f32.mrf.mxu0
        %v3438 = vadd.f32 0.0, %v3437
        %v3439 = vpop.f32.mrf.mxu0
        %3440 = vmatprep.mubr.bf16.mxu0 0
        %3441 = vmatmul.mubr.bf16.gmra.mxu0 %v3236
        %v3442 = vpop.f32.mrf.mxu0
        %v3443 = vadd.f32 0.0, %v3442
        %v3444 = vpop.f32.mrf.mxu0
        %v3445 = vpop.f32.mrf.mxu0
        %v3446 = vadd.f32 0.0, %v3445
        %v3447 = vpop.f32.mrf.mxu0
        %3448 = vmatprep.mubr.bf16.mxu0 0
        %3449 = vmatmul.mubr.bf16.gmra.mxu0 %v3237
        %v3450 = vpop.f32.mrf.mxu0
        %v3451 = vadd.f32 0.0, %v3450
        %v3452 = vpop.f32.mrf.mxu0
        %v3453 = vpop.f32.mrf.mxu0
        %v3454 = vadd.f32 0.0, %v3453
        %v3455 = vpop.f32.mrf.mxu0
        %3456 = vmatprep.mubr.bf16.mxu0 0
        %3457 = vmatmul.mubr.bf16.gmra.mxu0 %v3238
        %v3458 = vpop.f32.mrf.mxu0
        %v3459 = vadd.f32 0.0, %v3458
        %v3460 = vpop.f32.mrf.mxu0
        %v3461 = vpop.f32.mrf.mxu0
        %v3462 = vadd.f32 0.0, %v3461
        %v3463 = vpop.f32.mrf.mxu0
        %3464 = vdwg.mxu0
        %v3481 = vunpack.c.l.b16 %v3175
        %v3482 = vunpack.c.l.b16 %v3176
        %v3483 = vunpack.c.l.b16 %v3177
        %v3484 = vunpack.c.l.b16 %v3178
        %v3485 = vunpack.c.l.b16 %v3179
        %v3486 = vunpack.c.l.b16 %v3180
        %v3487 = vunpack.c.l.b16 %v3181
        %v3488 = vunpack.c.l.b16 %v3182
        %v3489 = vunpack.c.l.b16 %v3183
        %v3490 = vunpack.c.l.b16 %v3184
        %v3491 = vunpack.c.l.b16 %v3185
        %v3492 = vunpack.c.l.b16 %v3186
        %v3493 = vunpack.c.l.b16 %v3187
        %v3494 = vunpack.c.l.b16 %v3188
        %v3495 = vunpack.c.l.b16 %v3189
        %v3496 = vunpack.c.l.b16 %v3190
        %v3497 = vpack.c.b16 %v3482, %v3481
        %v3498 = vpack.c.b16 %v3484, %v3483
        %v3499 = vpack.c.b16 %v3486, %v3485
        %v3500 = vpack.c.b16 %v3488, %v3487
        %v3501 = vpack.c.b16 %v3490, %v3489
        %v3502 = vpack.c.b16 %v3492, %v3491
        %v3503 = vpack.c.b16 %v3494, %v3493
        %v3504 = vpack.c.b16 %v3496, %v3495
        %3513 = vmatprep.subr.bf16.mxu0 0
        %3514 = vmatpush1.bf16.msra.mxu0 %v3504
        %3515 = vmatprep.subr.bf16.mxu0 0
        %3516 = vmatpush1.bf16.msra.mxu0 %v3503
        %3517 = vmatprep.subr.bf16.mxu0 0
        %3518 = vmatpush1.bf16.msra.mxu0 %v3502
        %3519 = vmatprep.subr.bf16.mxu0 0
        %3520 = vmatpush1.bf16.msra.mxu0 %v3501
        %3521 = vmatprep.subr.bf16.mxu0 0
        %3522 = vmatpush1.bf16.msra.mxu0 %v3500
        %3523 = vmatprep.subr.bf16.mxu0 0
        %3524 = vmatpush1.bf16.msra.mxu0 %v3499
        %3525 = vmatprep.subr.bf16.mxu0 0
        %3526 = vmatpush1.bf16.msra.mxu0 %v3498
        %3527 = vmatprep.subr.bf16.mxu0 0
        %3528 = vmatpush1.bf16.msra.mxu0 %v3497
        %3529 = vmatprep.subr.bf16.mxu0 0
        %3530 = vmatpush2.bf16.msra.mxu0 0
        %3531 = vmatprep.subr.bf16.mxu0 0
        %3532 = vmatpush2.bf16.msra.mxu0 0
        %3533 = vmatprep.subr.bf16.mxu0 0
        %3534 = vmatpush2.bf16.msra.mxu0 0
        %3535 = vmatprep.subr.bf16.mxu0 0
        %3536 = vmatpush2.bf16.msra.mxu0 0
        %3537 = vmatprep.subr.bf16.mxu0 0
        %3538 = vmatpush2.bf16.msra.mxu0 0
        %3539 = vmatprep.subr.bf16.mxu0 0
        %3540 = vmatpush2.bf16.msra.mxu0 0
        %3541 = vmatprep.subr.bf16.mxu0 0
        %3542 = vmatpush2.bf16.msra.mxu0 0
        %3543 = vmatprep.subr.bf16.mxu0 0
        %3544 = vmatpush2.bf16.msra.mxu0 0
        %3545 = vmatprep.mubr.bf16.mxu0 0
        %3546 = vmatmul.mubr.bf16.gmra.mxu0 %v3159
        %v3547 = vpop.f32.mrf.mxu0
        %v3548 = vadd.f32 %v3339, %v3547
        %v3549 = vpop.f32.mrf.mxu0
        %v3550 = vpop.f32.mrf.mxu0
        %v3551 = vadd.f32 %v3342, %v3550
        %v3552 = vpop.f32.mrf.mxu0
        %3553 = vmatprep.mubr.bf16.mxu0 0
        %3554 = vmatmul.mubr.bf16.gmra.mxu0 %v3160
        %v3555 = vpop.f32.mrf.mxu0
        %v3556 = vadd.f32 %v3347, %v3555
        %v3557 = vpop.f32.mrf.mxu0
        %v3558 = vpop.f32.mrf.mxu0
        %v3559 = vadd.f32 %v3350, %v3558
        %v3560 = vpop.f32.mrf.mxu0
        %3561 = vmatprep.mubr.bf16.mxu0 0
        %3562 = vmatmul.mubr.bf16.gmra.mxu0 %v3161
        %v3563 = vpop.f32.mrf.mxu0
        %v3564 = vadd.f32 %v3355, %v3563
        %v3565 = vpop.f32.mrf.mxu0
        %v3566 = vpop.f32.mrf.mxu0
        %v3567 = vadd.f32 %v3358, %v3566
        %v3568 = vpop.f32.mrf.mxu0
        %3569 = vmatprep.mubr.bf16.mxu0 0
        %3570 = vmatmul.mubr.bf16.gmra.mxu0 %v3162
        %v3571 = vpop.f32.mrf.mxu0
        %v3572 = vadd.f32 %v3363, %v3571
        %v3573 = vpop.f32.mrf.mxu0
        %v3574 = vpop.f32.mrf.mxu0
        %v3575 = vadd.f32 %v3366, %v3574
        %v3576 = vpop.f32.mrf.mxu0
        %3577 = vmatprep.mubr.bf16.mxu0 0
        %3578 = vmatmul.mubr.bf16.gmra.mxu0 %v3163
        %v3579 = vpop.f32.mrf.mxu0
        %v3580 = vadd.f32 %v3371, %v3579
        %v3581 = vpop.f32.mrf.mxu0
        %v3582 = vpop.f32.mrf.mxu0
        %v3583 = vadd.f32 %v3374, %v3582
        %v3584 = vpop.f32.mrf.mxu0
        %3585 = vmatprep.mubr.bf16.mxu0 0
        %3586 = vmatmul.mubr.bf16.gmra.mxu0 %v3164
        %v3587 = vpop.f32.mrf.mxu0
        %v3588 = vadd.f32 %v3379, %v3587
        %v3589 = vpop.f32.mrf.mxu0
        %v3590 = vpop.f32.mrf.mxu0
        %v3591 = vadd.f32 %v3382, %v3590
        %v3592 = vpop.f32.mrf.mxu0
        %3593 = vmatprep.mubr.bf16.mxu0 0
        %3594 = vmatmul.mubr.bf16.gmra.mxu0 %v3165
        %v3595 = vpop.f32.mrf.mxu0
        %v3596 = vadd.f32 %v3387, %v3595
        %v3597 = vpop.f32.mrf.mxu0
        %v3598 = vpop.f32.mrf.mxu0
        %v3599 = vadd.f32 %v3390, %v3598
        %v3600 = vpop.f32.mrf.mxu0
        %3601 = vmatprep.mubr.bf16.mxu0 0
        %3602 = vmatmul.mubr.bf16.gmra.mxu0 %v3166
        %v3603 = vpop.f32.mrf.mxu0
        %v3604 = vadd.f32 %v3395, %v3603
        %v3605 = vpop.f32.mrf.mxu0
        %v3606 = vpop.f32.mrf.mxu0
        %v3607 = vadd.f32 %v3398, %v3606
        %v3608 = vpop.f32.mrf.mxu0
        %3609 = vmatprep.mubr.bf16.mxu0 0
        %3610 = vmatmul.mubr.bf16.gmra.mxu0 %v3167
        %v3611 = vpop.f32.mrf.mxu0
        %v3612 = vadd.f32 %v3403, %v3611
        %v3613 = vpop.f32.mrf.mxu0
        %v3614 = vpop.f32.mrf.mxu0
        %v3615 = vadd.f32 %v3406, %v3614
        %v3616 = vpop.f32.mrf.mxu0
        %3617 = vmatprep.mubr.bf16.mxu0 0
        %3618 = vmatmul.mubr.bf16.gmra.mxu0 %v3168
        %v3619 = vpop.f32.mrf.mxu0
        %v3620 = vadd.f32 %v3411, %v3619
        %v3621 = vpop.f32.mrf.mxu0
        %v3622 = vpop.f32.mrf.mxu0
        %v3623 = vadd.f32 %v3414, %v3622
        %v3624 = vpop.f32.mrf.mxu0
        %3625 = vmatprep.mubr.bf16.mxu0 0
        %3626 = vmatmul.mubr.bf16.gmra.mxu0 %v3169
        %v3627 = vpop.f32.mrf.mxu0
        %v3628 = vadd.f32 %v3419, %v3627
        %v3629 = vpop.f32.mrf.mxu0
        %v3630 = vpop.f32.mrf.mxu0
        %v3631 = vadd.f32 %v3422, %v3630
        %v3632 = vpop.f32.mrf.mxu0
        %3633 = vmatprep.mubr.bf16.mxu0 0
        %3634 = vmatmul.mubr.bf16.gmra.mxu0 %v3170
        %v3635 = vpop.f32.mrf.mxu0
        %v3636 = vadd.f32 %v3427, %v3635
        %v3637 = vpop.f32.mrf.mxu0
        %v3638 = vpop.f32.mrf.mxu0
        %v3639 = vadd.f32 %v3430, %v3638
        %v3640 = vpop.f32.mrf.mxu0
        %3641 = vmatprep.mubr.bf16.mxu0 0
        %3642 = vmatmul.mubr.bf16.gmra.mxu0 %v3171
        %v3643 = vpop.f32.mrf.mxu0
        %v3644 = vadd.f32 %v3435, %v3643
        %v3645 = vpop.f32.mrf.mxu0
        %v3646 = vpop.f32.mrf.mxu0
        %v3647 = vadd.f32 %v3438, %v3646
        %v3648 = vpop.f32.mrf.mxu0
        %3649 = vmatprep.mubr.bf16.mxu0 0
        %3650 = vmatmul.mubr.bf16.gmra.mxu0 %v3172
        %v3651 = vpop.f32.mrf.mxu0
        %v3652 = vadd.f32 %v3443, %v3651
        %v3653 = vpop.f32.mrf.mxu0
        %v3654 = vpop.f32.mrf.mxu0
        %v3655 = vadd.f32 %v3446, %v3654
        %v3656 = vpop.f32.mrf.mxu0
        %3657 = vmatprep.mubr.bf16.mxu0 0
        %3658 = vmatmul.mubr.bf16.gmra.mxu0 %v3173
        %v3659 = vpop.f32.mrf.mxu0
        %v3660 = vadd.f32 %v3451, %v3659
        %v3661 = vpop.f32.mrf.mxu0
        %v3662 = vpop.f32.mrf.mxu0
        %v3663 = vadd.f32 %v3454, %v3662
        %v3664 = vpop.f32.mrf.mxu0
        %3665 = vmatprep.mubr.bf16.mxu0 0
        %3666 = vmatmul.mubr.bf16.gmra.mxu0 %v3174
        %v3667 = vpop.f32.mrf.mxu0
        %v3668 = vadd.f32 %v3459, %v3667
        %v3669 = vpop.f32.mrf.mxu0
        %v3670 = vpop.f32.mrf.mxu0
        %v3671 = vadd.f32 %v3462, %v3670
        %v3672 = vpop.f32.mrf.mxu0
        %3673 = vdwg.mxu0
        %v3674 = vld [vmem:[#allocation2 + $0x2] sm:$0xff]
        %v3675 = vld [vmem:[#allocation2 + $0xa] sm:$0xff]
        %v3676 = vld [vmem:[#allocation2 + $0x1a] sm:$0xff]
        %v3677 = vld [vmem:[#allocation2 + $0x22] sm:$0xff]
        %v3678 = vld [vmem:[#allocation2 + $0x32] sm:$0xff]
        %v3679 = vld [vmem:[#allocation2 + $0x3a] sm:$0xff]
        %v3680 = vld [vmem:[#allocation2 + $0x4a] sm:$0xff]
        %v3681 = vld [vmem:[#allocation2 + $0x52] sm:$0xff]
        %v3682 = vld [vmem:[#allocation2 + $0x62] sm:$0xff]
        %v3683 = vld [vmem:[#allocation2 + $0x6a] sm:$0xff]
        %v3684 = vld [vmem:[#allocation2 + $0x7a] sm:$0xff]
        %v3685 = vld [vmem:[#allocation2 + $0x82] sm:$0xff]
        %v3686 = vld [vmem:[#allocation2 + $0x92] sm:$0xff]
        %v3687 = vld [vmem:[#allocation2 + $0x9a] sm:$0xff]
        %v3688 = vld [vmem:[#allocation2 + $0xaa] sm:$0xff]
        %v3689 = vld [vmem:[#allocation2 + $0xb2] sm:$0xff]
        %v3690 = vld [vmem:[#allocation2 + $0xc2] sm:$0xff]
        %v3691 = vld [vmem:[#allocation2 + $0xca] sm:$0xff]
        %v3692 = vld [vmem:[#allocation2 + $0xda] sm:$0xff]
        %v3693 = vld [vmem:[#allocation2 + $0xe2] sm:$0xff]
        %v3694 = vld [vmem:[#allocation2 + $0xf2] sm:$0xff]
        %v3695 = vld [vmem:[#allocation2 + $0xfa] sm:$0xff]
        %v3696 = vld [vmem:[#allocation2 + $0x10a] sm:$0xff]
        %v3697 = vld [vmem:[#allocation2 + $0x112] sm:$0xff]
        %v3698 = vld [vmem:[#allocation2 + $0x122] sm:$0xff]
        %v3699 = vld [vmem:[#allocation2 + $0x12a] sm:$0xff]
        %v3700 = vld [vmem:[#allocation2 + $0x13a] sm:$0xff]
        %v3701 = vld [vmem:[#allocation2 + $0x142] sm:$0xff]
        %v3702 = vld [vmem:[#allocation2 + $0x152] sm:$0xff]
        %v3703 = vld [vmem:[#allocation2 + $0x15a] sm:$0xff]
        %v3704 = vld [vmem:[#allocation2 + $0x16a] sm:$0xff]
        %v3705 = vld [vmem:[#allocation2 + $0x172] sm:$0xff]
        %v3706 = vpack.c.bf16 %v3675, %v3674
        %v3707 = vpack.c.bf16 %v3677, %v3676
        %v3708 = vpack.c.bf16 %v3679, %v3678
        %v3709 = vpack.c.bf16 %v3681, %v3680
        %v3710 = vpack.c.bf16 %v3683, %v3682
        %v3711 = vpack.c.bf16 %v3685, %v3684
        %v3712 = vpack.c.bf16 %v3687, %v3686
        %v3713 = vpack.c.bf16 %v3689, %v3688
        %v3714 = vpack.c.bf16 %v3691, %v3690
        %v3715 = vpack.c.bf16 %v3693, %v3692
        %v3716 = vpack.c.bf16 %v3695, %v3694
        %v3717 = vpack.c.bf16 %v3697, %v3696
        %v3718 = vpack.c.bf16 %v3699, %v3698
        %v3719 = vpack.c.bf16 %v3701, %v3700
        %v3720 = vpack.c.bf16 %v3703, %v3702
        %v3721 = vpack.c.bf16 %v3705, %v3704
        %s3722 = scalar_lea.vmem %s3, 128
        %v3723 = vld [vmem:[%s3722] sm:$0xf]
        %v3724 = vld [vmem:[%s3722 + $0x4] sm:$0xf]
        %v3725 = vld [vmem:[%s3722 + $0x8] sm:$0xf]
        %v3726 = vld [vmem:[%s3722 + $0xc] sm:$0xf]
        %v3727 = vld [vmem:[%s3722 + $0x10] sm:$0xf]
        %v3728 = vld [vmem:[%s3722 + $0x14] sm:$0xf]
        %v3729 = vld [vmem:[%s3722 + $0x18] sm:$0xf]
        %v3730 = vld [vmem:[%s3722 + $0x1c] sm:$0xf]
        %v3731 = vld [vmem:[%s3722 + $0x20] sm:$0xf]
        %v3732 = vld [vmem:[%s3722 + $0x24] sm:$0xf]
        %v3733 = vld [vmem:[%s3722 + $0x28] sm:$0xf]
        %v3734 = vld [vmem:[%s3722 + $0x2c] sm:$0xf]
        %v3735 = vld [vmem:[%s3722 + $0x30] sm:$0xf]
        %v3736 = vld [vmem:[%s3722 + $0x34] sm:$0xf]
        %v3737 = vld [vmem:[%s3722 + $0x38] sm:$0xf]
        %v3738 = vld [vmem:[%s3722 + $0x3c] sm:$0xf]
        %v3755 = vunpack.c.l.b16 %v3723
        %v3756 = vunpack.c.l.b16 %v3724
        %v3757 = vunpack.c.l.b16 %v3725
        %v3758 = vunpack.c.l.b16 %v3726
        %v3759 = vunpack.c.l.b16 %v3727
        %v3760 = vunpack.c.l.b16 %v3728
        %v3761 = vunpack.c.l.b16 %v3729
        %v3762 = vunpack.c.l.b16 %v3730
        %v3763 = vunpack.c.l.b16 %v3731
        %v3764 = vunpack.c.l.b16 %v3732
        %v3765 = vunpack.c.l.b16 %v3733
        %v3766 = vunpack.c.l.b16 %v3734
        %v3767 = vunpack.c.l.b16 %v3735
        %v3768 = vunpack.c.l.b16 %v3736
        %v3769 = vunpack.c.l.b16 %v3737
        %v3770 = vunpack.c.l.b16 %v3738
        %v3771 = vpack.c.b16 %v3756, %v3755
        %v3772 = vpack.c.b16 %v3758, %v3757
        %v3773 = vpack.c.b16 %v3760, %v3759
        %v3774 = vpack.c.b16 %v3762, %v3761
        %v3775 = vpack.c.b16 %v3764, %v3763
        %v3776 = vpack.c.b16 %v3766, %v3765
        %v3777 = vpack.c.b16 %v3768, %v3767
        %v3778 = vpack.c.b16 %v3770, %v3769
        %3787 = vmatprep.subr.bf16.mxu0 0
        %3788 = vmatpush1.bf16.msra.mxu0 %v3778
        %3789 = vmatprep.subr.bf16.mxu0 0
        %3790 = vmatpush1.bf16.msra.mxu0 %v3777
        %3791 = vmatprep.subr.bf16.mxu0 0
        %3792 = vmatpush1.bf16.msra.mxu0 %v3776
        %3793 = vmatprep.subr.bf16.mxu0 0
        %3794 = vmatpush1.bf16.msra.mxu0 %v3775
        %3795 = vmatprep.subr.bf16.mxu0 0
        %3796 = vmatpush1.bf16.msra.mxu0 %v3774
        %3797 = vmatprep.subr.bf16.mxu0 0
        %3798 = vmatpush1.bf16.msra.mxu0 %v3773
        %3799 = vmatprep.subr.bf16.mxu0 0
        %3800 = vmatpush1.bf16.msra.mxu0 %v3772
        %3801 = vmatprep.subr.bf16.mxu0 0
        %3802 = vmatpush1.bf16.msra.mxu0 %v3771
        %3803 = vmatprep.subr.bf16.mxu0 0
        %3804 = vmatpush2.bf16.msra.mxu0 0
        %3805 = vmatprep.subr.bf16.mxu0 0
        %3806 = vmatpush2.bf16.msra.mxu0 0
        %3807 = vmatprep.subr.bf16.mxu0 0
        %3808 = vmatpush2.bf16.msra.mxu0 0
        %3809 = vmatprep.subr.bf16.mxu0 0
        %3810 = vmatpush2.bf16.msra.mxu0 0
        %3811 = vmatprep.subr.bf16.mxu0 0
        %3812 = vmatpush2.bf16.msra.mxu0 0
        %3813 = vmatprep.subr.bf16.mxu0 0
        %3814 = vmatpush2.bf16.msra.mxu0 0
        %3815 = vmatprep.subr.bf16.mxu0 0
        %3816 = vmatpush2.bf16.msra.mxu0 0
        %3817 = vmatprep.subr.bf16.mxu0 0
        %3818 = vmatpush2.bf16.msra.mxu0 0
        %3819 = vmatprep.mubr.bf16.mxu0 0
        %3820 = vmatmul.mubr.bf16.gmra.mxu0 %v3706
        %v3821 = vpop.f32.mrf.mxu0
        %v3822 = vadd.f32 0.0, %v3821
        %v3823 = vpop.f32.mrf.mxu0
        %v3824 = vpop.f32.mrf.mxu0
        %v3825 = vadd.f32 0.0, %v3824
        %v3826 = vpop.f32.mrf.mxu0
        %3827 = vmatprep.mubr.bf16.mxu0 0
        %3828 = vmatmul.mubr.bf16.gmra.mxu0 %v3707
        %v3829 = vpop.f32.mrf.mxu0
        %v3830 = vadd.f32 0.0, %v3829
        %v3831 = vpop.f32.mrf.mxu0
        %v3832 = vpop.f32.mrf.mxu0
        %v3833 = vadd.f32 0.0, %v3832
        %v3834 = vpop.f32.mrf.mxu0
        %3835 = vmatprep.mubr.bf16.mxu0 0
        %3836 = vmatmul.mubr.bf16.gmra.mxu0 %v3708
        %v3837 = vpop.f32.mrf.mxu0
        %v3838 = vadd.f32 0.0, %v3837
        %v3839 = vpop.f32.mrf.mxu0
        %v3840 = vpop.f32.mrf.mxu0
        %v3841 = vadd.f32 0.0, %v3840
        %v3842 = vpop.f32.mrf.mxu0
        %3843 = vmatprep.mubr.bf16.mxu0 0
        %3844 = vmatmul.mubr.bf16.gmra.mxu0 %v3709
        %v3845 = vpop.f32.mrf.mxu0
        %v3846 = vadd.f32 0.0, %v3845
        %v3847 = vpop.f32.mrf.mxu0
        %v3848 = vpop.f32.mrf.mxu0
        %v3849 = vadd.f32 0.0, %v3848
        %v3850 = vpop.f32.mrf.mxu0
        %3851 = vmatprep.mubr.bf16.mxu0 0
        %3852 = vmatmul.mubr.bf16.gmra.mxu0 %v3710
        %v3853 = vpop.f32.mrf.mxu0
        %v3854 = vadd.f32 0.0, %v3853
        %v3855 = vpop.f32.mrf.mxu0
        %v3856 = vpop.f32.mrf.mxu0
        %v3857 = vadd.f32 0.0, %v3856
        %v3858 = vpop.f32.mrf.mxu0
        %3859 = vmatprep.mubr.bf16.mxu0 0
        %3860 = vmatmul.mubr.bf16.gmra.mxu0 %v3711
        %v3861 = vpop.f32.mrf.mxu0
        %v3862 = vadd.f32 0.0, %v3861
        %v3863 = vpop.f32.mrf.mxu0
        %v3864 = vpop.f32.mrf.mxu0
        %v3865 = vadd.f32 0.0, %v3864
        %v3866 = vpop.f32.mrf.mxu0
        %3867 = vmatprep.mubr.bf16.mxu0 0
        %3868 = vmatmul.mubr.bf16.gmra.mxu0 %v3712
        %v3869 = vpop.f32.mrf.mxu0
        %v3870 = vadd.f32 0.0, %v3869
        %v3871 = vpop.f32.mrf.mxu0
        %v3872 = vpop.f32.mrf.mxu0
        %v3873 = vadd.f32 0.0, %v3872
        %v3874 = vpop.f32.mrf.mxu0
        %3875 = vmatprep.mubr.bf16.mxu0 0
        %3876 = vmatmul.mubr.bf16.gmra.mxu0 %v3713
        %v3877 = vpop.f32.mrf.mxu0
        %v3878 = vadd.f32 0.0, %v3877
        %v3879 = vpop.f32.mrf.mxu0
        %v3880 = vpop.f32.mrf.mxu0
        %v3881 = vadd.f32 0.0, %v3880
        %v3882 = vpop.f32.mrf.mxu0
        %3883 = vmatprep.mubr.bf16.mxu0 0
        %3884 = vmatmul.mubr.bf16.gmra.mxu0 %v3714
        %v3885 = vpop.f32.mrf.mxu0
        %v3886 = vadd.f32 0.0, %v3885
        %v3887 = vpop.f32.mrf.mxu0
        %v3888 = vpop.f32.mrf.mxu0
        %v3889 = vadd.f32 0.0, %v3888
        %v3890 = vpop.f32.mrf.mxu0
        %3891 = vmatprep.mubr.bf16.mxu0 0
        %3892 = vmatmul.mubr.bf16.gmra.mxu0 %v3715
        %v3893 = vpop.f32.mrf.mxu0
        %v3894 = vadd.f32 0.0, %v3893
        %v3895 = vpop.f32.mrf.mxu0
        %v3896 = vpop.f32.mrf.mxu0
        %v3897 = vadd.f32 0.0, %v3896
        %v3898 = vpop.f32.mrf.mxu0
        %3899 = vmatprep.mubr.bf16.mxu0 0
        %3900 = vmatmul.mubr.bf16.gmra.mxu0 %v3716
        %v3901 = vpop.f32.mrf.mxu0
        %v3902 = vadd.f32 0.0, %v3901
        %v3903 = vpop.f32.mrf.mxu0
        %v3904 = vpop.f32.mrf.mxu0
        %v3905 = vadd.f32 0.0, %v3904
        %v3906 = vpop.f32.mrf.mxu0
        %3907 = vmatprep.mubr.bf16.mxu0 0
        %3908 = vmatmul.mubr.bf16.gmra.mxu0 %v3717
        %v3909 = vpop.f32.mrf.mxu0
        %v3910 = vadd.f32 0.0, %v3909
        %v3911 = vpop.f32.mrf.mxu0
        %v3912 = vpop.f32.mrf.mxu0
        %v3913 = vadd.f32 0.0, %v3912
        %v3914 = vpop.f32.mrf.mxu0
        %3915 = vmatprep.mubr.bf16.mxu0 0
        %3916 = vmatmul.mubr.bf16.gmra.mxu0 %v3718
        %v3917 = vpop.f32.mrf.mxu0
        %v3918 = vadd.f32 0.0, %v3917
        %v3919 = vpop.f32.mrf.mxu0
        %v3920 = vpop.f32.mrf.mxu0
        %v3921 = vadd.f32 0.0, %v3920
        %v3922 = vpop.f32.mrf.mxu0
        %3923 = vmatprep.mubr.bf16.mxu0 0
        %3924 = vmatmul.mubr.bf16.gmra.mxu0 %v3719
        %v3925 = vpop.f32.mrf.mxu0
        %v3926 = vadd.f32 0.0, %v3925
        %v3927 = vpop.f32.mrf.mxu0
        %v3928 = vpop.f32.mrf.mxu0
        %v3929 = vadd.f32 0.0, %v3928
        %v3930 = vpop.f32.mrf.mxu0
        %3931 = vmatprep.mubr.bf16.mxu0 0
        %3932 = vmatmul.mubr.bf16.gmra.mxu0 %v3720
        %v3933 = vpop.f32.mrf.mxu0
        %v3934 = vadd.f32 0.0, %v3933
        %v3935 = vpop.f32.mrf.mxu0
        %v3936 = vpop.f32.mrf.mxu0
        %v3937 = vadd.f32 0.0, %v3936
        %v3938 = vpop.f32.mrf.mxu0
        %3939 = vmatprep.mubr.bf16.mxu0 0
        %3940 = vmatmul.mubr.bf16.gmra.mxu0 %v3721
        %v3941 = vpop.f32.mrf.mxu0
        %v3942 = vadd.f32 0.0, %v3941
        %v3943 = vpop.f32.mrf.mxu0
        %v3944 = vpop.f32.mrf.mxu0
        %v3945 = vadd.f32 0.0, %v3944
        %v3946 = vpop.f32.mrf.mxu0
        %3947 = vdwg.mxu0
        %v3948 = vadd.f32 %v3548, %v3822
        %v3949 = vadd.f32 %v3551, %v3825
        %v3950 = vadd.f32 %v3556, %v3830
        %v3951 = vadd.f32 %v3559, %v3833
        %v3952 = vadd.f32 %v3564, %v3838
        %v3953 = vadd.f32 %v3567, %v3841
        %v3954 = vadd.f32 %v3572, %v3846
        %v3955 = vadd.f32 %v3575, %v3849
        %v3956 = vadd.f32 %v3580, %v3854
        %v3957 = vadd.f32 %v3583, %v3857
        %v3958 = vadd.f32 %v3588, %v3862
        %v3959 = vadd.f32 %v3591, %v3865
        %v3960 = vadd.f32 %v3596, %v3870
        %v3961 = vadd.f32 %v3599, %v3873
        %v3962 = vadd.f32 %v3604, %v3878
        %v3963 = vadd.f32 %v3607, %v3881
        %v3964 = vadd.f32 %v3612, %v3886
        %v3965 = vadd.f32 %v3615, %v3889
        %v3966 = vadd.f32 %v3620, %v3894
        %v3967 = vadd.f32 %v3623, %v3897
        %v3968 = vadd.f32 %v3628, %v3902
        %v3969 = vadd.f32 %v3631, %v3905
        %v3970 = vadd.f32 %v3636, %v3910
        %v3971 = vadd.f32 %v3639, %v3913
        %v3972 = vadd.f32 %v3644, %v3918
        %v3973 = vadd.f32 %v3647, %v3921
        %v3974 = vadd.f32 %v3652, %v3926
        %v3975 = vadd.f32 %v3655, %v3929
        %v3976 = vadd.f32 %v3660, %v3934
        %v3977 = vadd.f32 %v3663, %v3937
        %v3978 = vadd.f32 %v3668, %v3942
        %v3979 = vadd.f32 %v3671, %v3945
        %v3980 = vld [vmem:[%s3094] sm:$0xff]
        %v3981 = vld [vmem:[%s3094 + $0x8] sm:$0xff]
        %v3982 = vld [vmem:[%s3094 + $0x18] sm:$0xff]
        %v3983 = vld [vmem:[%s3094 + $0x20] sm:$0xff]
        %v3984 = vld [vmem:[%s3094 + $0x30] sm:$0xff]
        %v3985 = vld [vmem:[%s3094 + $0x38] sm:$0xff]
        %v3986 = vld [vmem:[%s3094 + $0x48] sm:$0xff]
        %v3987 = vld [vmem:[%s3094 + $0x50] sm:$0xff]
        %v3988 = vld [vmem:[%s3094 + $0x60] sm:$0xff]
        %v3989 = vld [vmem:[%s3094 + $0x68] sm:$0xff]
        %v3990 = vld [vmem:[%s3094 + $0x78] sm:$0xff]
        %v3991 = vld [vmem:[%s3094 + $0x80] sm:$0xff]
        %v3992 = vld [vmem:[%s3094 + $0x90] sm:$0xff]
        %v3993 = vld [vmem:[%s3094 + $0x98] sm:$0xff]
        %v3994 = vld [vmem:[%s3094 + $0xa8] sm:$0xff]
        %v3995 = vld [vmem:[%s3094 + $0xb0] sm:$0xff]
        %v3996 = vld [vmem:[%s3094 + $0xc0] sm:$0xff]
        %v3997 = vld [vmem:[%s3094 + $0xc8] sm:$0xff]
        %v3998 = vld [vmem:[%s3094 + $0xd8] sm:$0xff]
        %v3999 = vld [vmem:[%s3094 + $0xe0] sm:$0xff]
        %v4000 = vld [vmem:[%s3094 + $0xf0] sm:$0xff]
        %v4001 = vld [vmem:[%s3094 + $0xf8] sm:$0xff]
        %v4002 = vld [vmem:[%s3094 + $0x108] sm:$0xff]
        %v4003 = vld [vmem:[%s3094 + $0x110] sm:$0xff]
        %v4004 = vld [vmem:[%s3094 + $0x120] sm:$0xff]
        %v4005 = vld [vmem:[%s3094 + $0x128] sm:$0xff]
        %v4006 = vld [vmem:[%s3094 + $0x138] sm:$0xff]
        %v4007 = vld [vmem:[%s3094 + $0x140] sm:$0xff]
        %v4008 = vld [vmem:[%s3094 + $0x150] sm:$0xff]
        %v4009 = vld [vmem:[%s3094 + $0x158] sm:$0xff]
        %v4010 = vld [vmem:[%s3094 + $0x168] sm:$0xff]
        %v4011 = vld [vmem:[%s3094 + $0x170] sm:$0xff]
        %v4012 = vpack.c.bf16 %v3981, %v3980
        %v4013 = vpack.c.bf16 %v3983, %v3982
        %v4014 = vpack.c.bf16 %v3985, %v3984
        %v4015 = vpack.c.bf16 %v3987, %v3986
        %v4016 = vpack.c.bf16 %v3989, %v3988
        %v4017 = vpack.c.bf16 %v3991, %v3990
        %v4018 = vpack.c.bf16 %v3993, %v3992
        %v4019 = vpack.c.bf16 %v3995, %v3994
        %v4020 = vpack.c.bf16 %v3997, %v3996
        %v4021 = vpack.c.bf16 %v3999, %v3998
        %v4022 = vpack.c.bf16 %v4001, %v4000
        %v4023 = vpack.c.bf16 %v4003, %v4002
        %v4024 = vpack.c.bf16 %v4005, %v4004
        %v4025 = vpack.c.bf16 %v4007, %v4006
        %v4026 = vpack.c.bf16 %v4009, %v4008
        %v4027 = vpack.c.bf16 %v4011, %v4010
        %s4028 = scalar_lea.vmem %s3, 192
        %v4029 = vld [vmem:[%s4028] sm:$0xf]
        %v4030 = vld [vmem:[%s4028 + $0x4] sm:$0xf]
        %v4031 = vld [vmem:[%s4028 + $0x8] sm:$0xf]
        %v4032 = vld [vmem:[%s4028 + $0xc] sm:$0xf]
        %v4033 = vld [vmem:[%s4028 + $0x10] sm:$0xf]
        %v4034 = vld [vmem:[%s4028 + $0x14] sm:$0xf]
        %v4035 = vld [vmem:[%s4028 + $0x18] sm:$0xf]
        %v4036 = vld [vmem:[%s4028 + $0x1c] sm:$0xf]
        %v4037 = vld [vmem:[%s4028 + $0x20] sm:$0xf]
        %v4038 = vld [vmem:[%s4028 + $0x24] sm:$0xf]
        %v4039 = vld [vmem:[%s4028 + $0x28] sm:$0xf]
        %v4040 = vld [vmem:[%s4028 + $0x2c] sm:$0xf]
        %v4041 = vld [vmem:[%s4028 + $0x30] sm:$0xf]
        %v4042 = vld [vmem:[%s4028 + $0x34] sm:$0xf]
        %v4043 = vld [vmem:[%s4028 + $0x38] sm:$0xf]
        %v4044 = vld [vmem:[%s4028 + $0x3c] sm:$0xf]
        %v4061 = vunpack.c.l.b16 %v4029
        %v4062 = vunpack.c.l.b16 %v4030
        %v4063 = vunpack.c.l.b16 %v4031
        %v4064 = vunpack.c.l.b16 %v4032
        %v4065 = vunpack.c.l.b16 %v4033
        %v4066 = vunpack.c.l.b16 %v4034
        %v4067 = vunpack.c.l.b16 %v4035
        %v4068 = vunpack.c.l.b16 %v4036
        %v4069 = vunpack.c.l.b16 %v4037
        %v4070 = vunpack.c.l.b16 %v4038
        %v4071 = vunpack.c.l.b16 %v4039
        %v4072 = vunpack.c.l.b16 %v4040
        %v4073 = vunpack.c.l.b16 %v4041
        %v4074 = vunpack.c.l.b16 %v4042
        %v4075 = vunpack.c.l.b16 %v4043
        %v4076 = vunpack.c.l.b16 %v4044
        %v4077 = vpack.c.b16 %v4062, %v4061
        %v4078 = vpack.c.b16 %v4064, %v4063
        %v4079 = vpack.c.b16 %v4066, %v4065
        %v4080 = vpack.c.b16 %v4068, %v4067
        %v4081 = vpack.c.b16 %v4070, %v4069
        %v4082 = vpack.c.b16 %v4072, %v4071
        %v4083 = vpack.c.b16 %v4074, %v4073
        %v4084 = vpack.c.b16 %v4076, %v4075
        %4093 = vmatprep.subr.bf16.mxu0 0
        %4094 = vmatpush1.bf16.msra.mxu0 %v4084
        %4095 = vmatprep.subr.bf16.mxu0 0
        %4096 = vmatpush1.bf16.msra.mxu0 %v4083
        %4097 = vmatprep.subr.bf16.mxu0 0
        %4098 = vmatpush1.bf16.msra.mxu0 %v4082
        %4099 = vmatprep.subr.bf16.mxu0 0
        %4100 = vmatpush1.bf16.msra.mxu0 %v4081
        %4101 = vmatprep.subr.bf16.mxu0 0
        %4102 = vmatpush1.bf16.msra.mxu0 %v4080
        %4103 = vmatprep.subr.bf16.mxu0 0
        %4104 = vmatpush1.bf16.msra.mxu0 %v4079
        %4105 = vmatprep.subr.bf16.mxu0 0
        %4106 = vmatpush1.bf16.msra.mxu0 %v4078
        %4107 = vmatprep.subr.bf16.mxu0 0
        %4108 = vmatpush1.bf16.msra.mxu0 %v4077
        %4109 = vmatprep.subr.bf16.mxu0 0
        %4110 = vmatpush2.bf16.msra.mxu0 0
        %4111 = vmatprep.subr.bf16.mxu0 0
        %4112 = vmatpush2.bf16.msra.mxu0 0
        %4113 = vmatprep.subr.bf16.mxu0 0
        %4114 = vmatpush2.bf16.msra.mxu0 0
        %4115 = vmatprep.subr.bf16.mxu0 0
        %4116 = vmatpush2.bf16.msra.mxu0 0
        %4117 = vmatprep.subr.bf16.mxu0 0
        %4118 = vmatpush2.bf16.msra.mxu0 0
        %4119 = vmatprep.subr.bf16.mxu0 0
        %4120 = vmatpush2.bf16.msra.mxu0 0
        %4121 = vmatprep.subr.bf16.mxu0 0
        %4122 = vmatpush2.bf16.msra.mxu0 0
        %4123 = vmatprep.subr.bf16.mxu0 0
        %4124 = vmatpush2.bf16.msra.mxu0 0
        %4125 = vmatprep.mubr.bf16.mxu0 0
        %4126 = vmatmul.mubr.bf16.gmra.mxu0 %v4012
        %v4127 = vpop.f32.mrf.mxu0
        %v4128 = vadd.f32 0.0, %v4127
        %v4129 = vpop.f32.mrf.mxu0
        %v4130 = vpop.f32.mrf.mxu0
        %v4131 = vadd.f32 0.0, %v4130
        %v4132 = vpop.f32.mrf.mxu0
        %4133 = vmatprep.mubr.bf16.mxu0 0
        %4134 = vmatmul.mubr.bf16.gmra.mxu0 %v4013
        %v4135 = vpop.f32.mrf.mxu0
        %v4136 = vadd.f32 0.0, %v4135
        %v4137 = vpop.f32.mrf.mxu0
        %v4138 = vpop.f32.mrf.mxu0
        %v4139 = vadd.f32 0.0, %v4138
        %v4140 = vpop.f32.mrf.mxu0
        %4141 = vmatprep.mubr.bf16.mxu0 0
        %4142 = vmatmul.mubr.bf16.gmra.mxu0 %v4014
        %v4143 = vpop.f32.mrf.mxu0
        %v4144 = vadd.f32 0.0, %v4143
        %v4145 = vpop.f32.mrf.mxu0
        %v4146 = vpop.f32.mrf.mxu0
        %v4147 = vadd.f32 0.0, %v4146
        %v4148 = vpop.f32.mrf.mxu0
        %4149 = vmatprep.mubr.bf16.mxu0 0
        %4150 = vmatmul.mubr.bf16.gmra.mxu0 %v4015
        %v4151 = vpop.f32.mrf.mxu0
        %v4152 = vadd.f32 0.0, %v4151
        %v4153 = vpop.f32.mrf.mxu0
        %v4154 = vpop.f32.mrf.mxu0
        %v4155 = vadd.f32 0.0, %v4154
        %v4156 = vpop.f32.mrf.mxu0
        %4157 = vmatprep.mubr.bf16.mxu0 0
        %4158 = vmatmul.mubr.bf16.gmra.mxu0 %v4016
        %v4159 = vpop.f32.mrf.mxu0
        %v4160 = vadd.f32 0.0, %v4159
        %v4161 = vpop.f32.mrf.mxu0
        %v4162 = vpop.f32.mrf.mxu0
        %v4163 = vadd.f32 0.0, %v4162
        %v4164 = vpop.f32.mrf.mxu0
        %4165 = vmatprep.mubr.bf16.mxu0 0
        %4166 = vmatmul.mubr.bf16.gmra.mxu0 %v4017
        %v4167 = vpop.f32.mrf.mxu0
        %v4168 = vadd.f32 0.0, %v4167
        %v4169 = vpop.f32.mrf.mxu0
        %v4170 = vpop.f32.mrf.mxu0
        %v4171 = vadd.f32 0.0, %v4170
        %v4172 = vpop.f32.mrf.mxu0
        %4173 = vmatprep.mubr.bf16.mxu0 0
        %4174 = vmatmul.mubr.bf16.gmra.mxu0 %v4018
        %v4175 = vpop.f32.mrf.mxu0
        %v4176 = vadd.f32 0.0, %v4175
        %v4177 = vpop.f32.mrf.mxu0
        %v4178 = vpop.f32.mrf.mxu0
        %v4179 = vadd.f32 0.0, %v4178
        %v4180 = vpop.f32.mrf.mxu0
        %4181 = vmatprep.mubr.bf16.mxu0 0
        %4182 = vmatmul.mubr.bf16.gmra.mxu0 %v4019
        %v4183 = vpop.f32.mrf.mxu0
        %v4184 = vadd.f32 0.0, %v4183
        %v4185 = vpop.f32.mrf.mxu0
        %v4186 = vpop.f32.mrf.mxu0
        %v4187 = vadd.f32 0.0, %v4186
        %v4188 = vpop.f32.mrf.mxu0
        %4189 = vmatprep.mubr.bf16.mxu0 0
        %4190 = vmatmul.mubr.bf16.gmra.mxu0 %v4020
        %v4191 = vpop.f32.mrf.mxu0
        %v4192 = vadd.f32 0.0, %v4191
        %v4193 = vpop.f32.mrf.mxu0
        %v4194 = vpop.f32.mrf.mxu0
        %v4195 = vadd.f32 0.0, %v4194
        %v4196 = vpop.f32.mrf.mxu0
        %4197 = vmatprep.mubr.bf16.mxu0 0
        %4198 = vmatmul.mubr.bf16.gmra.mxu0 %v4021
        %v4199 = vpop.f32.mrf.mxu0
        %v4200 = vadd.f32 0.0, %v4199
        %v4201 = vpop.f32.mrf.mxu0
        %v4202 = vpop.f32.mrf.mxu0
        %v4203 = vadd.f32 0.0, %v4202
        %v4204 = vpop.f32.mrf.mxu0
        %4205 = vmatprep.mubr.bf16.mxu0 0
        %4206 = vmatmul.mubr.bf16.gmra.mxu0 %v4022
        %v4207 = vpop.f32.mrf.mxu0
        %v4208 = vadd.f32 0.0, %v4207
        %v4209 = vpop.f32.mrf.mxu0
        %v4210 = vpop.f32.mrf.mxu0
        %v4211 = vadd.f32 0.0, %v4210
        %v4212 = vpop.f32.mrf.mxu0
        %4213 = vmatprep.mubr.bf16.mxu0 0
        %4214 = vmatmul.mubr.bf16.gmra.mxu0 %v4023
        %v4215 = vpop.f32.mrf.mxu0
        %v4216 = vadd.f32 0.0, %v4215
        %v4217 = vpop.f32.mrf.mxu0
        %v4218 = vpop.f32.mrf.mxu0
        %v4219 = vadd.f32 0.0, %v4218
        %v4220 = vpop.f32.mrf.mxu0
        %4221 = vmatprep.mubr.bf16.mxu0 0
        %4222 = vmatmul.mubr.bf16.gmra.mxu0 %v4024
        %v4223 = vpop.f32.mrf.mxu0
        %v4224 = vadd.f32 0.0, %v4223
        %v4225 = vpop.f32.mrf.mxu0
        %v4226 = vpop.f32.mrf.mxu0
        %v4227 = vadd.f32 0.0, %v4226
        %v4228 = vpop.f32.mrf.mxu0
        %4229 = vmatprep.mubr.bf16.mxu0 0
        %4230 = vmatmul.mubr.bf16.gmra.mxu0 %v4025
        %v4231 = vpop.f32.mrf.mxu0
        %v4232 = vadd.f32 0.0, %v4231
        %v4233 = vpop.f32.mrf.mxu0
        %v4234 = vpop.f32.mrf.mxu0
        %v4235 = vadd.f32 0.0, %v4234
        %v4236 = vpop.f32.mrf.mxu0
        %4237 = vmatprep.mubr.bf16.mxu0 0
        %4238 = vmatmul.mubr.bf16.gmra.mxu0 %v4026
        %v4239 = vpop.f32.mrf.mxu0
        %v4240 = vadd.f32 0.0, %v4239
        %v4241 = vpop.f32.mrf.mxu0
        %v4242 = vpop.f32.mrf.mxu0
        %v4243 = vadd.f32 0.0, %v4242
        %v4244 = vpop.f32.mrf.mxu0
        %4245 = vmatprep.mubr.bf16.mxu0 0
        %4246 = vmatmul.mubr.bf16.gmra.mxu0 %v4027
        %v4247 = vpop.f32.mrf.mxu0
        %v4248 = vadd.f32 0.0, %v4247
        %v4249 = vpop.f32.mrf.mxu0
        %v4250 = vpop.f32.mrf.mxu0
        %v4251 = vadd.f32 0.0, %v4250
        %v4252 = vpop.f32.mrf.mxu0
        %4253 = vdwg.mxu0
        %v4254 = vadd.f32 %v3948, %v4128
        %v4255 = vadd.f32 %v3949, %v4131
        %v4256 = vadd.f32 %v3950, %v4136
        %v4257 = vadd.f32 %v3951, %v4139
        %v4258 = vadd.f32 %v3952, %v4144
        %v4259 = vadd.f32 %v3953, %v4147
        %v4260 = vadd.f32 %v3954, %v4152
        %v4261 = vadd.f32 %v3955, %v4155
        %v4262 = vadd.f32 %v3956, %v4160
        %v4263 = vadd.f32 %v3957, %v4163
        %v4264 = vadd.f32 %v3958, %v4168
        %v4265 = vadd.f32 %v3959, %v4171
        %v4266 = vadd.f32 %v3960, %v4176
        %v4267 = vadd.f32 %v3961, %v4179
        %v4268 = vadd.f32 %v3962, %v4184
        %v4269 = vadd.f32 %v3963, %v4187
        %v4270 = vadd.f32 %v3964, %v4192
        %v4271 = vadd.f32 %v3965, %v4195
        %v4272 = vadd.f32 %v3966, %v4200
        %v4273 = vadd.f32 %v3967, %v4203
        %v4274 = vadd.f32 %v3968, %v4208
        %v4275 = vadd.f32 %v3969, %v4211
        %v4276 = vadd.f32 %v3970, %v4216
        %v4277 = vadd.f32 %v3971, %v4219
        %v4278 = vadd.f32 %v3972, %v4224
        %v4279 = vadd.f32 %v3973, %v4227
        %v4280 = vadd.f32 %v3974, %v4232
        %v4281 = vadd.f32 %v3975, %v4235
        %v4282 = vadd.f32 %v3976, %v4240
        %v4283 = vadd.f32 %v3977, %v4243
        %v4284 = vadd.f32 %v3978, %v4248
        %v4285 = vadd.f32 %v3979, %v4251
        %v4286 = vld [vmem:[%s3094 + $0x1] sm:$0xff]
        %v4287 = vld [vmem:[%s3094 + $0x9] sm:$0xff]
        %v4288 = vld [vmem:[%s3094 + $0x19] sm:$0xff]
        %v4289 = vld [vmem:[%s3094 + $0x21] sm:$0xff]
        %v4290 = vld [vmem:[%s3094 + $0x31] sm:$0xff]
        %v4291 = vld [vmem:[%s3094 + $0x39] sm:$0xff]
        %v4292 = vld [vmem:[%s3094 + $0x49] sm:$0xff]
        %v4293 = vld [vmem:[%s3094 + $0x51] sm:$0xff]
        %v4294 = vld [vmem:[%s3094 + $0x61] sm:$0xff]
        %v4295 = vld [vmem:[%s3094 + $0x69] sm:$0xff]
        %v4296 = vld [vmem:[%s3094 + $0x79] sm:$0xff]
        %v4297 = vld [vmem:[%s3094 + $0x81] sm:$0xff]
        %v4298 = vld [vmem:[%s3094 + $0x91] sm:$0xff]
        %v4299 = vld [vmem:[%s3094 + $0x99] sm:$0xff]
        %v4300 = vld [vmem:[%s3094 + $0xa9] sm:$0xff]
        %v4301 = vld [vmem:[%s3094 + $0xb1] sm:$0xff]
        %v4302 = vld [vmem:[%s3094 + $0xc1] sm:$0xff]
        %v4303 = vld [vmem:[%s3094 + $0xc9] sm:$0xff]
        %v4304 = vld [vmem:[%s3094 + $0xd9] sm:$0xff]
        %v4305 = vld [vmem:[%s3094 + $0xe1] sm:$0xff]
        %v4306 = vld [vmem:[%s3094 + $0xf1] sm:$0xff]
        %v4307 = vld [vmem:[%s3094 + $0xf9] sm:$0xff]
        %v4308 = vld [vmem:[%s3094 + $0x109] sm:$0xff]
        %v4309 = vld [vmem:[%s3094 + $0x111] sm:$0xff]
        %v4310 = vld [vmem:[%s3094 + $0x121] sm:$0xff]
        %v4311 = vld [vmem:[%s3094 + $0x129] sm:$0xff]
        %v4312 = vld [vmem:[%s3094 + $0x139] sm:$0xff]
        %v4313 = vld [vmem:[%s3094 + $0x141] sm:$0xff]
        %v4314 = vld [vmem:[%s3094 + $0x151] sm:$0xff]
        %v4315 = vld [vmem:[%s3094 + $0x159] sm:$0xff]
        %v4316 = vld [vmem:[%s3094 + $0x169] sm:$0xff]
        %v4317 = vld [vmem:[%s3094 + $0x171] sm:$0xff]
        %v4318 = vpack.c.bf16 %v4287, %v4286
        %v4319 = vpack.c.bf16 %v4289, %v4288
        %v4320 = vpack.c.bf16 %v4291, %v4290
        %v4321 = vpack.c.bf16 %v4293, %v4292
        %v4322 = vpack.c.bf16 %v4295, %v4294
        %v4323 = vpack.c.bf16 %v4297, %v4296
        %v4324 = vpack.c.bf16 %v4299, %v4298
        %v4325 = vpack.c.bf16 %v4301, %v4300
        %v4326 = vpack.c.bf16 %v4303, %v4302
        %v4327 = vpack.c.bf16 %v4305, %v4304
        %v4328 = vpack.c.bf16 %v4307, %v4306
        %v4329 = vpack.c.bf16 %v4309, %v4308
        %v4330 = vpack.c.bf16 %v4311, %v4310
        %v4331 = vpack.c.bf16 %v4313, %v4312
        %v4332 = vpack.c.bf16 %v4315, %v4314
        %v4333 = vpack.c.bf16 %v4317, %v4316
        %s4334 = scalar_lea.vmem %s3, 256
        %v4335 = vld [vmem:[%s4334] sm:$0xf]
        %v4336 = vld [vmem:[%s4334 + $0x4] sm:$0xf]
        %v4337 = vld [vmem:[%s4334 + $0x8] sm:$0xf]
        %v4338 = vld [vmem:[%s4334 + $0xc] sm:$0xf]
        %v4339 = vld [vmem:[%s4334 + $0x10] sm:$0xf]
        %v4340 = vld [vmem:[%s4334 + $0x14] sm:$0xf]
        %v4341 = vld [vmem:[%s4334 + $0x18] sm:$0xf]
        %v4342 = vld [vmem:[%s4334 + $0x1c] sm:$0xf]
        %v4343 = vld [vmem:[%s4334 + $0x20] sm:$0xf]
        %v4344 = vld [vmem:[%s4334 + $0x24] sm:$0xf]
        %v4345 = vld [vmem:[%s4334 + $0x28] sm:$0xf]
        %v4346 = vld [vmem:[%s4334 + $0x2c] sm:$0xf]
        %v4347 = vld [vmem:[%s4334 + $0x30] sm:$0xf]
        %v4348 = vld [vmem:[%s4334 + $0x34] sm:$0xf]
        %v4349 = vld [vmem:[%s4334 + $0x38] sm:$0xf]
        %v4350 = vld [vmem:[%s4334 + $0x3c] sm:$0xf]
        %v4367 = vunpack.c.l.b16 %v4335
        %v4368 = vunpack.c.l.b16 %v4336
        %v4369 = vunpack.c.l.b16 %v4337
        %v4370 = vunpack.c.l.b16 %v4338
        %v4371 = vunpack.c.l.b16 %v4339
        %v4372 = vunpack.c.l.b16 %v4340
        %v4373 = vunpack.c.l.b16 %v4341
        %v4374 = vunpack.c.l.b16 %v4342
        %v4375 = vunpack.c.l.b16 %v4343
        %v4376 = vunpack.c.l.b16 %v4344
        %v4377 = vunpack.c.l.b16 %v4345
        %v4378 = vunpack.c.l.b16 %v4346
        %v4379 = vunpack.c.l.b16 %v4347
        %v4380 = vunpack.c.l.b16 %v4348
        %v4381 = vunpack.c.l.b16 %v4349
        %v4382 = vunpack.c.l.b16 %v4350
        %v4383 = vpack.c.b16 %v4368, %v4367
        %v4384 = vpack.c.b16 %v4370, %v4369
        %v4385 = vpack.c.b16 %v4372, %v4371
        %v4386 = vpack.c.b16 %v4374, %v4373
        %v4387 = vpack.c.b16 %v4376, %v4375
        %v4388 = vpack.c.b16 %v4378, %v4377
        %v4389 = vpack.c.b16 %v4380, %v4379
        %v4390 = vpack.c.b16 %v4382, %v4381
        %4399 = vmatprep.subr.bf16.mxu0 0
        %4400 = vmatpush1.bf16.msra.mxu0 %v4390
        %4401 = vmatprep.subr.bf16.mxu0 0
        %4402 = vmatpush1.bf16.msra.mxu0 %v4389
        %4403 = vmatprep.subr.bf16.mxu0 0
        %4404 = vmatpush1.bf16.msra.mxu0 %v4388
        %4405 = vmatprep.subr.bf16.mxu0 0
        %4406 = vmatpush1.bf16.msra.mxu0 %v4387
        %4407 = vmatprep.subr.bf16.mxu0 0
        %4408 = vmatpush1.bf16.msra.mxu0 %v4386
        %4409 = vmatprep.subr.bf16.mxu0 0
        %4410 = vmatpush1.bf16.msra.mxu0 %v4385
        %4411 = vmatprep.subr.bf16.mxu0 0
        %4412 = vmatpush1.bf16.msra.mxu0 %v4384
        %4413 = vmatprep.subr.bf16.mxu0 0
        %4414 = vmatpush1.bf16.msra.mxu0 %v4383
        %4415 = vmatprep.subr.bf16.mxu0 0
        %4416 = vmatpush2.bf16.msra.mxu0 0
        %4417 = vmatprep.subr.bf16.mxu0 0
        %4418 = vmatpush2.bf16.msra.mxu0 0
        %4419 = vmatprep.subr.bf16.mxu0 0
        %4420 = vmatpush2.bf16.msra.mxu0 0
        %4421 = vmatprep.subr.bf16.mxu0 0
        %4422 = vmatpush2.bf16.msra.mxu0 0
        %4423 = vmatprep.subr.bf16.mxu0 0
        %4424 = vmatpush2.bf16.msra.mxu0 0
        %4425 = vmatprep.subr.bf16.mxu0 0
        %4426 = vmatpush2.bf16.msra.mxu0 0
        %4427 = vmatprep.subr.bf16.mxu0 0
        %4428 = vmatpush2.bf16.msra.mxu0 0
        %4429 = vmatprep.subr.bf16.mxu0 0
        %4430 = vmatpush2.bf16.msra.mxu0 0
        %4431 = vmatprep.mubr.bf16.mxu0 0
        %4432 = vmatmul.mubr.bf16.gmra.mxu0 %v4318
        %v4433 = vpop.f32.mrf.mxu0
        %v4434 = vadd.f32 0.0, %v4433
        %v4435 = vpop.f32.mrf.mxu0
        %v4436 = vpop.f32.mrf.mxu0
        %v4437 = vadd.f32 0.0, %v4436
        %v4438 = vpop.f32.mrf.mxu0
        %4439 = vmatprep.mubr.bf16.mxu0 0
        %4440 = vmatmul.mubr.bf16.gmra.mxu0 %v4319
        %v4441 = vpop.f32.mrf.mxu0
        %v4442 = vadd.f32 0.0, %v4441
        %v4443 = vpop.f32.mrf.mxu0
        %v4444 = vpop.f32.mrf.mxu0
        %v4445 = vadd.f32 0.0, %v4444
        %v4446 = vpop.f32.mrf.mxu0
        %4447 = vmatprep.mubr.bf16.mxu0 0
        %4448 = vmatmul.mubr.bf16.gmra.mxu0 %v4320
        %v4449 = vpop.f32.mrf.mxu0
        %v4450 = vadd.f32 0.0, %v4449
        %v4451 = vpop.f32.mrf.mxu0
        %v4452 = vpop.f32.mrf.mxu0
        %v4453 = vadd.f32 0.0, %v4452
        %v4454 = vpop.f32.mrf.mxu0
        %4455 = vmatprep.mubr.bf16.mxu0 0
        %4456 = vmatmul.mubr.bf16.gmra.mxu0 %v4321
        %v4457 = vpop.f32.mrf.mxu0
        %v4458 = vadd.f32 0.0, %v4457
        %v4459 = vpop.f32.mrf.mxu0
        %v4460 = vpop.f32.mrf.mxu0
        %v4461 = vadd.f32 0.0, %v4460
        %v4462 = vpop.f32.mrf.mxu0
        %4463 = vmatprep.mubr.bf16.mxu0 0
        %4464 = vmatmul.mubr.bf16.gmra.mxu0 %v4322
        %v4465 = vpop.f32.mrf.mxu0
        %v4466 = vadd.f32 0.0, %v4465
        %v4467 = vpop.f32.mrf.mxu0
        %v4468 = vpop.f32.mrf.mxu0
        %v4469 = vadd.f32 0.0, %v4468
        %v4470 = vpop.f32.mrf.mxu0
        %4471 = vmatprep.mubr.bf16.mxu0 0
        %4472 = vmatmul.mubr.bf16.gmra.mxu0 %v4323
        %v4473 = vpop.f32.mrf.mxu0
        %v4474 = vadd.f32 0.0, %v4473
        %v4475 = vpop.f32.mrf.mxu0
        %v4476 = vpop.f32.mrf.mxu0
        %v4477 = vadd.f32 0.0, %v4476
        %v4478 = vpop.f32.mrf.mxu0
        %4479 = vmatprep.mubr.bf16.mxu0 0
        %4480 = vmatmul.mubr.bf16.gmra.mxu0 %v4324
        %v4481 = vpop.f32.mrf.mxu0
        %v4482 = vadd.f32 0.0, %v4481
        %v4483 = vpop.f32.mrf.mxu0
        %v4484 = vpop.f32.mrf.mxu0
        %v4485 = vadd.f32 0.0, %v4484
        %v4486 = vpop.f32.mrf.mxu0
        %4487 = vmatprep.mubr.bf16.mxu0 0
        %4488 = vmatmul.mubr.bf16.gmra.mxu0 %v4325
        %v4489 = vpop.f32.mrf.mxu0
        %v4490 = vadd.f32 0.0, %v4489
        %v4491 = vpop.f32.mrf.mxu0
        %v4492 = vpop.f32.mrf.mxu0
        %v4493 = vadd.f32 0.0, %v4492
        %v4494 = vpop.f32.mrf.mxu0
        %4495 = vmatprep.mubr.bf16.mxu0 0
        %4496 = vmatmul.mubr.bf16.gmra.mxu0 %v4326
        %v4497 = vpop.f32.mrf.mxu0
        %v4498 = vadd.f32 0.0, %v4497
        %v4499 = vpop.f32.mrf.mxu0
        %v4500 = vpop.f32.mrf.mxu0
        %v4501 = vadd.f32 0.0, %v4500
        %v4502 = vpop.f32.mrf.mxu0
        %4503 = vmatprep.mubr.bf16.mxu0 0
        %4504 = vmatmul.mubr.bf16.gmra.mxu0 %v4327
        %v4505 = vpop.f32.mrf.mxu0
        %v4506 = vadd.f32 0.0, %v4505
        %v4507 = vpop.f32.mrf.mxu0
        %v4508 = vpop.f32.mrf.mxu0
        %v4509 = vadd.f32 0.0, %v4508
        %v4510 = vpop.f32.mrf.mxu0
        %4511 = vmatprep.mubr.bf16.mxu0 0
        %4512 = vmatmul.mubr.bf16.gmra.mxu0 %v4328
        %v4513 = vpop.f32.mrf.mxu0
        %v4514 = vadd.f32 0.0, %v4513
        %v4515 = vpop.f32.mrf.mxu0
        %v4516 = vpop.f32.mrf.mxu0
        %v4517 = vadd.f32 0.0, %v4516
        %v4518 = vpop.f32.mrf.mxu0
        %4519 = vmatprep.mubr.bf16.mxu0 0
        %4520 = vmatmul.mubr.bf16.gmra.mxu0 %v4329
        %v4521 = vpop.f32.mrf.mxu0
        %v4522 = vadd.f32 0.0, %v4521
        %v4523 = vpop.f32.mrf.mxu0
        %v4524 = vpop.f32.mrf.mxu0
        %v4525 = vadd.f32 0.0, %v4524
        %v4526 = vpop.f32.mrf.mxu0
        %4527 = vmatprep.mubr.bf16.mxu0 0
        %4528 = vmatmul.mubr.bf16.gmra.mxu0 %v4330
        %v4529 = vpop.f32.mrf.mxu0
        %v4530 = vadd.f32 0.0, %v4529
        %v4531 = vpop.f32.mrf.mxu0
        %v4532 = vpop.f32.mrf.mxu0
        %v4533 = vadd.f32 0.0, %v4532
        %v4534 = vpop.f32.mrf.mxu0
        %4535 = vmatprep.mubr.bf16.mxu0 0
        %4536 = vmatmul.mubr.bf16.gmra.mxu0 %v4331
        %v4537 = vpop.f32.mrf.mxu0
        %v4538 = vadd.f32 0.0, %v4537
        %v4539 = vpop.f32.mrf.mxu0
        %v4540 = vpop.f32.mrf.mxu0
        %v4541 = vadd.f32 0.0, %v4540
        %v4542 = vpop.f32.mrf.mxu0
        %4543 = vmatprep.mubr.bf16.mxu0 0
        %4544 = vmatmul.mubr.bf16.gmra.mxu0 %v4332
        %v4545 = vpop.f32.mrf.mxu0
        %v4546 = vadd.f32 0.0, %v4545
        %v4547 = vpop.f32.mrf.mxu0
        %v4548 = vpop.f32.mrf.mxu0
        %v4549 = vadd.f32 0.0, %v4548
        %v4550 = vpop.f32.mrf.mxu0
        %4551 = vmatprep.mubr.bf16.mxu0 0
        %4552 = vmatmul.mubr.bf16.gmra.mxu0 %v4333
        %v4553 = vpop.f32.mrf.mxu0
        %v4554 = vadd.f32 0.0, %v4553
        %v4555 = vpop.f32.mrf.mxu0
        %v4556 = vpop.f32.mrf.mxu0
        %v4557 = vadd.f32 0.0, %v4556
        %v4558 = vpop.f32.mrf.mxu0
        %4559 = vdwg.mxu0
        %v4560 = vadd.f32 %v4254, %v4434
        %v4561 = vadd.f32 %v4255, %v4437
        %v4562 = vadd.f32 %v4256, %v4442
        %v4563 = vadd.f32 %v4257, %v4445
        %v4564 = vadd.f32 %v4258, %v4450
        %v4565 = vadd.f32 %v4259, %v4453
        %v4566 = vadd.f32 %v4260, %v4458
        %v4567 = vadd.f32 %v4261, %v4461
        %v4568 = vadd.f32 %v4262, %v4466
        %v4569 = vadd.f32 %v4263, %v4469
        %v4570 = vadd.f32 %v4264, %v4474
        %v4571 = vadd.f32 %v4265, %v4477
        %v4572 = vadd.f32 %v4266, %v4482
        %v4573 = vadd.f32 %v4267, %v4485
        %v4574 = vadd.f32 %v4268, %v4490
        %v4575 = vadd.f32 %v4269, %v4493
        %v4576 = vadd.f32 %v4270, %v4498
        %v4577 = vadd.f32 %v4271, %v4501
        %v4578 = vadd.f32 %v4272, %v4506
        %v4579 = vadd.f32 %v4273, %v4509
        %v4580 = vadd.f32 %v4274, %v4514
        %v4581 = vadd.f32 %v4275, %v4517
        %v4582 = vadd.f32 %v4276, %v4522
        %v4583 = vadd.f32 %v4277, %v4525
        %v4584 = vadd.f32 %v4278, %v4530
        %v4585 = vadd.f32 %v4279, %v4533
        %v4586 = vadd.f32 %v4280, %v4538
        %v4587 = vadd.f32 %v4281, %v4541
        %v4588 = vadd.f32 %v4282, %v4546
        %v4589 = vadd.f32 %v4283, %v4549
        %v4590 = vadd.f32 %v4284, %v4554
        %v4591 = vadd.f32 %v4285, %v4557
        %v4592 = vld [vmem:[%s3094 + $0x2] sm:$0xff]
        %v4593 = vld [vmem:[%s3094 + $0xa] sm:$0xff]
        %v4594 = vld [vmem:[%s3094 + $0x1a] sm:$0xff]
        %v4595 = vld [vmem:[%s3094 + $0x22] sm:$0xff]
        %v4596 = vld [vmem:[%s3094 + $0x32] sm:$0xff]
        %v4597 = vld [vmem:[%s3094 + $0x3a] sm:$0xff]
        %v4598 = vld [vmem:[%s3094 + $0x4a] sm:$0xff]
        %v4599 = vld [vmem:[%s3094 + $0x52] sm:$0xff]
        %v4600 = vld [vmem:[%s3094 + $0x62] sm:$0xff]
        %v4601 = vld [vmem:[%s3094 + $0x6a] sm:$0xff]
        %v4602 = vld [vmem:[%s3094 + $0x7a] sm:$0xff]
        %v4603 = vld [vmem:[%s3094 + $0x82] sm:$0xff]
        %v4604 = vld [vmem:[%s3094 + $0x92] sm:$0xff]
        %v4605 = vld [vmem:[%s3094 + $0x9a] sm:$0xff]
        %v4606 = vld [vmem:[%s3094 + $0xaa] sm:$0xff]
        %v4607 = vld [vmem:[%s3094 + $0xb2] sm:$0xff]
        %v4608 = vld [vmem:[%s3094 + $0xc2] sm:$0xff]
        %v4609 = vld [vmem:[%s3094 + $0xca] sm:$0xff]
        %v4610 = vld [vmem:[%s3094 + $0xda] sm:$0xff]
        %v4611 = vld [vmem:[%s3094 + $0xe2] sm:$0xff]
        %v4612 = vld [vmem:[%s3094 + $0xf2] sm:$0xff]
        %v4613 = vld [vmem:[%s3094 + $0xfa] sm:$0xff]
        %v4614 = vld [vmem:[%s3094 + $0x10a] sm:$0xff]
        %v4615 = vld [vmem:[%s3094 + $0x112] sm:$0xff]
        %v4616 = vld [vmem:[%s3094 + $0x122] sm:$0xff]
        %v4617 = vld [vmem:[%s3094 + $0x12a] sm:$0xff]
        %v4618 = vld [vmem:[%s3094 + $0x13a] sm:$0xff]
        %v4619 = vld [vmem:[%s3094 + $0x142] sm:$0xff]
        %v4620 = vld [vmem:[%s3094 + $0x152] sm:$0xff]
        %v4621 = vld [vmem:[%s3094 + $0x15a] sm:$0xff]
        %v4622 = vld [vmem:[%s3094 + $0x16a] sm:$0xff]
        %v4623 = vld [vmem:[%s3094 + $0x172] sm:$0xff]
        %v4624 = vpack.c.bf16 %v4593, %v4592
        %v4625 = vpack.c.bf16 %v4595, %v4594
        %v4626 = vpack.c.bf16 %v4597, %v4596
        %v4627 = vpack.c.bf16 %v4599, %v4598
        %v4628 = vpack.c.bf16 %v4601, %v4600
        %v4629 = vpack.c.bf16 %v4603, %v4602
        %v4630 = vpack.c.bf16 %v4605, %v4604
        %v4631 = vpack.c.bf16 %v4607, %v4606
        %v4632 = vpack.c.bf16 %v4609, %v4608
        %v4633 = vpack.c.bf16 %v4611, %v4610
        %v4634 = vpack.c.bf16 %v4613, %v4612
        %v4635 = vpack.c.bf16 %v4615, %v4614
        %v4636 = vpack.c.bf16 %v4617, %v4616
        %v4637 = vpack.c.bf16 %v4619, %v4618
        %v4638 = vpack.c.bf16 %v4621, %v4620
        %v4639 = vpack.c.bf16 %v4623, %v4622
        %s4640 = scalar_lea.vmem %s3, 320
        %v4641 = vld [vmem:[%s4640] sm:$0xf]
        %v4642 = vld [vmem:[%s4640 + $0x4] sm:$0xf]
        %v4643 = vld [vmem:[%s4640 + $0x8] sm:$0xf]
        %v4644 = vld [vmem:[%s4640 + $0xc] sm:$0xf]
        %v4645 = vld [vmem:[%s4640 + $0x10] sm:$0xf]
        %v4646 = vld [vmem:[%s4640 + $0x14] sm:$0xf]
        %v4647 = vld [vmem:[%s4640 + $0x18] sm:$0xf]
        %v4648 = vld [vmem:[%s4640 + $0x1c] sm:$0xf]
        %v4649 = vld [vmem:[%s4640 + $0x20] sm:$0xf]
        %v4650 = vld [vmem:[%s4640 + $0x24] sm:$0xf]
        %v4651 = vld [vmem:[%s4640 + $0x28] sm:$0xf]
        %v4652 = vld [vmem:[%s4640 + $0x2c] sm:$0xf]
        %v4653 = vld [vmem:[%s4640 + $0x30] sm:$0xf]
        %v4654 = vld [vmem:[%s4640 + $0x34] sm:$0xf]
        %v4655 = vld [vmem:[%s4640 + $0x38] sm:$0xf]
        %v4656 = vld [vmem:[%s4640 + $0x3c] sm:$0xf]
        %v4673 = vunpack.c.l.b16 %v4641
        %v4674 = vunpack.c.l.b16 %v4642
        %v4675 = vunpack.c.l.b16 %v4643
        %v4676 = vunpack.c.l.b16 %v4644
        %v4677 = vunpack.c.l.b16 %v4645
        %v4678 = vunpack.c.l.b16 %v4646
        %v4679 = vunpack.c.l.b16 %v4647
        %v4680 = vunpack.c.l.b16 %v4648
        %v4681 = vunpack.c.l.b16 %v4649
        %v4682 = vunpack.c.l.b16 %v4650
        %v4683 = vunpack.c.l.b16 %v4651
        %v4684 = vunpack.c.l.b16 %v4652
        %v4685 = vunpack.c.l.b16 %v4653
        %v4686 = vunpack.c.l.b16 %v4654
        %v4687 = vunpack.c.l.b16 %v4655
        %v4688 = vunpack.c.l.b16 %v4656
        %v4689 = vpack.c.b16 %v4674, %v4673
        %v4690 = vpack.c.b16 %v4676, %v4675
        %v4691 = vpack.c.b16 %v4678, %v4677
        %v4692 = vpack.c.b16 %v4680, %v4679
        %v4693 = vpack.c.b16 %v4682, %v4681
        %v4694 = vpack.c.b16 %v4684, %v4683
        %v4695 = vpack.c.b16 %v4686, %v4685
        %v4696 = vpack.c.b16 %v4688, %v4687
        %4705 = vmatprep.subr.bf16.mxu0 0
        %4706 = vmatpush1.bf16.msra.mxu0 %v4696
        %4707 = vmatprep.subr.bf16.mxu0 0
        %4708 = vmatpush1.bf16.msra.mxu0 %v4695
        %4709 = vmatprep.subr.bf16.mxu0 0
        %4710 = vmatpush1.bf16.msra.mxu0 %v4694
        %4711 = vmatprep.subr.bf16.mxu0 0
        %4712 = vmatpush1.bf16.msra.mxu0 %v4693
        %4713 = vmatprep.subr.bf16.mxu0 0
        %4714 = vmatpush1.bf16.msra.mxu0 %v4692
        %4715 = vmatprep.subr.bf16.mxu0 0
        %4716 = vmatpush1.bf16.msra.mxu0 %v4691
        %4717 = vmatprep.subr.bf16.mxu0 0
        %4718 = vmatpush1.bf16.msra.mxu0 %v4690
        %4719 = vmatprep.subr.bf16.mxu0 0
        %4720 = vmatpush1.bf16.msra.mxu0 %v4689
        %4721 = vmatprep.subr.bf16.mxu0 0
        %4722 = vmatpush2.bf16.msra.mxu0 0
        %4723 = vmatprep.subr.bf16.mxu0 0
        %4724 = vmatpush2.bf16.msra.mxu0 0
        %4725 = vmatprep.subr.bf16.mxu0 0
        %4726 = vmatpush2.bf16.msra.mxu0 0
        %4727 = vmatprep.subr.bf16.mxu0 0
        %4728 = vmatpush2.bf16.msra.mxu0 0
        %4729 = vmatprep.subr.bf16.mxu0 0
        %4730 = vmatpush2.bf16.msra.mxu0 0
        %4731 = vmatprep.subr.bf16.mxu0 0
        %4732 = vmatpush2.bf16.msra.mxu0 0
        %4733 = vmatprep.subr.bf16.mxu0 0
        %4734 = vmatpush2.bf16.msra.mxu0 0
        %4735 = vmatprep.subr.bf16.mxu0 0
        %4736 = vmatpush2.bf16.msra.mxu0 0
        %4737 = vmatprep.mubr.bf16.mxu0 0
        %4738 = vmatmul.mubr.bf16.gmra.mxu0 %v4624
        %v4739 = vpop.f32.mrf.mxu0
        %v4740 = vadd.f32 0.0, %v4739
        %v4741 = vpop.f32.mrf.mxu0
        %v4742 = vpop.f32.mrf.mxu0
        %v4743 = vadd.f32 0.0, %v4742
        %v4744 = vpop.f32.mrf.mxu0
        %4745 = vmatprep.mubr.bf16.mxu0 0
        %4746 = vmatmul.mubr.bf16.gmra.mxu0 %v4625
        %v4747 = vpop.f32.mrf.mxu0
        %v4748 = vadd.f32 0.0, %v4747
        %v4749 = vpop.f32.mrf.mxu0
        %v4750 = vpop.f32.mrf.mxu0
        %v4751 = vadd.f32 0.0, %v4750
        %v4752 = vpop.f32.mrf.mxu0
        %4753 = vmatprep.mubr.bf16.mxu0 0
        %4754 = vmatmul.mubr.bf16.gmra.mxu0 %v4626
        %v4755 = vpop.f32.mrf.mxu0
        %v4756 = vadd.f32 0.0, %v4755
        %v4757 = vpop.f32.mrf.mxu0
        %v4758 = vpop.f32.mrf.mxu0
        %v4759 = vadd.f32 0.0, %v4758
        %v4760 = vpop.f32.mrf.mxu0
        %4761 = vmatprep.mubr.bf16.mxu0 0
        %4762 = vmatmul.mubr.bf16.gmra.mxu0 %v4627
        %v4763 = vpop.f32.mrf.mxu0
        %v4764 = vadd.f32 0.0, %v4763
        %v4765 = vpop.f32.mrf.mxu0
        %v4766 = vpop.f32.mrf.mxu0
        %v4767 = vadd.f32 0.0, %v4766
        %v4768 = vpop.f32.mrf.mxu0
        %4769 = vmatprep.mubr.bf16.mxu0 0
        %4770 = vmatmul.mubr.bf16.gmra.mxu0 %v4628
        %v4771 = vpop.f32.mrf.mxu0
        %v4772 = vadd.f32 0.0, %v4771
        %v4773 = vpop.f32.mrf.mxu0
        %v4774 = vpop.f32.mrf.mxu0
        %v4775 = vadd.f32 0.0, %v4774
        %v4776 = vpop.f32.mrf.mxu0
        %4777 = vmatprep.mubr.bf16.mxu0 0
        %4778 = vmatmul.mubr.bf16.gmra.mxu0 %v4629
        %v4779 = vpop.f32.mrf.mxu0
        %v4780 = vadd.f32 0.0, %v4779
        %v4781 = vpop.f32.mrf.mxu0
        %v4782 = vpop.f32.mrf.mxu0
        %v4783 = vadd.f32 0.0, %v4782
        %v4784 = vpop.f32.mrf.mxu0
        %4785 = vmatprep.mubr.bf16.mxu0 0
        %4786 = vmatmul.mubr.bf16.gmra.mxu0 %v4630
        %v4787 = vpop.f32.mrf.mxu0
        %v4788 = vadd.f32 0.0, %v4787
        %v4789 = vpop.f32.mrf.mxu0
        %v4790 = vpop.f32.mrf.mxu0
        %v4791 = vadd.f32 0.0, %v4790
        %v4792 = vpop.f32.mrf.mxu0
        %4793 = vmatprep.mubr.bf16.mxu0 0
        %4794 = vmatmul.mubr.bf16.gmra.mxu0 %v4631
        %v4795 = vpop.f32.mrf.mxu0
        %v4796 = vadd.f32 0.0, %v4795
        %v4797 = vpop.f32.mrf.mxu0
        %v4798 = vpop.f32.mrf.mxu0
        %v4799 = vadd.f32 0.0, %v4798
        %v4800 = vpop.f32.mrf.mxu0
        %4801 = vmatprep.mubr.bf16.mxu0 0
        %4802 = vmatmul.mubr.bf16.gmra.mxu0 %v4632
        %v4803 = vpop.f32.mrf.mxu0
        %v4804 = vadd.f32 0.0, %v4803
        %v4805 = vpop.f32.mrf.mxu0
        %v4806 = vpop.f32.mrf.mxu0
        %v4807 = vadd.f32 0.0, %v4806
        %v4808 = vpop.f32.mrf.mxu0
        %4809 = vmatprep.mubr.bf16.mxu0 0
        %4810 = vmatmul.mubr.bf16.gmra.mxu0 %v4633
        %v4811 = vpop.f32.mrf.mxu0
        %v4812 = vadd.f32 0.0, %v4811
        %v4813 = vpop.f32.mrf.mxu0
        %v4814 = vpop.f32.mrf.mxu0
        %v4815 = vadd.f32 0.0, %v4814
        %v4816 = vpop.f32.mrf.mxu0
        %4817 = vmatprep.mubr.bf16.mxu0 0
        %4818 = vmatmul.mubr.bf16.gmra.mxu0 %v4634
        %v4819 = vpop.f32.mrf.mxu0
        %v4820 = vadd.f32 0.0, %v4819
        %v4821 = vpop.f32.mrf.mxu0
        %v4822 = vpop.f32.mrf.mxu0
        %v4823 = vadd.f32 0.0, %v4822
        %v4824 = vpop.f32.mrf.mxu0
        %4825 = vmatprep.mubr.bf16.mxu0 0
        %4826 = vmatmul.mubr.bf16.gmra.mxu0 %v4635
        %v4827 = vpop.f32.mrf.mxu0
        %v4828 = vadd.f32 0.0, %v4827
        %v4829 = vpop.f32.mrf.mxu0
        %v4830 = vpop.f32.mrf.mxu0
        %v4831 = vadd.f32 0.0, %v4830
        %v4832 = vpop.f32.mrf.mxu0
        %4833 = vmatprep.mubr.bf16.mxu0 0
        %4834 = vmatmul.mubr.bf16.gmra.mxu0 %v4636
        %v4835 = vpop.f32.mrf.mxu0
        %v4836 = vadd.f32 0.0, %v4835
        %v4837 = vpop.f32.mrf.mxu0
        %v4838 = vpop.f32.mrf.mxu0
        %v4839 = vadd.f32 0.0, %v4838
        %v4840 = vpop.f32.mrf.mxu0
        %4841 = vmatprep.mubr.bf16.mxu0 0
        %4842 = vmatmul.mubr.bf16.gmra.mxu0 %v4637
        %v4843 = vpop.f32.mrf.mxu0
        %v4844 = vadd.f32 0.0, %v4843
        %v4845 = vpop.f32.mrf.mxu0
        %v4846 = vpop.f32.mrf.mxu0
        %v4847 = vadd.f32 0.0, %v4846
        %v4848 = vpop.f32.mrf.mxu0
        %4849 = vmatprep.mubr.bf16.mxu0 0
        %4850 = vmatmul.mubr.bf16.gmra.mxu0 %v4638
        %v4851 = vpop.f32.mrf.mxu0
        %v4852 = vadd.f32 0.0, %v4851
        %v4853 = vpop.f32.mrf.mxu0
        %v4854 = vpop.f32.mrf.mxu0
        %v4855 = vadd.f32 0.0, %v4854
        %v4856 = vpop.f32.mrf.mxu0
        %4857 = vmatprep.mubr.bf16.mxu0 0
        %4858 = vmatmul.mubr.bf16.gmra.mxu0 %v4639
        %v4859 = vpop.f32.mrf.mxu0
        %v4860 = vadd.f32 0.0, %v4859
        %v4861 = vpop.f32.mrf.mxu0
        %v4862 = vpop.f32.mrf.mxu0
        %v4863 = vadd.f32 0.0, %v4862
        %v4864 = vpop.f32.mrf.mxu0
        %4865 = vdwg.mxu0
        %v4866 = vadd.f32 %v4560, %v4740
        %v4867 = vadd.f32 %v4561, %v4743
        %v4868 = vadd.f32 %v4562, %v4748
        %v4869 = vadd.f32 %v4563, %v4751
        %v4870 = vadd.f32 %v4564, %v4756
        %v4871 = vadd.f32 %v4565, %v4759
        %v4872 = vadd.f32 %v4566, %v4764
        %v4873 = vadd.f32 %v4567, %v4767
        %v4874 = vadd.f32 %v4568, %v4772
        %v4875 = vadd.f32 %v4569, %v4775
        %v4876 = vadd.f32 %v4570, %v4780
        %v4877 = vadd.f32 %v4571, %v4783
        %v4878 = vadd.f32 %v4572, %v4788
        %v4879 = vadd.f32 %v4573, %v4791
        %v4880 = vadd.f32 %v4574, %v4796
        %v4881 = vadd.f32 %v4575, %v4799
        %v4882 = vadd.f32 %v4576, %v4804
        %v4883 = vadd.f32 %v4577, %v4807
        %v4884 = vadd.f32 %v4578, %v4812
        %v4885 = vadd.f32 %v4579, %v4815
        %v4886 = vadd.f32 %v4580, %v4820
        %v4887 = vadd.f32 %v4581, %v4823
        %v4888 = vadd.f32 %v4582, %v4828
        %v4889 = vadd.f32 %v4583, %v4831
        %v4890 = vadd.f32 %v4584, %v4836
        %v4891 = vadd.f32 %v4585, %v4839
        %v4892 = vadd.f32 %v4586, %v4844
        %v4893 = vadd.f32 %v4587, %v4847
        %v4894 = vadd.f32 %v4588, %v4852
        %v4895 = vadd.f32 %v4589, %v4855
        %v4896 = vadd.f32 %v4590, %v4860
        %v4897 = vadd.f32 %v4591, %v4863
        %s4898 = scalar_lea.vmem [#allocation2], 48
        %v4899 = vld [vmem:[%s4898] sm:$0xff]
        %v4900 = vld [vmem:[%s4898 + $0x8] sm:$0xff]
        %v4901 = vld [vmem:[%s4898 + $0x18] sm:$0xff]
        %v4902 = vld [vmem:[%s4898 + $0x20] sm:$0xff]
        %v4903 = vld [vmem:[%s4898 + $0x30] sm:$0xff]
        %v4904 = vld [vmem:[%s4898 + $0x38] sm:$0xff]
        %v4905 = vld [vmem:[%s4898 + $0x48] sm:$0xff]
        %v4906 = vld [vmem:[%s4898 + $0x50] sm:$0xff]
        %v4907 = vld [vmem:[%s4898 + $0x60] sm:$0xff]
        %v4908 = vld [vmem:[%s4898 + $0x68] sm:$0xff]
        %v4909 = vld [vmem:[%s4898 + $0x78] sm:$0xff]
        %v4910 = vld [vmem:[%s4898 + $0x80] sm:$0xff]
        %v4911 = vld [vmem:[%s4898 + $0x90] sm:$0xff]
        %v4912 = vld [vmem:[%s4898 + $0x98] sm:$0xff]
        %v4913 = vld [vmem:[%s4898 + $0xa8] sm:$0xff]
        %v4914 = vld [vmem:[%s4898 + $0xb0] sm:$0xff]
        %v4915 = vld [vmem:[%s4898 + $0xc0] sm:$0xff]
        %v4916 = vld [vmem:[%s4898 + $0xc8] sm:$0xff]
        %v4917 = vld [vmem:[%s4898 + $0xd8] sm:$0xff]
        %v4918 = vld [vmem:[%s4898 + $0xe0] sm:$0xff]
        %v4919 = vld [vmem:[%s4898 + $0xf0] sm:$0xff]
        %v4920 = vld [vmem:[%s4898 + $0xf8] sm:$0xff]
        %v4921 = vld [vmem:[%s4898 + $0x108] sm:$0xff]
        %v4922 = vld [vmem:[%s4898 + $0x110] sm:$0xff]
        %v4923 = vld [vmem:[%s4898 + $0x120] sm:$0xff]
        %v4924 = vld [vmem:[%s4898 + $0x128] sm:$0xff]
        %v4925 = vld [vmem:[%s4898 + $0x138] sm:$0xff]
        %v4926 = vld [vmem:[%s4898 + $0x140] sm:$0xff]
        %v4927 = vld [vmem:[%s4898 + $0x150] sm:$0xff]
        %v4928 = vld [vmem:[%s4898 + $0x158] sm:$0xff]
        %v4929 = vld [vmem:[%s4898 + $0x168] sm:$0xff]
        %v4930 = vld [vmem:[%s4898 + $0x170] sm:$0xff]
        %v4931 = vpack.c.bf16 %v4900, %v4899
        %v4932 = vpack.c.bf16 %v4902, %v4901
        %v4933 = vpack.c.bf16 %v4904, %v4903
        %v4934 = vpack.c.bf16 %v4906, %v4905
        %v4935 = vpack.c.bf16 %v4908, %v4907
        %v4936 = vpack.c.bf16 %v4910, %v4909
        %v4937 = vpack.c.bf16 %v4912, %v4911
        %v4938 = vpack.c.bf16 %v4914, %v4913
        %v4939 = vpack.c.bf16 %v4916, %v4915
        %v4940 = vpack.c.bf16 %v4918, %v4917
        %v4941 = vpack.c.bf16 %v4920, %v4919
        %v4942 = vpack.c.bf16 %v4922, %v4921
        %v4943 = vpack.c.bf16 %v4924, %v4923
        %v4944 = vpack.c.bf16 %v4926, %v4925
        %v4945 = vpack.c.bf16 %v4928, %v4927
        %v4946 = vpack.c.bf16 %v4930, %v4929
        %s4947 = scalar_lea.vmem %s3, 384
        %v4948 = vld [vmem:[%s4947] sm:$0xf]
        %v4949 = vld [vmem:[%s4947 + $0x4] sm:$0xf]
        %v4950 = vld [vmem:[%s4947 + $0x8] sm:$0xf]
        %v4951 = vld [vmem:[%s4947 + $0xc] sm:$0xf]
        %v4952 = vld [vmem:[%s4947 + $0x10] sm:$0xf]
        %v4953 = vld [vmem:[%s4947 + $0x14] sm:$0xf]
        %v4954 = vld [vmem:[%s4947 + $0x18] sm:$0xf]
        %v4955 = vld [vmem:[%s4947 + $0x1c] sm:$0xf]
        %v4956 = vld [vmem:[%s4947 + $0x20] sm:$0xf]
        %v4957 = vld [vmem:[%s4947 + $0x24] sm:$0xf]
        %v4958 = vld [vmem:[%s4947 + $0x28] sm:$0xf]
        %v4959 = vld [vmem:[%s4947 + $0x2c] sm:$0xf]
        %v4960 = vld [vmem:[%s4947 + $0x30] sm:$0xf]
        %v4961 = vld [vmem:[%s4947 + $0x34] sm:$0xf]
        %v4962 = vld [vmem:[%s4947 + $0x38] sm:$0xf]
        %v4963 = vld [vmem:[%s4947 + $0x3c] sm:$0xf]
        %v4980 = vunpack.c.l.b16 %v4948
        %v4981 = vunpack.c.l.b16 %v4949
        %v4982 = vunpack.c.l.b16 %v4950
        %v4983 = vunpack.c.l.b16 %v4951
        %v4984 = vunpack.c.l.b16 %v4952
        %v4985 = vunpack.c.l.b16 %v4953
        %v4986 = vunpack.c.l.b16 %v4954
        %v4987 = vunpack.c.l.b16 %v4955
        %v4988 = vunpack.c.l.b16 %v4956
        %v4989 = vunpack.c.l.b16 %v4957
        %v4990 = vunpack.c.l.b16 %v4958
        %v4991 = vunpack.c.l.b16 %v4959
        %v4992 = vunpack.c.l.b16 %v4960
        %v4993 = vunpack.c.l.b16 %v4961
        %v4994 = vunpack.c.l.b16 %v4962
        %v4995 = vunpack.c.l.b16 %v4963
        %v4996 = vpack.c.b16 %v4981, %v4980
        %v4997 = vpack.c.b16 %v4983, %v4982
        %v4998 = vpack.c.b16 %v4985, %v4984
        %v4999 = vpack.c.b16 %v4987, %v4986
        %v5000 = vpack.c.b16 %v4989, %v4988
        %v5001 = vpack.c.b16 %v4991, %v4990
        %v5002 = vpack.c.b16 %v4993, %v4992
        %v5003 = vpack.c.b16 %v4995, %v4994
        %5012 = vmatprep.subr.bf16.mxu0 0
        %5013 = vmatpush1.bf16.msra.mxu0 %v5003
        %5014 = vmatprep.subr.bf16.mxu0 0
        %5015 = vmatpush1.bf16.msra.mxu0 %v5002
        %5016 = vmatprep.subr.bf16.mxu0 0
        %5017 = vmatpush1.bf16.msra.mxu0 %v5001
        %5018 = vmatprep.subr.bf16.mxu0 0
        %5019 = vmatpush1.bf16.msra.mxu0 %v5000
        %5020 = vmatprep.subr.bf16.mxu0 0
        %5021 = vmatpush1.bf16.msra.mxu0 %v4999
        %5022 = vmatprep.subr.bf16.mxu0 0
        %5023 = vmatpush1.bf16.msra.mxu0 %v4998
        %5024 = vmatprep.subr.bf16.mxu0 0
        %5025 = vmatpush1.bf16.msra.mxu0 %v4997
        %5026 = vmatprep.subr.bf16.mxu0 0
        %5027 = vmatpush1.bf16.msra.mxu0 %v4996
        %5028 = vmatprep.subr.bf16.mxu0 0
        %5029 = vmatpush2.bf16.msra.mxu0 0
        %5030 = vmatprep.subr.bf16.mxu0 0
        %5031 = vmatpush2.bf16.msra.mxu0 0
        %5032 = vmatprep.subr.bf16.mxu0 0
        %5033 = vmatpush2.bf16.msra.mxu0 0
        %5034 = vmatprep.subr.bf16.mxu0 0
        %5035 = vmatpush2.bf16.msra.mxu0 0
        %5036 = vmatprep.subr.bf16.mxu0 0
        %5037 = vmatpush2.bf16.msra.mxu0 0
        %5038 = vmatprep.subr.bf16.mxu0 0
        %5039 = vmatpush2.bf16.msra.mxu0 0
        %5040 = vmatprep.subr.bf16.mxu0 0
        %5041 = vmatpush2.bf16.msra.mxu0 0
        %5042 = vmatprep.subr.bf16.mxu0 0
        %5043 = vmatpush2.bf16.msra.mxu0 0
        %5044 = vmatprep.mubr.bf16.mxu0 0
        %5045 = vmatmul.mubr.bf16.gmra.mxu0 %v4931
        %v5046 = vpop.f32.mrf.mxu0
        %v5047 = vadd.f32 0.0, %v5046
        %v5048 = vpop.f32.mrf.mxu0
        %v5049 = vpop.f32.mrf.mxu0
        %v5050 = vadd.f32 0.0, %v5049
        %v5051 = vpop.f32.mrf.mxu0
        %5052 = vmatprep.mubr.bf16.mxu0 0
        %5053 = vmatmul.mubr.bf16.gmra.mxu0 %v4932
        %v5054 = vpop.f32.mrf.mxu0
        %v5055 = vadd.f32 0.0, %v5054
        %v5056 = vpop.f32.mrf.mxu0
        %v5057 = vpop.f32.mrf.mxu0
        %v5058 = vadd.f32 0.0, %v5057
        %v5059 = vpop.f32.mrf.mxu0
        %5060 = vmatprep.mubr.bf16.mxu0 0
        %5061 = vmatmul.mubr.bf16.gmra.mxu0 %v4933
        %v5062 = vpop.f32.mrf.mxu0
        %v5063 = vadd.f32 0.0, %v5062
        %v5064 = vpop.f32.mrf.mxu0
        %v5065 = vpop.f32.mrf.mxu0
        %v5066 = vadd.f32 0.0, %v5065
        %v5067 = vpop.f32.mrf.mxu0
        %5068 = vmatprep.mubr.bf16.mxu0 0
        %5069 = vmatmul.mubr.bf16.gmra.mxu0 %v4934
        %v5070 = vpop.f32.mrf.mxu0
        %v5071 = vadd.f32 0.0, %v5070
        %v5072 = vpop.f32.mrf.mxu0
        %v5073 = vpop.f32.mrf.mxu0
        %v5074 = vadd.f32 0.0, %v5073
        %v5075 = vpop.f32.mrf.mxu0
        %5076 = vmatprep.mubr.bf16.mxu0 0
        %5077 = vmatmul.mubr.bf16.gmra.mxu0 %v4935
        %v5078 = vpop.f32.mrf.mxu0
        %v5079 = vadd.f32 0.0, %v5078
        %v5080 = vpop.f32.mrf.mxu0
        %v5081 = vpop.f32.mrf.mxu0
        %v5082 = vadd.f32 0.0, %v5081
        %v5083 = vpop.f32.mrf.mxu0
        %5084 = vmatprep.mubr.bf16.mxu0 0
        %5085 = vmatmul.mubr.bf16.gmra.mxu0 %v4936
        %v5086 = vpop.f32.mrf.mxu0
        %v5087 = vadd.f32 0.0, %v5086
        %v5088 = vpop.f32.mrf.mxu0
        %v5089 = vpop.f32.mrf.mxu0
        %v5090 = vadd.f32 0.0, %v5089
        %v5091 = vpop.f32.mrf.mxu0
        %5092 = vmatprep.mubr.bf16.mxu0 0
        %5093 = vmatmul.mubr.bf16.gmra.mxu0 %v4937
        %v5094 = vpop.f32.mrf.mxu0
        %v5095 = vadd.f32 0.0, %v5094
        %v5096 = vpop.f32.mrf.mxu0
        %v5097 = vpop.f32.mrf.mxu0
        %v5098 = vadd.f32 0.0, %v5097
        %v5099 = vpop.f32.mrf.mxu0
        %5100 = vmatprep.mubr.bf16.mxu0 0
        %5101 = vmatmul.mubr.bf16.gmra.mxu0 %v4938
        %v5102 = vpop.f32.mrf.mxu0
        %v5103 = vadd.f32 0.0, %v5102
        %v5104 = vpop.f32.mrf.mxu0
        %v5105 = vpop.f32.mrf.mxu0
        %v5106 = vadd.f32 0.0, %v5105
        %v5107 = vpop.f32.mrf.mxu0
        %5108 = vmatprep.mubr.bf16.mxu0 0
        %5109 = vmatmul.mubr.bf16.gmra.mxu0 %v4939
        %v5110 = vpop.f32.mrf.mxu0
        %v5111 = vadd.f32 0.0, %v5110
        %v5112 = vpop.f32.mrf.mxu0
        %v5113 = vpop.f32.mrf.mxu0
        %v5114 = vadd.f32 0.0, %v5113
        %v5115 = vpop.f32.mrf.mxu0
        %5116 = vmatprep.mubr.bf16.mxu0 0
        %5117 = vmatmul.mubr.bf16.gmra.mxu0 %v4940
        %v5118 = vpop.f32.mrf.mxu0
        %v5119 = vadd.f32 0.0, %v5118
        %v5120 = vpop.f32.mrf.mxu0
        %v5121 = vpop.f32.mrf.mxu0
        %v5122 = vadd.f32 0.0, %v5121
        %v5123 = vpop.f32.mrf.mxu0
        %5124 = vmatprep.mubr.bf16.mxu0 0
        %5125 = vmatmul.mubr.bf16.gmra.mxu0 %v4941
        %v5126 = vpop.f32.mrf.mxu0
        %v5127 = vadd.f32 0.0, %v5126
        %v5128 = vpop.f32.mrf.mxu0
        %v5129 = vpop.f32.mrf.mxu0
        %v5130 = vadd.f32 0.0, %v5129
        %v5131 = vpop.f32.mrf.mxu0
        %5132 = vmatprep.mubr.bf16.mxu0 0
        %5133 = vmatmul.mubr.bf16.gmra.mxu0 %v4942
        %v5134 = vpop.f32.mrf.mxu0
        %v5135 = vadd.f32 0.0, %v5134
        %v5136 = vpop.f32.mrf.mxu0
        %v5137 = vpop.f32.mrf.mxu0
        %v5138 = vadd.f32 0.0, %v5137
        %v5139 = vpop.f32.mrf.mxu0
        %5140 = vmatprep.mubr.bf16.mxu0 0
        %5141 = vmatmul.mubr.bf16.gmra.mxu0 %v4943
        %v5142 = vpop.f32.mrf.mxu0
        %v5143 = vadd.f32 0.0, %v5142
        %v5144 = vpop.f32.mrf.mxu0
        %v5145 = vpop.f32.mrf.mxu0
        %v5146 = vadd.f32 0.0, %v5145
        %v5147 = vpop.f32.mrf.mxu0
        %5148 = vmatprep.mubr.bf16.mxu0 0
        %5149 = vmatmul.mubr.bf16.gmra.mxu0 %v4944
        %v5150 = vpop.f32.mrf.mxu0
        %v5151 = vadd.f32 0.0, %v5150
        %v5152 = vpop.f32.mrf.mxu0
        %v5153 = vpop.f32.mrf.mxu0
        %v5154 = vadd.f32 0.0, %v5153
        %v5155 = vpop.f32.mrf.mxu0
        %5156 = vmatprep.mubr.bf16.mxu0 0
        %5157 = vmatmul.mubr.bf16.gmra.mxu0 %v4945
        %v5158 = vpop.f32.mrf.mxu0
        %v5159 = vadd.f32 0.0, %v5158
        %v5160 = vpop.f32.mrf.mxu0
        %v5161 = vpop.f32.mrf.mxu0
        %v5162 = vadd.f32 0.0, %v5161
        %v5163 = vpop.f32.mrf.mxu0
        %5164 = vmatprep.mubr.bf16.mxu0 0
        %5165 = vmatmul.mubr.bf16.gmra.mxu0 %v4946
        %v5166 = vpop.f32.mrf.mxu0
        %v5167 = vadd.f32 0.0, %v5166
        %v5168 = vpop.f32.mrf.mxu0
        %v5169 = vpop.f32.mrf.mxu0
        %v5170 = vadd.f32 0.0, %v5169
        %v5171 = vpop.f32.mrf.mxu0
        %5172 = vdwg.mxu0
        %v5173 = vadd.f32 %v4866, %v5047
        %v5174 = vadd.f32 %v4867, %v5050
        %v5175 = vadd.f32 %v4868, %v5055
        %v5176 = vadd.f32 %v4869, %v5058
        %v5177 = vadd.f32 %v4870, %v5063
        %v5178 = vadd.f32 %v4871, %v5066
        %v5179 = vadd.f32 %v4872, %v5071
        %v5180 = vadd.f32 %v4873, %v5074
        %v5181 = vadd.f32 %v4874, %v5079
        %v5182 = vadd.f32 %v4875, %v5082
        %v5183 = vadd.f32 %v4876, %v5087
        %v5184 = vadd.f32 %v4877, %v5090
        %v5185 = vadd.f32 %v4878, %v5095
        %v5186 = vadd.f32 %v4879, %v5098
        %v5187 = vadd.f32 %v4880, %v5103
        %v5188 = vadd.f32 %v4881, %v5106
        %v5189 = vadd.f32 %v4882, %v5111
        %v5190 = vadd.f32 %v4883, %v5114
        %v5191 = vadd.f32 %v4884, %v5119
        %v5192 = vadd.f32 %v4885, %v5122
        %v5193 = vadd.f32 %v4886, %v5127
        %v5194 = vadd.f32 %v4887, %v5130
        %v5195 = vadd.f32 %v4888, %v5135
        %v5196 = vadd.f32 %v4889, %v5138
        %v5197 = vadd.f32 %v4890, %v5143
        %v5198 = vadd.f32 %v4891, %v5146
        %v5199 = vadd.f32 %v4892, %v5151
        %v5200 = vadd.f32 %v4893, %v5154
        %v5201 = vadd.f32 %v4894, %v5159
        %v5202 = vadd.f32 %v4895, %v5162
        %v5203 = vadd.f32 %v4896, %v5167
        %v5204 = vadd.f32 %v4897, %v5170
        %v5205 = vld [vmem:[%s4898 + $0x1] sm:$0xff]
        %v5206 = vld [vmem:[%s4898 + $0x9] sm:$0xff]
        %v5207 = vld [vmem:[%s4898 + $0x19] sm:$0xff]
        %v5208 = vld [vmem:[%s4898 + $0x21] sm:$0xff]
        %v5209 = vld [vmem:[%s4898 + $0x31] sm:$0xff]
        %v5210 = vld [vmem:[%s4898 + $0x39] sm:$0xff]
        %v5211 = vld [vmem:[%s4898 + $0x49] sm:$0xff]
        %v5212 = vld [vmem:[%s4898 + $0x51] sm:$0xff]
        %v5213 = vld [vmem:[%s4898 + $0x61] sm:$0xff]
        %v5214 = vld [vmem:[%s4898 + $0x69] sm:$0xff]
        %v5215 = vld [vmem:[%s4898 + $0x79] sm:$0xff]
        %v5216 = vld [vmem:[%s4898 + $0x81] sm:$0xff]
        %v5217 = vld [vmem:[%s4898 + $0x91] sm:$0xff]
        %v5218 = vld [vmem:[%s4898 + $0x99] sm:$0xff]
        %v5219 = vld [vmem:[%s4898 + $0xa9] sm:$0xff]
        %v5220 = vld [vmem:[%s4898 + $0xb1] sm:$0xff]
        %v5221 = vld [vmem:[%s4898 + $0xc1] sm:$0xff]
        %v5222 = vld [vmem:[%s4898 + $0xc9] sm:$0xff]
        %v5223 = vld [vmem:[%s4898 + $0xd9] sm:$0xff]
        %v5224 = vld [vmem:[%s4898 + $0xe1] sm:$0xff]
        %v5225 = vld [vmem:[%s4898 + $0xf1] sm:$0xff]
        %v5226 = vld [vmem:[%s4898 + $0xf9] sm:$0xff]
        %v5227 = vld [vmem:[%s4898 + $0x109] sm:$0xff]
        %v5228 = vld [vmem:[%s4898 + $0x111] sm:$0xff]
        %v5229 = vld [vmem:[%s4898 + $0x121] sm:$0xff]
        %v5230 = vld [vmem:[%s4898 + $0x129] sm:$0xff]
        %v5231 = vld [vmem:[%s4898 + $0x139] sm:$0xff]
        %v5232 = vld [vmem:[%s4898 + $0x141] sm:$0xff]
        %v5233 = vld [vmem:[%s4898 + $0x151] sm:$0xff]
        %v5234 = vld [vmem:[%s4898 + $0x159] sm:$0xff]
        %v5235 = vld [vmem:[%s4898 + $0x169] sm:$0xff]
        %v5236 = vld [vmem:[%s4898 + $0x171] sm:$0xff]
        %v5237 = vpack.c.bf16 %v5206, %v5205
        %v5238 = vpack.c.bf16 %v5208, %v5207
        %v5239 = vpack.c.bf16 %v5210, %v5209
        %v5240 = vpack.c.bf16 %v5212, %v5211
        %v5241 = vpack.c.bf16 %v5214, %v5213
        %v5242 = vpack.c.bf16 %v5216, %v5215
        %v5243 = vpack.c.bf16 %v5218, %v5217
        %v5244 = vpack.c.bf16 %v5220, %v5219
        %v5245 = vpack.c.bf16 %v5222, %v5221
        %v5246 = vpack.c.bf16 %v5224, %v5223
        %v5247 = vpack.c.bf16 %v5226, %v5225
        %v5248 = vpack.c.bf16 %v5228, %v5227
        %v5249 = vpack.c.bf16 %v5230, %v5229
        %v5250 = vpack.c.bf16 %v5232, %v5231
        %v5251 = vpack.c.bf16 %v5234, %v5233
        %v5252 = vpack.c.bf16 %v5236, %v5235
        %s5253 = scalar_lea.vmem %s3, 448
        %v5254 = vld [vmem:[%s5253] sm:$0xf]
        %v5255 = vld [vmem:[%s5253 + $0x4] sm:$0xf]
        %v5256 = vld [vmem:[%s5253 + $0x8] sm:$0xf]
        %v5257 = vld [vmem:[%s5253 + $0xc] sm:$0xf]
        %v5258 = vld [vmem:[%s5253 + $0x10] sm:$0xf]
        %v5259 = vld [vmem:[%s5253 + $0x14] sm:$0xf]
        %v5260 = vld [vmem:[%s5253 + $0x18] sm:$0xf]
        %v5261 = vld [vmem:[%s5253 + $0x1c] sm:$0xf]
        %v5262 = vld [vmem:[%s5253 + $0x20] sm:$0xf]
        %v5263 = vld [vmem:[%s5253 + $0x24] sm:$0xf]
        %v5264 = vld [vmem:[%s5253 + $0x28] sm:$0xf]
        %v5265 = vld [vmem:[%s5253 + $0x2c] sm:$0xf]
        %v5266 = vld [vmem:[%s5253 + $0x30] sm:$0xf]
        %v5267 = vld [vmem:[%s5253 + $0x34] sm:$0xf]
        %v5268 = vld [vmem:[%s5253 + $0x38] sm:$0xf]
        %v5269 = vld [vmem:[%s5253 + $0x3c] sm:$0xf]
        %v5286 = vunpack.c.l.b16 %v5254
        %v5287 = vunpack.c.l.b16 %v5255
        %v5288 = vunpack.c.l.b16 %v5256
        %v5289 = vunpack.c.l.b16 %v5257
        %v5290 = vunpack.c.l.b16 %v5258
        %v5291 = vunpack.c.l.b16 %v5259
        %v5292 = vunpack.c.l.b16 %v5260
        %v5293 = vunpack.c.l.b16 %v5261
        %v5294 = vunpack.c.l.b16 %v5262
        %v5295 = vunpack.c.l.b16 %v5263
        %v5296 = vunpack.c.l.b16 %v5264
        %v5297 = vunpack.c.l.b16 %v5265
        %v5298 = vunpack.c.l.b16 %v5266
        %v5299 = vunpack.c.l.b16 %v5267
        %v5300 = vunpack.c.l.b16 %v5268
        %v5301 = vunpack.c.l.b16 %v5269
        %v5302 = vpack.c.b16 %v5287, %v5286
        %v5303 = vpack.c.b16 %v5289, %v5288
        %v5304 = vpack.c.b16 %v5291, %v5290
        %v5305 = vpack.c.b16 %v5293, %v5292
        %v5306 = vpack.c.b16 %v5295, %v5294
        %v5307 = vpack.c.b16 %v5297, %v5296
        %v5308 = vpack.c.b16 %v5299, %v5298
        %v5309 = vpack.c.b16 %v5301, %v5300
        %5318 = vmatprep.subr.bf16.mxu0 0
        %5319 = vmatpush1.bf16.msra.mxu0 %v5309
        %5320 = vmatprep.subr.bf16.mxu0 0
        %5321 = vmatpush1.bf16.msra.mxu0 %v5308
        %5322 = vmatprep.subr.bf16.mxu0 0
        %5323 = vmatpush1.bf16.msra.mxu0 %v5307
        %5324 = vmatprep.subr.bf16.mxu0 0
        %5325 = vmatpush1.bf16.msra.mxu0 %v5306
        %5326 = vmatprep.subr.bf16.mxu0 0
        %5327 = vmatpush1.bf16.msra.mxu0 %v5305
        %5328 = vmatprep.subr.bf16.mxu0 0
        %5329 = vmatpush1.bf16.msra.mxu0 %v5304
        %5330 = vmatprep.subr.bf16.mxu0 0
        %5331 = vmatpush1.bf16.msra.mxu0 %v5303
        %5332 = vmatprep.subr.bf16.mxu0 0
        %5333 = vmatpush1.bf16.msra.mxu0 %v5302
        %5334 = vmatprep.subr.bf16.mxu0 0
        %5335 = vmatpush2.bf16.msra.mxu0 0
        %5336 = vmatprep.subr.bf16.mxu0 0
        %5337 = vmatpush2.bf16.msra.mxu0 0
        %5338 = vmatprep.subr.bf16.mxu0 0
        %5339 = vmatpush2.bf16.msra.mxu0 0
        %5340 = vmatprep.subr.bf16.mxu0 0
        %5341 = vmatpush2.bf16.msra.mxu0 0
        %5342 = vmatprep.subr.bf16.mxu0 0
        %5343 = vmatpush2.bf16.msra.mxu0 0
        %5344 = vmatprep.subr.bf16.mxu0 0
        %5345 = vmatpush2.bf16.msra.mxu0 0
        %5346 = vmatprep.subr.bf16.mxu0 0
        %5347 = vmatpush2.bf16.msra.mxu0 0
        %5348 = vmatprep.subr.bf16.mxu0 0
        %5349 = vmatpush2.bf16.msra.mxu0 0
        %5350 = vmatprep.mubr.bf16.mxu0 0
        %5351 = vmatmul.mubr.bf16.gmra.mxu0 %v5237
        %v5352 = vpop.f32.mrf.mxu0
        %v5353 = vadd.f32 0.0, %v5352
        %v5354 = vpop.f32.mrf.mxu0
        %v5355 = vpop.f32.mrf.mxu0
        %v5356 = vadd.f32 0.0, %v5355
        %v5357 = vpop.f32.mrf.mxu0
        %5358 = vmatprep.mubr.bf16.mxu0 0
        %5359 = vmatmul.mubr.bf16.gmra.mxu0 %v5238
        %v5360 = vpop.f32.mrf.mxu0
        %v5361 = vadd.f32 0.0, %v5360
        %v5362 = vpop.f32.mrf.mxu0
        %v5363 = vpop.f32.mrf.mxu0
        %v5364 = vadd.f32 0.0, %v5363
        %v5365 = vpop.f32.mrf.mxu0
        %5366 = vmatprep.mubr.bf16.mxu0 0
        %5367 = vmatmul.mubr.bf16.gmra.mxu0 %v5239
        %v5368 = vpop.f32.mrf.mxu0
        %v5369 = vadd.f32 0.0, %v5368
        %v5370 = vpop.f32.mrf.mxu0
        %v5371 = vpop.f32.mrf.mxu0
        %v5372 = vadd.f32 0.0, %v5371
        %v5373 = vpop.f32.mrf.mxu0
        %5374 = vmatprep.mubr.bf16.mxu0 0
        %5375 = vmatmul.mubr.bf16.gmra.mxu0 %v5240
        %v5376 = vpop.f32.mrf.mxu0
        %v5377 = vadd.f32 0.0, %v5376
        %v5378 = vpop.f32.mrf.mxu0
        %v5379 = vpop.f32.mrf.mxu0
        %v5380 = vadd.f32 0.0, %v5379
        %v5381 = vpop.f32.mrf.mxu0
        %5382 = vmatprep.mubr.bf16.mxu0 0
        %5383 = vmatmul.mubr.bf16.gmra.mxu0 %v5241
        %v5384 = vpop.f32.mrf.mxu0
        %v5385 = vadd.f32 0.0, %v5384
        %v5386 = vpop.f32.mrf.mxu0
        %v5387 = vpop.f32.mrf.mxu0
        %v5388 = vadd.f32 0.0, %v5387
        %v5389 = vpop.f32.mrf.mxu0
        %5390 = vmatprep.mubr.bf16.mxu0 0
        %5391 = vmatmul.mubr.bf16.gmra.mxu0 %v5242
        %v5392 = vpop.f32.mrf.mxu0
        %v5393 = vadd.f32 0.0, %v5392
        %v5394 = vpop.f32.mrf.mxu0
        %v5395 = vpop.f32.mrf.mxu0
        %v5396 = vadd.f32 0.0, %v5395
        %v5397 = vpop.f32.mrf.mxu0
        %5398 = vmatprep.mubr.bf16.mxu0 0
        %5399 = vmatmul.mubr.bf16.gmra.mxu0 %v5243
        %v5400 = vpop.f32.mrf.mxu0
        %v5401 = vadd.f32 0.0, %v5400
        %v5402 = vpop.f32.mrf.mxu0
        %v5403 = vpop.f32.mrf.mxu0
        %v5404 = vadd.f32 0.0, %v5403
        %v5405 = vpop.f32.mrf.mxu0
        %5406 = vmatprep.mubr.bf16.mxu0 0
        %5407 = vmatmul.mubr.bf16.gmra.mxu0 %v5244
        %v5408 = vpop.f32.mrf.mxu0
        %v5409 = vadd.f32 0.0, %v5408
        %v5410 = vpop.f32.mrf.mxu0
        %v5411 = vpop.f32.mrf.mxu0
        %v5412 = vadd.f32 0.0, %v5411
        %v5413 = vpop.f32.mrf.mxu0
        %5414 = vmatprep.mubr.bf16.mxu0 0
        %5415 = vmatmul.mubr.bf16.gmra.mxu0 %v5245
        %v5416 = vpop.f32.mrf.mxu0
        %v5417 = vadd.f32 0.0, %v5416
        %v5418 = vpop.f32.mrf.mxu0
        %v5419 = vpop.f32.mrf.mxu0
        %v5420 = vadd.f32 0.0, %v5419
        %v5421 = vpop.f32.mrf.mxu0
        %5422 = vmatprep.mubr.bf16.mxu0 0
        %5423 = vmatmul.mubr.bf16.gmra.mxu0 %v5246
        %v5424 = vpop.f32.mrf.mxu0
        %v5425 = vadd.f32 0.0, %v5424
        %v5426 = vpop.f32.mrf.mxu0
        %v5427 = vpop.f32.mrf.mxu0
        %v5428 = vadd.f32 0.0, %v5427
        %v5429 = vpop.f32.mrf.mxu0
        %5430 = vmatprep.mubr.bf16.mxu0 0
        %5431 = vmatmul.mubr.bf16.gmra.mxu0 %v5247
        %v5432 = vpop.f32.mrf.mxu0
        %v5433 = vadd.f32 0.0, %v5432
        %v5434 = vpop.f32.mrf.mxu0
        %v5435 = vpop.f32.mrf.mxu0
        %v5436 = vadd.f32 0.0, %v5435
        %v5437 = vpop.f32.mrf.mxu0
        %5438 = vmatprep.mubr.bf16.mxu0 0
        %5439 = vmatmul.mubr.bf16.gmra.mxu0 %v5248
        %v5440 = vpop.f32.mrf.mxu0
        %v5441 = vadd.f32 0.0, %v5440
        %v5442 = vpop.f32.mrf.mxu0
        %v5443 = vpop.f32.mrf.mxu0
        %v5444 = vadd.f32 0.0, %v5443
        %v5445 = vpop.f32.mrf.mxu0
        %5446 = vmatprep.mubr.bf16.mxu0 0
        %5447 = vmatmul.mubr.bf16.gmra.mxu0 %v5249
        %v5448 = vpop.f32.mrf.mxu0
        %v5449 = vadd.f32 0.0, %v5448
        %v5450 = vpop.f32.mrf.mxu0
        %v5451 = vpop.f32.mrf.mxu0
        %v5452 = vadd.f32 0.0, %v5451
        %v5453 = vpop.f32.mrf.mxu0
        %5454 = vmatprep.mubr.bf16.mxu0 0
        %5455 = vmatmul.mubr.bf16.gmra.mxu0 %v5250
        %v5456 = vpop.f32.mrf.mxu0
        %v5457 = vadd.f32 0.0, %v5456
        %v5458 = vpop.f32.mrf.mxu0
        %v5459 = vpop.f32.mrf.mxu0
        %v5460 = vadd.f32 0.0, %v5459
        %v5461 = vpop.f32.mrf.mxu0
        %5462 = vmatprep.mubr.bf16.mxu0 0
        %5463 = vmatmul.mubr.bf16.gmra.mxu0 %v5251
        %v5464 = vpop.f32.mrf.mxu0
        %v5465 = vadd.f32 0.0, %v5464
        %v5466 = vpop.f32.mrf.mxu0
        %v5467 = vpop.f32.mrf.mxu0
        %v5468 = vadd.f32 0.0, %v5467
        %v5469 = vpop.f32.mrf.mxu0
        %5470 = vmatprep.mubr.bf16.mxu0 0
        %5471 = vmatmul.mubr.bf16.gmra.mxu0 %v5252
        %v5472 = vpop.f32.mrf.mxu0
        %v5473 = vadd.f32 0.0, %v5472
        %v5474 = vpop.f32.mrf.mxu0
        %v5475 = vpop.f32.mrf.mxu0
        %v5476 = vadd.f32 0.0, %v5475
        %v5477 = vpop.f32.mrf.mxu0
        %5478 = vdwg.mxu0
        %v5479 = vadd.f32 %v5173, %v5353
        %v5480 = vadd.f32 %v5174, %v5356
        %v5481 = vadd.f32 %v5175, %v5361
        %v5482 = vadd.f32 %v5176, %v5364
        %v5483 = vadd.f32 %v5177, %v5369
        %v5484 = vadd.f32 %v5178, %v5372
        %v5485 = vadd.f32 %v5179, %v5377
        %v5486 = vadd.f32 %v5180, %v5380
        %v5487 = vadd.f32 %v5181, %v5385
        %v5488 = vadd.f32 %v5182, %v5388
        %v5489 = vadd.f32 %v5183, %v5393
        %v5490 = vadd.f32 %v5184, %v5396
        %v5491 = vadd.f32 %v5185, %v5401
        %v5492 = vadd.f32 %v5186, %v5404
        %v5493 = vadd.f32 %v5187, %v5409
        %v5494 = vadd.f32 %v5188, %v5412
        %v5495 = vadd.f32 %v5189, %v5417
        %v5496 = vadd.f32 %v5190, %v5420
        %v5497 = vadd.f32 %v5191, %v5425
        %v5498 = vadd.f32 %v5192, %v5428
        %v5499 = vadd.f32 %v5193, %v5433
        %v5500 = vadd.f32 %v5194, %v5436
        %v5501 = vadd.f32 %v5195, %v5441
        %v5502 = vadd.f32 %v5196, %v5444
        %v5503 = vadd.f32 %v5197, %v5449
        %v5504 = vadd.f32 %v5198, %v5452
        %v5505 = vadd.f32 %v5199, %v5457
        %v5506 = vadd.f32 %v5200, %v5460
        %v5507 = vadd.f32 %v5201, %v5465
        %v5508 = vadd.f32 %v5202, %v5468
        %v5509 = vadd.f32 %v5203, %v5473
        %v5510 = vadd.f32 %v5204, %v5476
        %v5511 = vld [vmem:[%s4898 + $0x2] sm:$0xff]
        %v5512 = vld [vmem:[%s4898 + $0xa] sm:$0xff]
        %v5513 = vld [vmem:[%s4898 + $0x1a] sm:$0xff]
        %v5514 = vld [vmem:[%s4898 + $0x22] sm:$0xff]
        %v5515 = vld [vmem:[%s4898 + $0x32] sm:$0xff]
        %v5516 = vld [vmem:[%s4898 + $0x3a] sm:$0xff]
        %v5517 = vld [vmem:[%s4898 + $0x4a] sm:$0xff]
        %v5518 = vld [vmem:[%s4898 + $0x52] sm:$0xff]
        %v5519 = vld [vmem:[%s4898 + $0x62] sm:$0xff]
        %v5520 = vld [vmem:[%s4898 + $0x6a] sm:$0xff]
        %v5521 = vld [vmem:[%s4898 + $0x7a] sm:$0xff]
        %v5522 = vld [vmem:[%s4898 + $0x82] sm:$0xff]
        %v5523 = vld [vmem:[%s4898 + $0x92] sm:$0xff]
        %v5524 = vld [vmem:[%s4898 + $0x9a] sm:$0xff]
        %v5525 = vld [vmem:[%s4898 + $0xaa] sm:$0xff]
        %v5526 = vld [vmem:[%s4898 + $0xb2] sm:$0xff]
        %v5527 = vld [vmem:[%s4898 + $0xc2] sm:$0xff]
        %v5528 = vld [vmem:[%s4898 + $0xca] sm:$0xff]
        %v5529 = vld [vmem:[%s4898 + $0xda] sm:$0xff]
        %v5530 = vld [vmem:[%s4898 + $0xe2] sm:$0xff]
        %v5531 = vld [vmem:[%s4898 + $0xf2] sm:$0xff]
        %v5532 = vld [vmem:[%s4898 + $0xfa] sm:$0xff]
        %v5533 = vld [vmem:[%s4898 + $0x10a] sm:$0xff]
        %v5534 = vld [vmem:[%s4898 + $0x112] sm:$0xff]
        %v5535 = vld [vmem:[%s4898 + $0x122] sm:$0xff]
        %v5536 = vld [vmem:[%s4898 + $0x12a] sm:$0xff]
        %v5537 = vld [vmem:[%s4898 + $0x13a] sm:$0xff]
        %v5538 = vld [vmem:[%s4898 + $0x142] sm:$0xff]
        %v5539 = vld [vmem:[%s4898 + $0x152] sm:$0xff]
        %v5540 = vld [vmem:[%s4898 + $0x15a] sm:$0xff]
        %v5541 = vld [vmem:[%s4898 + $0x16a] sm:$0xff]
        %v5542 = vld [vmem:[%s4898 + $0x172] sm:$0xff]
        %v5543 = vpack.c.bf16 %v5512, %v5511
        %v5544 = vpack.c.bf16 %v5514, %v5513
        %v5545 = vpack.c.bf16 %v5516, %v5515
        %v5546 = vpack.c.bf16 %v5518, %v5517
        %v5547 = vpack.c.bf16 %v5520, %v5519
        %v5548 = vpack.c.bf16 %v5522, %v5521
        %v5549 = vpack.c.bf16 %v5524, %v5523
        %v5550 = vpack.c.bf16 %v5526, %v5525
        %v5551 = vpack.c.bf16 %v5528, %v5527
        %v5552 = vpack.c.bf16 %v5530, %v5529
        %v5553 = vpack.c.bf16 %v5532, %v5531
        %v5554 = vpack.c.bf16 %v5534, %v5533
        %v5555 = vpack.c.bf16 %v5536, %v5535
        %v5556 = vpack.c.bf16 %v5538, %v5537
        %v5557 = vpack.c.bf16 %v5540, %v5539
        %v5558 = vpack.c.bf16 %v5542, %v5541
        %s5559 = scalar_lea.vmem %s3, 512
        %v5560 = vld [vmem:[%s5559] sm:$0xf]
        %v5561 = vld [vmem:[%s5559 + $0x4] sm:$0xf]
        %v5562 = vld [vmem:[%s5559 + $0x8] sm:$0xf]
        %v5563 = vld [vmem:[%s5559 + $0xc] sm:$0xf]
        %v5564 = vld [vmem:[%s5559 + $0x10] sm:$0xf]
        %v5565 = vld [vmem:[%s5559 + $0x14] sm:$0xf]
        %v5566 = vld [vmem:[%s5559 + $0x18] sm:$0xf]
        %v5567 = vld [vmem:[%s5559 + $0x1c] sm:$0xf]
        %v5568 = vld [vmem:[%s5559 + $0x20] sm:$0xf]
        %v5569 = vld [vmem:[%s5559 + $0x24] sm:$0xf]
        %v5570 = vld [vmem:[%s5559 + $0x28] sm:$0xf]
        %v5571 = vld [vmem:[%s5559 + $0x2c] sm:$0xf]
        %v5572 = vld [vmem:[%s5559 + $0x30] sm:$0xf]
        %v5573 = vld [vmem:[%s5559 + $0x34] sm:$0xf]
        %v5574 = vld [vmem:[%s5559 + $0x38] sm:$0xf]
        %v5575 = vld [vmem:[%s5559 + $0x3c] sm:$0xf]
        %v5592 = vunpack.c.l.b16 %v5560
        %v5593 = vunpack.c.l.b16 %v5561
        %v5594 = vunpack.c.l.b16 %v5562
        %v5595 = vunpack.c.l.b16 %v5563
        %v5596 = vunpack.c.l.b16 %v5564
        %v5597 = vunpack.c.l.b16 %v5565
        %v5598 = vunpack.c.l.b16 %v5566
        %v5599 = vunpack.c.l.b16 %v5567
        %v5600 = vunpack.c.l.b16 %v5568
        %v5601 = vunpack.c.l.b16 %v5569
        %v5602 = vunpack.c.l.b16 %v5570
        %v5603 = vunpack.c.l.b16 %v5571
        %v5604 = vunpack.c.l.b16 %v5572
        %v5605 = vunpack.c.l.b16 %v5573
        %v5606 = vunpack.c.l.b16 %v5574
        %v5607 = vunpack.c.l.b16 %v5575
        %v5608 = vpack.c.b16 %v5593, %v5592
        %v5609 = vpack.c.b16 %v5595, %v5594
        %v5610 = vpack.c.b16 %v5597, %v5596
        %v5611 = vpack.c.b16 %v5599, %v5598
        %v5612 = vpack.c.b16 %v5601, %v5600
        %v5613 = vpack.c.b16 %v5603, %v5602
        %v5614 = vpack.c.b16 %v5605, %v5604
        %v5615 = vpack.c.b16 %v5607, %v5606
        %5624 = vmatprep.subr.bf16.mxu0 0
        %5625 = vmatpush1.bf16.msra.mxu0 %v5615
        %5626 = vmatprep.subr.bf16.mxu0 0
        %5627 = vmatpush1.bf16.msra.mxu0 %v5614
        %5628 = vmatprep.subr.bf16.mxu0 0
        %5629 = vmatpush1.bf16.msra.mxu0 %v5613
        %5630 = vmatprep.subr.bf16.mxu0 0
        %5631 = vmatpush1.bf16.msra.mxu0 %v5612
        %5632 = vmatprep.subr.bf16.mxu0 0
        %5633 = vmatpush1.bf16.msra.mxu0 %v5611
        %5634 = vmatprep.subr.bf16.mxu0 0
        %5635 = vmatpush1.bf16.msra.mxu0 %v5610
        %5636 = vmatprep.subr.bf16.mxu0 0
        %5637 = vmatpush1.bf16.msra.mxu0 %v5609
        %5638 = vmatprep.subr.bf16.mxu0 0
        %5639 = vmatpush1.bf16.msra.mxu0 %v5608
        %5640 = vmatprep.subr.bf16.mxu0 0
        %5641 = vmatpush2.bf16.msra.mxu0 0
        %5642 = vmatprep.subr.bf16.mxu0 0
        %5643 = vmatpush2.bf16.msra.mxu0 0
        %5644 = vmatprep.subr.bf16.mxu0 0
        %5645 = vmatpush2.bf16.msra.mxu0 0
        %5646 = vmatprep.subr.bf16.mxu0 0
        %5647 = vmatpush2.bf16.msra.mxu0 0
        %5648 = vmatprep.subr.bf16.mxu0 0
        %5649 = vmatpush2.bf16.msra.mxu0 0
        %5650 = vmatprep.subr.bf16.mxu0 0
        %5651 = vmatpush2.bf16.msra.mxu0 0
        %5652 = vmatprep.subr.bf16.mxu0 0
        %5653 = vmatpush2.bf16.msra.mxu0 0
        %5654 = vmatprep.subr.bf16.mxu0 0
        %5655 = vmatpush2.bf16.msra.mxu0 0
        %5656 = vmatprep.mubr.bf16.mxu0 0
        %5657 = vmatmul.mubr.bf16.gmra.mxu0 %v5543
        %v5658 = vpop.f32.mrf.mxu0
        %v5659 = vadd.f32 0.0, %v5658
        %v5660 = vpop.f32.mrf.mxu0
        %v5661 = vpop.f32.mrf.mxu0
        %v5662 = vadd.f32 0.0, %v5661
        %v5663 = vpop.f32.mrf.mxu0
        %5664 = vmatprep.mubr.bf16.mxu0 0
        %5665 = vmatmul.mubr.bf16.gmra.mxu0 %v5544
        %v5666 = vpop.f32.mrf.mxu0
        %v5667 = vadd.f32 0.0, %v5666
        %v5668 = vpop.f32.mrf.mxu0
        %v5669 = vpop.f32.mrf.mxu0
        %v5670 = vadd.f32 0.0, %v5669
        %v5671 = vpop.f32.mrf.mxu0
        %5672 = vmatprep.mubr.bf16.mxu0 0
        %5673 = vmatmul.mubr.bf16.gmra.mxu0 %v5545
        %v5674 = vpop.f32.mrf.mxu0
        %v5675 = vadd.f32 0.0, %v5674
        %v5676 = vpop.f32.mrf.mxu0
        %v5677 = vpop.f32.mrf.mxu0
        %v5678 = vadd.f32 0.0, %v5677
        %v5679 = vpop.f32.mrf.mxu0
        %5680 = vmatprep.mubr.bf16.mxu0 0
        %5681 = vmatmul.mubr.bf16.gmra.mxu0 %v5546
        %v5682 = vpop.f32.mrf.mxu0
        %v5683 = vadd.f32 0.0, %v5682
        %v5684 = vpop.f32.mrf.mxu0
        %v5685 = vpop.f32.mrf.mxu0
        %v5686 = vadd.f32 0.0, %v5685
        %v5687 = vpop.f32.mrf.mxu0
        %5688 = vmatprep.mubr.bf16.mxu0 0
        %5689 = vmatmul.mubr.bf16.gmra.mxu0 %v5547
        %v5690 = vpop.f32.mrf.mxu0
        %v5691 = vadd.f32 0.0, %v5690
        %v5692 = vpop.f32.mrf.mxu0
        %v5693 = vpop.f32.mrf.mxu0
        %v5694 = vadd.f32 0.0, %v5693
        %v5695 = vpop.f32.mrf.mxu0
        %5696 = vmatprep.mubr.bf16.mxu0 0
        %5697 = vmatmul.mubr.bf16.gmra.mxu0 %v5548
        %v5698 = vpop.f32.mrf.mxu0
        %v5699 = vadd.f32 0.0, %v5698
        %v5700 = vpop.f32.mrf.mxu0
        %v5701 = vpop.f32.mrf.mxu0
        %v5702 = vadd.f32 0.0, %v5701
        %v5703 = vpop.f32.mrf.mxu0
        %5704 = vmatprep.mubr.bf16.mxu0 0
        %5705 = vmatmul.mubr.bf16.gmra.mxu0 %v5549
        %v5706 = vpop.f32.mrf.mxu0
        %v5707 = vadd.f32 0.0, %v5706
        %v5708 = vpop.f32.mrf.mxu0
        %v5709 = vpop.f32.mrf.mxu0
        %v5710 = vadd.f32 0.0, %v5709
        %v5711 = vpop.f32.mrf.mxu0
        %5712 = vmatprep.mubr.bf16.mxu0 0
        %5713 = vmatmul.mubr.bf16.gmra.mxu0 %v5550
        %v5714 = vpop.f32.mrf.mxu0
        %v5715 = vadd.f32 0.0, %v5714
        %v5716 = vpop.f32.mrf.mxu0
        %v5717 = vpop.f32.mrf.mxu0
        %v5718 = vadd.f32 0.0, %v5717
        %v5719 = vpop.f32.mrf.mxu0
        %5720 = vmatprep.mubr.bf16.mxu0 0
        %5721 = vmatmul.mubr.bf16.gmra.mxu0 %v5551
        %v5722 = vpop.f32.mrf.mxu0
        %v5723 = vadd.f32 0.0, %v5722
        %v5724 = vpop.f32.mrf.mxu0
        %v5725 = vpop.f32.mrf.mxu0
        %v5726 = vadd.f32 0.0, %v5725
        %v5727 = vpop.f32.mrf.mxu0
        %5728 = vmatprep.mubr.bf16.mxu0 0
        %5729 = vmatmul.mubr.bf16.gmra.mxu0 %v5552
        %v5730 = vpop.f32.mrf.mxu0
        %v5731 = vadd.f32 0.0, %v5730
        %v5732 = vpop.f32.mrf.mxu0
        %v5733 = vpop.f32.mrf.mxu0
        %v5734 = vadd.f32 0.0, %v5733
        %v5735 = vpop.f32.mrf.mxu0
        %5736 = vmatprep.mubr.bf16.mxu0 0
        %5737 = vmatmul.mubr.bf16.gmra.mxu0 %v5553
        %v5738 = vpop.f32.mrf.mxu0
        %v5739 = vadd.f32 0.0, %v5738
        %v5740 = vpop.f32.mrf.mxu0
        %v5741 = vpop.f32.mrf.mxu0
        %v5742 = vadd.f32 0.0, %v5741
        %v5743 = vpop.f32.mrf.mxu0
        %5744 = vmatprep.mubr.bf16.mxu0 0
        %5745 = vmatmul.mubr.bf16.gmra.mxu0 %v5554
        %v5746 = vpop.f32.mrf.mxu0
        %v5747 = vadd.f32 0.0, %v5746
        %v5748 = vpop.f32.mrf.mxu0
        %v5749 = vpop.f32.mrf.mxu0
        %v5750 = vadd.f32 0.0, %v5749
        %v5751 = vpop.f32.mrf.mxu0
        %5752 = vmatprep.mubr.bf16.mxu0 0
        %5753 = vmatmul.mubr.bf16.gmra.mxu0 %v5555
        %v5754 = vpop.f32.mrf.mxu0
        %v5755 = vadd.f32 0.0, %v5754
        %v5756 = vpop.f32.mrf.mxu0
        %v5757 = vpop.f32.mrf.mxu0
        %v5758 = vadd.f32 0.0, %v5757
        %v5759 = vpop.f32.mrf.mxu0
        %5760 = vmatprep.mubr.bf16.mxu0 0
        %5761 = vmatmul.mubr.bf16.gmra.mxu0 %v5556
        %v5762 = vpop.f32.mrf.mxu0
        %v5763 = vadd.f32 0.0, %v5762
        %v5764 = vpop.f32.mrf.mxu0
        %v5765 = vpop.f32.mrf.mxu0
        %v5766 = vadd.f32 0.0, %v5765
        %v5767 = vpop.f32.mrf.mxu0
        %5768 = vmatprep.mubr.bf16.mxu0 0
        %5769 = vmatmul.mubr.bf16.gmra.mxu0 %v5557
        %v5770 = vpop.f32.mrf.mxu0
        %v5771 = vadd.f32 0.0, %v5770
        %v5772 = vpop.f32.mrf.mxu0
        %v5773 = vpop.f32.mrf.mxu0
        %v5774 = vadd.f32 0.0, %v5773
        %v5775 = vpop.f32.mrf.mxu0
        %5776 = vmatprep.mubr.bf16.mxu0 0
        %5777 = vmatmul.mubr.bf16.gmra.mxu0 %v5558
        %v5778 = vpop.f32.mrf.mxu0
        %v5779 = vadd.f32 0.0, %v5778
        %v5780 = vpop.f32.mrf.mxu0
        %v5781 = vpop.f32.mrf.mxu0
        %v5782 = vadd.f32 0.0, %v5781
        %v5783 = vpop.f32.mrf.mxu0
        %5784 = vdwg.mxu0
        %v5785 = vadd.f32 %v5479, %v5659
        %v5786 = vadd.f32 %v5480, %v5662
        %v5787 = vadd.f32 %v5481, %v5667
        %v5788 = vadd.f32 %v5482, %v5670
        %v5789 = vadd.f32 %v5483, %v5675
        %v5790 = vadd.f32 %v5484, %v5678
        %v5791 = vadd.f32 %v5485, %v5683
        %v5792 = vadd.f32 %v5486, %v5686
        %v5793 = vadd.f32 %v5487, %v5691
        %v5794 = vadd.f32 %v5488, %v5694
        %v5795 = vadd.f32 %v5489, %v5699
        %v5796 = vadd.f32 %v5490, %v5702
        %v5797 = vadd.f32 %v5491, %v5707
        %v5798 = vadd.f32 %v5492, %v5710
        %v5799 = vadd.f32 %v5493, %v5715
        %v5800 = vadd.f32 %v5494, %v5718
        %v5801 = vadd.f32 %v5495, %v5723
        %v5802 = vadd.f32 %v5496, %v5726
        %v5803 = vadd.f32 %v5497, %v5731
        %v5804 = vadd.f32 %v5498, %v5734
        %v5805 = vadd.f32 %v5499, %v5739
        %v5806 = vadd.f32 %v5500, %v5742
        %v5807 = vadd.f32 %v5501, %v5747
        %v5808 = vadd.f32 %v5502, %v5750
        %v5809 = vadd.f32 %v5503, %v5755
        %v5810 = vadd.f32 %v5504, %v5758
        %v5811 = vadd.f32 %v5505, %v5763
        %v5812 = vadd.f32 %v5506, %v5766
        %v5813 = vadd.f32 %v5507, %v5771
        %v5814 = vadd.f32 %v5508, %v5774
        %v5815 = vadd.f32 %v5509, %v5779
        %v5816 = vadd.f32 %v5510, %v5782
        %v5817 = vld [vmem:[%s4] sm:$0x1]
        %v5819 = vlaneseq
        %v5820 = vshrl.u32 %v5819, 7
        %v5821 = vsub.s32 0, %v5820
        %v5822 = vrot.slane %v5817, %v5821
        %v5824 = vadd.f32 %v5785, %v5822
        %v5825 = vadd.f32 %v5786, %v5822
        %v5826 = vadd.f32 %v5787, %v5822
        %v5827 = vadd.f32 %v5788, %v5822
        %v5828 = vadd.f32 %v5789, %v5822
        %v5829 = vadd.f32 %v5790, %v5822
        %v5830 = vadd.f32 %v5791, %v5822
        %v5831 = vadd.f32 %v5792, %v5822
        %v5832 = vadd.f32 %v5793, %v5822
        %v5833 = vadd.f32 %v5794, %v5822
        %v5834 = vadd.f32 %v5795, %v5822
        %v5835 = vadd.f32 %v5796, %v5822
        %v5836 = vadd.f32 %v5797, %v5822
        %v5837 = vadd.f32 %v5798, %v5822
        %v5838 = vadd.f32 %v5799, %v5822
        %v5839 = vadd.f32 %v5800, %v5822
        %v5840 = vadd.f32 %v5801, %v5822
        %v5841 = vadd.f32 %v5802, %v5822
        %v5842 = vadd.f32 %v5803, %v5822
        %v5843 = vadd.f32 %v5804, %v5822
        %v5844 = vadd.f32 %v5805, %v5822
        %v5845 = vadd.f32 %v5806, %v5822
        %v5846 = vadd.f32 %v5807, %v5822
        %v5847 = vadd.f32 %v5808, %v5822
        %v5848 = vadd.f32 %v5809, %v5822
        %v5849 = vadd.f32 %v5810, %v5822
        %v5850 = vadd.f32 %v5811, %v5822
        %v5851 = vadd.f32 %v5812, %v5822
        %v5852 = vadd.f32 %v5813, %v5822
        %v5853 = vadd.f32 %v5814, %v5822
        %v5854 = vadd.f32 %v5815, %v5822
        %v5855 = vadd.f32 %v5816, %v5822
        %v5856 = vmax.f32 %v5824, 0.0
        %v5857 = vmax.f32 %v5825, 0.0
        %v5858 = vmax.f32 %v5826, 0.0
        %v5859 = vmax.f32 %v5827, 0.0
        %v5860 = vmax.f32 %v5828, 0.0
        %v5861 = vmax.f32 %v5829, 0.0
        %v5862 = vmax.f32 %v5830, 0.0
        %v5863 = vmax.f32 %v5831, 0.0
        %v5864 = vmax.f32 %v5832, 0.0
        %v5865 = vmax.f32 %v5833, 0.0
        %v5866 = vmax.f32 %v5834, 0.0
        %v5867 = vmax.f32 %v5835, 0.0
        %v5868 = vmax.f32 %v5836, 0.0
        %v5869 = vmax.f32 %v5837, 0.0
        %v5870 = vmax.f32 %v5838, 0.0
        %v5871 = vmax.f32 %v5839, 0.0
        %v5872 = vmax.f32 %v5840, 0.0
        %v5873 = vmax.f32 %v5841, 0.0
        %v5874 = vmax.f32 %v5842, 0.0
        %v5875 = vmax.f32 %v5843, 0.0
        %v5876 = vmax.f32 %v5844, 0.0
        %v5877 = vmax.f32 %v5845, 0.0
        %v5878 = vmax.f32 %v5846, 0.0
        %v5879 = vmax.f32 %v5847, 0.0
        %v5880 = vmax.f32 %v5848, 0.0
        %v5881 = vmax.f32 %v5849, 0.0
        %v5882 = vmax.f32 %v5850, 0.0
        %v5883 = vmax.f32 %v5851, 0.0
        %v5884 = vmax.f32 %v5852, 0.0
        %v5885 = vmax.f32 %v5853, 0.0
        %v5886 = vmax.f32 %v5854, 0.0
        %v5887 = vmax.f32 %v5855, 0.0
        %v5888 = vpack.c.bf16 %v5857, %v5856
        %v5889 = vpack.c.bf16 %v5859, %v5858
        %v5890 = vpack.c.bf16 %v5861, %v5860
        %v5891 = vpack.c.bf16 %v5863, %v5862
        %v5892 = vpack.c.bf16 %v5865, %v5864
        %v5893 = vpack.c.bf16 %v5867, %v5866
        %v5894 = vpack.c.bf16 %v5869, %v5868
        %v5895 = vpack.c.bf16 %v5871, %v5870
        %v5896 = vpack.c.bf16 %v5873, %v5872
        %v5897 = vpack.c.bf16 %v5875, %v5874
        %v5898 = vpack.c.bf16 %v5877, %v5876
        %v5899 = vpack.c.bf16 %v5879, %v5878
        %v5900 = vpack.c.bf16 %v5881, %v5880
        %v5901 = vpack.c.bf16 %v5883, %v5882
        %v5902 = vpack.c.bf16 %v5885, %v5884
        %v5903 = vpack.c.bf16 %v5887, %v5886
        %5904 = vmatprep.subr.bf16.mxu0 0
        %5905 = vmatpush1.bf16.msra.mxu0 %v5895
        %5906 = vmatprep.subr.bf16.mxu0 0
        %5907 = vmatpush1.bf16.msra.mxu0 %v5894
        %5908 = vmatprep.subr.bf16.mxu0 0
        %5909 = vmatpush1.bf16.msra.mxu0 %v5893
        %5910 = vmatprep.subr.bf16.mxu0 0
        %5911 = vmatpush1.bf16.msra.mxu0 %v5892
        %5912 = vmatprep.subr.bf16.mxu0 0
        %5913 = vmatpush1.bf16.msra.mxu0 %v5891
        %5914 = vmatprep.subr.bf16.mxu0 0
        %5915 = vmatpush1.bf16.msra.mxu0 %v5890
        %5916 = vmatprep.subr.bf16.mxu0 0
        %5917 = vmatpush1.bf16.msra.mxu0 %v5889
        %5918 = vmatprep.subr.bf16.mxu0 0
        %5919 = vmatpush1.bf16.msra.mxu0 %v5888
        %5920 = vmatprep.subr.bf16.mxu0 0
        %5921 = vmatpush2.bf16.msra.mxu0 %v5903
        %5922 = vmatprep.subr.bf16.mxu0 0
        %5923 = vmatpush2.bf16.msra.mxu0 %v5902
        %5924 = vmatprep.subr.bf16.mxu0 0
        %5925 = vmatpush2.bf16.msra.mxu0 %v5901
        %5926 = vmatprep.subr.bf16.mxu0 0
        %5927 = vmatpush2.bf16.msra.mxu0 %v5900
        %5928 = vmatprep.subr.bf16.mxu0 0
        %5929 = vmatpush2.bf16.msra.mxu0 %v5899
        %5930 = vmatprep.subr.bf16.mxu0 0
        %5931 = vmatpush2.bf16.msra.mxu0 %v5898
        %5932 = vmatprep.subr.bf16.mxu0 0
        %5933 = vmatpush2.bf16.msra.mxu0 %v5897
        %5934 = vmatprep.subr.bf16.mxu0 0
        %5935 = vmatpush2.bf16.msra.mxu0 %v5896
        %5936 = vmatprep.mubr.bf16.mxu0 1065369472
        %5937 = vmatmul.mubr.bf16.gmra.mxu0 1065369472
        %v5938 = vpop.f32.mrf.mxu0
        %v5939 = vadd.f32 0.0, %v5938
        %v5940 = vpop.f32.mrf.mxu0
        %v5941 = vpop.f32.mrf.mxu0
        %v5942 = vpop.f32.mrf.mxu0
        %5943 = vdwg.mxu0
        %v5944 = vmul.f32 %v5939, 0.00390625
        %v5945 = vpack.c.bf16 %v5944, %v5944
        %v5946 = vld [vmem:[%s5] sm:$0xf]
        %v5947 = vld [vmem:[%s5 + $0x4] sm:$0xf]
        %v5948 = vld [vmem:[%s5 + $0x8] sm:$0xf]
        %v5949 = vld [vmem:[%s5 + $0xc] sm:$0xf]
        %v5950 = vld [vmem:[%s5 + $0x10] sm:$0xf]
        %v5951 = vld [vmem:[%s5 + $0x14] sm:$0xf]
        %v5952 = vld [vmem:[%s5 + $0x18] sm:$0xf]
        %v5953 = vld [vmem:[%s5 + $0x1c] sm:$0xf]
        %v5954 = vld [vmem:[%s5 + $0x20] sm:$0xf]
        %v5955 = vld [vmem:[%s5 + $0x24] sm:$0xf]
        %v5956 = vld [vmem:[%s5 + $0x28] sm:$0xf]
        %v5957 = vld [vmem:[%s5 + $0x2c] sm:$0xf]
        %v5958 = vld [vmem:[%s5 + $0x30] sm:$0xf]
        %v5959 = vld [vmem:[%s5 + $0x34] sm:$0xf]
        %v5960 = vld [vmem:[%s5 + $0x38] sm:$0xf]
        %v5961 = vld [vmem:[%s5 + $0x3c] sm:$0xf]
        %v5962 = vld [vmem:[%s6] sm:$0x1]
        %v5979 = vunpack.c.l.b16 %v5946
        %v5980 = vunpack.c.l.b16 %v5947
        %v5981 = vunpack.c.l.b16 %v5948
        %v5982 = vunpack.c.l.b16 %v5949
        %v5983 = vunpack.c.l.b16 %v5950
        %v5984 = vunpack.c.l.b16 %v5951
        %v5985 = vunpack.c.l.b16 %v5952
        %v5986 = vunpack.c.l.b16 %v5953
        %v5987 = vunpack.c.l.b16 %v5954
        %v5988 = vunpack.c.l.b16 %v5955
        %v5989 = vunpack.c.l.b16 %v5956
        %v5990 = vunpack.c.l.b16 %v5957
        %v5991 = vunpack.c.l.b16 %v5958
        %v5992 = vunpack.c.l.b16 %v5959
        %v5993 = vunpack.c.l.b16 %v5960
        %v5994 = vunpack.c.l.b16 %v5961
        %v5995 = vpack.c.b16 %v5980, %v5979
        %v5996 = vpack.c.b16 %v5982, %v5981
        %v5997 = vpack.c.b16 %v5984, %v5983
        %v5998 = vpack.c.b16 %v5986, %v5985
        %v5999 = vpack.c.b16 %v5988, %v5987
        %v6000 = vpack.c.b16 %v5990, %v5989
        %v6001 = vpack.c.b16 %v5992, %v5991
        %v6002 = vpack.c.b16 %v5994, %v5993
        %6011 = vmatprep.subr.bf16.mxu0 0
        %6012 = vmatpush1.bf16.msra.mxu0 %v6002
        %6013 = vmatprep.subr.bf16.mxu0 0
        %6014 = vmatpush1.bf16.msra.mxu0 %v6001
        %6015 = vmatprep.subr.bf16.mxu0 0
        %6016 = vmatpush1.bf16.msra.mxu0 %v6000
        %6017 = vmatprep.subr.bf16.mxu0 0
        %6018 = vmatpush1.bf16.msra.mxu0 %v5999
        %6019 = vmatprep.subr.bf16.mxu0 0
        %6020 = vmatpush1.bf16.msra.mxu0 %v5998
        %6021 = vmatprep.subr.bf16.mxu0 0
        %6022 = vmatpush1.bf16.msra.mxu0 %v5997
        %6023 = vmatprep.subr.bf16.mxu0 0
        %6024 = vmatpush1.bf16.msra.mxu0 %v5996
        %6025 = vmatprep.subr.bf16.mxu0 0
        %6026 = vmatpush1.bf16.msra.mxu0 %v5995
        %6027 = vmatprep.subr.bf16.mxu0 0
        %6028 = vmatpush2.bf16.msra.mxu0 0
        %6029 = vmatprep.subr.bf16.mxu0 0
        %6030 = vmatpush2.bf16.msra.mxu0 0
        %6031 = vmatprep.subr.bf16.mxu0 0
        %6032 = vmatpush2.bf16.msra.mxu0 0
        %6033 = vmatprep.subr.bf16.mxu0 0
        %6034 = vmatpush2.bf16.msra.mxu0 0
        %6035 = vmatprep.subr.bf16.mxu0 0
        %6036 = vmatpush2.bf16.msra.mxu0 0
        %6037 = vmatprep.subr.bf16.mxu0 0
        %6038 = vmatpush2.bf16.msra.mxu0 0
        %6039 = vmatprep.subr.bf16.mxu0 0
        %6040 = vmatpush2.bf16.msra.mxu0 0
        %6041 = vmatprep.subr.bf16.mxu0 0
        %6042 = vmatpush2.bf16.msra.mxu0 0
        %6043 = vmatprep.mubr.bf16.mxu0 0
        %6044 = vmatmul.mubr.bf16.gmra.mxu0 %v5945
        %v6045 = vpop.f32.mrf.mxu0
        %v6046 = vadd.f32 %v5962, %v6045
        %v6047 = vpop.f32.mrf.mxu0
        %v6048 = vpop.f32.mrf.mxu0
        %v6049 = vpop.f32.mrf.mxu0
        %6050 = vdwg.mxu0
        %6051 = vst [vmem:[%s270] sm:$0x1] %v6046
        %s6052 = sand.u32 %s181, 1
        %s6053 = scalar_lea.sflag [#allocation4], %s6052
        %s6054 = sand.u32 %s181, 1
        %s6055 = scalar_lea.vmem [#allocation3], %s6054
        // Predicated region
        $region49: #{sknet_forward_val_clf.1} parent=47 // pred_check
          %p6056 = pneg %p191
        $region50: #{sknet_forward_val_clf.1} parent=47 // pred_check_branch
          %6058 = sbr.rel (%p6056) target = $region52
        $region51: #{sknet_forward_val_clf.1} parent=47 // pred_region
          %s6060 = ssub.s32 16, 16
          %6061 = vsyncadd %s6053, %s6060
          %s6062 = smul.addr %s21, 16
          %s6063 = scalar_lea.hbm %s7, %s6062
          %s6065 = sshll.u32 %s6055, 4
          %s6066 = int_to_ptr.vmem [resolvable:$true] %s6065
          %6068 = dma.vmem_to_hbm [thread:$0]  %s6066, 16, %s6063, %s6053
        $region52: #{sknet_forward_val_clf.1} parent=47 // pred_fallthru
          _
      $region48: #{sknet_forward_val_clf.1} parent=5 // pred_fallthru
        _
      %p6069 = scmp.le.s32.totalorder 2, %s16
      // Predicated region
      $region53: #{sknet_forward_val_clf.1} parent=5 // pred_check
        %p6070 = pneg %p6069
      $region54: #{sknet_forward_val_clf.1} parent=5 // pred_check_branch
        %6072 = sbr.rel (%p6070) target = $region56
      $region55: #{sknet_forward_val_clf.1} parent=5 // pred_region
        %s6073 = ssub.s32 %s16, 2
        // Predicated region
        $region57: #{sknet_forward_val_clf.1} parent=55 // pred_check
          %p6074 = pneg %p197
        $region58: #{sknet_forward_val_clf.1} parent=55 // pred_check_branch
          %6076 = sbr.rel (%p6074) target = $region60
        $region59: #{sknet_forward_val_clf.1} parent=55 // pred_region
          %s6077 = sand.u32 %s182, 1
          %s6078 = scalar_lea.sflag [#allocation4], %s6077
          %s6079 = sand.u32 %s182, 1
          %s6080 = scalar_lea.vmem [#allocation3], %s6079
          %6081 = dma.done %s6078, 16
        $region60: #{sknet_forward_val_clf.1} parent=55 // pred_fallthru
          _
      $region56: #{sknet_forward_val_clf.1} parent=5 // pred_fallthru
        _
    $region6: #{sknet_forward_val_clf.1} parent=1 // loop_footer
      %s20 = sadd.s32 1, %s16
    $region7: #{sknet_forward_val_clf.1} parent=1 // loop_footer_branch
      %15 = sbr.rel target = $region3
    $region8: #{sknet_forward_val_clf.1} parent=1 // loop_exit
      _
    %6082 = vsyncpa [#allocation4], 1
    %s6083 = scalar_lea.sflag [#allocation4], 1
    %6084 = vsyncpa %s6083, 1

</llo_original>
